<compile_context>
chip_gen: v7x
topology: tpu7x:2x2x1
jax: 0.10.0
libtpu: 0.0.40
codegen_flags: <defaults>
</compile_context>

<pallas_src>
import functools

import jax
import jax.numpy as jnp
from jax.experimental import pallas as pl
from jax.experimental.pallas import tpu as pltpu


def _round_up(n, m):
    return ((n + m - 1) // m) * m


def _gelu_tanh(x):
    # TODO(synk): torch nn.GELU() default is exact erf; the tanh form (max abs
    # err ~1e-3) keeps the transcendental on the EUP instead of a long VALU
    # polynomial over the largest (TH*W x 4C) tensor.
    c = 0.7978845608028654  # sqrt(2/pi)
    return 0.5 * x * (1.0 + jnp.tanh(c * (x + 0.044715 * (x * x * x))))


def _tpu_generation():
    try:
        kind = jax.devices()[0].device_kind.lower()
    except Exception:
        kind = ""
    for g in ("v7", "v6", "v5", "v4"):
        if g in kind:
            return g
    return "other"


# ----------------------------------------------------------------------------
# Pallas kernel: one ConvNeXt block for one (batch, row-block) grid step
# ----------------------------------------------------------------------------
def _convnext_block_kernel(xpad_ref, taps_ref, pp_ref, w1_ref, b1_ref, w2_ref,
                           o_ref, *, TH, W, C, Cp, eps, compute_dtype):
    cdt = compute_dtype
    bf16_compute = jnp.dtype(cdt) == jnp.dtype(jnp.bfloat16)

    # Rows [row0, row0 + TH + 6) of the spatially padded image; leading-axis
    # dynamic offset is pure address arithmetic.
    row0 = pl.multiple_of(pl.program_id(1) * TH, TH)

    taps = taps_ref[...]        # (49, Cp) in compute dtype, hoisted
    pp = pp_ref[...]            # (8, Cp) f32: dw_b / gamma / beta / scale / b2

    # ---- depthwise 7x7 conv (padding=3, stride=1, groups=C) ----
    # j-outer / i-inner.  Each column tap is a direct (sublane-shifted) ref
    # load, so the (TH+6, W+6, Cp) slab never materializes; the 7 row taps per
    # column are free leading-axis slices.  Column MACs run in the compute
    # dtype (bf16 on v6e/v7x); the 7 per-column partials sum into f32.
    acc = jnp.zeros((TH, W, Cp), jnp.float32)
    for j in range(7):
        col = xpad_ref[0, pl.ds(row0, TH + 6), pl.ds(j, W), :].astype(cdt)
        part = col[0:TH] * taps[j]
        for i in range(1, 7):
            part = part + col[i:i + TH] * taps[i * 7 + j]
        acc = acc + part.astype(jnp.float32)
    acc = acc + pp[0]                                   # depthwise bias

    # ---- ChannelLayerNorm, mode='channel_first' ----
    # torch semantics: unbiased std, eps added to std (outside the sqrt).
    # Padded lanes of `acc` are exactly zero, so lane sums equal sums over the
    # real C channels; variance via sum(x^2) - C*mean^2 keeps padded lanes out.
    inv_c = 1.0 / C
    inv_cm1 = 1.0 / max(C - 1, 1)  # TODO(synk): C == 1 is degenerate in torch too
    s1 = jnp.sum(acc, axis=-1, keepdims=True)
    s2 = jnp.sum(acc * acc, axis=-1, keepdims=True)
    mean = s1 * inv_c
    var_u = jnp.maximum((s2 - s1 * mean) * inv_cm1, 0.0)
    inv_std = pl.reciprocal(jnp.sqrt(var_u) + eps, approx=True)     # EUP
    y = pp[1] * ((acc - mean) * inv_std) + pp[2]

    # ---- pointwise conv 1 (C -> 4C) + GELU ----  bf16 MXU, f32 accumulation
    # TODO(synk): for W not a multiple of 8 (late ConvNeXt stages, W in {7,14})
    # this flatten and its inverse are sublane relayouts; pad W to 8 in-block.
    y2 = y.reshape(TH * W, Cp).astype(jnp.bfloat16)
    h = jnp.dot(y2, w1_ref[...], preferred_element_type=jnp.float32)
    if bf16_compute:
        h = _gelu_tanh(h.astype(jnp.bfloat16) + b1_ref[...])   # bf16 VPU/EUP
        z = jnp.dot(h, w2_ref[...], preferred_element_type=jnp.float32)
    else:
        h = _gelu_tanh(h + b1_ref[...])                         # f32 (v5e)
        z = jnp.dot(h.astype(jnp.bfloat16), w2_ref[...],
                    preferred_element_type=jnp.float32)

    # ---- pointwise bias + layer scale + residual ----
    z = (z + pp[4]).reshape(TH, W, Cp)
    # Re-read the centre window (the residual) from the resident padded input
    # just before the add: no TH*W*Cp live range across LN / matmuls / GELU.
    x_id = xpad_ref[0, pl.ds(row0 + 3, TH), pl.ds(3, W), :]
    o_ref[0] = (z * pp[3] + x_id).astype(o_ref.dtype)


# ----------------------------------------------------------------------------
# Wrapper (layout conversion, lane padding, parameter repacking, tiling)
# ----------------------------------------------------------------------------
def convnext_block(x_nchw, params, eps=1e-6, row_tile=None):
    B, C, H, W = x_nchw.shape
    C4 = 4 * C
    Cp = _round_up(C, 128)        # lane-dense channel padding
    C4p = _round_up(C4, 128)
    Hp, Wp = H + 6, W + 6

    gen = _tpu_generation()
    # bf16 VALU work only where the VPU/EUP support it (v6e / v7x).
    compute_dtype = jnp.bfloat16 if gen in ("v6", "v7") else jnp.float32
    # Generation-aware VMEM budgets: total cap and per-step working-set target.
    if gen == "v7":
        vmem_cap, work_target = 56 << 20, 10 << 20      # 64 MiB physical / TC
    elif gen == "v6":
        vmem_cap, work_target = 104 << 20, 28 << 20     # 128 MiB physical
    elif gen == "v5":
        vmem_cap, work_target = 104 << 20, 20 << 20     # 128 MiB physical
    else:
        vmem_cap, work_target = 64 << 20, 16 << 20

    # NCHW -> NHWC, spatial pad 3 for the 7x7 conv, channel pad to Cp.  Kept in
    # f32 so the identity (residual) path re-read inside the kernel is exact.
    # TODO(synk): when stacking blocks keep activations NHWC + Cp-padded (and
    # in the network dtype, e.g. bf16) so this transpose/pad and the final
    # strip/transpose don't add extra HBM passes.
    x = jnp.transpose(x_nchw, (0, 2, 3, 1)).astype(jnp.float32)
    xpad = jnp.pad(x, ((0, 0), (3, 3), (3, 3), (0, Cp - C)))

    def lane_pad(a, n):
        return jnp.pad(a, [(0, 0)] * (a.ndim - 1) + [(0, n - a.shape[-1])])

    # Parameter repacking (tiny, plain JAX glue).
    taps = lane_pad(
        jnp.transpose(params["dw_w"][:, 0, :, :], (1, 2, 0)).reshape(49, C),
        Cp).astype(compute_dtype)                                   # (49, Cp)
    # Merge the small per-channel params into one (8, Cp) buffer:
    #   row 0: dw bias, 1: gamma, 2: beta, 3: layer scale, 4: pw2 bias.
    pp = jnp.zeros((8, Cp), jnp.float32)
    pp = pp.at[0, :C].set(params["dw_b"])
    pp = pp.at[1, :C].set(params["gamma"])
    pp = pp.at[2, :C].set(params["beta"])
    pp = pp.at[3, :C].set(params["scale"])
    pp = pp.at[4, :C].set(params["pw2_b"])
    w1 = jnp.pad(params["pw1_w"][:, :, 0, 0].T,
                 ((0, Cp - C), (0, C4p - C4))).astype(jnp.bfloat16)  # (Cp, C4p)
    b1 = lane_pad(params["pw1_b"].reshape(1, C4), C4p).astype(compute_dtype)
    w2 = jnp.pad(params["pw2_w"][:, :, 0, 0].T,
                 ((0, C4p - C4), (0, Cp - C))).astype(jnp.bfloat16)  # (C4p, Cp)

    # ---- VMEM accounting & row-tile selection -------------------------------
    f32b, bf16b = 4, 2
    cdb = 2 if compute_dtype == jnp.bfloat16 else 4
    fixed_bytes = (
        2 * Hp * Wp * Cp * f32b                  # xpad block (double-buffered)
        + 2 * 2 * Cp * C4p * bf16b               # w1 + w2 (double-buffered)
        + 2 * (49 * Cp * cdb + 8 * Cp * f32b + C4p * cdb))
    # TODO(synk): pipeline_mode=pl.Buffered(1) on the constant-index inputs
    # (weights/params/xpad) would halve their residency; deferred until the
    # single-buffer pipeline mode is verified on the target jax build.

    def step_bytes(th):
        return (2 * th * W * Cp * f32b                # output block (x2 bufs)
                + (th + 6) * W * Cp * (f32b + cdb)    # per-column load + cast
                + 4 * th * W * Cp * f32b              # acc / y / z / residual
                + th * W * C4p * (f32b + cdb))        # matmul-1 out + GELU copy

    if row_tile is None:
        divisors = [d for d in range(1, H + 1) if H % d == 0]
        feasible = [d for d in divisors
                    if step_bytes(d) <= work_target
                    and fixed_bytes + step_bytes(d) <= vmem_cap]
        row_tile = max(feasible) if feasible else min(divisors)
    TH = int(row_tile)
    if H % TH != 0:
        # TODO(synk): support ragged final row tiles (masked store) so
        # prime-ish H doesn't force degenerate tilings.
        raise ValueError(f"row_tile={TH} must divide H={H}")
    nH = H // TH

    vmem_limit = int(min(vmem_cap,
                         max(32 << 20, 1.25 * (fixed_bytes + step_bytes(TH)))))

    cost = pl.CostEstimate(
        flops=B * (4 * H * W * Cp * C4p            # two 1x1 matmuls
                   + 2 * 49 * H * W * Cp           # depthwise MACs
                   + 12 * H * W * Cp),             # LN / scale / residual
        transcendentals=B * H * W * (C4p + 1),
        bytes_accessed=(B * (Hp * Wp + H * W) * Cp * 4
                        + 2 * Cp * C4p * 2 + (49 + 8) * Cp * 4))

    kernel = functools.partial(_convnext_block_kernel, TH=TH, W=W, C=C, Cp=Cp,
                               eps=eps, compute_dtype=compute_dtype)

    # v7x megacore: shard the batch axis across the two TensorCores so each
    # core keeps the "fetch xpad once per batch element" reuse; rows stay
    # serial.  With B == 1 let the row axis carry the parallelism instead.
    dims = ("parallel", "arbitrary") if B > 1 else ("parallel", "parallel")

    out_nhwc = pl.pallas_call(
        kernel,
        out_shape=jax.ShapeDtypeStruct((B, H, W, Cp), jnp.float32),
        grid_spec=pltpu.PrefetchScalarGridSpec(
            num_scalar_prefetch=0,
            grid=(B, nH),
            in_specs=[
                pl.BlockSpec((1, Hp, Wp, Cp), lambda b, h: (b, 0, 0, 0)),  # xpad
                pl.BlockSpec((49, Cp), lambda b, h: (0, 0)),      # dw taps
                pl.BlockSpec((8, Cp), lambda b, h: (0, 0)),       # merged params
                pl.BlockSpec((Cp, C4p), lambda b, h: (0, 0)),     # w1
                pl.BlockSpec((1, C4p), lambda b, h: (0, 0)),      # b1
                pl.BlockSpec((C4p, Cp), lambda b, h: (0, 0)),     # w2
            ],
            out_specs=pl.BlockSpec((1, TH, W, Cp), lambda b, h: (b, h, 0, 0)),
        ),
        compiler_params=pltpu.CompilerParams(
            dimension_semantics=dims,
            vmem_limit_bytes=vmem_limit),
        cost_estimate=cost,
    )(xpad, taps, pp, w1, b1, w2)

    # strip channel padding, NHWC -> NCHW (PyTorch convention)
    return jnp.transpose(out_nhwc[..., :C], (0, 3, 1, 2))


# ----------------------------------------------------------------------------
# Pure-JAX reference (NCHW, mirrors the PyTorch forward) for a sanity check
# ----------------------------------------------------------------------------
def convnext_block_reference(x, params, eps=1e-6):
    B, C, H, W = x.shape
    y = jax.lax.conv_general_dilated(
        x, params["dw_w"], window_strides=(1, 1), padding=((3, 3), (3, 3)),
        dimension_numbers=("NCHW", "OIHW", "NCHW"), feature_group_count=C)
    y = y + params["dw_b"][None, :, None, None]
    mean = y.mean(axis=1, keepdims=True)
    std = jnp.sqrt(((y - mean) ** 2).sum(axis=1, keepdims=True) / (C - 1))
    y = (params["gamma"][None, :, None, None] * (y - mean) / (std + eps)
         + params["beta"][None, :, None, None])
    h = jnp.einsum("nchw,oc->nohw", y, params["pw1_w"][:, :, 0, 0])
    h = h + params["pw1_b"][None, :, None, None]
    h = jax.nn.gelu(h, approximate=False)
    z = jnp.einsum("nchw,oc->nohw", h, params["pw2_w"][:, :, 0, 0])
    z = z + params["pw2_b"][None, :, None, None]
    z = z * params["scale"][None, :, None, None]
    return z + x


# ----------------------------------------------------------------------------
def make_params(key, C, scale_init_value=1e-6):
    C4 = 4 * C
    ks = jax.random.split(key, 6)
    return {
        # nn.Conv2d(C, C, 7, groups=C): weight (C, 1, 7, 7), bias (C,)
        "dw_w": 0.1 * jax.random.normal(ks[0], (C, 1, 7, 7), jnp.float32),
        "dw_b": 0.05 * jax.random.normal(ks[1], (C,), jnp.float32),
        # ChannelLayerNorm params (init: ones / zeros)
        "gamma": jnp.ones((C,), jnp.float32),
        "beta": jnp.zeros((C,), jnp.float32),
        # nn.Conv2d(C, 4C, 1): weight (4C, C, 1, 1), bias (4C,)
        "pw1_w": 0.1 * jax.random.normal(ks[2], (C4, C, 1, 1), jnp.float32),
        "pw1_b": 0.05 * jax.random.normal(ks[3], (C4,), jnp.float32),
        # nn.Conv2d(4C, C, 1): weight (C, 4C, 1, 1), bias (C,)
        "pw2_w": 0.1 * jax.random.normal(ks[4], (C, C4, 1, 1), jnp.float32),
        "pw2_b": 0.05 * jax.random.normal(ks[5], (C,), jnp.float32),
        # layer scale (init: scale_init_value * ones)
        "scale": scale_init_value * jnp.ones((C,), jnp.float32),
    }


if __name__ == "__main__":
    B, C, H, W = 2, 8, 16, 16          # small NCHW input
    key = jax.random.PRNGKey(0)
    kx, kp = jax.random.split(key)
    x = jax.random.normal(kx, (B, C, H, W), jnp.float32)

    # 1) auto row-tile path, module-default layer scale (1e-6): tight check
    #    (residual path is exact f32).
    run_auto = jax.jit(convnext_block)
    params = make_params(kp, C, scale_init_value=1e-6)
    out = jax.block_until_ready(run_auto(x, params))
    ref = convnext_block_reference(x, params)
    assert out.shape == (B, C, H, W)
    err = float(jnp.max(jnp.abs(out - ref)))
    assert err < 1e-3, f"max |err| = {err}"

    # 2) explicit row tiling (grid=(B, 2)) with a larger layer scale so the
    #    bf16 / tanh-GELU compute path is actually exercised (looser tol).
    run_tiled = jax.jit(functools.partial(convnext_block, row_tile=8))
    params2 = make_params(kp, C, scale_init_value=0.5)
    out2 = jax.block_until_ready(run_tiled(x, params2))
    ref2 = convnext_block_reference(x, params2)
    err2 = float(jnp.max(jnp.abs(out2 - ref2)))
    assert err2 < 5e-2, f"max |err| = {err2}"

    print("KERNEL_OK")
</pallas_src>

<mosaic_0001>
module attributes {stable_mosaic.version = 11 : i64} {
  func.func @_convnext_block_kernel(%arg0: i32, %arg1: i32, %arg2: memref<1x22x22x128xf32, #tpu.memory_space<vmem>>, %arg3: memref<49x128xf32, #tpu.memory_space<vmem>>, %arg4: memref<8x128xf32, #tpu.memory_space<vmem>>, %arg5: memref<128x128xbf16, #tpu.memory_space<vmem>>, %arg6: memref<1x128xf32, #tpu.memory_space<vmem>>, %arg7: memref<128x128xbf16, #tpu.memory_space<vmem>>, %arg8: memref<1x16x16x128xf32, #tpu.memory_space<vmem>>) attributes {dimension_semantics = [#tpu.dimension_semantics<parallel>, #tpu.dimension_semantics<arbitrary>], iteration_bounds = array<i64: 2, 1>, scalar_prefetch = 0 : i64, scratch_operands = 0 : i64, tpu.core_type = #tpu.core_type<tc>, window_params = [{transform_indices = @transform_0, window_bounds = array<i64: 1, 22, 22, 128>}, {pipeline_mode = #tpu.pipeline_mode<synchronous>, transform_indices = @transform_1, window_bounds = array<i64: 49, 128>}, {pipeline_mode = #tpu.pipeline_mode<synchronous>, transform_indices = @transform_2, window_bounds = array<i64: 8, 128>}, {pipeline_mode = #tpu.pipeline_mode<synchronous>, transform_indices = @transform_3, window_bounds = array<i64: 128, 128>}, {pipeline_mode = #tpu.pipeline_mode<synchronous>, transform_indices = @transform_4, window_bounds = array<i64: 1, 128>}, {pipeline_mode = #tpu.pipeline_mode<synchronous>, transform_indices = @transform_5, window_bounds = array<i64: 128, 128>}, {transform_indices = @transform_6, window_bounds = array<i64: 1, 16, 16, 128>}]} {
    %c16_i32 = arith.constant 16 : i32
    %0 = arith.muli %arg1, %c16_i32 : i32
    %1 = tpu.assume_multiple %0, 16 : i32
    %c0 = arith.constant 0 : index
    %c0_0 = arith.constant 0 : index
    %2 = vector.load %arg3[%c0, %c0_0] : memref<49x128xf32, #tpu.memory_space<vmem>>, vector<49x128xf32>
    %c0_1 = arith.constant 0 : index
    %c0_2 = arith.constant 0 : index
    %3 = vector.load %arg4[%c0_1, %c0_2] : memref<8x128xf32, #tpu.memory_space<vmem>>, vector<8x128xf32>
    %cst = arith.constant 0.000000e+00 : f32
    %4 = vector.broadcast %cst : f32 to vector<16x16x128xf32>
    %c0_3 = arith.constant 0 : index
    %5 = arith.index_cast %1 : i32 to index
    %c0_4 = arith.constant 0 : index
    %c0_5 = arith.constant 0 : index
    %6 = vector.load %arg2[%c0_3, %5, %c0_4, %c0_5] : memref<1x22x22x128xf32, #tpu.memory_space<vmem>>, vector<1x22x16x128xf32>
    %7 = vector.shape_cast %6 : vector<1x22x16x128xf32> to vector<22x16x128xf32>
    %8 = vector.extract_strided_slice %7 {offsets = [0, 0, 0], sizes = [16, 16, 128], strides = [1, 1, 1]} : vector<22x16x128xf32> to vector<16x16x128xf32>
    %9 = vector.extract_strided_slice %2 {offsets = [0, 0], sizes = [1, 128], strides = [1, 1]} : vector<49x128xf32> to vector<1x128xf32>
    %10 = vector.shape_cast %9 : vector<1x128xf32> to vector<128xf32>
    %11 = vector.shape_cast %10 : vector<128xf32> to vector<1x1x128xf32>
    %12 = vector.broadcast %11 : vector<1x1x128xf32> to vector<16x16x128xf32>
    %13 = arith.mulf %8, %12 : vector<16x16x128xf32>
    %14 = vector.extract_strided_slice %7 {offsets = [1, 0, 0], sizes = [16, 16, 128], strides = [1, 1, 1]} : vector<22x16x128xf32> to vector<16x16x128xf32>
    %15 = vector.extract_strided_slice %2 {offsets = [7, 0], sizes = [1, 128], strides = [1, 1]} : vector<49x128xf32> to vector<1x128xf32>
    %16 = vector.shape_cast %15 : vector<1x128xf32> to vector<128xf32>
    %17 = vector.shape_cast %16 : vector<128xf32> to vector<1x1x128xf32>
    %18 = vector.broadcast %17 : vector<1x1x128xf32> to vector<16x16x128xf32>
    %19 = arith.mulf %14, %18 : vector<16x16x128xf32>
    %20 = arith.addf %13, %19 : vector<16x16x128xf32>
    %21 = vector.extract_strided_slice %7 {offsets = [2, 0, 0], sizes = [16, 16, 128], strides = [1, 1, 1]} : vector<22x16x128xf32> to vector<16x16x128xf32>
    %22 = vector.extract_strided_slice %2 {offsets = [14, 0], sizes = [1, 128], strides = [1, 1]} : vector<49x128xf32> to vector<1x128xf32>
    %23 = vector.shape_cast %22 : vector<1x128xf32> to vector<128xf32>
    %24 = vector.shape_cast %23 : vector<128xf32> to vector<1x1x128xf32>
    %25 = vector.broadcast %24 : vector<1x1x128xf32> to vector<16x16x128xf32>
    %26 = arith.mulf %21, %25 : vector<16x16x128xf32>
    %27 = arith.addf %20, %26 : vector<16x16x128xf32>
    %28 = vector.extract_strided_slice %7 {offsets = [3, 0, 0], sizes = [16, 16, 128], strides = [1, 1, 1]} : vector<22x16x128xf32> to vector<16x16x128xf32>
    %29 = vector.extract_strided_slice %2 {offsets = [21, 0], sizes = [1, 128], strides = [1, 1]} : vector<49x128xf32> to vector<1x128xf32>
    %30 = vector.shape_cast %29 : vector<1x128xf32> to vector<128xf32>
    %31 = vector.shape_cast %30 : vector<128xf32> to vector<1x1x128xf32>
    %32 = vector.broadcast %31 : vector<1x1x128xf32> to vector<16x16x128xf32>
    %33 = arith.mulf %28, %32 : vector<16x16x128xf32>
    %34 = arith.addf %27, %33 : vector<16x16x128xf32>
    %35 = vector.extract_strided_slice %7 {offsets = [4, 0, 0], sizes = [16, 16, 128], strides = [1, 1, 1]} : vector<22x16x128xf32> to vector<16x16x128xf32>
    %36 = vector.extract_strided_slice %2 {offsets = [28, 0], sizes = [1, 128], strides = [1, 1]} : vector<49x128xf32> to vector<1x128xf32>
    %37 = vector.shape_cast %36 : vector<1x128xf32> to vector<128xf32>
    %38 = vector.shape_cast %37 : vector<128xf32> to vector<1x1x128xf32>
    %39 = vector.broadcast %38 : vector<1x1x128xf32> to vector<16x16x128xf32>
    %40 = arith.mulf %35, %39 : vector<16x16x128xf32>
    %41 = arith.addf %34, %40 : vector<16x16x128xf32>
    %42 = vector.extract_strided_slice %7 {offsets = [5, 0, 0], sizes = [16, 16, 128], strides = [1, 1, 1]} : vector<22x16x128xf32> to vector<16x16x128xf32>
    %43 = vector.extract_strided_slice %2 {offsets = [35, 0], sizes = [1, 128], strides = [1, 1]} : vector<49x128xf32> to vector<1x128xf32>
    %44 = vector.shape_cast %43 : vector<1x128xf32> to vector<128xf32>
    %45 = vector.shape_cast %44 : vector<128xf32> to vector<1x1x128xf32>
    %46 = vector.broadcast %45 : vector<1x1x128xf32> to vector<16x16x128xf32>
    %47 = arith.mulf %42, %46 : vector<16x16x128xf32>
    %48 = arith.addf %41, %47 : vector<16x16x128xf32>
    %49 = vector.extract_strided_slice %7 {offsets = [6, 0, 0], sizes = [16, 16, 128], strides = [1, 1, 1]} : vector<22x16x128xf32> to vector<16x16x128xf32>
    %50 = vector.extract_strided_slice %2 {offsets = [42, 0], sizes = [1, 128], strides = [1, 1]} : vector<49x128xf32> to vector<1x128xf32>
    %51 = vector.shape_cast %50 : vector<1x128xf32> to vector<128xf32>
    %52 = vector.shape_cast %51 : vector<128xf32> to vector<1x1x128xf32>
    %53 = vector.broadcast %52 : vector<1x1x128xf32> to vector<16x16x128xf32>
    %54 = arith.mulf %49, %53 : vector<16x16x128xf32>
    %55 = arith.addf %48, %54 : vector<16x16x128xf32>
    %56 = arith.addf %4, %55 : vector<16x16x128xf32>
    %c0_6 = arith.constant 0 : index
    %57 = arith.index_cast %1 : i32 to index
    %c1 = arith.constant 1 : index
    %c0_7 = arith.constant 0 : index
    %58 = vector.load %arg2[%c0_6, %57, %c1, %c0_7] : memref<1x22x22x128xf32, #tpu.memory_space<vmem>>, vector<1x22x16x128xf32>
    %59 = vector.shape_cast %58 : vector<1x22x16x128xf32> to vector<22x16x128xf32>
    %60 = vector.extract_strided_slice %59 {offsets = [0, 0, 0], sizes = [16, 16, 128], strides = [1, 1, 1]} : vector<22x16x128xf32> to vector<16x16x128xf32>
    %61 = vector.extract_strided_slice %2 {offsets = [1, 0], sizes = [1, 128], strides = [1, 1]} : vector<49x128xf32> to vector<1x128xf32>
    %62 = vector.shape_cast %61 : vector<1x128xf32> to vector<128xf32>
    %63 = vector.shape_cast %62 : vector<128xf32> to vector<1x1x128xf32>
    %64 = vector.broadcast %63 : vector<1x1x128xf32> to vector<16x16x128xf32>
    %65 = arith.mulf %60, %64 : vector<16x16x128xf32>
    %66 = vector.extract_strided_slice %59 {offsets = [1, 0, 0], sizes = [16, 16, 128], strides = [1, 1, 1]} : vector<22x16x128xf32> to vector<16x16x128xf32>
    %67 = vector.extract_strided_slice %2 {offsets = [8, 0], sizes = [1, 128], strides = [1, 1]} : vector<49x128xf32> to vector<1x128xf32>
    %68 = vector.shape_cast %67 : vector<1x128xf32> to vector<128xf32>
    %69 = vector.shape_cast %68 : vector<128xf32> to vector<1x1x128xf32>
    %70 = vector.broadcast %69 : vector<1x1x128xf32> to vector<16x16x128xf32>
    %71 = arith.mulf %66, %70 : vector<16x16x128xf32>
    %72 = arith.addf %65, %71 : vector<16x16x128xf32>
    %73 = vector.extract_strided_slice %59 {offsets = [2, 0, 0], sizes = [16, 16, 128], strides = [1, 1, 1]} : vector<22x16x128xf32> to vector<16x16x128xf32>
    %74 = vector.extract_strided_slice %2 {offsets = [15, 0], sizes = [1, 128], strides = [1, 1]} : vector<49x128xf32> to vector<1x128xf32>
    %75 = vector.shape_cast %74 : vector<1x128xf32> to vector<128xf32>
    %76 = vector.shape_cast %75 : vector<128xf32> to vector<1x1x128xf32>
    %77 = vector.broadcast %76 : vector<1x1x128xf32> to vector<16x16x128xf32>
    %78 = arith.mulf %73, %77 : vector<16x16x128xf32>
    %79 = arith.addf %72, %78 : vector<16x16x128xf32>
    %80 = vector.extract_strided_slice %59 {offsets = [3, 0, 0], sizes = [16, 16, 128], strides = [1, 1, 1]} : vector<22x16x128xf32> to vector<16x16x128xf32>
    %81 = vector.extract_strided_slice %2 {offsets = [22, 0], sizes = [1, 128], strides = [1, 1]} : vector<49x128xf32> to vector<1x128xf32>
    %82 = vector.shape_cast %81 : vector<1x128xf32> to vector<128xf32>
    %83 = vector.shape_cast %82 : vector<128xf32> to vector<1x1x128xf32>
    %84 = vector.broadcast %83 : vector<1x1x128xf32> to vector<16x16x128xf32>
    %85 = arith.mulf %80, %84 : vector<16x16x128xf32>
    %86 = arith.addf %79, %85 : vector<16x16x128xf32>
    %87 = vector.extract_strided_slice %59 {offsets = [4, 0, 0], sizes = [16, 16, 128], strides = [1, 1, 1]} : vector<22x16x128xf32> to vector<16x16x128xf32>
    %88 = vector.extract_strided_slice %2 {offsets = [29, 0], sizes = [1, 128], strides = [1, 1]} : vector<49x128xf32> to vector<1x128xf32>
    %89 = vector.shape_cast %88 : vector<1x128xf32> to vector<128xf32>
    %90 = vector.shape_cast %89 : vector<128xf32> to vector<1x1x128xf32>
    %91 = vector.broadcast %90 : vector<1x1x128xf32> to vector<16x16x128xf32>
    %92 = arith.mulf %87, %91 : vector<16x16x128xf32>
    %93 = arith.addf %86, %92 : vector<16x16x128xf32>
    %94 = vector.extract_strided_slice %59 {offsets = [5, 0, 0], sizes = [16, 16, 128], strides = [1, 1, 1]} : vector<22x16x128xf32> to vector<16x16x128xf32>
    %95 = vector.extract_strided_slice %2 {offsets = [36, 0], sizes = [1, 128], strides = [1, 1]} : vector<49x128xf32> to vector<1x128xf32>
    %96 = vector.shape_cast %95 : vector<1x128xf32> to vector<128xf32>
    %97 = vector.shape_cast %96 : vector<128xf32> to vector<1x1x128xf32>
    %98 = vector.broadcast %97 : vector<1x1x128xf32> to vector<16x16x128xf32>
    %99 = arith.mulf %94, %98 : vector<16x16x128xf32>
    %100 = arith.addf %93, %99 : vector<16x16x128xf32>
    %101 = vector.extract_strided_slice %59 {offsets = [6, 0, 0], sizes = [16, 16, 128], strides = [1, 1, 1]} : vector<22x16x128xf32> to vector<16x16x128xf32>
    %102 = vector.extract_strided_slice %2 {offsets = [43, 0], sizes = [1, 128], strides = [1, 1]} : vector<49x128xf32> to vector<1x128xf32>
    %103 = vector.shape_cast %102 : vector<1x128xf32> to vector<128xf32>
    %104 = vector.shape_cast %103 : vector<128xf32> to vector<1x1x128xf32>
    %105 = vector.broadcast %104 : vector<1x1x128xf32> to vector<16x16x128xf32>
    %106 = arith.mulf %101, %105 : vector<16x16x128xf32>
    %107 = arith.addf %100, %106 : vector<16x16x128xf32>
    %108 = arith.addf %56, %107 : vector<16x16x128xf32>
    %c0_8 = arith.constant 0 : index
    %109 = arith.index_cast %1 : i32 to index
    %c2 = arith.constant 2 : index
    %c0_9 = arith.constant 0 : index
    %110 = vector.load %arg2[%c0_8, %109, %c2, %c0_9] : memref<1x22x22x128xf32, #tpu.memory_space<vmem>>, vector<1x22x16x128xf32>
    %111 = vector.shape_cast %110 : vector<1x22x16x128xf32> to vector<22x16x128xf32>
    %112 = vector.extract_strided_slice %111 {offsets = [0, 0, 0], sizes = [16, 16, 128], strides = [1, 1, 1]} : vector<22x16x128xf32> to vector<16x16x128xf32>
    %113 = vector.extract_strided_slice %2 {offsets = [2, 0], sizes = [1, 128], strides = [1, 1]} : vector<49x128xf32> to vector<1x128xf32>
    %114 = vector.shape_cast %113 : vector<1x128xf32> to vector<128xf32>
    %115 = vector.shape_cast %114 : vector<128xf32> to vector<1x1x128xf32>
    %116 = vector.broadcast %115 : vector<1x1x128xf32> to vector<16x16x128xf32>
    %117 = arith.mulf %112, %116 : vector<16x16x128xf32>
    %118 = vector.extract_strided_slice %111 {offsets = [1, 0, 0], sizes = [16, 16, 128], strides = [1, 1, 1]} : vector<22x16x128xf32> to vector<16x16x128xf32>
    %119 = vector.extract_strided_slice %2 {offsets = [9, 0], sizes = [1, 128], strides = [1, 1]} : vector<49x128xf32> to vector<1x128xf32>
    %120 = vector.shape_cast %119 : vector<1x128xf32> to vector<128xf32>
    %121 = vector.shape_cast %120 : vector<128xf32> to vector<1x1x128xf32>
    %122 = vector.broadcast %121 : vector<1x1x128xf32> to vector<16x16x128xf32>
    %123 = arith.mulf %118, %122 : vector<16x16x128xf32>
    %124 = arith.addf %117, %123 : vector<16x16x128xf32>
    %125 = vector.extract_strided_slice %111 {offsets = [2, 0, 0], sizes = [16, 16, 128], strides = [1, 1, 1]} : vector<22x16x128xf32> to vector<16x16x128xf32>
    %126 = vector.extract_strided_slice %2 {offsets = [16, 0], sizes = [1, 128], strides = [1, 1]} : vector<49x128xf32> to vector<1x128xf32>
    %127 = vector.shape_cast %126 : vector<1x128xf32> to vector<128xf32>
    %128 = vector.shape_cast %127 : vector<128xf32> to vector<1x1x128xf32>
    %129 = vector.broadcast %128 : vector<1x1x128xf32> to vector<16x16x128xf32>
    %130 = arith.mulf %125, %129 : vector<16x16x128xf32>
    %131 = arith.addf %124, %130 : vector<16x16x128xf32>
    %132 = vector.extract_strided_slice %111 {offsets = [3, 0, 0], sizes = [16, 16, 128], strides = [1, 1, 1]} : vector<22x16x128xf32> to vector<16x16x128xf32>
    %133 = vector.extract_strided_slice %2 {offsets = [23, 0], sizes = [1, 128], strides = [1, 1]} : vector<49x128xf32> to vector<1x128xf32>
    %134 = vector.shape_cast %133 : vector<1x128xf32> to vector<128xf32>
    %135 = vector.shape_cast %134 : vector<128xf32> to vector<1x1x128xf32>
    %136 = vector.broadcast %135 : vector<1x1x128xf32> to vector<16x16x128xf32>
    %137 = arith.mulf %132, %136 : vector<16x16x128xf32>
    %138 = arith.addf %131, %137 : vector<16x16x128xf32>
    %139 = vector.extract_strided_slice %111 {offsets = [4, 0, 0], sizes = [16, 16, 128], strides = [1, 1, 1]} : vector<22x16x128xf32> to vector<16x16x128xf32>
    %140 = vector.extract_strided_slice %2 {offsets = [30, 0], sizes = [1, 128], strides = [1, 1]} : vector<49x128xf32> to vector<1x128xf32>
    %141 = vector.shape_cast %140 : vector<1x128xf32> to vector<128xf32>
    %142 = vector.shape_cast %141 : vector<128xf32> to vector<1x1x128xf32>
    %143 = vector.broadcast %142 : vector<1x1x128xf32> to vector<16x16x128xf32>
    %144 = arith.mulf %139, %143 : vector<16x16x128xf32>
    %145 = arith.addf %138, %144 : vector<16x16x128xf32>
    %146 = vector.extract_strided_slice %111 {offsets = [5, 0, 0], sizes = [16, 16, 128], strides = [1, 1, 1]} : vector<22x16x128xf32> to vector<16x16x128xf32>
    %147 = vector.extract_strided_slice %2 {offsets = [37, 0], sizes = [1, 128], strides = [1, 1]} : vector<49x128xf32> to vector<1x128xf32>
    %148 = vector.shape_cast %147 : vector<1x128xf32> to vector<128xf32>
    %149 = vector.shape_cast %148 : vector<128xf32> to vector<1x1x128xf32>
    %150 = vector.broadcast %149 : vector<1x1x128xf32> to vector<16x16x128xf32>
    %151 = arith.mulf %146, %150 : vector<16x16x128xf32>
    %152 = arith.addf %145, %151 : vector<16x16x128xf32>
    %153 = vector.extract_strided_slice %111 {offsets = [6, 0, 0], sizes = [16, 16, 128], strides = [1, 1, 1]} : vector<22x16x128xf32> to vector<16x16x128xf32>
    %154 = vector.extract_strided_slice %2 {offsets = [44, 0], sizes = [1, 128], strides = [1, 1]} : vector<49x128xf32> to vector<1x128xf32>
    %155 = vector.shape_cast %154 : vector<1x128xf32> to vector<128xf32>
    %156 = vector.shape_cast %155 : vector<128xf32> to vector<1x1x128xf32>
    %157 = vector.broadcast %156 : vector<1x1x128xf32> to vector<16x16x128xf32>
    %158 = arith.mulf %153, %157 : vector<16x16x128xf32>
    %159 = arith.addf %152, %158 : vector<16x16x128xf32>
    %160 = arith.addf %108, %159 : vector<16x16x128xf32>
    %c0_10 = arith.constant 0 : index
    %161 = arith.index_cast %1 : i32 to index
    %c3 = arith.constant 3 : index
    %c0_11 = arith.constant 0 : index
    %162 = vector.load %arg2[%c0_10, %161, %c3, %c0_11] : memref<1x22x22x128xf32, #tpu.memory_space<vmem>>, vector<1x22x16x128xf32>
    %163 = vector.shape_cast %162 : vector<1x22x16x128xf32> to vector<22x16x128xf32>
    %164 = vector.extract_strided_slice %163 {offsets = [0, 0, 0], sizes = [16, 16, 128], strides = [1, 1, 1]} : vector<22x16x128xf32> to vector<16x16x128xf32>
    %165 = vector.extract_strided_slice %2 {offsets = [3, 0], sizes = [1, 128], strides = [1, 1]} : vector<49x128xf32> to vector<1x128xf32>
    %166 = vector.shape_cast %165 : vector<1x128xf32> to vector<128xf32>
    %167 = vector.shape_cast %166 : vector<128xf32> to vector<1x1x128xf32>
    %168 = vector.broadcast %167 : vector<1x1x128xf32> to vector<16x16x128xf32>
    %169 = arith.mulf %164, %168 : vector<16x16x128xf32>
    %170 = vector.extract_strided_slice %163 {offsets = [1, 0, 0], sizes = [16, 16, 128], strides = [1, 1, 1]} : vector<22x16x128xf32> to vector<16x16x128xf32>
    %171 = vector.extract_strided_slice %2 {offsets = [10, 0], sizes = [1, 128], strides = [1, 1]} : vector<49x128xf32> to vector<1x128xf32>
    %172 = vector.shape_cast %171 : vector<1x128xf32> to vector<128xf32>
    %173 = vector.shape_cast %172 : vector<128xf32> to vector<1x1x128xf32>
    %174 = vector.broadcast %173 : vector<1x1x128xf32> to vector<16x16x128xf32>
    %175 = arith.mulf %170, %174 : vector<16x16x128xf32>
    %176 = arith.addf %169, %175 : vector<16x16x128xf32>
    %177 = vector.extract_strided_slice %163 {offsets = [2, 0, 0], sizes = [16, 16, 128], strides = [1, 1, 1]} : vector<22x16x128xf32> to vector<16x16x128xf32>
    %178 = vector.extract_strided_slice %2 {offsets = [17, 0], sizes = [1, 128], strides = [1, 1]} : vector<49x128xf32> to vector<1x128xf32>
    %179 = vector.shape_cast %178 : vector<1x128xf32> to vector<128xf32>
    %180 = vector.shape_cast %179 : vector<128xf32> to vector<1x1x128xf32>
    %181 = vector.broadcast %180 : vector<1x1x128xf32> to vector<16x16x128xf32>
    %182 = arith.mulf %177, %181 : vector<16x16x128xf32>
    %183 = arith.addf %176, %182 : vector<16x16x128xf32>
    %184 = vector.extract_strided_slice %163 {offsets = [3, 0, 0], sizes = [16, 16, 128], strides = [1, 1, 1]} : vector<22x16x128xf32> to vector<16x16x128xf32>
    %185 = vector.extract_strided_slice %2 {offsets = [24, 0], sizes = [1, 128], strides = [1, 1]} : vector<49x128xf32> to vector<1x128xf32>
    %186 = vector.shape_cast %185 : vector<1x128xf32> to vector<128xf32>
    %187 = vector.shape_cast %186 : vector<128xf32> to vector<1x1x128xf32>
    %188 = vector.broadcast %187 : vector<1x1x128xf32> to vector<16x16x128xf32>
    %189 = arith.mulf %184, %188 : vector<16x16x128xf32>
    %190 = arith.addf %183, %189 : vector<16x16x128xf32>
    %191 = vector.extract_strided_slice %163 {offsets = [4, 0, 0], sizes = [16, 16, 128], strides = [1, 1, 1]} : vector<22x16x128xf32> to vector<16x16x128xf32>
    %192 = vector.extract_strided_slice %2 {offsets = [31, 0], sizes = [1, 128], strides = [1, 1]} : vector<49x128xf32> to vector<1x128xf32>
    %193 = vector.shape_cast %192 : vector<1x128xf32> to vector<128xf32>
    %194 = vector.shape_cast %193 : vector<128xf32> to vector<1x1x128xf32>
    %195 = vector.broadcast %194 : vector<1x1x128xf32> to vector<16x16x128xf32>
    %196 = arith.mulf %191, %195 : vector<16x16x128xf32>
    %197 = arith.addf %190, %196 : vector<16x16x128xf32>
    %198 = vector.extract_strided_slice %163 {offsets = [5, 0, 0], sizes = [16, 16, 128], strides = [1, 1, 1]} : vector<22x16x128xf32> to vector<16x16x128xf32>
    %199 = vector.extract_strided_slice %2 {offsets = [38, 0], sizes = [1, 128], strides = [1, 1]} : vector<49x128xf32> to vector<1x128xf32>
    %200 = vector.shape_cast %199 : vector<1x128xf32> to vector<128xf32>
    %201 = vector.shape_cast %200 : vector<128xf32> to vector<1x1x128xf32>
    %202 = vector.broadcast %201 : vector<1x1x128xf32> to vector<16x16x128xf32>
    %203 = arith.mulf %198, %202 : vector<16x16x128xf32>
    %204 = arith.addf %197, %203 : vector<16x16x128xf32>
    %205 = vector.extract_strided_slice %163 {offsets = [6, 0, 0], sizes = [16, 16, 128], strides = [1, 1, 1]} : vector<22x16x128xf32> to vector<16x16x128xf32>
    %206 = vector.extract_strided_slice %2 {offsets = [45, 0], sizes = [1, 128], strides = [1, 1]} : vector<49x128xf32> to vector<1x128xf32>
    %207 = vector.shape_cast %206 : vector<1x128xf32> to vector<128xf32>
    %208 = vector.shape_cast %207 : vector<128xf32> to vector<1x1x128xf32>
    %209 = vector.broadcast %208 : vector<1x1x128xf32> to vector<16x16x128xf32>
    %210 = arith.mulf %205, %209 : vector<16x16x128xf32>
    %211 = arith.addf %204, %210 : vector<16x16x128xf32>
    %212 = arith.addf %160, %211 : vector<16x16x128xf32>
    %c0_12 = arith.constant 0 : index
    %213 = arith.index_cast %1 : i32 to index
    %c4 = arith.constant 4 : index
    %c0_13 = arith.constant 0 : index
    %214 = vector.load %arg2[%c0_12, %213, %c4, %c0_13] : memref<1x22x22x128xf32, #tpu.memory_space<vmem>>, vector<1x22x16x128xf32>
    %215 = vector.shape_cast %214 : vector<1x22x16x128xf32> to vector<22x16x128xf32>
    %216 = vector.extract_strided_slice %215 {offsets = [0, 0, 0], sizes = [16, 16, 128], strides = [1, 1, 1]} : vector<22x16x128xf32> to vector<16x16x128xf32>
    %217 = vector.extract_strided_slice %2 {offsets = [4, 0], sizes = [1, 128], strides = [1, 1]} : vector<49x128xf32> to vector<1x128xf32>
    %218 = vector.shape_cast %217 : vector<1x128xf32> to vector<128xf32>
    %219 = vector.shape_cast %218 : vector<128xf32> to vector<1x1x128xf32>
    %220 = vector.broadcast %219 : vector<1x1x128xf32> to vector<16x16x128xf32>
    %221 = arith.mulf %216, %220 : vector<16x16x128xf32>
    %222 = vector.extract_strided_slice %215 {offsets = [1, 0, 0], sizes = [16, 16, 128], strides = [1, 1, 1]} : vector<22x16x128xf32> to vector<16x16x128xf32>
    %223 = vector.extract_strided_slice %2 {offsets = [11, 0], sizes = [1, 128], strides = [1, 1]} : vector<49x128xf32> to vector<1x128xf32>
    %224 = vector.shape_cast %223 : vector<1x128xf32> to vector<128xf32>
    %225 = vector.shape_cast %224 : vector<128xf32> to vector<1x1x128xf32>
    %226 = vector.broadcast %225 : vector<1x1x128xf32> to vector<16x16x128xf32>
    %227 = arith.mulf %222, %226 : vector<16x16x128xf32>
    %228 = arith.addf %221, %227 : vector<16x16x128xf32>
    %229 = vector.extract_strided_slice %215 {offsets = [2, 0, 0], sizes = [16, 16, 128], strides = [1, 1, 1]} : vector<22x16x128xf32> to vector<16x16x128xf32>
    %230 = vector.extract_strided_slice %2 {offsets = [18, 0], sizes = [1, 128], strides = [1, 1]} : vector<49x128xf32> to vector<1x128xf32>
    %231 = vector.shape_cast %230 : vector<1x128xf32> to vector<128xf32>
    %232 = vector.shape_cast %231 : vector<128xf32> to vector<1x1x128xf32>
    %233 = vector.broadcast %232 : vector<1x1x128xf32> to vector<16x16x128xf32>
    %234 = arith.mulf %229, %233 : vector<16x16x128xf32>
    %235 = arith.addf %228, %234 : vector<16x16x128xf32>
    %236 = vector.extract_strided_slice %215 {offsets = [3, 0, 0], sizes = [16, 16, 128], strides = [1, 1, 1]} : vector<22x16x128xf32> to vector<16x16x128xf32>
    %237 = vector.extract_strided_slice %2 {offsets = [25, 0], sizes = [1, 128], strides = [1, 1]} : vector<49x128xf32> to vector<1x128xf32>
    %238 = vector.shape_cast %237 : vector<1x128xf32> to vector<128xf32>
    %239 = vector.shape_cast %238 : vector<128xf32> to vector<1x1x128xf32>
    %240 = vector.broadcast %239 : vector<1x1x128xf32> to vector<16x16x128xf32>
    %241 = arith.mulf %236, %240 : vector<16x16x128xf32>
    %242 = arith.addf %235, %241 : vector<16x16x128xf32>
    %243 = vector.extract_strided_slice %215 {offsets = [4, 0, 0], sizes = [16, 16, 128], strides = [1, 1, 1]} : vector<22x16x128xf32> to vector<16x16x128xf32>
    %244 = vector.extract_strided_slice %2 {offsets = [32, 0], sizes = [1, 128], strides = [1, 1]} : vector<49x128xf32> to vector<1x128xf32>
    %245 = vector.shape_cast %244 : vector<1x128xf32> to vector<128xf32>
    %246 = vector.shape_cast %245 : vector<128xf32> to vector<1x1x128xf32>
    %247 = vector.broadcast %246 : vector<1x1x128xf32> to vector<16x16x128xf32>
    %248 = arith.mulf %243, %247 : vector<16x16x128xf32>
    %249 = arith.addf %242, %248 : vector<16x16x128xf32>
    %250 = vector.extract_strided_slice %215 {offsets = [5, 0, 0], sizes = [16, 16, 128], strides = [1, 1, 1]} : vector<22x16x128xf32> to vector<16x16x128xf32>
    %251 = vector.extract_strided_slice %2 {offsets = [39, 0], sizes = [1, 128], strides = [1, 1]} : vector<49x128xf32> to vector<1x128xf32>
    %252 = vector.shape_cast %251 : vector<1x128xf32> to vector<128xf32>
    %253 = vector.shape_cast %252 : vector<128xf32> to vector<1x1x128xf32>
    %254 = vector.broadcast %253 : vector<1x1x128xf32> to vector<16x16x128xf32>
    %255 = arith.mulf %250, %254 : vector<16x16x128xf32>
    %256 = arith.addf %249, %255 : vector<16x16x128xf32>
    %257 = vector.extract_strided_slice %215 {offsets = [6, 0, 0], sizes = [16, 16, 128], strides = [1, 1, 1]} : vector<22x16x128xf32> to vector<16x16x128xf32>
    %258 = vector.extract_strided_slice %2 {offsets = [46, 0], sizes = [1, 128], strides = [1, 1]} : vector<49x128xf32> to vector<1x128xf32>
    %259 = vector.shape_cast %258 : vector<1x128xf32> to vector<128xf32>
    %260 = vector.shape_cast %259 : vector<128xf32> to vector<1x1x128xf32>
    %261 = vector.broadcast %260 : vector<1x1x128xf32> to vector<16x16x128xf32>
    %262 = arith.mulf %257, %261 : vector<16x16x128xf32>
    %263 = arith.addf %256, %262 : vector<16x16x128xf32>
    %264 = arith.addf %212, %263 : vector<16x16x128xf32>
    %c0_14 = arith.constant 0 : index
    %265 = arith.index_cast %1 : i32 to index
    %c5 = arith.constant 5 : index
    %c0_15 = arith.constant 0 : index
    %266 = vector.load %arg2[%c0_14, %265, %c5, %c0_15] : memref<1x22x22x128xf32, #tpu.memory_space<vmem>>, vector<1x22x16x128xf32>
    %267 = vector.shape_cast %266 : vector<1x22x16x128xf32> to vector<22x16x128xf32>
    %268 = vector.extract_strided_slice %267 {offsets = [0, 0, 0], sizes = [16, 16, 128], strides = [1, 1, 1]} : vector<22x16x128xf32> to vector<16x16x128xf32>
    %269 = vector.extract_strided_slice %2 {offsets = [5, 0], sizes = [1, 128], strides = [1, 1]} : vector<49x128xf32> to vector<1x128xf32>
    %270 = vector.shape_cast %269 : vector<1x128xf32> to vector<128xf32>
    %271 = vector.shape_cast %270 : vector<128xf32> to vector<1x1x128xf32>
    %272 = vector.broadcast %271 : vector<1x1x128xf32> to vector<16x16x128xf32>
    %273 = arith.mulf %268, %272 : vector<16x16x128xf32>
    %274 = vector.extract_strided_slice %267 {offsets = [1, 0, 0], sizes = [16, 16, 128], strides = [1, 1, 1]} : vector<22x16x128xf32> to vector<16x16x128xf32>
    %275 = vector.extract_strided_slice %2 {offsets = [12, 0], sizes = [1, 128], strides = [1, 1]} : vector<49x128xf32> to vector<1x128xf32>
    %276 = vector.shape_cast %275 : vector<1x128xf32> to vector<128xf32>
    %277 = vector.shape_cast %276 : vector<128xf32> to vector<1x1x128xf32>
    %278 = vector.broadcast %277 : vector<1x1x128xf32> to vector<16x16x128xf32>
    %279 = arith.mulf %274, %278 : vector<16x16x128xf32>
    %280 = arith.addf %273, %279 : vector<16x16x128xf32>
    %281 = vector.extract_strided_slice %267 {offsets = [2, 0, 0], sizes = [16, 16, 128], strides = [1, 1, 1]} : vector<22x16x128xf32> to vector<16x16x128xf32>
    %282 = vector.extract_strided_slice %2 {offsets = [19, 0], sizes = [1, 128], strides = [1, 1]} : vector<49x128xf32> to vector<1x128xf32>
    %283 = vector.shape_cast %282 : vector<1x128xf32> to vector<128xf32>
    %284 = vector.shape_cast %283 : vector<128xf32> to vector<1x1x128xf32>
    %285 = vector.broadcast %284 : vector<1x1x128xf32> to vector<16x16x128xf32>
    %286 = arith.mulf %281, %285 : vector<16x16x128xf32>
    %287 = arith.addf %280, %286 : vector<16x16x128xf32>
    %288 = vector.extract_strided_slice %267 {offsets = [3, 0, 0], sizes = [16, 16, 128], strides = [1, 1, 1]} : vector<22x16x128xf32> to vector<16x16x128xf32>
    %289 = vector.extract_strided_slice %2 {offsets = [26, 0], sizes = [1, 128], strides = [1, 1]} : vector<49x128xf32> to vector<1x128xf32>
    %290 = vector.shape_cast %289 : vector<1x128xf32> to vector<128xf32>
    %291 = vector.shape_cast %290 : vector<128xf32> to vector<1x1x128xf32>
    %292 = vector.broadcast %291 : vector<1x1x128xf32> to vector<16x16x128xf32>
    %293 = arith.mulf %288, %292 : vector<16x16x128xf32>
    %294 = arith.addf %287, %293 : vector<16x16x128xf32>
    %295 = vector.extract_strided_slice %267 {offsets = [4, 0, 0], sizes = [16, 16, 128], strides = [1, 1, 1]} : vector<22x16x128xf32> to vector<16x16x128xf32>
    %296 = vector.extract_strided_slice %2 {offsets = [33, 0], sizes = [1, 128], strides = [1, 1]} : vector<49x128xf32> to vector<1x128xf32>
    %297 = vector.shape_cast %296 : vector<1x128xf32> to vector<128xf32>
    %298 = vector.shape_cast %297 : vector<128xf32> to vector<1x1x128xf32>
    %299 = vector.broadcast %298 : vector<1x1x128xf32> to vector<16x16x128xf32>
    %300 = arith.mulf %295, %299 : vector<16x16x128xf32>
    %301 = arith.addf %294, %300 : vector<16x16x128xf32>
    %302 = vector.extract_strided_slice %267 {offsets = [5, 0, 0], sizes = [16, 16, 128], strides = [1, 1, 1]} : vector<22x16x128xf32> to vector<16x16x128xf32>
    %303 = vector.extract_strided_slice %2 {offsets = [40, 0], sizes = [1, 128], strides = [1, 1]} : vector<49x128xf32> to vector<1x128xf32>
    %304 = vector.shape_cast %303 : vector<1x128xf32> to vector<128xf32>
    %305 = vector.shape_cast %304 : vector<128xf32> to vector<1x1x128xf32>
    %306 = vector.broadcast %305 : vector<1x1x128xf32> to vector<16x16x128xf32>
    %307 = arith.mulf %302, %306 : vector<16x16x128xf32>
    %308 = arith.addf %301, %307 : vector<16x16x128xf32>
    %309 = vector.extract_strided_slice %267 {offsets = [6, 0, 0], sizes = [16, 16, 128], strides = [1, 1, 1]} : vector<22x16x128xf32> to vector<16x16x128xf32>
    %310 = vector.extract_strided_slice %2 {offsets = [47, 0], sizes = [1, 128], strides = [1, 1]} : vector<49x128xf32> to vector<1x128xf32>
    %311 = vector.shape_cast %310 : vector<1x128xf32> to vector<128xf32>
    %312 = vector.shape_cast %311 : vector<128xf32> to vector<1x1x128xf32>
    %313 = vector.broadcast %312 : vector<1x1x128xf32> to vector<16x16x128xf32>
    %314 = arith.mulf %309, %313 : vector<16x16x128xf32>
    %315 = arith.addf %308, %314 : vector<16x16x128xf32>
    %316 = arith.addf %264, %315 : vector<16x16x128xf32>
    %c0_16 = arith.constant 0 : index
    %317 = arith.index_cast %1 : i32 to index
    %c6 = arith.constant 6 : index
    %c0_17 = arith.constant 0 : index
    %318 = vector.load %arg2[%c0_16, %317, %c6, %c0_17] : memref<1x22x22x128xf32, #tpu.memory_space<vmem>>, vector<1x22x16x128xf32>
    %319 = vector.shape_cast %318 : vector<1x22x16x128xf32> to vector<22x16x128xf32>
    %320 = vector.extract_strided_slice %319 {offsets = [0, 0, 0], sizes = [16, 16, 128], strides = [1, 1, 1]} : vector<22x16x128xf32> to vector<16x16x128xf32>
    %321 = vector.extract_strided_slice %2 {offsets = [6, 0], sizes = [1, 128], strides = [1, 1]} : vector<49x128xf32> to vector<1x128xf32>
    %322 = vector.shape_cast %321 : vector<1x128xf32> to vector<128xf32>
    %323 = vector.shape_cast %322 : vector<128xf32> to vector<1x1x128xf32>
    %324 = vector.broadcast %323 : vector<1x1x128xf32> to vector<16x16x128xf32>
    %325 = arith.mulf %320, %324 : vector<16x16x128xf32>
    %326 = vector.extract_strided_slice %319 {offsets = [1, 0, 0], sizes = [16, 16, 128], strides = [1, 1, 1]} : vector<22x16x128xf32> to vector<16x16x128xf32>
    %327 = vector.extract_strided_slice %2 {offsets = [13, 0], sizes = [1, 128], strides = [1, 1]} : vector<49x128xf32> to vector<1x128xf32>
    %328 = vector.shape_cast %327 : vector<1x128xf32> to vector<128xf32>
    %329 = vector.shape_cast %328 : vector<128xf32> to vector<1x1x128xf32>
    %330 = vector.broadcast %329 : vector<1x1x128xf32> to vector<16x16x128xf32>
    %331 = arith.mulf %326, %330 : vector<16x16x128xf32>
    %332 = arith.addf %325, %331 : vector<16x16x128xf32>
    %333 = vector.extract_strided_slice %319 {offsets = [2, 0, 0], sizes = [16, 16, 128], strides = [1, 1, 1]} : vector<22x16x128xf32> to vector<16x16x128xf32>
    %334 = vector.extract_strided_slice %2 {offsets = [20, 0], sizes = [1, 128], strides = [1, 1]} : vector<49x128xf32> to vector<1x128xf32>
    %335 = vector.shape_cast %334 : vector<1x128xf32> to vector<128xf32>
    %336 = vector.shape_cast %335 : vector<128xf32> to vector<1x1x128xf32>
    %337 = vector.broadcast %336 : vector<1x1x128xf32> to vector<16x16x128xf32>
    %338 = arith.mulf %333, %337 : vector<16x16x128xf32>
    %339 = arith.addf %332, %338 : vector<16x16x128xf32>
    %340 = vector.extract_strided_slice %319 {offsets = [3, 0, 0], sizes = [16, 16, 128], strides = [1, 1, 1]} : vector<22x16x128xf32> to vector<16x16x128xf32>
    %341 = vector.extract_strided_slice %2 {offsets = [27, 0], sizes = [1, 128], strides = [1, 1]} : vector<49x128xf32> to vector<1x128xf32>
    %342 = vector.shape_cast %341 : vector<1x128xf32> to vector<128xf32>
    %343 = vector.shape_cast %342 : vector<128xf32> to vector<1x1x128xf32>
    %344 = vector.broadcast %343 : vector<1x1x128xf32> to vector<16x16x128xf32>
    %345 = arith.mulf %340, %344 : vector<16x16x128xf32>
    %346 = arith.addf %339, %345 : vector<16x16x128xf32>
    %347 = vector.extract_strided_slice %319 {offsets = [4, 0, 0], sizes = [16, 16, 128], strides = [1, 1, 1]} : vector<22x16x128xf32> to vector<16x16x128xf32>
    %348 = vector.extract_strided_slice %2 {offsets = [34, 0], sizes = [1, 128], strides = [1, 1]} : vector<49x128xf32> to vector<1x128xf32>
    %349 = vector.shape_cast %348 : vector<1x128xf32> to vector<128xf32>
    %350 = vector.shape_cast %349 : vector<128xf32> to vector<1x1x128xf32>
    %351 = vector.broadcast %350 : vector<1x1x128xf32> to vector<16x16x128xf32>
    %352 = arith.mulf %347, %351 : vector<16x16x128xf32>
    %353 = arith.addf %346, %352 : vector<16x16x128xf32>
    %354 = vector.extract_strided_slice %319 {offsets = [5, 0, 0], sizes = [16, 16, 128], strides = [1, 1, 1]} : vector<22x16x128xf32> to vector<16x16x128xf32>
    %355 = vector.extract_strided_slice %2 {offsets = [41, 0], sizes = [1, 128], strides = [1, 1]} : vector<49x128xf32> to vector<1x128xf32>
    %356 = vector.shape_cast %355 : vector<1x128xf32> to vector<128xf32>
    %357 = vector.shape_cast %356 : vector<128xf32> to vector<1x1x128xf32>
    %358 = vector.broadcast %357 : vector<1x1x128xf32> to vector<16x16x128xf32>
    %359 = arith.mulf %354, %358 : vector<16x16x128xf32>
    %360 = arith.addf %353, %359 : vector<16x16x128xf32>
    %361 = vector.extract_strided_slice %319 {offsets = [6, 0, 0], sizes = [16, 16, 128], strides = [1, 1, 1]} : vector<22x16x128xf32> to vector<16x16x128xf32>
    %362 = vector.extract_strided_slice %2 {offsets = [48, 0], sizes = [1, 128], strides = [1, 1]} : vector<49x128xf32> to vector<1x128xf32>
    %363 = vector.shape_cast %362 : vector<1x128xf32> to vector<128xf32>
    %364 = vector.shape_cast %363 : vector<128xf32> to vector<1x1x128xf32>
    %365 = vector.broadcast %364 : vector<1x1x128xf32> to vector<16x16x128xf32>
    %366 = arith.mulf %361, %365 : vector<16x16x128xf32>
    %367 = arith.addf %360, %366 : vector<16x16x128xf32>
    %368 = arith.addf %316, %367 : vector<16x16x128xf32>
    %369 = vector.extract_strided_slice %3 {offsets = [0, 0], sizes = [1, 128], strides = [1, 1]} : vector<8x128xf32> to vector<1x128xf32>
    %370 = vector.shape_cast %369 : vector<1x128xf32> to vector<128xf32>
    %371 = vector.shape_cast %370 : vector<128xf32> to vector<1x1x128xf32>
    %372 = vector.broadcast %371 : vector<1x1x128xf32> to vector<16x16x128xf32>
    %373 = arith.addf %368, %372 : vector<16x16x128xf32>
    %cst_18 = arith.constant dense<0.000000e+00> : vector<16x16xf32>
    %374 = vector.multi_reduction <add>, %373, %cst_18 [2] : vector<16x16x128xf32> to vector<16x16xf32>
    %375 = vector.shape_cast %374 : vector<16x16xf32> to vector<16x16x1xf32>
    %376 = arith.mulf %373, %373 : vector<16x16x128xf32>
    %cst_19 = arith.constant dense<0.000000e+00> : vector<16x16xf32>
    %377 = vector.multi_reduction <add>, %376, %cst_19 [2] : vector<16x16x128xf32> to vector<16x16xf32>
    %378 = vector.shape_cast %377 : vector<16x16xf32> to vector<16x16x1xf32>
    %cst_20 = arith.constant 1.250000e-01 : f32
    %379 = vector.broadcast %cst_20 : f32 to vector<16x16x1xf32>
    %380 = arith.mulf %375, %379 : vector<16x16x1xf32>
    %381 = arith.mulf %375, %380 : vector<16x16x1xf32>
    %382 = arith.subf %378, %381 : vector<16x16x1xf32>
    %cst_21 = arith.constant 0.142857149 : f32
    %383 = vector.broadcast %cst_21 : f32 to vector<16x16x1xf32>
    %384 = arith.mulf %382, %383 : vector<16x16x1xf32>
    %cst_22 = arith.constant 0.000000e+00 : f32
    %385 = vector.broadcast %cst_22 : f32 to vector<16x16x1xf32>
    %386 = arith.maximumf %384, %385 : vector<16x16x1xf32>
    %387 = math.sqrt %386 : vector<16x16x1xf32>
    %cst_23 = arith.constant 9.99999997E-7 : f32
    %388 = vector.broadcast %cst_23 : f32 to vector<16x16x1xf32>
    %389 = arith.addf %387, %388 : vector<16x16x1xf32>
    %390 = tpu.reciprocal %389 {approx = true} : vector<16x16x1xf32> -> vector<16x16x1xf32>
    %391 = vector.extract_strided_slice %3 {offsets = [1, 0], sizes = [1, 128], strides = [1, 1]} : vector<8x128xf32> to vector<1x128xf32>
    %392 = vector.shape_cast %391 : vector<1x128xf32> to vector<128xf32>
    %393 = vector.broadcast %380 : vector<16x16x1xf32> to vector<16x16x128xf32>
    %394 = arith.subf %373, %393 : vector<16x16x128xf32>
    %395 = vector.broadcast %390 : vector<16x16x1xf32> to vector<16x16x128xf32>
    %396 = arith.mulf %394, %395 : vector<16x16x128xf32>
    %397 = vector.shape_cast %392 : vector<128xf32> to vector<1x1x128xf32>
    %398 = vector.broadcast %397 : vector<1x1x128xf32> to vector<16x16x128xf32>
    %399 = arith.mulf %398, %396 : vector<16x16x128xf32>
    %400 = vector.extract_strided_slice %3 {offsets = [2, 0], sizes = [1, 128], strides = [1, 1]} : vector<8x128xf32> to vector<1x128xf32>
    %401 = vector.shape_cast %400 : vector<1x128xf32> to vector<128xf32>
    %402 = vector.shape_cast %401 : vector<128xf32> to vector<1x1x128xf32>
    %403 = vector.broadcast %402 : vector<1x1x128xf32> to vector<16x16x128xf32>
    %404 = arith.addf %399, %403 : vector<16x16x128xf32>
    %405 = vector.shape_cast %404 : vector<16x16x128xf32> to vector<256x128xf32>
    %406 = arith.truncf %405 : vector<256x128xf32> to vector<256x128xbf16>
    %c0_24 = arith.constant 0 : index
    %c0_25 = arith.constant 0 : index
    %407 = vector.load %arg5[%c0_24, %c0_25] : memref<128x128xbf16, #tpu.memory_space<vmem>>, vector<128x128xbf16>
    %cst_26 = arith.constant dense<0.000000e+00> : vector<256x128xf32>
    %408 = tpu.matmul %406, %407, %cst_26 {dimension_numbers = #tpu.dot_dimension_numbers<[1], [0], [0], [1], [0, 0, 1, 1], [], []>} : vector<256x128xbf16>, vector<128x128xbf16>, vector<256x128xf32> -> vector<256x128xf32>
    %c0_27 = arith.constant 0 : index
    %c0_28 = arith.constant 0 : index
    %409 = vector.load %arg6[%c0_27, %c0_28] : memref<1x128xf32, #tpu.memory_space<vmem>>, vector<1x128xf32>
    %410 = vector.broadcast %409 : vector<1x128xf32> to vector<256x128xf32>
    %411 = arith.addf %408, %410 : vector<256x128xf32>
    %cst_29 = arith.constant 5.000000e-01 : f32
    %412 = vector.broadcast %cst_29 : f32 to vector<256x128xf32>
    %413 = arith.mulf %412, %411 : vector<256x128xf32>
    %414 = arith.mulf %411, %411 : vector<256x128xf32>
    %415 = arith.mulf %414, %411 : vector<256x128xf32>
    %cst_30 = arith.constant 4.471500e-02 : f32
    %416 = vector.broadcast %cst_30 : f32 to vector<256x128xf32>
    %417 = arith.mulf %416, %415 : vector<256x128xf32>
    %418 = arith.addf %411, %417 : vector<256x128xf32>
    %cst_31 = arith.constant 0.797884583 : f32
    %419 = vector.broadcast %cst_31 : f32 to vector<256x128xf32>
    %420 = arith.mulf %419, %418 : vector<256x128xf32>
    %421 = math.tanh %420 : vector<256x128xf32>
    %cst_32 = arith.constant 1.000000e+00 : f32
    %422 = vector.broadcast %cst_32 : f32 to vector<256x128xf32>
    %423 = arith.addf %422, %421 : vector<256x128xf32>
    %424 = arith.mulf %413, %423 : vector<256x128xf32>
    %425 = arith.truncf %424 : vector<256x128xf32> to vector<256x128xbf16>
    %c0_33 = arith.constant 0 : index
    %c0_34 = arith.constant 0 : index
    %426 = vector.load %arg7[%c0_33, %c0_34] : memref<128x128xbf16, #tpu.memory_space<vmem>>, vector<128x128xbf16>
    %cst_35 = arith.constant dense<0.000000e+00> : vector<256x128xf32>
    %427 = tpu.matmul %425, %426, %cst_35 {dimension_numbers = #tpu.dot_dimension_numbers<[1], [0], [0], [1], [0, 0, 1, 1], [], []>} : vector<256x128xbf16>, vector<128x128xbf16>, vector<256x128xf32> -> vector<256x128xf32>
    %428 = vector.extract_strided_slice %3 {offsets = [4, 0], sizes = [1, 128], strides = [1, 1]} : vector<8x128xf32> to vector<1x128xf32>
    %429 = vector.shape_cast %428 : vector<1x128xf32> to vector<128xf32>
    %430 = vector.shape_cast %429 : vector<128xf32> to vector<1x128xf32>
    %431 = vector.broadcast %430 : vector<1x128xf32> to vector<256x128xf32>
    %432 = arith.addf %427, %431 : vector<256x128xf32>
    %433 = vector.shape_cast %432 : vector<256x128xf32> to vector<16x16x128xf32>
    %c3_i32 = arith.constant 3 : i32
    %434 = arith.addi %1, %c3_i32 : i32
    %c0_36 = arith.constant 0 : index
    %435 = arith.index_cast %434 : i32 to index
    %c3_37 = arith.constant 3 : index
    %c0_38 = arith.constant 0 : index
    %436 = vector.load %arg2[%c0_36, %435, %c3_37, %c0_38] : memref<1x22x22x128xf32, #tpu.memory_space<vmem>>, vector<1x16x16x128xf32>
    %437 = vector.shape_cast %436 : vector<1x16x16x128xf32> to vector<16x16x128xf32>
    %438 = vector.extract_strided_slice %3 {offsets = [3, 0], sizes = [1, 128], strides = [1, 1]} : vector<8x128xf32> to vector<1x128xf32>
    %439 = vector.shape_cast %438 : vector<1x128xf32> to vector<128xf32>
    %440 = vector.shape_cast %439 : vector<128xf32> to vector<1x1x128xf32>
    %441 = vector.broadcast %440 : vector<1x1x128xf32> to vector<16x16x128xf32>
    %442 = arith.mulf %433, %441 : vector<16x16x128xf32>
    %443 = arith.addf %442, %437 : vector<16x16x128xf32>
    %c0_39 = arith.constant 0 : index
    %c0_40 = arith.constant 0 : index
    %c0_41 = arith.constant 0 : index
    %c0_42 = arith.constant 0 : index
    %444 = vector.load %arg8[%c0_39, %c0_40, %c0_41, %c0_42] : memref<1x16x16x128xf32, #tpu.memory_space<vmem>>, vector<1x16x16x128xf32>
    %445 = vector.shape_cast %444 : vector<1x16x16x128xf32> to vector<16x16x128xf32>
    %446 = vector.shape_cast %443 : vector<16x16x128xf32> to vector<1x16x16x128xf32>
    tpu.vector_store %arg8[%c0_39, %c0_40, %c0_41, %c0_42], %446 {strides = array<i32>} : memref<1x16x16x128xf32, #tpu.memory_space<vmem>>, vector<1x16x16x128xf32>,
    return
  }
  func.func @transform_0(%arg0: i32, %arg1: i32) -> (i32, i32, i32, i32) {
    %c0_i32 = arith.constant 0 : i32
    %c0_i32_0 = arith.constant 0 : i32
    %c0_i32_1 = arith.constant 0 : i32
    %c0_i32_2 = arith.constant 0 : i32
    return %arg0, %c0_i32, %c0_i32_0, %c0_i32_1 : i32, i32, i32, i32
  }
  func.func @transform_1(%arg0: i32, %arg1: i32) -> (i32, i32) {
    %c0_i32 = arith.constant 0 : i32
    %c0_i32_0 = arith.constant 0 : i32
    %c0_i32_1 = arith.constant 0 : i32
    return %c0_i32, %c0_i32_0 : i32, i32
  }
  func.func @transform_2(%arg0: i32, %arg1: i32) -> (i32, i32) {
    %c0_i32 = arith.constant 0 : i32
    %c0_i32_0 = arith.constant 0 : i32
    %c0_i32_1 = arith.constant 0 : i32
    return %c0_i32, %c0_i32_0 : i32, i32
  }
  func.func @transform_3(%arg0: i32, %arg1: i32) -> (i32, i32) {
    %c0_i32 = arith.constant 0 : i32
    %c0_i32_0 = arith.constant 0 : i32
    %c0_i32_1 = arith.constant 0 : i32
    return %c0_i32, %c0_i32_0 : i32, i32
  }
  func.func @transform_4(%arg0: i32, %arg1: i32) -> (i32, i32) {
    %c0_i32 = arith.constant 0 : i32
    %c0_i32_0 = arith.constant 0 : i32
    %c0_i32_1 = arith.constant 0 : i32
    return %c0_i32, %c0_i32_0 : i32, i32
  }
  func.func @transform_5(%arg0: i32, %arg1: i32) -> (i32, i32) {
    %c0_i32 = arith.constant 0 : i32
    %c0_i32_0 = arith.constant 0 : i32
    %c0_i32_1 = arith.constant 0 : i32
    return %c0_i32, %c0_i32_0 : i32, i32
  }
  func.func @transform_6(%arg0: i32, %arg1: i32) -> (i32, i32, i32, i32) {
    %c0_i32 = arith.constant 0 : i32
    %c0_i32_0 = arith.constant 0 : i32
    %c0_i32_1 = arith.constant 0 : i32
    return %arg0, %arg1, %c0_i32, %c0_i32_0 : i32, i32, i32, i32
  }
}

</mosaic_0001>

<llo_original>
// kernel: convnext_block.1
$region0: #{convnext_block.1}
  #allocation0 [shape = 'u32[]', space=smem, size = 0x4, offset = 0x4, fixed_abs, tag = 'smem constant byte address 0x4 - core index']
  #allocation1 [shape = 'u32[144,128]{1,0:T(1,128)}', space=vmem, size = 0x12000, scoped, tag = 'internal scratch']
  %s0 = inlined_call_operand.vmem [shape: f32[2,22,22,128], index: 0, kind: input, shape index: {}]
  %s1 = inlined_call_operand.vmem [shape: f32[49,128], index: 1, kind: input, shape index: {}]
  %s2 = inlined_call_operand.vmem [shape: f32[8,128], index: 2, kind: input, shape index: {}]
  %s3 = inlined_call_operand.vmem [shape: bf16[128,128], index: 3, kind: input, shape index: {}]
  %s4 = inlined_call_operand.vmem [shape: f32[1,128], index: 4, kind: input, shape index: {}]
  %s5 = inlined_call_operand.vmem [shape: bf16[128,128], index: 5, kind: input, shape index: {}]
  %s6 = inlined_call_operand.vmem [shape: f32[2,16,16,128], index: 6, kind: output, shape index: {}]
  %s7 = sld [smem:[#allocation0]]
  $region57: #{convnext_block.1} parent=0
    _
  %s9 = ssub.s32 1, %s7
  %s10 = scalar_select 0, %s9, %s7
  loop: start=0, step=1, limit=4
  $region2: #{convnext_block.1} parent=0 // loop_pre_header
    _
  $region3: #{convnext_block.1} parent=0 // loop_header
    %s12 = sphi 0, %s16
    %p13 = scmp.ge.s32.totalorder %s12, 4
    %s19 = sphi 0, %s31
    %s20 = sphi 0, %s27
    %s21 = sphi 0, %s19
    %s22 = sphi 0, %s20
    %s23 = sphi 0, %s21
    %s24 = sphi 0, %s22
    %s34 = sphi 0, %s36
    %s37 = sphi 0, %s34
    %s38 = sphi 0, %s37
    %s54 = sphi 0, %s38
    %s58 = sphi 0, %s58
    %s60 = sphi 0, %s58
    %s61 = sphi 0, %s60
    %s75 = sphi 0, %s61
    %s79 = sphi 0, %s79
    %s81 = sphi 0, %s79
    %s82 = sphi 0, %s81
    %s96 = sphi 0, %s82
    %s100 = sphi 0, %s100
    %s102 = sphi 0, %s100
    %s103 = sphi 0, %s102
    %s117 = sphi 0, %s103
    %s121 = sphi 0, %s121
    %s123 = sphi 0, %s121
    %s124 = sphi 0, %s123
    %s138 = sphi 0, %s124
    %s142 = sphi 0, %s142
    %s144 = sphi 0, %s142
    %s145 = sphi 0, %s144
    %s159 = sphi 0, %s145
    %s167 = sphi 0, %s169
    %s170 = sphi 0, %s167
    %s171 = sphi 0, %s170
    %s187 = sphi 0, %s171
  $region4: #{convnext_block.1} parent=0 // loop_header_branch
    %15 = sbr.rel (%p13) target = $region8
  $region5: #{convnext_block.1} parent=0 // loop_body
    %s17 = ssub.s32 %s12, 1
    %s18 = ssub.s32 %s12, 2
    %s25 = sadd.s32 1, %s20
    %p26 = scmp.ge.s32.totalorder %s25, 1
    %s27 = scalar_select %p26, 0, %s25
    %s28 = sadd.s32 1, %s19
    %s29 = scalar_select %p26, %s28, %s19
    %p30 = scmp.ge.s32.totalorder %s29, 2
    %s31 = scalar_select %p30, 0, %s29
    %s32 = ssub.s32 %s19, %s31
    %p33 = scmp.eq.s32.totalorder %s32, 0
    %s35 = sadd.s32 %s34, 1
    %s36 = scalar_select %p33, %s34, %s35
    %p39 = pneg %p33
    %p40 = scmp.eq.s32.totalorder %s12, 1
    %p41 = por %p39, %p40
    %p42 = scmp.ne.s32.totalorder %s34, %s37
    %p43 = scmp.eq.s32.totalorder %s12, 0
    %p44 = por %p42, %p43
    %p45 = scmp.ne.s32.totalorder %s34, %s37
    %p46 = scmp.eq.s32.totalorder %s17, 1
    %p47 = por %p45, %p46
    %p48 = scmp.ne.s32.totalorder %s37, %s38
    %p49 = scmp.eq.s32.totalorder %s17, 0
    %p50 = por %p48, %p49
    %p51 = scmp.ne.s32.totalorder %s37, %s38
    %p52 = scmp.eq.s32.totalorder %s18, 1
    %p53 = por %p51, %p52
    %p55 = scmp.ne.s32.totalorder %s38, %s54
    %p56 = scmp.eq.s32.totalorder %s18, 0
    %p57 = por %p55, %p56
    %s59 = sadd.s32 %s58, 1
    %p62 = scmp.eq.s32.totalorder %s12, 1
    %p63 = scmp.ne.s32.totalorder %s58, %s60
    %p64 = scmp.eq.s32.totalorder %s12, 0
    %p65 = por %p63, %p64
    %p66 = scmp.ne.s32.totalorder %s58, %s60
    %p67 = scmp.eq.s32.totalorder %s17, 1
    %p68 = por %p66, %p67
    %p69 = scmp.ne.s32.totalorder %s60, %s61
    %p70 = scmp.eq.s32.totalorder %s17, 0
    %p71 = por %p69, %p70
    %p72 = scmp.ne.s32.totalorder %s60, %s61
    %p73 = scmp.eq.s32.totalorder %s18, 1
    %p74 = por %p72, %p73
    %p76 = scmp.ne.s32.totalorder %s61, %s75
    %p77 = scmp.eq.s32.totalorder %s18, 0
    %p78 = por %p76, %p77
    %s80 = sadd.s32 %s79, 1
    %p83 = scmp.eq.s32.totalorder %s12, 1
    %p84 = scmp.ne.s32.totalorder %s79, %s81
    %p85 = scmp.eq.s32.totalorder %s12, 0
    %p86 = por %p84, %p85
    %p87 = scmp.ne.s32.totalorder %s79, %s81
    %p88 = scmp.eq.s32.totalorder %s17, 1
    %p89 = por %p87, %p88
    %p90 = scmp.ne.s32.totalorder %s81, %s82
    %p91 = scmp.eq.s32.totalorder %s17, 0
    %p92 = por %p90, %p91
    %p93 = scmp.ne.s32.totalorder %s81, %s82
    %p94 = scmp.eq.s32.totalorder %s18, 1
    %p95 = por %p93, %p94
    %p97 = scmp.ne.s32.totalorder %s82, %s96
    %p98 = scmp.eq.s32.totalorder %s18, 0
    %p99 = por %p97, %p98
    %s101 = sadd.s32 %s100, 1
    %p104 = scmp.eq.s32.totalorder %s12, 1
    %p105 = scmp.ne.s32.totalorder %s100, %s102
    %p106 = scmp.eq.s32.totalorder %s12, 0
    %p107 = por %p105, %p106
    %p108 = scmp.ne.s32.totalorder %s100, %s102
    %p109 = scmp.eq.s32.totalorder %s17, 1
    %p110 = por %p108, %p109
    %p111 = scmp.ne.s32.totalorder %s102, %s103
    %p112 = scmp.eq.s32.totalorder %s17, 0
    %p113 = por %p111, %p112
    %p114 = scmp.ne.s32.totalorder %s102, %s103
    %p115 = scmp.eq.s32.totalorder %s18, 1
    %p116 = por %p114, %p115
    %p118 = scmp.ne.s32.totalorder %s103, %s117
    %p119 = scmp.eq.s32.totalorder %s18, 0
    %p120 = por %p118, %p119
    %s122 = sadd.s32 %s121, 1
    %p125 = scmp.eq.s32.totalorder %s12, 1
    %p126 = scmp.ne.s32.totalorder %s121, %s123
    %p127 = scmp.eq.s32.totalorder %s12, 0
    %p128 = por %p126, %p127
    %p129 = scmp.ne.s32.totalorder %s121, %s123
    %p130 = scmp.eq.s32.totalorder %s17, 1
    %p131 = por %p129, %p130
    %p132 = scmp.ne.s32.totalorder %s123, %s124
    %p133 = scmp.eq.s32.totalorder %s17, 0
    %p134 = por %p132, %p133
    %p135 = scmp.ne.s32.totalorder %s123, %s124
    %p136 = scmp.eq.s32.totalorder %s18, 1
    %p137 = por %p135, %p136
    %p139 = scmp.ne.s32.totalorder %s124, %s138
    %p140 = scmp.eq.s32.totalorder %s18, 0
    %p141 = por %p139, %p140
    %s143 = sadd.s32 %s142, 1
    %p146 = scmp.eq.s32.totalorder %s12, 1
    %p147 = scmp.ne.s32.totalorder %s142, %s144
    %p148 = scmp.eq.s32.totalorder %s12, 0
    %p149 = por %p147, %p148
    %p150 = scmp.ne.s32.totalorder %s142, %s144
    %p151 = scmp.eq.s32.totalorder %s17, 1
    %p152 = por %p150, %p151
    %p153 = scmp.ne.s32.totalorder %s144, %s145
    %p154 = scmp.eq.s32.totalorder %s17, 0
    %p155 = por %p153, %p154
    %p156 = scmp.ne.s32.totalorder %s144, %s145
    %p157 = scmp.eq.s32.totalorder %s18, 1
    %p158 = por %p156, %p157
    %p160 = scmp.ne.s32.totalorder %s145, %s159
    %p161 = scmp.eq.s32.totalorder %s18, 0
    %p162 = por %p160, %p161
    %s163 = ssub.s32 %s19, %s31
    %s164 = ssub.s32 %s20, %s27
    %s165 = sor.u32 %s163, %s164
    %p166 = scmp.eq.s32.totalorder %s165, 0
    %s168 = sadd.s32 %s167, 1
    %s169 = scalar_select %p166, %s167, %s168
    %p172 = pneg %p166
    %p173 = scmp.eq.s32.totalorder %s12, 1
    %p174 = por %p172, %p173
    %p175 = scmp.ne.s32.totalorder %s167, %s170
    %p176 = scmp.eq.s32.totalorder %s12, 0
    %p177 = por %p175, %p176
    %p178 = scmp.ne.s32.totalorder %s167, %s170
    %p179 = scmp.eq.s32.totalorder %s17, 1
    %p180 = por %p178, %p179
    %p181 = scmp.ne.s32.totalorder %s170, %s171
    %p182 = scmp.eq.s32.totalorder %s17, 0
    %p183 = por %p181, %p182
    %p184 = scmp.ne.s32.totalorder %s170, %s171
    %p185 = scmp.eq.s32.totalorder %s18, 1
    %p186 = por %p184, %p185
    %p188 = scmp.ne.s32.totalorder %s171, %s187
    %p189 = scmp.eq.s32.totalorder %s18, 0
    %p190 = por %p188, %p189
    %p191 = scmp.le.s32.totalorder 1, %s12
    %p192 = scmp.lt.s32.totalorder %s12, 3
    %p193 = pnand %p191, %p192
    %p194 = pneg %p193
    // Predicated region
    $region9: #{convnext_block.1} parent=5 // pred_check
      _
    $region10: #{convnext_block.1} parent=5 // pred_check_branch
      %196 = sbr.rel (%p193) target = $region12
    $region11: #{convnext_block.1} parent=5 // pred_region
      %s197 = ssub.s32 %s12, 1
      // Predicated region
      $region13: #{convnext_block.1} parent=11 // pred_check
        %p198 = pneg %p71
      $region14: #{convnext_block.1} parent=11 // pred_check_branch
        %200 = sbr.rel (%p198) target = $region16
      $region15: #{convnext_block.1} parent=11 // pred_region
        _
      $region16: #{convnext_block.1} parent=11 // pred_fallthru
        _
      // Predicated region
      $region17: #{convnext_block.1} parent=11 // pred_check
        %p201 = pneg %p92
      $region18: #{convnext_block.1} parent=11 // pred_check_branch
        %203 = sbr.rel (%p201) target = $region20
      $region19: #{convnext_block.1} parent=11 // pred_region
        _
      $region20: #{convnext_block.1} parent=11 // pred_fallthru
        _
      // Predicated region
      $region21: #{convnext_block.1} parent=11 // pred_check
        %p204 = pneg %p113
      $region22: #{convnext_block.1} parent=11 // pred_check_branch
        %206 = sbr.rel (%p204) target = $region24
      $region23: #{convnext_block.1} parent=11 // pred_region
        _
      $region24: #{convnext_block.1} parent=11 // pred_fallthru
        _
      // Predicated region
      $region25: #{convnext_block.1} parent=11 // pred_check
        %p207 = pneg %p134
      $region26: #{convnext_block.1} parent=11 // pred_check_branch
        %209 = sbr.rel (%p207) target = $region28
      $region27: #{convnext_block.1} parent=11 // pred_region
        _
      $region28: #{convnext_block.1} parent=11 // pred_fallthru
        _
      // Predicated region
      $region29: #{convnext_block.1} parent=11 // pred_check
        %p210 = pneg %p155
      $region30: #{convnext_block.1} parent=11 // pred_check_branch
        %212 = sbr.rel (%p210) target = $region32
      $region31: #{convnext_block.1} parent=11 // pred_region
        _
      $region32: #{convnext_block.1} parent=11 // pred_fallthru
        _
    $region12: #{convnext_block.1} parent=5 // pred_fallthru
      _
    %p213 = scmp.lt.s32.totalorder %s12, 2
    // Predicated region
    $region33: #{convnext_block.1} parent=5 // pred_check
      %p214 = pneg %p213
    $region34: #{convnext_block.1} parent=5 // pred_check_branch
      %216 = sbr.rel (%p214) target = $region36
    $region35: #{convnext_block.1} parent=5 // pred_region
      // Predicated region
      $region37: #{convnext_block.1} parent=35 // pred_check
        %p217 = pneg %p44
      $region38: #{convnext_block.1} parent=35 // pred_check_branch
        %219 = sbr.rel (%p217) target = $region40
      $region39: #{convnext_block.1} parent=35 // pred_region
        %p220 = scmp.lt.s32.totalorder %s19, 1
        %s221 = scalar_select %p220, %s19, 1
        %s222 = smul.addr %s221, 66
        %s223 = smul.addr %s222, 8
        %s224 = scalar_lea.vmem %s0, %s223
      $region40: #{convnext_block.1} parent=35 // pred_fallthru
        _
    $region36: #{convnext_block.1} parent=5 // pred_fallthru
      _
    %p225 = scmp.le.s32.totalorder 1, %s12
    %p226 = scmp.lt.s32.totalorder %s12, 3
    %p227 = pnand %p225, %p226
    %p228 = pneg %p227
    // Predicated region
    $region41: #{convnext_block.1} parent=5 // pred_check
      _
    $region42: #{convnext_block.1} parent=5 // pred_check_branch
      %230 = sbr.rel (%p227) target = $region44
    $region43: #{convnext_block.1} parent=5 // pred_region
      %s231 = ssub.s32 %s12, 1
      %p232 = scmp.lt.s32.totalorder %s21, 1
      %s233 = scalar_select %p232, %s21, 1
      %s234 = smul.addr %s233, 66
      %s235 = smul.addr %s234, 8
      %s236 = scalar_lea.vmem %s0, %s235
      %p237 = pneg %p50
      %p238 = pneg %p47
      %p239 = pneg %p71
      %p240 = pneg %p68
      %p241 = pneg %p92
      %p242 = pneg %p89
      %p243 = pneg %p113
      %p244 = pneg %p110
      %p245 = pneg %p134
      %p246 = pneg %p131
      %p247 = pneg %p155
      %p248 = pneg %p152
      %p249 = pneg %p183
      %p250 = pneg %p180
      %s251 = smul.u32 16, %s22
      %p252 = scmp.lt.s32.totalorder %s21, 1
      %s253 = scalar_select %p252, %s21, 1
      %p254 = scmp.lt.s32.totalorder %s251, 15
      %s255 = scalar_select %p254, %s251, 15
      %s256 = smul.addr %s255, 2
      %s257 = smul.addr %s253, 32
      %s258 = sadd.s32 %s256, %s257
      %s259 = smul.addr %s258, 8
      %s260 = scalar_lea.vmem %s6, %s259
      %p261 = scmp.lt.s32.totalorder %s21, 1
      %s262 = scalar_select %p261, %s21, 1
      %s263 = smul.addr %s262, 66
      %s264 = smul.addr %s263, 8
      %s265 = scalar_lea.vmem %s0, %s264
      %s266 = smul.u32 16, %s22
      %p267 = scmp.lt.s32.totalorder %s21, 1
      %s268 = scalar_select %p267, %s21, 1
      %p269 = scmp.lt.s32.totalorder %s266, 15
      %s270 = scalar_select %p269, %s266, 15
      %s271 = smul.addr %s270, 2
      %s272 = smul.addr %s268, 32
      %s273 = sadd.s32 %s271, %s272
      %s274 = smul.addr %s273, 8
      %s275 = scalar_lea.vmem %s6, %s274
      %s276 = smul.u32 16, %s22
      %s278 = smul.u32 %s22, 16
      %v279 = vld [vmem:[%s1] sm:$0xff]
      %v280 = vld [vmem:[%s1 + $0x8] sm:$0xff]
      %v281 = vld [vmem:[%s1 + $0x10] sm:$0xff]
      %v282 = vld [vmem:[%s1 + $0x18] sm:$0xff]
      %v283 = vld [vmem:[%s1 + $0x20] sm:$0xff]
      %v284 = vld [vmem:[%s1 + $0x28] sm:$0xff]
      %v285 = vld [vmem:[%s1 + $0x30] sm:$0x1]
      %v286 = vld [vmem:[%s2] sm:$0xff]
      %s287 = smul.u32 %s278, 24
      %s288 = scalar_lea.vmem %s265, %s287
      %v289 = vld [vmem:[%s288] sm:$0xff]
      %v290 = vld [vmem:[%s288 + $0x8] sm:$0xff]
      %v291 = vld [vmem:[%s288 + $0x18] sm:$0xff]
      %v292 = vld [vmem:[%s288 + $0x20] sm:$0xff]
      %v293 = vld [vmem:[%s288 + $0x30] sm:$0xff]
      %v294 = vld [vmem:[%s288 + $0x38] sm:$0xff]
      %v295 = vld [vmem:[%s288 + $0x48] sm:$0xff]
      %v296 = vld [vmem:[%s288 + $0x50] sm:$0xff]
      %v297 = vld [vmem:[%s288 + $0x60] sm:$0xff]
      %v298 = vld [vmem:[%s288 + $0x68] sm:$0xff]
      %v299 = vld [vmem:[%s288 + $0x78] sm:$0xff]
      %v300 = vld [vmem:[%s288 + $0x80] sm:$0xff]
      %v301 = vld [vmem:[%s288 + $0x90] sm:$0xff]
      %v302 = vld [vmem:[%s288 + $0x98] sm:$0xff]
      %v303 = vld [vmem:[%s288 + $0xa8] sm:$0xff]
      %v304 = vld [vmem:[%s288 + $0xb0] sm:$0xff]
      %v305 = vld [vmem:[%s288 + $0xc0] sm:$0xff]
      %v306 = vld [vmem:[%s288 + $0xc8] sm:$0xff]
      %v307 = vld [vmem:[%s288 + $0xd8] sm:$0xff]
      %v308 = vld [vmem:[%s288 + $0xe0] sm:$0xff]
      %v309 = vld [vmem:[%s288 + $0xf0] sm:$0xff]
      %v310 = vld [vmem:[%s288 + $0xf8] sm:$0xff]
      %v311 = vld [vmem:[%s288 + $0x108] sm:$0xff]
      %v312 = vld [vmem:[%s288 + $0x110] sm:$0xff]
      %v313 = vld [vmem:[%s288 + $0x120] sm:$0xff]
      %v314 = vld [vmem:[%s288 + $0x128] sm:$0xff]
      %v315 = vld [vmem:[%s288 + $0x138] sm:$0xff]
      %v316 = vld [vmem:[%s288 + $0x140] sm:$0xff]
      %v317 = vld [vmem:[%s288 + $0x150] sm:$0xff]
      %v318 = vld [vmem:[%s288 + $0x158] sm:$0xff]
      %v319 = vld [vmem:[%s288 + $0x168] sm:$0xff]
      %v320 = vld [vmem:[%s288 + $0x170] sm:$0xff]
      %v321 = vld [vmem:[%s288 + $0x180] sm:$0xff]
      %v322 = vld [vmem:[%s288 + $0x188] sm:$0xff]
      %v323 = vld [vmem:[%s288 + $0x198] sm:$0xff]
      %v324 = vld [vmem:[%s288 + $0x1a0] sm:$0xff]
      %v325 = vld [vmem:[%s288 + $0x1b0] sm:$0xff]
      %v326 = vld [vmem:[%s288 + $0x1b8] sm:$0xff]
      %v327 = vld [vmem:[%s288 + $0x1c8] sm:$0xff]
      %v328 = vld [vmem:[%s288 + $0x1d0] sm:$0xff]
      %v329 = vld [vmem:[%s288 + $0x1e0] sm:$0xff]
      %v330 = vld [vmem:[%s288 + $0x1e8] sm:$0xff]
      %v331 = vld [vmem:[%s288 + $0x1f8] sm:$0xff]
      %v332 = vld [vmem:[%s288 + $0x200] sm:$0xff]
      %v333 = vlaneseq
      %v334 = vshrl.u32 %v333, 7
      %v335 = vsub.s32 0, %v334
      %v336 = vrot.slane %v279, %v335
      %v337 = vmul.f32 %v289, %v336
      %v338 = vmul.f32 %v290, %v336
      %v339 = vmul.f32 %v291, %v336
      %v340 = vmul.f32 %v292, %v336
      %v341 = vmul.f32 %v293, %v336
      %v342 = vmul.f32 %v294, %v336
      %v343 = vmul.f32 %v295, %v336
      %v344 = vmul.f32 %v296, %v336
      %v345 = vmul.f32 %v297, %v336
      %v346 = vmul.f32 %v298, %v336
      %v347 = vmul.f32 %v299, %v336
      %v348 = vmul.f32 %v300, %v336
      %v349 = vmul.f32 %v301, %v336
      %v350 = vmul.f32 %v302, %v336
      %v351 = vmul.f32 %v303, %v336
      %v352 = vmul.f32 %v304, %v336
      %v353 = vmul.f32 %v305, %v336
      %v354 = vmul.f32 %v306, %v336
      %v355 = vmul.f32 %v307, %v336
      %v356 = vmul.f32 %v308, %v336
      %v357 = vmul.f32 %v309, %v336
      %v358 = vmul.f32 %v310, %v336
      %v359 = vmul.f32 %v311, %v336
      %v360 = vmul.f32 %v312, %v336
      %v361 = vmul.f32 %v313, %v336
      %v362 = vmul.f32 %v314, %v336
      %v363 = vmul.f32 %v315, %v336
      %v364 = vmul.f32 %v316, %v336
      %v365 = vmul.f32 %v317, %v336
      %v366 = vmul.f32 %v318, %v336
      %v367 = vmul.f32 %v319, %v336
      %v368 = vmul.f32 %v320, %v336
      %v369 = vlaneseq
      %v370 = vshrl.u32 %v369, 7
      %v371 = vsub.s32 7, %v370
      %v372 = vrot.slane %v279, %v371
      %v373 = vmul.f32 %v291, %v372
      %v374 = vmul.f32 %v292, %v372
      %v375 = vmul.f32 %v293, %v372
      %v376 = vmul.f32 %v294, %v372
      %v377 = vmul.f32 %v295, %v372
      %v378 = vmul.f32 %v296, %v372
      %v379 = vmul.f32 %v297, %v372
      %v380 = vmul.f32 %v298, %v372
      %v381 = vmul.f32 %v299, %v372
      %v382 = vmul.f32 %v300, %v372
      %v383 = vmul.f32 %v301, %v372
      %v384 = vmul.f32 %v302, %v372
      %v385 = vmul.f32 %v303, %v372
      %v386 = vmul.f32 %v304, %v372
      %v387 = vmul.f32 %v305, %v372
      %v388 = vmul.f32 %v306, %v372
      %v389 = vmul.f32 %v307, %v372
      %v390 = vmul.f32 %v308, %v372
      %v391 = vmul.f32 %v309, %v372
      %v392 = vmul.f32 %v310, %v372
      %v393 = vmul.f32 %v311, %v372
      %v394 = vmul.f32 %v312, %v372
      %v395 = vmul.f32 %v313, %v372
      %v396 = vmul.f32 %v314, %v372
      %v397 = vmul.f32 %v315, %v372
      %v398 = vmul.f32 %v316, %v372
      %v399 = vmul.f32 %v317, %v372
      %v400 = vmul.f32 %v318, %v372
      %v401 = vmul.f32 %v319, %v372
      %v402 = vmul.f32 %v320, %v372
      %v403 = vmul.f32 %v321, %v372
      %v404 = vmul.f32 %v322, %v372
      %v405 = vadd.f32 %v337, %v373
      %v406 = vadd.f32 %v338, %v374
      %v407 = vadd.f32 %v339, %v375
      %v408 = vadd.f32 %v340, %v376
      %v409 = vadd.f32 %v341, %v377
      %v410 = vadd.f32 %v342, %v378
      %v411 = vadd.f32 %v343, %v379
      %v412 = vadd.f32 %v344, %v380
      %v413 = vadd.f32 %v345, %v381
      %v414 = vadd.f32 %v346, %v382
      %v415 = vadd.f32 %v347, %v383
      %v416 = vadd.f32 %v348, %v384
      %v417 = vadd.f32 %v349, %v385
      %v418 = vadd.f32 %v350, %v386
      %v419 = vadd.f32 %v351, %v387
      %v420 = vadd.f32 %v352, %v388
      %v421 = vadd.f32 %v353, %v389
      %v422 = vadd.f32 %v354, %v390
      %v423 = vadd.f32 %v355, %v391
      %v424 = vadd.f32 %v356, %v392
      %v425 = vadd.f32 %v357, %v393
      %v426 = vadd.f32 %v358, %v394
      %v427 = vadd.f32 %v359, %v395
      %v428 = vadd.f32 %v360, %v396
      %v429 = vadd.f32 %v361, %v397
      %v430 = vadd.f32 %v362, %v398
      %v431 = vadd.f32 %v363, %v399
      %v432 = vadd.f32 %v364, %v400
      %v433 = vadd.f32 %v365, %v401
      %v434 = vadd.f32 %v366, %v402
      %v435 = vadd.f32 %v367, %v403
      %v436 = vadd.f32 %v368, %v404
      %v437 = vlaneseq
      %v438 = vshrl.u32 %v437, 7
      %v439 = vsub.s32 6, %v438
      %v440 = vrot.slane %v280, %v439
      %v441 = vmul.f32 %v293, %v440
      %v442 = vmul.f32 %v294, %v440
      %v443 = vmul.f32 %v295, %v440
      %v444 = vmul.f32 %v296, %v440
      %v445 = vmul.f32 %v297, %v440
      %v446 = vmul.f32 %v298, %v440
      %v447 = vmul.f32 %v299, %v440
      %v448 = vmul.f32 %v300, %v440
      %v449 = vmul.f32 %v301, %v440
      %v450 = vmul.f32 %v302, %v440
      %v451 = vmul.f32 %v303, %v440
      %v452 = vmul.f32 %v304, %v440
      %v453 = vmul.f32 %v305, %v440
      %v454 = vmul.f32 %v306, %v440
      %v455 = vmul.f32 %v307, %v440
      %v456 = vmul.f32 %v308, %v440
      %v457 = vmul.f32 %v309, %v440
      %v458 = vmul.f32 %v310, %v440
      %v459 = vmul.f32 %v311, %v440
      %v460 = vmul.f32 %v312, %v440
      %v461 = vmul.f32 %v313, %v440
      %v462 = vmul.f32 %v314, %v440
      %v463 = vmul.f32 %v315, %v440
      %v464 = vmul.f32 %v316, %v440
      %v465 = vmul.f32 %v317, %v440
      %v466 = vmul.f32 %v318, %v440
      %v467 = vmul.f32 %v319, %v440
      %v468 = vmul.f32 %v320, %v440
      %v469 = vmul.f32 %v321, %v440
      %v470 = vmul.f32 %v322, %v440
      %v471 = vmul.f32 %v323, %v440
      %v472 = vmul.f32 %v324, %v440
      %v473 = vadd.f32 %v405, %v441
      %v474 = vadd.f32 %v406, %v442
      %v475 = vadd.f32 %v407, %v443
      %v476 = vadd.f32 %v408, %v444
      %v477 = vadd.f32 %v409, %v445
      %v478 = vadd.f32 %v410, %v446
      %v479 = vadd.f32 %v411, %v447
      %v480 = vadd.f32 %v412, %v448
      %v481 = vadd.f32 %v413, %v449
      %v482 = vadd.f32 %v414, %v450
      %v483 = vadd.f32 %v415, %v451
      %v484 = vadd.f32 %v416, %v452
      %v485 = vadd.f32 %v417, %v453
      %v486 = vadd.f32 %v418, %v454
      %v487 = vadd.f32 %v419, %v455
      %v488 = vadd.f32 %v420, %v456
      %v489 = vadd.f32 %v421, %v457
      %v490 = vadd.f32 %v422, %v458
      %v491 = vadd.f32 %v423, %v459
      %v492 = vadd.f32 %v424, %v460
      %v493 = vadd.f32 %v425, %v461
      %v494 = vadd.f32 %v426, %v462
      %v495 = vadd.f32 %v427, %v463
      %v496 = vadd.f32 %v428, %v464
      %v497 = vadd.f32 %v429, %v465
      %v498 = vadd.f32 %v430, %v466
      %v499 = vadd.f32 %v431, %v467
      %v500 = vadd.f32 %v432, %v468
      %v501 = vadd.f32 %v433, %v469
      %v502 = vadd.f32 %v434, %v470
      %v503 = vadd.f32 %v435, %v471
      %v504 = vadd.f32 %v436, %v472
      %v505 = vlaneseq
      %v506 = vshrl.u32 %v505, 7
      %v507 = vsub.s32 5, %v506
      %v508 = vrot.slane %v281, %v507
      %v509 = vmul.f32 %v295, %v508
      %v510 = vmul.f32 %v296, %v508
      %v511 = vmul.f32 %v297, %v508
      %v512 = vmul.f32 %v298, %v508
      %v513 = vmul.f32 %v299, %v508
      %v514 = vmul.f32 %v300, %v508
      %v515 = vmul.f32 %v301, %v508
      %v516 = vmul.f32 %v302, %v508
      %v517 = vmul.f32 %v303, %v508
      %v518 = vmul.f32 %v304, %v508
      %v519 = vmul.f32 %v305, %v508
      %v520 = vmul.f32 %v306, %v508
      %v521 = vmul.f32 %v307, %v508
      %v522 = vmul.f32 %v308, %v508
      %v523 = vmul.f32 %v309, %v508
      %v524 = vmul.f32 %v310, %v508
      %v525 = vmul.f32 %v311, %v508
      %v526 = vmul.f32 %v312, %v508
      %v527 = vmul.f32 %v313, %v508
      %v528 = vmul.f32 %v314, %v508
      %v529 = vmul.f32 %v315, %v508
      %v530 = vmul.f32 %v316, %v508
      %v531 = vmul.f32 %v317, %v508
      %v532 = vmul.f32 %v318, %v508
      %v533 = vmul.f32 %v319, %v508
      %v534 = vmul.f32 %v320, %v508
      %v535 = vmul.f32 %v321, %v508
      %v536 = vmul.f32 %v322, %v508
      %v537 = vmul.f32 %v323, %v508
      %v538 = vmul.f32 %v324, %v508
      %v539 = vmul.f32 %v325, %v508
      %v540 = vmul.f32 %v326, %v508
      %v541 = vadd.f32 %v473, %v509
      %v542 = vadd.f32 %v474, %v510
      %v543 = vadd.f32 %v475, %v511
      %v544 = vadd.f32 %v476, %v512
      %v545 = vadd.f32 %v477, %v513
      %v546 = vadd.f32 %v478, %v514
      %v547 = vadd.f32 %v479, %v515
      %v548 = vadd.f32 %v480, %v516
      %v549 = vadd.f32 %v481, %v517
      %v550 = vadd.f32 %v482, %v518
      %v551 = vadd.f32 %v483, %v519
      %v552 = vadd.f32 %v484, %v520
      %v553 = vadd.f32 %v485, %v521
      %v554 = vadd.f32 %v486, %v522
      %v555 = vadd.f32 %v487, %v523
      %v556 = vadd.f32 %v488, %v524
      %v557 = vadd.f32 %v489, %v525
      %v558 = vadd.f32 %v490, %v526
      %v559 = vadd.f32 %v491, %v527
      %v560 = vadd.f32 %v492, %v528
      %v561 = vadd.f32 %v493, %v529
      %v562 = vadd.f32 %v494, %v530
      %v563 = vadd.f32 %v495, %v531
      %v564 = vadd.f32 %v496, %v532
      %v565 = vadd.f32 %v497, %v533
      %v566 = vadd.f32 %v498, %v534
      %v567 = vadd.f32 %v499, %v535
      %v568 = vadd.f32 %v500, %v536
      %v569 = vadd.f32 %v501, %v537
      %v570 = vadd.f32 %v502, %v538
      %v571 = vadd.f32 %v503, %v539
      %v572 = vadd.f32 %v504, %v540
      %v573 = vlaneseq
      %v574 = vshrl.u32 %v573, 7
      %v575 = vsub.s32 4, %v574
      %v576 = vrot.slane %v282, %v575
      %v577 = vmul.f32 %v297, %v576
      %v578 = vmul.f32 %v298, %v576
      %v579 = vmul.f32 %v299, %v576
      %v580 = vmul.f32 %v300, %v576
      %v581 = vmul.f32 %v301, %v576
      %v582 = vmul.f32 %v302, %v576
      %v583 = vmul.f32 %v303, %v576
      %v584 = vmul.f32 %v304, %v576
      %v585 = vmul.f32 %v305, %v576
      %v586 = vmul.f32 %v306, %v576
      %v587 = vmul.f32 %v307, %v576
      %v588 = vmul.f32 %v308, %v576
      %v589 = vmul.f32 %v309, %v576
      %v590 = vmul.f32 %v310, %v576
      %v591 = vmul.f32 %v311, %v576
      %v592 = vmul.f32 %v312, %v576
      %v593 = vmul.f32 %v313, %v576
      %v594 = vmul.f32 %v314, %v576
      %v595 = vmul.f32 %v315, %v576
      %v596 = vmul.f32 %v316, %v576
      %v597 = vmul.f32 %v317, %v576
      %v598 = vmul.f32 %v318, %v576
      %v599 = vmul.f32 %v319, %v576
      %v600 = vmul.f32 %v320, %v576
      %v601 = vmul.f32 %v321, %v576
      %v602 = vmul.f32 %v322, %v576
      %v603 = vmul.f32 %v323, %v576
      %v604 = vmul.f32 %v324, %v576
      %v605 = vmul.f32 %v325, %v576
      %v606 = vmul.f32 %v326, %v576
      %v607 = vmul.f32 %v327, %v576
      %v608 = vmul.f32 %v328, %v576
      %v609 = vadd.f32 %v541, %v577
      %v610 = vadd.f32 %v542, %v578
      %v611 = vadd.f32 %v543, %v579
      %v612 = vadd.f32 %v544, %v580
      %v613 = vadd.f32 %v545, %v581
      %v614 = vadd.f32 %v546, %v582
      %v615 = vadd.f32 %v547, %v583
      %v616 = vadd.f32 %v548, %v584
      %v617 = vadd.f32 %v549, %v585
      %v618 = vadd.f32 %v550, %v586
      %v619 = vadd.f32 %v551, %v587
      %v620 = vadd.f32 %v552, %v588
      %v621 = vadd.f32 %v553, %v589
      %v622 = vadd.f32 %v554, %v590
      %v623 = vadd.f32 %v555, %v591
      %v624 = vadd.f32 %v556, %v592
      %v625 = vadd.f32 %v557, %v593
      %v626 = vadd.f32 %v558, %v594
      %v627 = vadd.f32 %v559, %v595
      %v628 = vadd.f32 %v560, %v596
      %v629 = vadd.f32 %v561, %v597
      %v630 = vadd.f32 %v562, %v598
      %v631 = vadd.f32 %v563, %v599
      %v632 = vadd.f32 %v564, %v600
      %v633 = vadd.f32 %v565, %v601
      %v634 = vadd.f32 %v566, %v602
      %v635 = vadd.f32 %v567, %v603
      %v636 = vadd.f32 %v568, %v604
      %v637 = vadd.f32 %v569, %v605
      %v638 = vadd.f32 %v570, %v606
      %v639 = vadd.f32 %v571, %v607
      %v640 = vadd.f32 %v572, %v608
      %v641 = vlaneseq
      %v642 = vshrl.u32 %v641, 7
      %v643 = vsub.s32 3, %v642
      %v644 = vrot.slane %v283, %v643
      %v645 = vmul.f32 %v299, %v644
      %v646 = vmul.f32 %v300, %v644
      %v647 = vmul.f32 %v301, %v644
      %v648 = vmul.f32 %v302, %v644
      %v649 = vmul.f32 %v303, %v644
      %v650 = vmul.f32 %v304, %v644
      %v651 = vmul.f32 %v305, %v644
      %v652 = vmul.f32 %v306, %v644
      %v653 = vmul.f32 %v307, %v644
      %v654 = vmul.f32 %v308, %v644
      %v655 = vmul.f32 %v309, %v644
      %v656 = vmul.f32 %v310, %v644
      %v657 = vmul.f32 %v311, %v644
      %v658 = vmul.f32 %v312, %v644
      %v659 = vmul.f32 %v313, %v644
      %v660 = vmul.f32 %v314, %v644
      %v661 = vmul.f32 %v315, %v644
      %v662 = vmul.f32 %v316, %v644
      %v663 = vmul.f32 %v317, %v644
      %v664 = vmul.f32 %v318, %v644
      %v665 = vmul.f32 %v319, %v644
      %v666 = vmul.f32 %v320, %v644
      %v667 = vmul.f32 %v321, %v644
      %v668 = vmul.f32 %v322, %v644
      %v669 = vmul.f32 %v323, %v644
      %v670 = vmul.f32 %v324, %v644
      %v671 = vmul.f32 %v325, %v644
      %v672 = vmul.f32 %v326, %v644
      %v673 = vmul.f32 %v327, %v644
      %v674 = vmul.f32 %v328, %v644
      %v675 = vmul.f32 %v329, %v644
      %v676 = vmul.f32 %v330, %v644
      %v677 = vadd.f32 %v609, %v645
      %v678 = vadd.f32 %v610, %v646
      %v679 = vadd.f32 %v611, %v647
      %v680 = vadd.f32 %v612, %v648
      %v681 = vadd.f32 %v613, %v649
      %v682 = vadd.f32 %v614, %v650
      %v683 = vadd.f32 %v615, %v651
      %v684 = vadd.f32 %v616, %v652
      %v685 = vadd.f32 %v617, %v653
      %v686 = vadd.f32 %v618, %v654
      %v687 = vadd.f32 %v619, %v655
      %v688 = vadd.f32 %v620, %v656
      %v689 = vadd.f32 %v621, %v657
      %v690 = vadd.f32 %v622, %v658
      %v691 = vadd.f32 %v623, %v659
      %v692 = vadd.f32 %v624, %v660
      %v693 = vadd.f32 %v625, %v661
      %v694 = vadd.f32 %v626, %v662
      %v695 = vadd.f32 %v627, %v663
      %v696 = vadd.f32 %v628, %v664
      %v697 = vadd.f32 %v629, %v665
      %v698 = vadd.f32 %v630, %v666
      %v699 = vadd.f32 %v631, %v667
      %v700 = vadd.f32 %v632, %v668
      %v701 = vadd.f32 %v633, %v669
      %v702 = vadd.f32 %v634, %v670
      %v703 = vadd.f32 %v635, %v671
      %v704 = vadd.f32 %v636, %v672
      %v705 = vadd.f32 %v637, %v673
      %v706 = vadd.f32 %v638, %v674
      %v707 = vadd.f32 %v639, %v675
      %v708 = vadd.f32 %v640, %v676
      %v709 = vlaneseq
      %v710 = vshrl.u32 %v709, 7
      %v711 = vsub.s32 2, %v710
      %v712 = vrot.slane %v284, %v711
      %v713 = vmul.f32 %v301, %v712
      %v714 = vmul.f32 %v302, %v712
      %v715 = vmul.f32 %v303, %v712
      %v716 = vmul.f32 %v304, %v712
      %v717 = vmul.f32 %v305, %v712
      %v718 = vmul.f32 %v306, %v712
      %v719 = vmul.f32 %v307, %v712
      %v720 = vmul.f32 %v308, %v712
      %v721 = vmul.f32 %v309, %v712
      %v722 = vmul.f32 %v310, %v712
      %v723 = vmul.f32 %v311, %v712
      %v724 = vmul.f32 %v312, %v712
      %v725 = vmul.f32 %v313, %v712
      %v726 = vmul.f32 %v314, %v712
      %v727 = vmul.f32 %v315, %v712
      %v728 = vmul.f32 %v316, %v712
      %v729 = vmul.f32 %v317, %v712
      %v730 = vmul.f32 %v318, %v712
      %v731 = vmul.f32 %v319, %v712
      %v732 = vmul.f32 %v320, %v712
      %v733 = vmul.f32 %v321, %v712
      %v734 = vmul.f32 %v322, %v712
      %v735 = vmul.f32 %v323, %v712
      %v736 = vmul.f32 %v324, %v712
      %v737 = vmul.f32 %v325, %v712
      %v738 = vmul.f32 %v326, %v712
      %v739 = vmul.f32 %v327, %v712
      %v740 = vmul.f32 %v328, %v712
      %v741 = vmul.f32 %v329, %v712
      %v742 = vmul.f32 %v330, %v712
      %v743 = vmul.f32 %v331, %v712
      %v744 = vmul.f32 %v332, %v712
      %v745 = vadd.f32 %v677, %v713
      %v746 = vadd.f32 %v678, %v714
      %v747 = vadd.f32 %v679, %v715
      %v748 = vadd.f32 %v680, %v716
      %v749 = vadd.f32 %v681, %v717
      %v750 = vadd.f32 %v682, %v718
      %v751 = vadd.f32 %v683, %v719
      %v752 = vadd.f32 %v684, %v720
      %v753 = vadd.f32 %v685, %v721
      %v754 = vadd.f32 %v686, %v722
      %v755 = vadd.f32 %v687, %v723
      %v756 = vadd.f32 %v688, %v724
      %v757 = vadd.f32 %v689, %v725
      %v758 = vadd.f32 %v690, %v726
      %v759 = vadd.f32 %v691, %v727
      %v760 = vadd.f32 %v692, %v728
      %v761 = vadd.f32 %v693, %v729
      %v762 = vadd.f32 %v694, %v730
      %v763 = vadd.f32 %v695, %v731
      %v764 = vadd.f32 %v696, %v732
      %v765 = vadd.f32 %v697, %v733
      %v766 = vadd.f32 %v698, %v734
      %v767 = vadd.f32 %v699, %v735
      %v768 = vadd.f32 %v700, %v736
      %v769 = vadd.f32 %v701, %v737
      %v770 = vadd.f32 %v702, %v738
      %v771 = vadd.f32 %v703, %v739
      %v772 = vadd.f32 %v704, %v740
      %v773 = vadd.f32 %v705, %v741
      %v774 = vadd.f32 %v706, %v742
      %v775 = vadd.f32 %v707, %v743
      %v776 = vadd.f32 %v708, %v744
      %v777 = vadd.f32 %v745, 0.0
      %v778 = vadd.f32 %v746, 0.0
      %v779 = vadd.f32 %v747, 0.0
      %v780 = vadd.f32 %v748, 0.0
      %v781 = vadd.f32 %v749, 0.0
      %v782 = vadd.f32 %v750, 0.0
      %v783 = vadd.f32 %v751, 0.0
      %v784 = vadd.f32 %v752, 0.0
      %v785 = vadd.f32 %v753, 0.0
      %v786 = vadd.f32 %v754, 0.0
      %v787 = vadd.f32 %v755, 0.0
      %v788 = vadd.f32 %v756, 0.0
      %v789 = vadd.f32 %v757, 0.0
      %v790 = vadd.f32 %v758, 0.0
      %v791 = vadd.f32 %v759, 0.0
      %v792 = vadd.f32 %v760, 0.0
      %v793 = vadd.f32 %v761, 0.0
      %v794 = vadd.f32 %v762, 0.0
      %v795 = vadd.f32 %v763, 0.0
      %v796 = vadd.f32 %v764, 0.0
      %v797 = vadd.f32 %v765, 0.0
      %v798 = vadd.f32 %v766, 0.0
      %v799 = vadd.f32 %v767, 0.0
      %v800 = vadd.f32 %v768, 0.0
      %v801 = vadd.f32 %v769, 0.0
      %v802 = vadd.f32 %v770, 0.0
      %v803 = vadd.f32 %v771, 0.0
      %v804 = vadd.f32 %v772, 0.0
      %v805 = vadd.f32 %v773, 0.0
      %v806 = vadd.f32 %v774, 0.0
      %v807 = vadd.f32 %v775, 0.0
      %v808 = vadd.f32 %v776, 0.0
      %v809 = vld [vmem:[%s288 + $0x1] sm:$0xff]
      %v810 = vld [vmem:[%s288 + $0x9] sm:$0xff]
      %v811 = vld [vmem:[%s288 + $0x19] sm:$0xff]
      %v812 = vld [vmem:[%s288 + $0x21] sm:$0xff]
      %v813 = vld [vmem:[%s288 + $0x31] sm:$0xff]
      %v814 = vld [vmem:[%s288 + $0x39] sm:$0xff]
      %v815 = vld [vmem:[%s288 + $0x49] sm:$0xff]
      %v816 = vld [vmem:[%s288 + $0x51] sm:$0xff]
      %v817 = vld [vmem:[%s288 + $0x61] sm:$0xff]
      %v818 = vld [vmem:[%s288 + $0x69] sm:$0xff]
      %v819 = vld [vmem:[%s288 + $0x79] sm:$0xff]
      %v820 = vld [vmem:[%s288 + $0x81] sm:$0xff]
      %v821 = vld [vmem:[%s288 + $0x91] sm:$0xff]
      %v822 = vld [vmem:[%s288 + $0x99] sm:$0xff]
      %v823 = vld [vmem:[%s288 + $0xa9] sm:$0xff]
      %v824 = vld [vmem:[%s288 + $0xb1] sm:$0xff]
      %v825 = vld [vmem:[%s288 + $0xc1] sm:$0xff]
      %v826 = vld [vmem:[%s288 + $0xc9] sm:$0xff]
      %v827 = vld [vmem:[%s288 + $0xd9] sm:$0xff]
      %v828 = vld [vmem:[%s288 + $0xe1] sm:$0xff]
      %v829 = vld [vmem:[%s288 + $0xf1] sm:$0xff]
      %v830 = vld [vmem:[%s288 + $0xf9] sm:$0xff]
      %v831 = vld [vmem:[%s288 + $0x109] sm:$0xff]
      %v832 = vld [vmem:[%s288 + $0x111] sm:$0xff]
      %v833 = vld [vmem:[%s288 + $0x121] sm:$0xff]
      %v834 = vld [vmem:[%s288 + $0x129] sm:$0xff]
      %v835 = vld [vmem:[%s288 + $0x139] sm:$0xff]
      %v836 = vld [vmem:[%s288 + $0x141] sm:$0xff]
      %v837 = vld [vmem:[%s288 + $0x151] sm:$0xff]
      %v838 = vld [vmem:[%s288 + $0x159] sm:$0xff]
      %v839 = vld [vmem:[%s288 + $0x169] sm:$0xff]
      %v840 = vld [vmem:[%s288 + $0x171] sm:$0xff]
      %v841 = vld [vmem:[%s288 + $0x181] sm:$0xff]
      %v842 = vld [vmem:[%s288 + $0x189] sm:$0xff]
      %v843 = vld [vmem:[%s288 + $0x199] sm:$0xff]
      %v844 = vld [vmem:[%s288 + $0x1a1] sm:$0xff]
      %v845 = vld [vmem:[%s288 + $0x1b1] sm:$0xff]
      %v846 = vld [vmem:[%s288 + $0x1b9] sm:$0xff]
      %v847 = vld [vmem:[%s288 + $0x1c9] sm:$0xff]
      %v848 = vld [vmem:[%s288 + $0x1d1] sm:$0xff]
      %v849 = vld [vmem:[%s288 + $0x1e1] sm:$0xff]
      %v850 = vld [vmem:[%s288 + $0x1e9] sm:$0xff]
      %v851 = vld [vmem:[%s288 + $0x1f9] sm:$0xff]
      %v852 = vld [vmem:[%s288 + $0x201] sm:$0xff]
      %v853 = vlaneseq
      %v854 = vshrl.u32 %v853, 7
      %v855 = vsub.s32 1, %v854
      %v856 = vrot.slane %v279, %v855
      %v857 = vmul.f32 %v809, %v856
      %v858 = vmul.f32 %v810, %v856
      %v859 = vmul.f32 %v811, %v856
      %v860 = vmul.f32 %v812, %v856
      %v861 = vmul.f32 %v813, %v856
      %v862 = vmul.f32 %v814, %v856
      %v863 = vmul.f32 %v815, %v856
      %v864 = vmul.f32 %v816, %v856
      %v865 = vmul.f32 %v817, %v856
      %v866 = vmul.f32 %v818, %v856
      %v867 = vmul.f32 %v819, %v856
      %v868 = vmul.f32 %v820, %v856
      %v869 = vmul.f32 %v821, %v856
      %v870 = vmul.f32 %v822, %v856
      %v871 = vmul.f32 %v823, %v856
      %v872 = vmul.f32 %v824, %v856
      %v873 = vmul.f32 %v825, %v856
      %v874 = vmul.f32 %v826, %v856
      %v875 = vmul.f32 %v827, %v856
      %v876 = vmul.f32 %v828, %v856
      %v877 = vmul.f32 %v829, %v856
      %v878 = vmul.f32 %v830, %v856
      %v879 = vmul.f32 %v831, %v856
      %v880 = vmul.f32 %v832, %v856
      %v881 = vmul.f32 %v833, %v856
      %v882 = vmul.f32 %v834, %v856
      %v883 = vmul.f32 %v835, %v856
      %v884 = vmul.f32 %v836, %v856
      %v885 = vmul.f32 %v837, %v856
      %v886 = vmul.f32 %v838, %v856
      %v887 = vmul.f32 %v839, %v856
      %v888 = vmul.f32 %v840, %v856
      %v889 = vlaneseq
      %v890 = vshrl.u32 %v889, 7
      %v891 = vsub.s32 0, %v890
      %v892 = vrot.slane %v280, %v891
      %v893 = vmul.f32 %v811, %v892
      %v894 = vmul.f32 %v812, %v892
      %v895 = vmul.f32 %v813, %v892
      %v896 = vmul.f32 %v814, %v892
      %v897 = vmul.f32 %v815, %v892
      %v898 = vmul.f32 %v816, %v892
      %v899 = vmul.f32 %v817, %v892
      %v900 = vmul.f32 %v818, %v892
      %v901 = vmul.f32 %v819, %v892
      %v902 = vmul.f32 %v820, %v892
      %v903 = vmul.f32 %v821, %v892
      %v904 = vmul.f32 %v822, %v892
      %v905 = vmul.f32 %v823, %v892
      %v906 = vmul.f32 %v824, %v892
      %v907 = vmul.f32 %v825, %v892
      %v908 = vmul.f32 %v826, %v892
      %v909 = vmul.f32 %v827, %v892
      %v910 = vmul.f32 %v828, %v892
      %v911 = vmul.f32 %v829, %v892
      %v912 = vmul.f32 %v830, %v892
      %v913 = vmul.f32 %v831, %v892
      %v914 = vmul.f32 %v832, %v892
      %v915 = vmul.f32 %v833, %v892
      %v916 = vmul.f32 %v834, %v892
      %v917 = vmul.f32 %v835, %v892
      %v918 = vmul.f32 %v836, %v892
      %v919 = vmul.f32 %v837, %v892
      %v920 = vmul.f32 %v838, %v892
      %v921 = vmul.f32 %v839, %v892
      %v922 = vmul.f32 %v840, %v892
      %v923 = vmul.f32 %v841, %v892
      %v924 = vmul.f32 %v842, %v892
      %v925 = vadd.f32 %v857, %v893
      %v926 = vadd.f32 %v858, %v894
      %v927 = vadd.f32 %v859, %v895
      %v928 = vadd.f32 %v860, %v896
      %v929 = vadd.f32 %v861, %v897
      %v930 = vadd.f32 %v862, %v898
      %v931 = vadd.f32 %v863, %v899
      %v932 = vadd.f32 %v864, %v900
      %v933 = vadd.f32 %v865, %v901
      %v934 = vadd.f32 %v866, %v902
      %v935 = vadd.f32 %v867, %v903
      %v936 = vadd.f32 %v868, %v904
      %v937 = vadd.f32 %v869, %v905
      %v938 = vadd.f32 %v870, %v906
      %v939 = vadd.f32 %v871, %v907
      %v940 = vadd.f32 %v872, %v908
      %v941 = vadd.f32 %v873, %v909
      %v942 = vadd.f32 %v874, %v910
      %v943 = vadd.f32 %v875, %v911
      %v944 = vadd.f32 %v876, %v912
      %v945 = vadd.f32 %v877, %v913
      %v946 = vadd.f32 %v878, %v914
      %v947 = vadd.f32 %v879, %v915
      %v948 = vadd.f32 %v880, %v916
      %v949 = vadd.f32 %v881, %v917
      %v950 = vadd.f32 %v882, %v918
      %v951 = vadd.f32 %v883, %v919
      %v952 = vadd.f32 %v884, %v920
      %v953 = vadd.f32 %v885, %v921
      %v954 = vadd.f32 %v886, %v922
      %v955 = vadd.f32 %v887, %v923
      %v956 = vadd.f32 %v888, %v924
      %v957 = vlaneseq
      %v958 = vshrl.u32 %v957, 7
      %v959 = vsub.s32 7, %v958
      %v960 = vrot.slane %v280, %v959
      %v961 = vmul.f32 %v813, %v960
      %v962 = vmul.f32 %v814, %v960
      %v963 = vmul.f32 %v815, %v960
      %v964 = vmul.f32 %v816, %v960
      %v965 = vmul.f32 %v817, %v960
      %v966 = vmul.f32 %v818, %v960
      %v967 = vmul.f32 %v819, %v960
      %v968 = vmul.f32 %v820, %v960
      %v969 = vmul.f32 %v821, %v960
      %v970 = vmul.f32 %v822, %v960
      %v971 = vmul.f32 %v823, %v960
      %v972 = vmul.f32 %v824, %v960
      %v973 = vmul.f32 %v825, %v960
      %v974 = vmul.f32 %v826, %v960
      %v975 = vmul.f32 %v827, %v960
      %v976 = vmul.f32 %v828, %v960
      %v977 = vmul.f32 %v829, %v960
      %v978 = vmul.f32 %v830, %v960
      %v979 = vmul.f32 %v831, %v960
      %v980 = vmul.f32 %v832, %v960
      %v981 = vmul.f32 %v833, %v960
      %v982 = vmul.f32 %v834, %v960
      %v983 = vmul.f32 %v835, %v960
      %v984 = vmul.f32 %v836, %v960
      %v985 = vmul.f32 %v837, %v960
      %v986 = vmul.f32 %v838, %v960
      %v987 = vmul.f32 %v839, %v960
      %v988 = vmul.f32 %v840, %v960
      %v989 = vmul.f32 %v841, %v960
      %v990 = vmul.f32 %v842, %v960
      %v991 = vmul.f32 %v843, %v960
      %v992 = vmul.f32 %v844, %v960
      %v993 = vadd.f32 %v925, %v961
      %v994 = vadd.f32 %v926, %v962
      %v995 = vadd.f32 %v927, %v963
      %v996 = vadd.f32 %v928, %v964
      %v997 = vadd.f32 %v929, %v965
      %v998 = vadd.f32 %v930, %v966
      %v999 = vadd.f32 %v931, %v967
      %v1000 = vadd.f32 %v932, %v968
      %v1001 = vadd.f32 %v933, %v969
      %v1002 = vadd.f32 %v934, %v970
      %v1003 = vadd.f32 %v935, %v971
      %v1004 = vadd.f32 %v936, %v972
      %v1005 = vadd.f32 %v937, %v973
      %v1006 = vadd.f32 %v938, %v974
      %v1007 = vadd.f32 %v939, %v975
      %v1008 = vadd.f32 %v940, %v976
      %v1009 = vadd.f32 %v941, %v977
      %v1010 = vadd.f32 %v942, %v978
      %v1011 = vadd.f32 %v943, %v979
      %v1012 = vadd.f32 %v944, %v980
      %v1013 = vadd.f32 %v945, %v981
      %v1014 = vadd.f32 %v946, %v982
      %v1015 = vadd.f32 %v947, %v983
      %v1016 = vadd.f32 %v948, %v984
      %v1017 = vadd.f32 %v949, %v985
      %v1018 = vadd.f32 %v950, %v986
      %v1019 = vadd.f32 %v951, %v987
      %v1020 = vadd.f32 %v952, %v988
      %v1021 = vadd.f32 %v953, %v989
      %v1022 = vadd.f32 %v954, %v990
      %v1023 = vadd.f32 %v955, %v991
      %v1024 = vadd.f32 %v956, %v992
      %v1025 = vlaneseq
      %v1026 = vshrl.u32 %v1025, 7
      %v1027 = vsub.s32 6, %v1026
      %v1028 = vrot.slane %v281, %v1027
      %v1029 = vmul.f32 %v815, %v1028
      %v1030 = vmul.f32 %v816, %v1028
      %v1031 = vmul.f32 %v817, %v1028
      %v1032 = vmul.f32 %v818, %v1028
      %v1033 = vmul.f32 %v819, %v1028
      %v1034 = vmul.f32 %v820, %v1028
      %v1035 = vmul.f32 %v821, %v1028
      %v1036 = vmul.f32 %v822, %v1028
      %v1037 = vmul.f32 %v823, %v1028
      %v1038 = vmul.f32 %v824, %v1028
      %v1039 = vmul.f32 %v825, %v1028
      %v1040 = vmul.f32 %v826, %v1028
      %v1041 = vmul.f32 %v827, %v1028
      %v1042 = vmul.f32 %v828, %v1028
      %v1043 = vmul.f32 %v829, %v1028
      %v1044 = vmul.f32 %v830, %v1028
      %v1045 = vmul.f32 %v831, %v1028
      %v1046 = vmul.f32 %v832, %v1028
      %v1047 = vmul.f32 %v833, %v1028
      %v1048 = vmul.f32 %v834, %v1028
      %v1049 = vmul.f32 %v835, %v1028
      %v1050 = vmul.f32 %v836, %v1028
      %v1051 = vmul.f32 %v837, %v1028
      %v1052 = vmul.f32 %v838, %v1028
      %v1053 = vmul.f32 %v839, %v1028
      %v1054 = vmul.f32 %v840, %v1028
      %v1055 = vmul.f32 %v841, %v1028
      %v1056 = vmul.f32 %v842, %v1028
      %v1057 = vmul.f32 %v843, %v1028
      %v1058 = vmul.f32 %v844, %v1028
      %v1059 = vmul.f32 %v845, %v1028
      %v1060 = vmul.f32 %v846, %v1028
      %v1061 = vadd.f32 %v993, %v1029
      %v1062 = vadd.f32 %v994, %v1030
      %v1063 = vadd.f32 %v995, %v1031
      %v1064 = vadd.f32 %v996, %v1032
      %v1065 = vadd.f32 %v997, %v1033
      %v1066 = vadd.f32 %v998, %v1034
      %v1067 = vadd.f32 %v999, %v1035
      %v1068 = vadd.f32 %v1000, %v1036
      %v1069 = vadd.f32 %v1001, %v1037
      %v1070 = vadd.f32 %v1002, %v1038
      %v1071 = vadd.f32 %v1003, %v1039
      %v1072 = vadd.f32 %v1004, %v1040
      %v1073 = vadd.f32 %v1005, %v1041
      %v1074 = vadd.f32 %v1006, %v1042
      %v1075 = vadd.f32 %v1007, %v1043
      %v1076 = vadd.f32 %v1008, %v1044
      %v1077 = vadd.f32 %v1009, %v1045
      %v1078 = vadd.f32 %v1010, %v1046
      %v1079 = vadd.f32 %v1011, %v1047
      %v1080 = vadd.f32 %v1012, %v1048
      %v1081 = vadd.f32 %v1013, %v1049
      %v1082 = vadd.f32 %v1014, %v1050
      %v1083 = vadd.f32 %v1015, %v1051
      %v1084 = vadd.f32 %v1016, %v1052
      %v1085 = vadd.f32 %v1017, %v1053
      %v1086 = vadd.f32 %v1018, %v1054
      %v1087 = vadd.f32 %v1019, %v1055
      %v1088 = vadd.f32 %v1020, %v1056
      %v1089 = vadd.f32 %v1021, %v1057
      %v1090 = vadd.f32 %v1022, %v1058
      %v1091 = vadd.f32 %v1023, %v1059
      %v1092 = vadd.f32 %v1024, %v1060
      %v1093 = vlaneseq
      %v1094 = vshrl.u32 %v1093, 7
      %v1095 = vsub.s32 5, %v1094
      %v1096 = vrot.slane %v282, %v1095
      %v1097 = vmul.f32 %v817, %v1096
      %v1098 = vmul.f32 %v818, %v1096
      %v1099 = vmul.f32 %v819, %v1096
      %v1100 = vmul.f32 %v820, %v1096
      %v1101 = vmul.f32 %v821, %v1096
      %v1102 = vmul.f32 %v822, %v1096
      %v1103 = vmul.f32 %v823, %v1096
      %v1104 = vmul.f32 %v824, %v1096
      %v1105 = vmul.f32 %v825, %v1096
      %v1106 = vmul.f32 %v826, %v1096
      %v1107 = vmul.f32 %v827, %v1096
      %v1108 = vmul.f32 %v828, %v1096
      %v1109 = vmul.f32 %v829, %v1096
      %v1110 = vmul.f32 %v830, %v1096
      %v1111 = vmul.f32 %v831, %v1096
      %v1112 = vmul.f32 %v832, %v1096
      %v1113 = vmul.f32 %v833, %v1096
      %v1114 = vmul.f32 %v834, %v1096
      %v1115 = vmul.f32 %v835, %v1096
      %v1116 = vmul.f32 %v836, %v1096
      %v1117 = vmul.f32 %v837, %v1096
      %v1118 = vmul.f32 %v838, %v1096
      %v1119 = vmul.f32 %v839, %v1096
      %v1120 = vmul.f32 %v840, %v1096
      %v1121 = vmul.f32 %v841, %v1096
      %v1122 = vmul.f32 %v842, %v1096
      %v1123 = vmul.f32 %v843, %v1096
      %v1124 = vmul.f32 %v844, %v1096
      %v1125 = vmul.f32 %v845, %v1096
      %v1126 = vmul.f32 %v846, %v1096
      %v1127 = vmul.f32 %v847, %v1096
      %v1128 = vmul.f32 %v848, %v1096
      %v1129 = vadd.f32 %v1061, %v1097
      %v1130 = vadd.f32 %v1062, %v1098
      %v1131 = vadd.f32 %v1063, %v1099
      %v1132 = vadd.f32 %v1064, %v1100
      %v1133 = vadd.f32 %v1065, %v1101
      %v1134 = vadd.f32 %v1066, %v1102
      %v1135 = vadd.f32 %v1067, %v1103
      %v1136 = vadd.f32 %v1068, %v1104
      %v1137 = vadd.f32 %v1069, %v1105
      %v1138 = vadd.f32 %v1070, %v1106
      %v1139 = vadd.f32 %v1071, %v1107
      %v1140 = vadd.f32 %v1072, %v1108
      %v1141 = vadd.f32 %v1073, %v1109
      %v1142 = vadd.f32 %v1074, %v1110
      %v1143 = vadd.f32 %v1075, %v1111
      %v1144 = vadd.f32 %v1076, %v1112
      %v1145 = vadd.f32 %v1077, %v1113
      %v1146 = vadd.f32 %v1078, %v1114
      %v1147 = vadd.f32 %v1079, %v1115
      %v1148 = vadd.f32 %v1080, %v1116
      %v1149 = vadd.f32 %v1081, %v1117
      %v1150 = vadd.f32 %v1082, %v1118
      %v1151 = vadd.f32 %v1083, %v1119
      %v1152 = vadd.f32 %v1084, %v1120
      %v1153 = vadd.f32 %v1085, %v1121
      %v1154 = vadd.f32 %v1086, %v1122
      %v1155 = vadd.f32 %v1087, %v1123
      %v1156 = vadd.f32 %v1088, %v1124
      %v1157 = vadd.f32 %v1089, %v1125
      %v1158 = vadd.f32 %v1090, %v1126
      %v1159 = vadd.f32 %v1091, %v1127
      %v1160 = vadd.f32 %v1092, %v1128
      %v1161 = vlaneseq
      %v1162 = vshrl.u32 %v1161, 7
      %v1163 = vsub.s32 4, %v1162
      %v1164 = vrot.slane %v283, %v1163
      %v1165 = vmul.f32 %v819, %v1164
      %v1166 = vmul.f32 %v820, %v1164
      %v1167 = vmul.f32 %v821, %v1164
      %v1168 = vmul.f32 %v822, %v1164
      %v1169 = vmul.f32 %v823, %v1164
      %v1170 = vmul.f32 %v824, %v1164
      %v1171 = vmul.f32 %v825, %v1164
      %v1172 = vmul.f32 %v826, %v1164
      %v1173 = vmul.f32 %v827, %v1164
      %v1174 = vmul.f32 %v828, %v1164
      %v1175 = vmul.f32 %v829, %v1164
      %v1176 = vmul.f32 %v830, %v1164
      %v1177 = vmul.f32 %v831, %v1164
      %v1178 = vmul.f32 %v832, %v1164
      %v1179 = vmul.f32 %v833, %v1164
      %v1180 = vmul.f32 %v834, %v1164
      %v1181 = vmul.f32 %v835, %v1164
      %v1182 = vmul.f32 %v836, %v1164
      %v1183 = vmul.f32 %v837, %v1164
      %v1184 = vmul.f32 %v838, %v1164
      %v1185 = vmul.f32 %v839, %v1164
      %v1186 = vmul.f32 %v840, %v1164
      %v1187 = vmul.f32 %v841, %v1164
      %v1188 = vmul.f32 %v842, %v1164
      %v1189 = vmul.f32 %v843, %v1164
      %v1190 = vmul.f32 %v844, %v1164
      %v1191 = vmul.f32 %v845, %v1164
      %v1192 = vmul.f32 %v846, %v1164
      %v1193 = vmul.f32 %v847, %v1164
      %v1194 = vmul.f32 %v848, %v1164
      %v1195 = vmul.f32 %v849, %v1164
      %v1196 = vmul.f32 %v850, %v1164
      %v1197 = vadd.f32 %v1129, %v1165
      %v1198 = vadd.f32 %v1130, %v1166
      %v1199 = vadd.f32 %v1131, %v1167
      %v1200 = vadd.f32 %v1132, %v1168
      %v1201 = vadd.f32 %v1133, %v1169
      %v1202 = vadd.f32 %v1134, %v1170
      %v1203 = vadd.f32 %v1135, %v1171
      %v1204 = vadd.f32 %v1136, %v1172
      %v1205 = vadd.f32 %v1137, %v1173
      %v1206 = vadd.f32 %v1138, %v1174
      %v1207 = vadd.f32 %v1139, %v1175
      %v1208 = vadd.f32 %v1140, %v1176
      %v1209 = vadd.f32 %v1141, %v1177
      %v1210 = vadd.f32 %v1142, %v1178
      %v1211 = vadd.f32 %v1143, %v1179
      %v1212 = vadd.f32 %v1144, %v1180
      %v1213 = vadd.f32 %v1145, %v1181
      %v1214 = vadd.f32 %v1146, %v1182
      %v1215 = vadd.f32 %v1147, %v1183
      %v1216 = vadd.f32 %v1148, %v1184
      %v1217 = vadd.f32 %v1149, %v1185
      %v1218 = vadd.f32 %v1150, %v1186
      %v1219 = vadd.f32 %v1151, %v1187
      %v1220 = vadd.f32 %v1152, %v1188
      %v1221 = vadd.f32 %v1153, %v1189
      %v1222 = vadd.f32 %v1154, %v1190
      %v1223 = vadd.f32 %v1155, %v1191
      %v1224 = vadd.f32 %v1156, %v1192
      %v1225 = vadd.f32 %v1157, %v1193
      %v1226 = vadd.f32 %v1158, %v1194
      %v1227 = vadd.f32 %v1159, %v1195
      %v1228 = vadd.f32 %v1160, %v1196
      %v1229 = vlaneseq
      %v1230 = vshrl.u32 %v1229, 7
      %v1231 = vsub.s32 3, %v1230
      %v1232 = vrot.slane %v284, %v1231
      %v1233 = vmul.f32 %v821, %v1232
      %v1234 = vmul.f32 %v822, %v1232
      %v1235 = vmul.f32 %v823, %v1232
      %v1236 = vmul.f32 %v824, %v1232
      %v1237 = vmul.f32 %v825, %v1232
      %v1238 = vmul.f32 %v826, %v1232
      %v1239 = vmul.f32 %v827, %v1232
      %v1240 = vmul.f32 %v828, %v1232
      %v1241 = vmul.f32 %v829, %v1232
      %v1242 = vmul.f32 %v830, %v1232
      %v1243 = vmul.f32 %v831, %v1232
      %v1244 = vmul.f32 %v832, %v1232
      %v1245 = vmul.f32 %v833, %v1232
      %v1246 = vmul.f32 %v834, %v1232
      %v1247 = vmul.f32 %v835, %v1232
      %v1248 = vmul.f32 %v836, %v1232
      %v1249 = vmul.f32 %v837, %v1232
      %v1250 = vmul.f32 %v838, %v1232
      %v1251 = vmul.f32 %v839, %v1232
      %v1252 = vmul.f32 %v840, %v1232
      %v1253 = vmul.f32 %v841, %v1232
      %v1254 = vmul.f32 %v842, %v1232
      %v1255 = vmul.f32 %v843, %v1232
      %v1256 = vmul.f32 %v844, %v1232
      %v1257 = vmul.f32 %v845, %v1232
      %v1258 = vmul.f32 %v846, %v1232
      %v1259 = vmul.f32 %v847, %v1232
      %v1260 = vmul.f32 %v848, %v1232
      %v1261 = vmul.f32 %v849, %v1232
      %v1262 = vmul.f32 %v850, %v1232
      %v1263 = vmul.f32 %v851, %v1232
      %v1264 = vmul.f32 %v852, %v1232
      %v1265 = vadd.f32 %v1197, %v1233
      %v1266 = vadd.f32 %v1198, %v1234
      %v1267 = vadd.f32 %v1199, %v1235
      %v1268 = vadd.f32 %v1200, %v1236
      %v1269 = vadd.f32 %v1201, %v1237
      %v1270 = vadd.f32 %v1202, %v1238
      %v1271 = vadd.f32 %v1203, %v1239
      %v1272 = vadd.f32 %v1204, %v1240
      %v1273 = vadd.f32 %v1205, %v1241
      %v1274 = vadd.f32 %v1206, %v1242
      %v1275 = vadd.f32 %v1207, %v1243
      %v1276 = vadd.f32 %v1208, %v1244
      %v1277 = vadd.f32 %v1209, %v1245
      %v1278 = vadd.f32 %v1210, %v1246
      %v1279 = vadd.f32 %v1211, %v1247
      %v1280 = vadd.f32 %v1212, %v1248
      %v1281 = vadd.f32 %v1213, %v1249
      %v1282 = vadd.f32 %v1214, %v1250
      %v1283 = vadd.f32 %v1215, %v1251
      %v1284 = vadd.f32 %v1216, %v1252
      %v1285 = vadd.f32 %v1217, %v1253
      %v1286 = vadd.f32 %v1218, %v1254
      %v1287 = vadd.f32 %v1219, %v1255
      %v1288 = vadd.f32 %v1220, %v1256
      %v1289 = vadd.f32 %v1221, %v1257
      %v1290 = vadd.f32 %v1222, %v1258
      %v1291 = vadd.f32 %v1223, %v1259
      %v1292 = vadd.f32 %v1224, %v1260
      %v1293 = vadd.f32 %v1225, %v1261
      %v1294 = vadd.f32 %v1226, %v1262
      %v1295 = vadd.f32 %v1227, %v1263
      %v1296 = vadd.f32 %v1228, %v1264
      %v1297 = vadd.f32 %v777, %v1265
      %v1298 = vadd.f32 %v778, %v1266
      %v1299 = vadd.f32 %v779, %v1267
      %v1300 = vadd.f32 %v780, %v1268
      %v1301 = vadd.f32 %v781, %v1269
      %v1302 = vadd.f32 %v782, %v1270
      %v1303 = vadd.f32 %v783, %v1271
      %v1304 = vadd.f32 %v784, %v1272
      %v1305 = vadd.f32 %v785, %v1273
      %v1306 = vadd.f32 %v786, %v1274
      %v1307 = vadd.f32 %v787, %v1275
      %v1308 = vadd.f32 %v788, %v1276
      %v1309 = vadd.f32 %v789, %v1277
      %v1310 = vadd.f32 %v790, %v1278
      %v1311 = vadd.f32 %v791, %v1279
      %v1312 = vadd.f32 %v792, %v1280
      %v1313 = vadd.f32 %v793, %v1281
      %v1314 = vadd.f32 %v794, %v1282
      %v1315 = vadd.f32 %v795, %v1283
      %v1316 = vadd.f32 %v796, %v1284
      %v1317 = vadd.f32 %v797, %v1285
      %v1318 = vadd.f32 %v798, %v1286
      %v1319 = vadd.f32 %v799, %v1287
      %v1320 = vadd.f32 %v800, %v1288
      %v1321 = vadd.f32 %v801, %v1289
      %v1322 = vadd.f32 %v802, %v1290
      %v1323 = vadd.f32 %v803, %v1291
      %v1324 = vadd.f32 %v804, %v1292
      %v1325 = vadd.f32 %v805, %v1293
      %v1326 = vadd.f32 %v806, %v1294
      %v1327 = vadd.f32 %v807, %v1295
      %v1328 = vadd.f32 %v808, %v1296
      %v1329 = vld [vmem:[%s288 + $0x2] sm:$0xff]
      %v1330 = vld [vmem:[%s288 + $0xa] sm:$0xff]
      %v1331 = vld [vmem:[%s288 + $0x1a] sm:$0xff]
      %v1332 = vld [vmem:[%s288 + $0x22] sm:$0xff]
      %v1333 = vld [vmem:[%s288 + $0x32] sm:$0xff]
      %v1334 = vld [vmem:[%s288 + $0x3a] sm:$0xff]
      %v1335 = vld [vmem:[%s288 + $0x4a] sm:$0xff]
      %v1336 = vld [vmem:[%s288 + $0x52] sm:$0xff]
      %v1337 = vld [vmem:[%s288 + $0x62] sm:$0xff]
      %v1338 = vld [vmem:[%s288 + $0x6a] sm:$0xff]
      %v1339 = vld [vmem:[%s288 + $0x7a] sm:$0xff]
      %v1340 = vld [vmem:[%s288 + $0x82] sm:$0xff]
      %v1341 = vld [vmem:[%s288 + $0x92] sm:$0xff]
      %v1342 = vld [vmem:[%s288 + $0x9a] sm:$0xff]
      %v1343 = vld [vmem:[%s288 + $0xaa] sm:$0xff]
      %v1344 = vld [vmem:[%s288 + $0xb2] sm:$0xff]
      %v1345 = vld [vmem:[%s288 + $0xc2] sm:$0xff]
      %v1346 = vld [vmem:[%s288 + $0xca] sm:$0xff]
      %v1347 = vld [vmem:[%s288 + $0xda] sm:$0xff]
      %v1348 = vld [vmem:[%s288 + $0xe2] sm:$0xff]
      %v1349 = vld [vmem:[%s288 + $0xf2] sm:$0xff]
      %v1350 = vld [vmem:[%s288 + $0xfa] sm:$0xff]
      %v1351 = vld [vmem:[%s288 + $0x10a] sm:$0xff]
      %v1352 = vld [vmem:[%s288 + $0x112] sm:$0xff]
      %v1353 = vld [vmem:[%s288 + $0x122] sm:$0xff]
      %v1354 = vld [vmem:[%s288 + $0x12a] sm:$0xff]
      %v1355 = vld [vmem:[%s288 + $0x13a] sm:$0xff]
      %v1356 = vld [vmem:[%s288 + $0x142] sm:$0xff]
      %v1357 = vld [vmem:[%s288 + $0x152] sm:$0xff]
      %v1358 = vld [vmem:[%s288 + $0x15a] sm:$0xff]
      %v1359 = vld [vmem:[%s288 + $0x16a] sm:$0xff]
      %v1360 = vld [vmem:[%s288 + $0x172] sm:$0xff]
      %v1361 = vld [vmem:[%s288 + $0x182] sm:$0xff]
      %v1362 = vld [vmem:[%s288 + $0x18a] sm:$0xff]
      %v1363 = vld [vmem:[%s288 + $0x19a] sm:$0xff]
      %v1364 = vld [vmem:[%s288 + $0x1a2] sm:$0xff]
      %v1365 = vld [vmem:[%s288 + $0x1b2] sm:$0xff]
      %v1366 = vld [vmem:[%s288 + $0x1ba] sm:$0xff]
      %v1367 = vld [vmem:[%s288 + $0x1ca] sm:$0xff]
      %v1368 = vld [vmem:[%s288 + $0x1d2] sm:$0xff]
      %v1369 = vld [vmem:[%s288 + $0x1e2] sm:$0xff]
      %v1370 = vld [vmem:[%s288 + $0x1ea] sm:$0xff]
      %v1371 = vld [vmem:[%s288 + $0x1fa] sm:$0xff]
      %v1372 = vld [vmem:[%s288 + $0x202] sm:$0xff]
      %v1373 = vlaneseq
      %v1374 = vshrl.u32 %v1373, 7
      %v1375 = vsub.s32 2, %v1374
      %v1376 = vrot.slane %v279, %v1375
      %v1377 = vmul.f32 %v1329, %v1376
      %v1378 = vmul.f32 %v1330, %v1376
      %v1379 = vmul.f32 %v1331, %v1376
      %v1380 = vmul.f32 %v1332, %v1376
      %v1381 = vmul.f32 %v1333, %v1376
      %v1382 = vmul.f32 %v1334, %v1376
      %v1383 = vmul.f32 %v1335, %v1376
      %v1384 = vmul.f32 %v1336, %v1376
      %v1385 = vmul.f32 %v1337, %v1376
      %v1386 = vmul.f32 %v1338, %v1376
      %v1387 = vmul.f32 %v1339, %v1376
      %v1388 = vmul.f32 %v1340, %v1376
      %v1389 = vmul.f32 %v1341, %v1376
      %v1390 = vmul.f32 %v1342, %v1376
      %v1391 = vmul.f32 %v1343, %v1376
      %v1392 = vmul.f32 %v1344, %v1376
      %v1393 = vmul.f32 %v1345, %v1376
      %v1394 = vmul.f32 %v1346, %v1376
      %v1395 = vmul.f32 %v1347, %v1376
      %v1396 = vmul.f32 %v1348, %v1376
      %v1397 = vmul.f32 %v1349, %v1376
      %v1398 = vmul.f32 %v1350, %v1376
      %v1399 = vmul.f32 %v1351, %v1376
      %v1400 = vmul.f32 %v1352, %v1376
      %v1401 = vmul.f32 %v1353, %v1376
      %v1402 = vmul.f32 %v1354, %v1376
      %v1403 = vmul.f32 %v1355, %v1376
      %v1404 = vmul.f32 %v1356, %v1376
      %v1405 = vmul.f32 %v1357, %v1376
      %v1406 = vmul.f32 %v1358, %v1376
      %v1407 = vmul.f32 %v1359, %v1376
      %v1408 = vmul.f32 %v1360, %v1376
      %v1409 = vlaneseq
      %v1410 = vshrl.u32 %v1409, 7
      %v1411 = vsub.s32 1, %v1410
      %v1412 = vrot.slane %v280, %v1411
      %v1413 = vmul.f32 %v1331, %v1412
      %v1414 = vmul.f32 %v1332, %v1412
      %v1415 = vmul.f32 %v1333, %v1412
      %v1416 = vmul.f32 %v1334, %v1412
      %v1417 = vmul.f32 %v1335, %v1412
      %v1418 = vmul.f32 %v1336, %v1412
      %v1419 = vmul.f32 %v1337, %v1412
      %v1420 = vmul.f32 %v1338, %v1412
      %v1421 = vmul.f32 %v1339, %v1412
      %v1422 = vmul.f32 %v1340, %v1412
      %v1423 = vmul.f32 %v1341, %v1412
      %v1424 = vmul.f32 %v1342, %v1412
      %v1425 = vmul.f32 %v1343, %v1412
      %v1426 = vmul.f32 %v1344, %v1412
      %v1427 = vmul.f32 %v1345, %v1412
      %v1428 = vmul.f32 %v1346, %v1412
      %v1429 = vmul.f32 %v1347, %v1412
      %v1430 = vmul.f32 %v1348, %v1412
      %v1431 = vmul.f32 %v1349, %v1412
      %v1432 = vmul.f32 %v1350, %v1412
      %v1433 = vmul.f32 %v1351, %v1412
      %v1434 = vmul.f32 %v1352, %v1412
      %v1435 = vmul.f32 %v1353, %v1412
      %v1436 = vmul.f32 %v1354, %v1412
      %v1437 = vmul.f32 %v1355, %v1412
      %v1438 = vmul.f32 %v1356, %v1412
      %v1439 = vmul.f32 %v1357, %v1412
      %v1440 = vmul.f32 %v1358, %v1412
      %v1441 = vmul.f32 %v1359, %v1412
      %v1442 = vmul.f32 %v1360, %v1412
      %v1443 = vmul.f32 %v1361, %v1412
      %v1444 = vmul.f32 %v1362, %v1412
      %v1445 = vadd.f32 %v1377, %v1413
      %v1446 = vadd.f32 %v1378, %v1414
      %v1447 = vadd.f32 %v1379, %v1415
      %v1448 = vadd.f32 %v1380, %v1416
      %v1449 = vadd.f32 %v1381, %v1417
      %v1450 = vadd.f32 %v1382, %v1418
      %v1451 = vadd.f32 %v1383, %v1419
      %v1452 = vadd.f32 %v1384, %v1420
      %v1453 = vadd.f32 %v1385, %v1421
      %v1454 = vadd.f32 %v1386, %v1422
      %v1455 = vadd.f32 %v1387, %v1423
      %v1456 = vadd.f32 %v1388, %v1424
      %v1457 = vadd.f32 %v1389, %v1425
      %v1458 = vadd.f32 %v1390, %v1426
      %v1459 = vadd.f32 %v1391, %v1427
      %v1460 = vadd.f32 %v1392, %v1428
      %v1461 = vadd.f32 %v1393, %v1429
      %v1462 = vadd.f32 %v1394, %v1430
      %v1463 = vadd.f32 %v1395, %v1431
      %v1464 = vadd.f32 %v1396, %v1432
      %v1465 = vadd.f32 %v1397, %v1433
      %v1466 = vadd.f32 %v1398, %v1434
      %v1467 = vadd.f32 %v1399, %v1435
      %v1468 = vadd.f32 %v1400, %v1436
      %v1469 = vadd.f32 %v1401, %v1437
      %v1470 = vadd.f32 %v1402, %v1438
      %v1471 = vadd.f32 %v1403, %v1439
      %v1472 = vadd.f32 %v1404, %v1440
      %v1473 = vadd.f32 %v1405, %v1441
      %v1474 = vadd.f32 %v1406, %v1442
      %v1475 = vadd.f32 %v1407, %v1443
      %v1476 = vadd.f32 %v1408, %v1444
      %v1477 = vlaneseq
      %v1478 = vshrl.u32 %v1477, 7
      %v1479 = vsub.s32 0, %v1478
      %v1480 = vrot.slane %v281, %v1479
      %v1481 = vmul.f32 %v1333, %v1480
      %v1482 = vmul.f32 %v1334, %v1480
      %v1483 = vmul.f32 %v1335, %v1480
      %v1484 = vmul.f32 %v1336, %v1480
      %v1485 = vmul.f32 %v1337, %v1480
      %v1486 = vmul.f32 %v1338, %v1480
      %v1487 = vmul.f32 %v1339, %v1480
      %v1488 = vmul.f32 %v1340, %v1480
      %v1489 = vmul.f32 %v1341, %v1480
      %v1490 = vmul.f32 %v1342, %v1480
      %v1491 = vmul.f32 %v1343, %v1480
      %v1492 = vmul.f32 %v1344, %v1480
      %v1493 = vmul.f32 %v1345, %v1480
      %v1494 = vmul.f32 %v1346, %v1480
      %v1495 = vmul.f32 %v1347, %v1480
      %v1496 = vmul.f32 %v1348, %v1480
      %v1497 = vmul.f32 %v1349, %v1480
      %v1498 = vmul.f32 %v1350, %v1480
      %v1499 = vmul.f32 %v1351, %v1480
      %v1500 = vmul.f32 %v1352, %v1480
      %v1501 = vmul.f32 %v1353, %v1480
      %v1502 = vmul.f32 %v1354, %v1480
      %v1503 = vmul.f32 %v1355, %v1480
      %v1504 = vmul.f32 %v1356, %v1480
      %v1505 = vmul.f32 %v1357, %v1480
      %v1506 = vmul.f32 %v1358, %v1480
      %v1507 = vmul.f32 %v1359, %v1480
      %v1508 = vmul.f32 %v1360, %v1480
      %v1509 = vmul.f32 %v1361, %v1480
      %v1510 = vmul.f32 %v1362, %v1480
      %v1511 = vmul.f32 %v1363, %v1480
      %v1512 = vmul.f32 %v1364, %v1480
      %v1513 = vadd.f32 %v1445, %v1481
      %v1514 = vadd.f32 %v1446, %v1482
      %v1515 = vadd.f32 %v1447, %v1483
      %v1516 = vadd.f32 %v1448, %v1484
      %v1517 = vadd.f32 %v1449, %v1485
      %v1518 = vadd.f32 %v1450, %v1486
      %v1519 = vadd.f32 %v1451, %v1487
      %v1520 = vadd.f32 %v1452, %v1488
      %v1521 = vadd.f32 %v1453, %v1489
      %v1522 = vadd.f32 %v1454, %v1490
      %v1523 = vadd.f32 %v1455, %v1491
      %v1524 = vadd.f32 %v1456, %v1492
      %v1525 = vadd.f32 %v1457, %v1493
      %v1526 = vadd.f32 %v1458, %v1494
      %v1527 = vadd.f32 %v1459, %v1495
      %v1528 = vadd.f32 %v1460, %v1496
      %v1529 = vadd.f32 %v1461, %v1497
      %v1530 = vadd.f32 %v1462, %v1498
      %v1531 = vadd.f32 %v1463, %v1499
      %v1532 = vadd.f32 %v1464, %v1500
      %v1533 = vadd.f32 %v1465, %v1501
      %v1534 = vadd.f32 %v1466, %v1502
      %v1535 = vadd.f32 %v1467, %v1503
      %v1536 = vadd.f32 %v1468, %v1504
      %v1537 = vadd.f32 %v1469, %v1505
      %v1538 = vadd.f32 %v1470, %v1506
      %v1539 = vadd.f32 %v1471, %v1507
      %v1540 = vadd.f32 %v1472, %v1508
      %v1541 = vadd.f32 %v1473, %v1509
      %v1542 = vadd.f32 %v1474, %v1510
      %v1543 = vadd.f32 %v1475, %v1511
      %v1544 = vadd.f32 %v1476, %v1512
      %v1545 = vlaneseq
      %v1546 = vshrl.u32 %v1545, 7
      %v1547 = vsub.s32 7, %v1546
      %v1548 = vrot.slane %v281, %v1547
      %v1549 = vmul.f32 %v1335, %v1548
      %v1550 = vmul.f32 %v1336, %v1548
      %v1551 = vmul.f32 %v1337, %v1548
      %v1552 = vmul.f32 %v1338, %v1548
      %v1553 = vmul.f32 %v1339, %v1548
      %v1554 = vmul.f32 %v1340, %v1548
      %v1555 = vmul.f32 %v1341, %v1548
      %v1556 = vmul.f32 %v1342, %v1548
      %v1557 = vmul.f32 %v1343, %v1548
      %v1558 = vmul.f32 %v1344, %v1548
      %v1559 = vmul.f32 %v1345, %v1548
      %v1560 = vmul.f32 %v1346, %v1548
      %v1561 = vmul.f32 %v1347, %v1548
      %v1562 = vmul.f32 %v1348, %v1548
      %v1563 = vmul.f32 %v1349, %v1548
      %v1564 = vmul.f32 %v1350, %v1548
      %v1565 = vmul.f32 %v1351, %v1548
      %v1566 = vmul.f32 %v1352, %v1548
      %v1567 = vmul.f32 %v1353, %v1548
      %v1568 = vmul.f32 %v1354, %v1548
      %v1569 = vmul.f32 %v1355, %v1548
      %v1570 = vmul.f32 %v1356, %v1548
      %v1571 = vmul.f32 %v1357, %v1548
      %v1572 = vmul.f32 %v1358, %v1548
      %v1573 = vmul.f32 %v1359, %v1548
      %v1574 = vmul.f32 %v1360, %v1548
      %v1575 = vmul.f32 %v1361, %v1548
      %v1576 = vmul.f32 %v1362, %v1548
      %v1577 = vmul.f32 %v1363, %v1548
      %v1578 = vmul.f32 %v1364, %v1548
      %v1579 = vmul.f32 %v1365, %v1548
      %v1580 = vmul.f32 %v1366, %v1548
      %v1581 = vadd.f32 %v1513, %v1549
      %v1582 = vadd.f32 %v1514, %v1550
      %v1583 = vadd.f32 %v1515, %v1551
      %v1584 = vadd.f32 %v1516, %v1552
      %v1585 = vadd.f32 %v1517, %v1553
      %v1586 = vadd.f32 %v1518, %v1554
      %v1587 = vadd.f32 %v1519, %v1555
      %v1588 = vadd.f32 %v1520, %v1556
      %v1589 = vadd.f32 %v1521, %v1557
      %v1590 = vadd.f32 %v1522, %v1558
      %v1591 = vadd.f32 %v1523, %v1559
      %v1592 = vadd.f32 %v1524, %v1560
      %v1593 = vadd.f32 %v1525, %v1561
      %v1594 = vadd.f32 %v1526, %v1562
      %v1595 = vadd.f32 %v1527, %v1563
      %v1596 = vadd.f32 %v1528, %v1564
      %v1597 = vadd.f32 %v1529, %v1565
      %v1598 = vadd.f32 %v1530, %v1566
      %v1599 = vadd.f32 %v1531, %v1567
      %v1600 = vadd.f32 %v1532, %v1568
      %v1601 = vadd.f32 %v1533, %v1569
      %v1602 = vadd.f32 %v1534, %v1570
      %v1603 = vadd.f32 %v1535, %v1571
      %v1604 = vadd.f32 %v1536, %v1572
      %v1605 = vadd.f32 %v1537, %v1573
      %v1606 = vadd.f32 %v1538, %v1574
      %v1607 = vadd.f32 %v1539, %v1575
      %v1608 = vadd.f32 %v1540, %v1576
      %v1609 = vadd.f32 %v1541, %v1577
      %v1610 = vadd.f32 %v1542, %v1578
      %v1611 = vadd.f32 %v1543, %v1579
      %v1612 = vadd.f32 %v1544, %v1580
      %v1613 = vlaneseq
      %v1614 = vshrl.u32 %v1613, 7
      %v1615 = vsub.s32 6, %v1614
      %v1616 = vrot.slane %v282, %v1615
      %v1617 = vmul.f32 %v1337, %v1616
      %v1618 = vmul.f32 %v1338, %v1616
      %v1619 = vmul.f32 %v1339, %v1616
      %v1620 = vmul.f32 %v1340, %v1616
      %v1621 = vmul.f32 %v1341, %v1616
      %v1622 = vmul.f32 %v1342, %v1616
      %v1623 = vmul.f32 %v1343, %v1616
      %v1624 = vmul.f32 %v1344, %v1616
      %v1625 = vmul.f32 %v1345, %v1616
      %v1626 = vmul.f32 %v1346, %v1616
      %v1627 = vmul.f32 %v1347, %v1616
      %v1628 = vmul.f32 %v1348, %v1616
      %v1629 = vmul.f32 %v1349, %v1616
      %v1630 = vmul.f32 %v1350, %v1616
      %v1631 = vmul.f32 %v1351, %v1616
      %v1632 = vmul.f32 %v1352, %v1616
      %v1633 = vmul.f32 %v1353, %v1616
      %v1634 = vmul.f32 %v1354, %v1616
      %v1635 = vmul.f32 %v1355, %v1616
      %v1636 = vmul.f32 %v1356, %v1616
      %v1637 = vmul.f32 %v1357, %v1616
      %v1638 = vmul.f32 %v1358, %v1616
      %v1639 = vmul.f32 %v1359, %v1616
      %v1640 = vmul.f32 %v1360, %v1616
      %v1641 = vmul.f32 %v1361, %v1616
      %v1642 = vmul.f32 %v1362, %v1616
      %v1643 = vmul.f32 %v1363, %v1616
      %v1644 = vmul.f32 %v1364, %v1616
      %v1645 = vmul.f32 %v1365, %v1616
      %v1646 = vmul.f32 %v1366, %v1616
      %v1647 = vmul.f32 %v1367, %v1616
      %v1648 = vmul.f32 %v1368, %v1616
      %v1649 = vadd.f32 %v1581, %v1617
      %v1650 = vadd.f32 %v1582, %v1618
      %v1651 = vadd.f32 %v1583, %v1619
      %v1652 = vadd.f32 %v1584, %v1620
      %v1653 = vadd.f32 %v1585, %v1621
      %v1654 = vadd.f32 %v1586, %v1622
      %v1655 = vadd.f32 %v1587, %v1623
      %v1656 = vadd.f32 %v1588, %v1624
      %v1657 = vadd.f32 %v1589, %v1625
      %v1658 = vadd.f32 %v1590, %v1626
      %v1659 = vadd.f32 %v1591, %v1627
      %v1660 = vadd.f32 %v1592, %v1628
      %v1661 = vadd.f32 %v1593, %v1629
      %v1662 = vadd.f32 %v1594, %v1630
      %v1663 = vadd.f32 %v1595, %v1631
      %v1664 = vadd.f32 %v1596, %v1632
      %v1665 = vadd.f32 %v1597, %v1633
      %v1666 = vadd.f32 %v1598, %v1634
      %v1667 = vadd.f32 %v1599, %v1635
      %v1668 = vadd.f32 %v1600, %v1636
      %v1669 = vadd.f32 %v1601, %v1637
      %v1670 = vadd.f32 %v1602, %v1638
      %v1671 = vadd.f32 %v1603, %v1639
      %v1672 = vadd.f32 %v1604, %v1640
      %v1673 = vadd.f32 %v1605, %v1641
      %v1674 = vadd.f32 %v1606, %v1642
      %v1675 = vadd.f32 %v1607, %v1643
      %v1676 = vadd.f32 %v1608, %v1644
      %v1677 = vadd.f32 %v1609, %v1645
      %v1678 = vadd.f32 %v1610, %v1646
      %v1679 = vadd.f32 %v1611, %v1647
      %v1680 = vadd.f32 %v1612, %v1648
      %v1681 = vlaneseq
      %v1682 = vshrl.u32 %v1681, 7
      %v1683 = vsub.s32 5, %v1682
      %v1684 = vrot.slane %v283, %v1683
      %v1685 = vmul.f32 %v1339, %v1684
      %v1686 = vmul.f32 %v1340, %v1684
      %v1687 = vmul.f32 %v1341, %v1684
      %v1688 = vmul.f32 %v1342, %v1684
      %v1689 = vmul.f32 %v1343, %v1684
      %v1690 = vmul.f32 %v1344, %v1684
      %v1691 = vmul.f32 %v1345, %v1684
      %v1692 = vmul.f32 %v1346, %v1684
      %v1693 = vmul.f32 %v1347, %v1684
      %v1694 = vmul.f32 %v1348, %v1684
      %v1695 = vmul.f32 %v1349, %v1684
      %v1696 = vmul.f32 %v1350, %v1684
      %v1697 = vmul.f32 %v1351, %v1684
      %v1698 = vmul.f32 %v1352, %v1684
      %v1699 = vmul.f32 %v1353, %v1684
      %v1700 = vmul.f32 %v1354, %v1684
      %v1701 = vmul.f32 %v1355, %v1684
      %v1702 = vmul.f32 %v1356, %v1684
      %v1703 = vmul.f32 %v1357, %v1684
      %v1704 = vmul.f32 %v1358, %v1684
      %v1705 = vmul.f32 %v1359, %v1684
      %v1706 = vmul.f32 %v1360, %v1684
      %v1707 = vmul.f32 %v1361, %v1684
      %v1708 = vmul.f32 %v1362, %v1684
      %v1709 = vmul.f32 %v1363, %v1684
      %v1710 = vmul.f32 %v1364, %v1684
      %v1711 = vmul.f32 %v1365, %v1684
      %v1712 = vmul.f32 %v1366, %v1684
      %v1713 = vmul.f32 %v1367, %v1684
      %v1714 = vmul.f32 %v1368, %v1684
      %v1715 = vmul.f32 %v1369, %v1684
      %v1716 = vmul.f32 %v1370, %v1684
      %v1717 = vadd.f32 %v1649, %v1685
      %v1718 = vadd.f32 %v1650, %v1686
      %v1719 = vadd.f32 %v1651, %v1687
      %v1720 = vadd.f32 %v1652, %v1688
      %v1721 = vadd.f32 %v1653, %v1689
      %v1722 = vadd.f32 %v1654, %v1690
      %v1723 = vadd.f32 %v1655, %v1691
      %v1724 = vadd.f32 %v1656, %v1692
      %v1725 = vadd.f32 %v1657, %v1693
      %v1726 = vadd.f32 %v1658, %v1694
      %v1727 = vadd.f32 %v1659, %v1695
      %v1728 = vadd.f32 %v1660, %v1696
      %v1729 = vadd.f32 %v1661, %v1697
      %v1730 = vadd.f32 %v1662, %v1698
      %v1731 = vadd.f32 %v1663, %v1699
      %v1732 = vadd.f32 %v1664, %v1700
      %v1733 = vadd.f32 %v1665, %v1701
      %v1734 = vadd.f32 %v1666, %v1702
      %v1735 = vadd.f32 %v1667, %v1703
      %v1736 = vadd.f32 %v1668, %v1704
      %v1737 = vadd.f32 %v1669, %v1705
      %v1738 = vadd.f32 %v1670, %v1706
      %v1739 = vadd.f32 %v1671, %v1707
      %v1740 = vadd.f32 %v1672, %v1708
      %v1741 = vadd.f32 %v1673, %v1709
      %v1742 = vadd.f32 %v1674, %v1710
      %v1743 = vadd.f32 %v1675, %v1711
      %v1744 = vadd.f32 %v1676, %v1712
      %v1745 = vadd.f32 %v1677, %v1713
      %v1746 = vadd.f32 %v1678, %v1714
      %v1747 = vadd.f32 %v1679, %v1715
      %v1748 = vadd.f32 %v1680, %v1716
      %v1749 = vlaneseq
      %v1750 = vshrl.u32 %v1749, 7
      %v1751 = vsub.s32 4, %v1750
      %v1752 = vrot.slane %v284, %v1751
      %v1753 = vmul.f32 %v1341, %v1752
      %v1754 = vmul.f32 %v1342, %v1752
      %v1755 = vmul.f32 %v1343, %v1752
      %v1756 = vmul.f32 %v1344, %v1752
      %v1757 = vmul.f32 %v1345, %v1752
      %v1758 = vmul.f32 %v1346, %v1752
      %v1759 = vmul.f32 %v1347, %v1752
      %v1760 = vmul.f32 %v1348, %v1752
      %v1761 = vmul.f32 %v1349, %v1752
      %v1762 = vmul.f32 %v1350, %v1752
      %v1763 = vmul.f32 %v1351, %v1752
      %v1764 = vmul.f32 %v1352, %v1752
      %v1765 = vmul.f32 %v1353, %v1752
      %v1766 = vmul.f32 %v1354, %v1752
      %v1767 = vmul.f32 %v1355, %v1752
      %v1768 = vmul.f32 %v1356, %v1752
      %v1769 = vmul.f32 %v1357, %v1752
      %v1770 = vmul.f32 %v1358, %v1752
      %v1771 = vmul.f32 %v1359, %v1752
      %v1772 = vmul.f32 %v1360, %v1752
      %v1773 = vmul.f32 %v1361, %v1752
      %v1774 = vmul.f32 %v1362, %v1752
      %v1775 = vmul.f32 %v1363, %v1752
      %v1776 = vmul.f32 %v1364, %v1752
      %v1777 = vmul.f32 %v1365, %v1752
      %v1778 = vmul.f32 %v1366, %v1752
      %v1779 = vmul.f32 %v1367, %v1752
      %v1780 = vmul.f32 %v1368, %v1752
      %v1781 = vmul.f32 %v1369, %v1752
      %v1782 = vmul.f32 %v1370, %v1752
      %v1783 = vmul.f32 %v1371, %v1752
      %v1784 = vmul.f32 %v1372, %v1752
      %v1785 = vadd.f32 %v1717, %v1753
      %v1786 = vadd.f32 %v1718, %v1754
      %v1787 = vadd.f32 %v1719, %v1755
      %v1788 = vadd.f32 %v1720, %v1756
      %v1789 = vadd.f32 %v1721, %v1757
      %v1790 = vadd.f32 %v1722, %v1758
      %v1791 = vadd.f32 %v1723, %v1759
      %v1792 = vadd.f32 %v1724, %v1760
      %v1793 = vadd.f32 %v1725, %v1761
      %v1794 = vadd.f32 %v1726, %v1762
      %v1795 = vadd.f32 %v1727, %v1763
      %v1796 = vadd.f32 %v1728, %v1764
      %v1797 = vadd.f32 %v1729, %v1765
      %v1798 = vadd.f32 %v1730, %v1766
      %v1799 = vadd.f32 %v1731, %v1767
      %v1800 = vadd.f32 %v1732, %v1768
      %v1801 = vadd.f32 %v1733, %v1769
      %v1802 = vadd.f32 %v1734, %v1770
      %v1803 = vadd.f32 %v1735, %v1771
      %v1804 = vadd.f32 %v1736, %v1772
      %v1805 = vadd.f32 %v1737, %v1773
      %v1806 = vadd.f32 %v1738, %v1774
      %v1807 = vadd.f32 %v1739, %v1775
      %v1808 = vadd.f32 %v1740, %v1776
      %v1809 = vadd.f32 %v1741, %v1777
      %v1810 = vadd.f32 %v1742, %v1778
      %v1811 = vadd.f32 %v1743, %v1779
      %v1812 = vadd.f32 %v1744, %v1780
      %v1813 = vadd.f32 %v1745, %v1781
      %v1814 = vadd.f32 %v1746, %v1782
      %v1815 = vadd.f32 %v1747, %v1783
      %v1816 = vadd.f32 %v1748, %v1784
      %v1817 = vadd.f32 %v1297, %v1785
      %v1818 = vadd.f32 %v1298, %v1786
      %v1819 = vadd.f32 %v1299, %v1787
      %v1820 = vadd.f32 %v1300, %v1788
      %v1821 = vadd.f32 %v1301, %v1789
      %v1822 = vadd.f32 %v1302, %v1790
      %v1823 = vadd.f32 %v1303, %v1791
      %v1824 = vadd.f32 %v1304, %v1792
      %v1825 = vadd.f32 %v1305, %v1793
      %v1826 = vadd.f32 %v1306, %v1794
      %v1827 = vadd.f32 %v1307, %v1795
      %v1828 = vadd.f32 %v1308, %v1796
      %v1829 = vadd.f32 %v1309, %v1797
      %v1830 = vadd.f32 %v1310, %v1798
      %v1831 = vadd.f32 %v1311, %v1799
      %v1832 = vadd.f32 %v1312, %v1800
      %v1833 = vadd.f32 %v1313, %v1801
      %v1834 = vadd.f32 %v1314, %v1802
      %v1835 = vadd.f32 %v1315, %v1803
      %v1836 = vadd.f32 %v1316, %v1804
      %v1837 = vadd.f32 %v1317, %v1805
      %v1838 = vadd.f32 %v1318, %v1806
      %v1839 = vadd.f32 %v1319, %v1807
      %v1840 = vadd.f32 %v1320, %v1808
      %v1841 = vadd.f32 %v1321, %v1809
      %v1842 = vadd.f32 %v1322, %v1810
      %v1843 = vadd.f32 %v1323, %v1811
      %v1844 = vadd.f32 %v1324, %v1812
      %v1845 = vadd.f32 %v1325, %v1813
      %v1846 = vadd.f32 %v1326, %v1814
      %v1847 = vadd.f32 %v1327, %v1815
      %v1848 = vadd.f32 %v1328, %v1816
      %v1849 = vld [vmem:[%s288 + $0x3] sm:$0xff]
      %v1850 = vld [vmem:[%s288 + $0xb] sm:$0xff]
      %v1851 = vld [vmem:[%s288 + $0x1b] sm:$0xff]
      %v1852 = vld [vmem:[%s288 + $0x23] sm:$0xff]
      %v1853 = vld [vmem:[%s288 + $0x33] sm:$0xff]
      %v1854 = vld [vmem:[%s288 + $0x3b] sm:$0xff]
      %v1855 = vld [vmem:[%s288 + $0x4b] sm:$0xff]
      %v1856 = vld [vmem:[%s288 + $0x53] sm:$0xff]
      %v1857 = vld [vmem:[%s288 + $0x63] sm:$0xff]
      %v1858 = vld [vmem:[%s288 + $0x6b] sm:$0xff]
      %v1859 = vld [vmem:[%s288 + $0x7b] sm:$0xff]
      %v1860 = vld [vmem:[%s288 + $0x83] sm:$0xff]
      %v1861 = vld [vmem:[%s288 + $0x93] sm:$0xff]
      %v1862 = vld [vmem:[%s288 + $0x9b] sm:$0xff]
      %v1863 = vld [vmem:[%s288 + $0xab] sm:$0xff]
      %v1864 = vld [vmem:[%s288 + $0xb3] sm:$0xff]
      %v1865 = vld [vmem:[%s288 + $0xc3] sm:$0xff]
      %v1866 = vld [vmem:[%s288 + $0xcb] sm:$0xff]
      %v1867 = vld [vmem:[%s288 + $0xdb] sm:$0xff]
      %v1868 = vld [vmem:[%s288 + $0xe3] sm:$0xff]
      %v1869 = vld [vmem:[%s288 + $0xf3] sm:$0xff]
      %v1870 = vld [vmem:[%s288 + $0xfb] sm:$0xff]
      %v1871 = vld [vmem:[%s288 + $0x10b] sm:$0xff]
      %v1872 = vld [vmem:[%s288 + $0x113] sm:$0xff]
      %v1873 = vld [vmem:[%s288 + $0x123] sm:$0xff]
      %v1874 = vld [vmem:[%s288 + $0x12b] sm:$0xff]
      %v1875 = vld [vmem:[%s288 + $0x13b] sm:$0xff]
      %v1876 = vld [vmem:[%s288 + $0x143] sm:$0xff]
      %v1877 = vld [vmem:[%s288 + $0x153] sm:$0xff]
      %v1878 = vld [vmem:[%s288 + $0x15b] sm:$0xff]
      %v1879 = vld [vmem:[%s288 + $0x16b] sm:$0xff]
      %v1880 = vld [vmem:[%s288 + $0x173] sm:$0xff]
      %v1881 = vld [vmem:[%s288 + $0x183] sm:$0xff]
      %v1882 = vld [vmem:[%s288 + $0x18b] sm:$0xff]
      %v1883 = vld [vmem:[%s288 + $0x19b] sm:$0xff]
      %v1884 = vld [vmem:[%s288 + $0x1a3] sm:$0xff]
      %v1885 = vld [vmem:[%s288 + $0x1b3] sm:$0xff]
      %v1886 = vld [vmem:[%s288 + $0x1bb] sm:$0xff]
      %v1887 = vld [vmem:[%s288 + $0x1cb] sm:$0xff]
      %v1888 = vld [vmem:[%s288 + $0x1d3] sm:$0xff]
      %v1889 = vld [vmem:[%s288 + $0x1e3] sm:$0xff]
      %v1890 = vld [vmem:[%s288 + $0x1eb] sm:$0xff]
      %v1891 = vld [vmem:[%s288 + $0x1fb] sm:$0xff]
      %v1892 = vld [vmem:[%s288 + $0x203] sm:$0xff]
      %v1893 = vlaneseq
      %v1894 = vshrl.u32 %v1893, 7
      %v1895 = vsub.s32 3, %v1894
      %v1896 = vrot.slane %v279, %v1895
      %v1897 = vmul.f32 %v1849, %v1896
      %v1898 = vmul.f32 %v1850, %v1896
      %v1899 = vmul.f32 %v1851, %v1896
      %v1900 = vmul.f32 %v1852, %v1896
      %v1901 = vmul.f32 %v1853, %v1896
      %v1902 = vmul.f32 %v1854, %v1896
      %v1903 = vmul.f32 %v1855, %v1896
      %v1904 = vmul.f32 %v1856, %v1896
      %v1905 = vmul.f32 %v1857, %v1896
      %v1906 = vmul.f32 %v1858, %v1896
      %v1907 = vmul.f32 %v1859, %v1896
      %v1908 = vmul.f32 %v1860, %v1896
      %v1909 = vmul.f32 %v1861, %v1896
      %v1910 = vmul.f32 %v1862, %v1896
      %v1911 = vmul.f32 %v1863, %v1896
      %v1912 = vmul.f32 %v1864, %v1896
      %v1913 = vmul.f32 %v1865, %v1896
      %v1914 = vmul.f32 %v1866, %v1896
      %v1915 = vmul.f32 %v1867, %v1896
      %v1916 = vmul.f32 %v1868, %v1896
      %v1917 = vmul.f32 %v1869, %v1896
      %v1918 = vmul.f32 %v1870, %v1896
      %v1919 = vmul.f32 %v1871, %v1896
      %v1920 = vmul.f32 %v1872, %v1896
      %v1921 = vmul.f32 %v1873, %v1896
      %v1922 = vmul.f32 %v1874, %v1896
      %v1923 = vmul.f32 %v1875, %v1896
      %v1924 = vmul.f32 %v1876, %v1896
      %v1925 = vmul.f32 %v1877, %v1896
      %v1926 = vmul.f32 %v1878, %v1896
      %v1927 = vmul.f32 %v1879, %v1896
      %v1928 = vmul.f32 %v1880, %v1896
      %v1929 = vlaneseq
      %v1930 = vshrl.u32 %v1929, 7
      %v1931 = vsub.s32 2, %v1930
      %v1932 = vrot.slane %v280, %v1931
      %v1933 = vmul.f32 %v1851, %v1932
      %v1934 = vmul.f32 %v1852, %v1932
      %v1935 = vmul.f32 %v1853, %v1932
      %v1936 = vmul.f32 %v1854, %v1932
      %v1937 = vmul.f32 %v1855, %v1932
      %v1938 = vmul.f32 %v1856, %v1932
      %v1939 = vmul.f32 %v1857, %v1932
      %v1940 = vmul.f32 %v1858, %v1932
      %v1941 = vmul.f32 %v1859, %v1932
      %v1942 = vmul.f32 %v1860, %v1932
      %v1943 = vmul.f32 %v1861, %v1932
      %v1944 = vmul.f32 %v1862, %v1932
      %v1945 = vmul.f32 %v1863, %v1932
      %v1946 = vmul.f32 %v1864, %v1932
      %v1947 = vmul.f32 %v1865, %v1932
      %v1948 = vmul.f32 %v1866, %v1932
      %v1949 = vmul.f32 %v1867, %v1932
      %v1950 = vmul.f32 %v1868, %v1932
      %v1951 = vmul.f32 %v1869, %v1932
      %v1952 = vmul.f32 %v1870, %v1932
      %v1953 = vmul.f32 %v1871, %v1932
      %v1954 = vmul.f32 %v1872, %v1932
      %v1955 = vmul.f32 %v1873, %v1932
      %v1956 = vmul.f32 %v1874, %v1932
      %v1957 = vmul.f32 %v1875, %v1932
      %v1958 = vmul.f32 %v1876, %v1932
      %v1959 = vmul.f32 %v1877, %v1932
      %v1960 = vmul.f32 %v1878, %v1932
      %v1961 = vmul.f32 %v1879, %v1932
      %v1962 = vmul.f32 %v1880, %v1932
      %v1963 = vmul.f32 %v1881, %v1932
      %v1964 = vmul.f32 %v1882, %v1932
      %v1965 = vadd.f32 %v1897, %v1933
      %v1966 = vadd.f32 %v1898, %v1934
      %v1967 = vadd.f32 %v1899, %v1935
      %v1968 = vadd.f32 %v1900, %v1936
      %v1969 = vadd.f32 %v1901, %v1937
      %v1970 = vadd.f32 %v1902, %v1938
      %v1971 = vadd.f32 %v1903, %v1939
      %v1972 = vadd.f32 %v1904, %v1940
      %v1973 = vadd.f32 %v1905, %v1941
      %v1974 = vadd.f32 %v1906, %v1942
      %v1975 = vadd.f32 %v1907, %v1943
      %v1976 = vadd.f32 %v1908, %v1944
      %v1977 = vadd.f32 %v1909, %v1945
      %v1978 = vadd.f32 %v1910, %v1946
      %v1979 = vadd.f32 %v1911, %v1947
      %v1980 = vadd.f32 %v1912, %v1948
      %v1981 = vadd.f32 %v1913, %v1949
      %v1982 = vadd.f32 %v1914, %v1950
      %v1983 = vadd.f32 %v1915, %v1951
      %v1984 = vadd.f32 %v1916, %v1952
      %v1985 = vadd.f32 %v1917, %v1953
      %v1986 = vadd.f32 %v1918, %v1954
      %v1987 = vadd.f32 %v1919, %v1955
      %v1988 = vadd.f32 %v1920, %v1956
      %v1989 = vadd.f32 %v1921, %v1957
      %v1990 = vadd.f32 %v1922, %v1958
      %v1991 = vadd.f32 %v1923, %v1959
      %v1992 = vadd.f32 %v1924, %v1960
      %v1993 = vadd.f32 %v1925, %v1961
      %v1994 = vadd.f32 %v1926, %v1962
      %v1995 = vadd.f32 %v1927, %v1963
      %v1996 = vadd.f32 %v1928, %v1964
      %v1997 = vlaneseq
      %v1998 = vshrl.u32 %v1997, 7
      %v1999 = vsub.s32 1, %v1998
      %v2000 = vrot.slane %v281, %v1999
      %v2001 = vmul.f32 %v1853, %v2000
      %v2002 = vmul.f32 %v1854, %v2000
      %v2003 = vmul.f32 %v1855, %v2000
      %v2004 = vmul.f32 %v1856, %v2000
      %v2005 = vmul.f32 %v1857, %v2000
      %v2006 = vmul.f32 %v1858, %v2000
      %v2007 = vmul.f32 %v1859, %v2000
      %v2008 = vmul.f32 %v1860, %v2000
      %v2009 = vmul.f32 %v1861, %v2000
      %v2010 = vmul.f32 %v1862, %v2000
      %v2011 = vmul.f32 %v1863, %v2000
      %v2012 = vmul.f32 %v1864, %v2000
      %v2013 = vmul.f32 %v1865, %v2000
      %v2014 = vmul.f32 %v1866, %v2000
      %v2015 = vmul.f32 %v1867, %v2000
      %v2016 = vmul.f32 %v1868, %v2000
      %v2017 = vmul.f32 %v1869, %v2000
      %v2018 = vmul.f32 %v1870, %v2000
      %v2019 = vmul.f32 %v1871, %v2000
      %v2020 = vmul.f32 %v1872, %v2000
      %v2021 = vmul.f32 %v1873, %v2000
      %v2022 = vmul.f32 %v1874, %v2000
      %v2023 = vmul.f32 %v1875, %v2000
      %v2024 = vmul.f32 %v1876, %v2000
      %v2025 = vmul.f32 %v1877, %v2000
      %v2026 = vmul.f32 %v1878, %v2000
      %v2027 = vmul.f32 %v1879, %v2000
      %v2028 = vmul.f32 %v1880, %v2000
      %v2029 = vmul.f32 %v1881, %v2000
      %v2030 = vmul.f32 %v1882, %v2000
      %v2031 = vmul.f32 %v1883, %v2000
      %v2032 = vmul.f32 %v1884, %v2000
      %v2033 = vadd.f32 %v1965, %v2001
      %v2034 = vadd.f32 %v1966, %v2002
      %v2035 = vadd.f32 %v1967, %v2003
      %v2036 = vadd.f32 %v1968, %v2004
      %v2037 = vadd.f32 %v1969, %v2005
      %v2038 = vadd.f32 %v1970, %v2006
      %v2039 = vadd.f32 %v1971, %v2007
      %v2040 = vadd.f32 %v1972, %v2008
      %v2041 = vadd.f32 %v1973, %v2009
      %v2042 = vadd.f32 %v1974, %v2010
      %v2043 = vadd.f32 %v1975, %v2011
      %v2044 = vadd.f32 %v1976, %v2012
      %v2045 = vadd.f32 %v1977, %v2013
      %v2046 = vadd.f32 %v1978, %v2014
      %v2047 = vadd.f32 %v1979, %v2015
      %v2048 = vadd.f32 %v1980, %v2016
      %v2049 = vadd.f32 %v1981, %v2017
      %v2050 = vadd.f32 %v1982, %v2018
      %v2051 = vadd.f32 %v1983, %v2019
      %v2052 = vadd.f32 %v1984, %v2020
      %v2053 = vadd.f32 %v1985, %v2021
      %v2054 = vadd.f32 %v1986, %v2022
      %v2055 = vadd.f32 %v1987, %v2023
      %v2056 = vadd.f32 %v1988, %v2024
      %v2057 = vadd.f32 %v1989, %v2025
      %v2058 = vadd.f32 %v1990, %v2026
      %v2059 = vadd.f32 %v1991, %v2027
      %v2060 = vadd.f32 %v1992, %v2028
      %v2061 = vadd.f32 %v1993, %v2029
      %v2062 = vadd.f32 %v1994, %v2030
      %v2063 = vadd.f32 %v1995, %v2031
      %v2064 = vadd.f32 %v1996, %v2032
      %v2065 = vlaneseq
      %v2066 = vshrl.u32 %v2065, 7
      %v2067 = vsub.s32 0, %v2066
      %v2068 = vrot.slane %v282, %v2067
      %v2069 = vmul.f32 %v1855, %v2068
      %v2070 = vmul.f32 %v1856, %v2068
      %v2071 = vmul.f32 %v1857, %v2068
      %v2072 = vmul.f32 %v1858, %v2068
      %v2073 = vmul.f32 %v1859, %v2068
      %v2074 = vmul.f32 %v1860, %v2068
      %v2075 = vmul.f32 %v1861, %v2068
      %v2076 = vmul.f32 %v1862, %v2068
      %v2077 = vmul.f32 %v1863, %v2068
      %v2078 = vmul.f32 %v1864, %v2068
      %v2079 = vmul.f32 %v1865, %v2068
      %v2080 = vmul.f32 %v1866, %v2068
      %v2081 = vmul.f32 %v1867, %v2068
      %v2082 = vmul.f32 %v1868, %v2068
      %v2083 = vmul.f32 %v1869, %v2068
      %v2084 = vmul.f32 %v1870, %v2068
      %v2085 = vmul.f32 %v1871, %v2068
      %v2086 = vmul.f32 %v1872, %v2068
      %v2087 = vmul.f32 %v1873, %v2068
      %v2088 = vmul.f32 %v1874, %v2068
      %v2089 = vmul.f32 %v1875, %v2068
      %v2090 = vmul.f32 %v1876, %v2068
      %v2091 = vmul.f32 %v1877, %v2068
      %v2092 = vmul.f32 %v1878, %v2068
      %v2093 = vmul.f32 %v1879, %v2068
      %v2094 = vmul.f32 %v1880, %v2068
      %v2095 = vmul.f32 %v1881, %v2068
      %v2096 = vmul.f32 %v1882, %v2068
      %v2097 = vmul.f32 %v1883, %v2068
      %v2098 = vmul.f32 %v1884, %v2068
      %v2099 = vmul.f32 %v1885, %v2068
      %v2100 = vmul.f32 %v1886, %v2068
      %v2101 = vadd.f32 %v2033, %v2069
      %v2102 = vadd.f32 %v2034, %v2070
      %v2103 = vadd.f32 %v2035, %v2071
      %v2104 = vadd.f32 %v2036, %v2072
      %v2105 = vadd.f32 %v2037, %v2073
      %v2106 = vadd.f32 %v2038, %v2074
      %v2107 = vadd.f32 %v2039, %v2075
      %v2108 = vadd.f32 %v2040, %v2076
      %v2109 = vadd.f32 %v2041, %v2077
      %v2110 = vadd.f32 %v2042, %v2078
      %v2111 = vadd.f32 %v2043, %v2079
      %v2112 = vadd.f32 %v2044, %v2080
      %v2113 = vadd.f32 %v2045, %v2081
      %v2114 = vadd.f32 %v2046, %v2082
      %v2115 = vadd.f32 %v2047, %v2083
      %v2116 = vadd.f32 %v2048, %v2084
      %v2117 = vadd.f32 %v2049, %v2085
      %v2118 = vadd.f32 %v2050, %v2086
      %v2119 = vadd.f32 %v2051, %v2087
      %v2120 = vadd.f32 %v2052, %v2088
      %v2121 = vadd.f32 %v2053, %v2089
      %v2122 = vadd.f32 %v2054, %v2090
      %v2123 = vadd.f32 %v2055, %v2091
      %v2124 = vadd.f32 %v2056, %v2092
      %v2125 = vadd.f32 %v2057, %v2093
      %v2126 = vadd.f32 %v2058, %v2094
      %v2127 = vadd.f32 %v2059, %v2095
      %v2128 = vadd.f32 %v2060, %v2096
      %v2129 = vadd.f32 %v2061, %v2097
      %v2130 = vadd.f32 %v2062, %v2098
      %v2131 = vadd.f32 %v2063, %v2099
      %v2132 = vadd.f32 %v2064, %v2100
      %v2133 = vlaneseq
      %v2134 = vshrl.u32 %v2133, 7
      %v2135 = vsub.s32 7, %v2134
      %v2136 = vrot.slane %v282, %v2135
      %v2137 = vmul.f32 %v1857, %v2136
      %v2138 = vmul.f32 %v1858, %v2136
      %v2139 = vmul.f32 %v1859, %v2136
      %v2140 = vmul.f32 %v1860, %v2136
      %v2141 = vmul.f32 %v1861, %v2136
      %v2142 = vmul.f32 %v1862, %v2136
      %v2143 = vmul.f32 %v1863, %v2136
      %v2144 = vmul.f32 %v1864, %v2136
      %v2145 = vmul.f32 %v1865, %v2136
      %v2146 = vmul.f32 %v1866, %v2136
      %v2147 = vmul.f32 %v1867, %v2136
      %v2148 = vmul.f32 %v1868, %v2136
      %v2149 = vmul.f32 %v1869, %v2136
      %v2150 = vmul.f32 %v1870, %v2136
      %v2151 = vmul.f32 %v1871, %v2136
      %v2152 = vmul.f32 %v1872, %v2136
      %v2153 = vmul.f32 %v1873, %v2136
      %v2154 = vmul.f32 %v1874, %v2136
      %v2155 = vmul.f32 %v1875, %v2136
      %v2156 = vmul.f32 %v1876, %v2136
      %v2157 = vmul.f32 %v1877, %v2136
      %v2158 = vmul.f32 %v1878, %v2136
      %v2159 = vmul.f32 %v1879, %v2136
      %v2160 = vmul.f32 %v1880, %v2136
      %v2161 = vmul.f32 %v1881, %v2136
      %v2162 = vmul.f32 %v1882, %v2136
      %v2163 = vmul.f32 %v1883, %v2136
      %v2164 = vmul.f32 %v1884, %v2136
      %v2165 = vmul.f32 %v1885, %v2136
      %v2166 = vmul.f32 %v1886, %v2136
      %v2167 = vmul.f32 %v1887, %v2136
      %v2168 = vmul.f32 %v1888, %v2136
      %v2169 = vadd.f32 %v2101, %v2137
      %v2170 = vadd.f32 %v2102, %v2138
      %v2171 = vadd.f32 %v2103, %v2139
      %v2172 = vadd.f32 %v2104, %v2140
      %v2173 = vadd.f32 %v2105, %v2141
      %v2174 = vadd.f32 %v2106, %v2142
      %v2175 = vadd.f32 %v2107, %v2143
      %v2176 = vadd.f32 %v2108, %v2144
      %v2177 = vadd.f32 %v2109, %v2145
      %v2178 = vadd.f32 %v2110, %v2146
      %v2179 = vadd.f32 %v2111, %v2147
      %v2180 = vadd.f32 %v2112, %v2148
      %v2181 = vadd.f32 %v2113, %v2149
      %v2182 = vadd.f32 %v2114, %v2150
      %v2183 = vadd.f32 %v2115, %v2151
      %v2184 = vadd.f32 %v2116, %v2152
      %v2185 = vadd.f32 %v2117, %v2153
      %v2186 = vadd.f32 %v2118, %v2154
      %v2187 = vadd.f32 %v2119, %v2155
      %v2188 = vadd.f32 %v2120, %v2156
      %v2189 = vadd.f32 %v2121, %v2157
      %v2190 = vadd.f32 %v2122, %v2158
      %v2191 = vadd.f32 %v2123, %v2159
      %v2192 = vadd.f32 %v2124, %v2160
      %v2193 = vadd.f32 %v2125, %v2161
      %v2194 = vadd.f32 %v2126, %v2162
      %v2195 = vadd.f32 %v2127, %v2163
      %v2196 = vadd.f32 %v2128, %v2164
      %v2197 = vadd.f32 %v2129, %v2165
      %v2198 = vadd.f32 %v2130, %v2166
      %v2199 = vadd.f32 %v2131, %v2167
      %v2200 = vadd.f32 %v2132, %v2168
      %v2201 = vlaneseq
      %v2202 = vshrl.u32 %v2201, 7
      %v2203 = vsub.s32 6, %v2202
      %v2204 = vrot.slane %v283, %v2203
      %v2205 = vmul.f32 %v1859, %v2204
      %v2206 = vmul.f32 %v1860, %v2204
      %v2207 = vmul.f32 %v1861, %v2204
      %v2208 = vmul.f32 %v1862, %v2204
      %v2209 = vmul.f32 %v1863, %v2204
      %v2210 = vmul.f32 %v1864, %v2204
      %v2211 = vmul.f32 %v1865, %v2204
      %v2212 = vmul.f32 %v1866, %v2204
      %v2213 = vmul.f32 %v1867, %v2204
      %v2214 = vmul.f32 %v1868, %v2204
      %v2215 = vmul.f32 %v1869, %v2204
      %v2216 = vmul.f32 %v1870, %v2204
      %v2217 = vmul.f32 %v1871, %v2204
      %v2218 = vmul.f32 %v1872, %v2204
      %v2219 = vmul.f32 %v1873, %v2204
      %v2220 = vmul.f32 %v1874, %v2204
      %v2221 = vmul.f32 %v1875, %v2204
      %v2222 = vmul.f32 %v1876, %v2204
      %v2223 = vmul.f32 %v1877, %v2204
      %v2224 = vmul.f32 %v1878, %v2204
      %v2225 = vmul.f32 %v1879, %v2204
      %v2226 = vmul.f32 %v1880, %v2204
      %v2227 = vmul.f32 %v1881, %v2204
      %v2228 = vmul.f32 %v1882, %v2204
      %v2229 = vmul.f32 %v1883, %v2204
      %v2230 = vmul.f32 %v1884, %v2204
      %v2231 = vmul.f32 %v1885, %v2204
      %v2232 = vmul.f32 %v1886, %v2204
      %v2233 = vmul.f32 %v1887, %v2204
      %v2234 = vmul.f32 %v1888, %v2204
      %v2235 = vmul.f32 %v1889, %v2204
      %v2236 = vmul.f32 %v1890, %v2204
      %v2237 = vadd.f32 %v2169, %v2205
      %v2238 = vadd.f32 %v2170, %v2206
      %v2239 = vadd.f32 %v2171, %v2207
      %v2240 = vadd.f32 %v2172, %v2208
      %v2241 = vadd.f32 %v2173, %v2209
      %v2242 = vadd.f32 %v2174, %v2210
      %v2243 = vadd.f32 %v2175, %v2211
      %v2244 = vadd.f32 %v2176, %v2212
      %v2245 = vadd.f32 %v2177, %v2213
      %v2246 = vadd.f32 %v2178, %v2214
      %v2247 = vadd.f32 %v2179, %v2215
      %v2248 = vadd.f32 %v2180, %v2216
      %v2249 = vadd.f32 %v2181, %v2217
      %v2250 = vadd.f32 %v2182, %v2218
      %v2251 = vadd.f32 %v2183, %v2219
      %v2252 = vadd.f32 %v2184, %v2220
      %v2253 = vadd.f32 %v2185, %v2221
      %v2254 = vadd.f32 %v2186, %v2222
      %v2255 = vadd.f32 %v2187, %v2223
      %v2256 = vadd.f32 %v2188, %v2224
      %v2257 = vadd.f32 %v2189, %v2225
      %v2258 = vadd.f32 %v2190, %v2226
      %v2259 = vadd.f32 %v2191, %v2227
      %v2260 = vadd.f32 %v2192, %v2228
      %v2261 = vadd.f32 %v2193, %v2229
      %v2262 = vadd.f32 %v2194, %v2230
      %v2263 = vadd.f32 %v2195, %v2231
      %v2264 = vadd.f32 %v2196, %v2232
      %v2265 = vadd.f32 %v2197, %v2233
      %v2266 = vadd.f32 %v2198, %v2234
      %v2267 = vadd.f32 %v2199, %v2235
      %v2268 = vadd.f32 %v2200, %v2236
      %v2269 = vlaneseq
      %v2270 = vshrl.u32 %v2269, 7
      %v2271 = vsub.s32 5, %v2270
      %v2272 = vrot.slane %v284, %v2271
      %v2273 = vmul.f32 %v1861, %v2272
      %v2274 = vmul.f32 %v1862, %v2272
      %v2275 = vmul.f32 %v1863, %v2272
      %v2276 = vmul.f32 %v1864, %v2272
      %v2277 = vmul.f32 %v1865, %v2272
      %v2278 = vmul.f32 %v1866, %v2272
      %v2279 = vmul.f32 %v1867, %v2272
      %v2280 = vmul.f32 %v1868, %v2272
      %v2281 = vmul.f32 %v1869, %v2272
      %v2282 = vmul.f32 %v1870, %v2272
      %v2283 = vmul.f32 %v1871, %v2272
      %v2284 = vmul.f32 %v1872, %v2272
      %v2285 = vmul.f32 %v1873, %v2272
      %v2286 = vmul.f32 %v1874, %v2272
      %v2287 = vmul.f32 %v1875, %v2272
      %v2288 = vmul.f32 %v1876, %v2272
      %v2289 = vmul.f32 %v1877, %v2272
      %v2290 = vmul.f32 %v1878, %v2272
      %v2291 = vmul.f32 %v1879, %v2272
      %v2292 = vmul.f32 %v1880, %v2272
      %v2293 = vmul.f32 %v1881, %v2272
      %v2294 = vmul.f32 %v1882, %v2272
      %v2295 = vmul.f32 %v1883, %v2272
      %v2296 = vmul.f32 %v1884, %v2272
      %v2297 = vmul.f32 %v1885, %v2272
      %v2298 = vmul.f32 %v1886, %v2272
      %v2299 = vmul.f32 %v1887, %v2272
      %v2300 = vmul.f32 %v1888, %v2272
      %v2301 = vmul.f32 %v1889, %v2272
      %v2302 = vmul.f32 %v1890, %v2272
      %v2303 = vmul.f32 %v1891, %v2272
      %v2304 = vmul.f32 %v1892, %v2272
      %v2305 = vadd.f32 %v2237, %v2273
      %v2306 = vadd.f32 %v2238, %v2274
      %v2307 = vadd.f32 %v2239, %v2275
      %v2308 = vadd.f32 %v2240, %v2276
      %v2309 = vadd.f32 %v2241, %v2277
      %v2310 = vadd.f32 %v2242, %v2278
      %v2311 = vadd.f32 %v2243, %v2279
      %v2312 = vadd.f32 %v2244, %v2280
      %v2313 = vadd.f32 %v2245, %v2281
      %v2314 = vadd.f32 %v2246, %v2282
      %v2315 = vadd.f32 %v2247, %v2283
      %v2316 = vadd.f32 %v2248, %v2284
      %v2317 = vadd.f32 %v2249, %v2285
      %v2318 = vadd.f32 %v2250, %v2286
      %v2319 = vadd.f32 %v2251, %v2287
      %v2320 = vadd.f32 %v2252, %v2288
      %v2321 = vadd.f32 %v2253, %v2289
      %v2322 = vadd.f32 %v2254, %v2290
      %v2323 = vadd.f32 %v2255, %v2291
      %v2324 = vadd.f32 %v2256, %v2292
      %v2325 = vadd.f32 %v2257, %v2293
      %v2326 = vadd.f32 %v2258, %v2294
      %v2327 = vadd.f32 %v2259, %v2295
      %v2328 = vadd.f32 %v2260, %v2296
      %v2329 = vadd.f32 %v2261, %v2297
      %v2330 = vadd.f32 %v2262, %v2298
      %v2331 = vadd.f32 %v2263, %v2299
      %v2332 = vadd.f32 %v2264, %v2300
      %v2333 = vadd.f32 %v2265, %v2301
      %v2334 = vadd.f32 %v2266, %v2302
      %v2335 = vadd.f32 %v2267, %v2303
      %v2336 = vadd.f32 %v2268, %v2304
      %v2337 = vadd.f32 %v1817, %v2305
      %v2338 = vadd.f32 %v1818, %v2306
      %v2339 = vadd.f32 %v1819, %v2307
      %v2340 = vadd.f32 %v1820, %v2308
      %v2341 = vadd.f32 %v1821, %v2309
      %v2342 = vadd.f32 %v1822, %v2310
      %v2343 = vadd.f32 %v1823, %v2311
      %v2344 = vadd.f32 %v1824, %v2312
      %v2345 = vadd.f32 %v1825, %v2313
      %v2346 = vadd.f32 %v1826, %v2314
      %v2347 = vadd.f32 %v1827, %v2315
      %v2348 = vadd.f32 %v1828, %v2316
      %v2349 = vadd.f32 %v1829, %v2317
      %v2350 = vadd.f32 %v1830, %v2318
      %v2351 = vadd.f32 %v1831, %v2319
      %v2352 = vadd.f32 %v1832, %v2320
      %v2353 = vadd.f32 %v1833, %v2321
      %v2354 = vadd.f32 %v1834, %v2322
      %v2355 = vadd.f32 %v1835, %v2323
      %v2356 = vadd.f32 %v1836, %v2324
      %v2357 = vadd.f32 %v1837, %v2325
      %v2358 = vadd.f32 %v1838, %v2326
      %v2359 = vadd.f32 %v1839, %v2327
      %v2360 = vadd.f32 %v1840, %v2328
      %v2361 = vadd.f32 %v1841, %v2329
      %v2362 = vadd.f32 %v1842, %v2330
      %v2363 = vadd.f32 %v1843, %v2331
      %v2364 = vadd.f32 %v1844, %v2332
      %v2365 = vadd.f32 %v1845, %v2333
      %v2366 = vadd.f32 %v1846, %v2334
      %v2367 = vadd.f32 %v1847, %v2335
      %v2368 = vadd.f32 %v1848, %v2336
      %v2369 = vld [vmem:[%s288 + $0x4] sm:$0xff]
      %v2370 = vld [vmem:[%s288 + $0xc] sm:$0xff]
      %v2371 = vld [vmem:[%s288 + $0x1c] sm:$0xff]
      %v2372 = vld [vmem:[%s288 + $0x24] sm:$0xff]
      %v2373 = vld [vmem:[%s288 + $0x34] sm:$0xff]
      %v2374 = vld [vmem:[%s288 + $0x3c] sm:$0xff]
      %v2375 = vld [vmem:[%s288 + $0x4c] sm:$0xff]
      %v2376 = vld [vmem:[%s288 + $0x54] sm:$0xff]
      %v2377 = vld [vmem:[%s288 + $0x64] sm:$0xff]
      %v2378 = vld [vmem:[%s288 + $0x6c] sm:$0xff]
      %v2379 = vld [vmem:[%s288 + $0x7c] sm:$0xff]
      %v2380 = vld [vmem:[%s288 + $0x84] sm:$0xff]
      %v2381 = vld [vmem:[%s288 + $0x94] sm:$0xff]
      %v2382 = vld [vmem:[%s288 + $0x9c] sm:$0xff]
      %v2383 = vld [vmem:[%s288 + $0xac] sm:$0xff]
      %v2384 = vld [vmem:[%s288 + $0xb4] sm:$0xff]
      %v2385 = vld [vmem:[%s288 + $0xc4] sm:$0xff]
      %v2386 = vld [vmem:[%s288 + $0xcc] sm:$0xff]
      %v2387 = vld [vmem:[%s288 + $0xdc] sm:$0xff]
      %v2388 = vld [vmem:[%s288 + $0xe4] sm:$0xff]
      %v2389 = vld [vmem:[%s288 + $0xf4] sm:$0xff]
      %v2390 = vld [vmem:[%s288 + $0xfc] sm:$0xff]
      %v2391 = vld [vmem:[%s288 + $0x10c] sm:$0xff]
      %v2392 = vld [vmem:[%s288 + $0x114] sm:$0xff]
      %v2393 = vld [vmem:[%s288 + $0x124] sm:$0xff]
      %v2394 = vld [vmem:[%s288 + $0x12c] sm:$0xff]
      %v2395 = vld [vmem:[%s288 + $0x13c] sm:$0xff]
      %v2396 = vld [vmem:[%s288 + $0x144] sm:$0xff]
      %v2397 = vld [vmem:[%s288 + $0x154] sm:$0xff]
      %v2398 = vld [vmem:[%s288 + $0x15c] sm:$0xff]
      %v2399 = vld [vmem:[%s288 + $0x16c] sm:$0xff]
      %v2400 = vld [vmem:[%s288 + $0x174] sm:$0xff]
      %v2401 = vld [vmem:[%s288 + $0x184] sm:$0xff]
      %v2402 = vld [vmem:[%s288 + $0x18c] sm:$0xff]
      %v2403 = vld [vmem:[%s288 + $0x19c] sm:$0xff]
      %v2404 = vld [vmem:[%s288 + $0x1a4] sm:$0xff]
      %v2405 = vld [vmem:[%s288 + $0x1b4] sm:$0xff]
      %v2406 = vld [vmem:[%s288 + $0x1bc] sm:$0xff]
      %v2407 = vld [vmem:[%s288 + $0x1cc] sm:$0xff]
      %v2408 = vld [vmem:[%s288 + $0x1d4] sm:$0xff]
      %v2409 = vld [vmem:[%s288 + $0x1e4] sm:$0xff]
      %v2410 = vld [vmem:[%s288 + $0x1ec] sm:$0xff]
      %v2411 = vld [vmem:[%s288 + $0x1fc] sm:$0xff]
      %v2412 = vld [vmem:[%s288 + $0x204] sm:$0xff]
      %v2413 = vlaneseq
      %v2414 = vshrl.u32 %v2413, 7
      %v2415 = vsub.s32 4, %v2414
      %v2416 = vrot.slane %v279, %v2415
      %v2417 = vmul.f32 %v2369, %v2416
      %v2418 = vmul.f32 %v2370, %v2416
      %v2419 = vmul.f32 %v2371, %v2416
      %v2420 = vmul.f32 %v2372, %v2416
      %v2421 = vmul.f32 %v2373, %v2416
      %v2422 = vmul.f32 %v2374, %v2416
      %v2423 = vmul.f32 %v2375, %v2416
      %v2424 = vmul.f32 %v2376, %v2416
      %v2425 = vmul.f32 %v2377, %v2416
      %v2426 = vmul.f32 %v2378, %v2416
      %v2427 = vmul.f32 %v2379, %v2416
      %v2428 = vmul.f32 %v2380, %v2416
      %v2429 = vmul.f32 %v2381, %v2416
      %v2430 = vmul.f32 %v2382, %v2416
      %v2431 = vmul.f32 %v2383, %v2416
      %v2432 = vmul.f32 %v2384, %v2416
      %v2433 = vmul.f32 %v2385, %v2416
      %v2434 = vmul.f32 %v2386, %v2416
      %v2435 = vmul.f32 %v2387, %v2416
      %v2436 = vmul.f32 %v2388, %v2416
      %v2437 = vmul.f32 %v2389, %v2416
      %v2438 = vmul.f32 %v2390, %v2416
      %v2439 = vmul.f32 %v2391, %v2416
      %v2440 = vmul.f32 %v2392, %v2416
      %v2441 = vmul.f32 %v2393, %v2416
      %v2442 = vmul.f32 %v2394, %v2416
      %v2443 = vmul.f32 %v2395, %v2416
      %v2444 = vmul.f32 %v2396, %v2416
      %v2445 = vmul.f32 %v2397, %v2416
      %v2446 = vmul.f32 %v2398, %v2416
      %v2447 = vmul.f32 %v2399, %v2416
      %v2448 = vmul.f32 %v2400, %v2416
      %v2449 = vlaneseq
      %v2450 = vshrl.u32 %v2449, 7
      %v2451 = vsub.s32 3, %v2450
      %v2452 = vrot.slane %v280, %v2451
      %v2453 = vmul.f32 %v2371, %v2452
      %v2454 = vmul.f32 %v2372, %v2452
      %v2455 = vmul.f32 %v2373, %v2452
      %v2456 = vmul.f32 %v2374, %v2452
      %v2457 = vmul.f32 %v2375, %v2452
      %v2458 = vmul.f32 %v2376, %v2452
      %v2459 = vmul.f32 %v2377, %v2452
      %v2460 = vmul.f32 %v2378, %v2452
      %v2461 = vmul.f32 %v2379, %v2452
      %v2462 = vmul.f32 %v2380, %v2452
      %v2463 = vmul.f32 %v2381, %v2452
      %v2464 = vmul.f32 %v2382, %v2452
      %v2465 = vmul.f32 %v2383, %v2452
      %v2466 = vmul.f32 %v2384, %v2452
      %v2467 = vmul.f32 %v2385, %v2452
      %v2468 = vmul.f32 %v2386, %v2452
      %v2469 = vmul.f32 %v2387, %v2452
      %v2470 = vmul.f32 %v2388, %v2452
      %v2471 = vmul.f32 %v2389, %v2452
      %v2472 = vmul.f32 %v2390, %v2452
      %v2473 = vmul.f32 %v2391, %v2452
      %v2474 = vmul.f32 %v2392, %v2452
      %v2475 = vmul.f32 %v2393, %v2452
      %v2476 = vmul.f32 %v2394, %v2452
      %v2477 = vmul.f32 %v2395, %v2452
      %v2478 = vmul.f32 %v2396, %v2452
      %v2479 = vmul.f32 %v2397, %v2452
      %v2480 = vmul.f32 %v2398, %v2452
      %v2481 = vmul.f32 %v2399, %v2452
      %v2482 = vmul.f32 %v2400, %v2452
      %v2483 = vmul.f32 %v2401, %v2452
      %v2484 = vmul.f32 %v2402, %v2452
      %v2485 = vadd.f32 %v2417, %v2453
      %v2486 = vadd.f32 %v2418, %v2454
      %v2487 = vadd.f32 %v2419, %v2455
      %v2488 = vadd.f32 %v2420, %v2456
      %v2489 = vadd.f32 %v2421, %v2457
      %v2490 = vadd.f32 %v2422, %v2458
      %v2491 = vadd.f32 %v2423, %v2459
      %v2492 = vadd.f32 %v2424, %v2460
      %v2493 = vadd.f32 %v2425, %v2461
      %v2494 = vadd.f32 %v2426, %v2462
      %v2495 = vadd.f32 %v2427, %v2463
      %v2496 = vadd.f32 %v2428, %v2464
      %v2497 = vadd.f32 %v2429, %v2465
      %v2498 = vadd.f32 %v2430, %v2466
      %v2499 = vadd.f32 %v2431, %v2467
      %v2500 = vadd.f32 %v2432, %v2468
      %v2501 = vadd.f32 %v2433, %v2469
      %v2502 = vadd.f32 %v2434, %v2470
      %v2503 = vadd.f32 %v2435, %v2471
      %v2504 = vadd.f32 %v2436, %v2472
      %v2505 = vadd.f32 %v2437, %v2473
      %v2506 = vadd.f32 %v2438, %v2474
      %v2507 = vadd.f32 %v2439, %v2475
      %v2508 = vadd.f32 %v2440, %v2476
      %v2509 = vadd.f32 %v2441, %v2477
      %v2510 = vadd.f32 %v2442, %v2478
      %v2511 = vadd.f32 %v2443, %v2479
      %v2512 = vadd.f32 %v2444, %v2480
      %v2513 = vadd.f32 %v2445, %v2481
      %v2514 = vadd.f32 %v2446, %v2482
      %v2515 = vadd.f32 %v2447, %v2483
      %v2516 = vadd.f32 %v2448, %v2484
      %v2517 = vlaneseq
      %v2518 = vshrl.u32 %v2517, 7
      %v2519 = vsub.s32 2, %v2518
      %v2520 = vrot.slane %v281, %v2519
      %v2521 = vmul.f32 %v2373, %v2520
      %v2522 = vmul.f32 %v2374, %v2520
      %v2523 = vmul.f32 %v2375, %v2520
      %v2524 = vmul.f32 %v2376, %v2520
      %v2525 = vmul.f32 %v2377, %v2520
      %v2526 = vmul.f32 %v2378, %v2520
      %v2527 = vmul.f32 %v2379, %v2520
      %v2528 = vmul.f32 %v2380, %v2520
      %v2529 = vmul.f32 %v2381, %v2520
      %v2530 = vmul.f32 %v2382, %v2520
      %v2531 = vmul.f32 %v2383, %v2520
      %v2532 = vmul.f32 %v2384, %v2520
      %v2533 = vmul.f32 %v2385, %v2520
      %v2534 = vmul.f32 %v2386, %v2520
      %v2535 = vmul.f32 %v2387, %v2520
      %v2536 = vmul.f32 %v2388, %v2520
      %v2537 = vmul.f32 %v2389, %v2520
      %v2538 = vmul.f32 %v2390, %v2520
      %v2539 = vmul.f32 %v2391, %v2520
      %v2540 = vmul.f32 %v2392, %v2520
      %v2541 = vmul.f32 %v2393, %v2520
      %v2542 = vmul.f32 %v2394, %v2520
      %v2543 = vmul.f32 %v2395, %v2520
      %v2544 = vmul.f32 %v2396, %v2520
      %v2545 = vmul.f32 %v2397, %v2520
      %v2546 = vmul.f32 %v2398, %v2520
      %v2547 = vmul.f32 %v2399, %v2520
      %v2548 = vmul.f32 %v2400, %v2520
      %v2549 = vmul.f32 %v2401, %v2520
      %v2550 = vmul.f32 %v2402, %v2520
      %v2551 = vmul.f32 %v2403, %v2520
      %v2552 = vmul.f32 %v2404, %v2520
      %v2553 = vadd.f32 %v2485, %v2521
      %v2554 = vadd.f32 %v2486, %v2522
      %v2555 = vadd.f32 %v2487, %v2523
      %v2556 = vadd.f32 %v2488, %v2524
      %v2557 = vadd.f32 %v2489, %v2525
      %v2558 = vadd.f32 %v2490, %v2526
      %v2559 = vadd.f32 %v2491, %v2527
      %v2560 = vadd.f32 %v2492, %v2528
      %v2561 = vadd.f32 %v2493, %v2529
      %v2562 = vadd.f32 %v2494, %v2530
      %v2563 = vadd.f32 %v2495, %v2531
      %v2564 = vadd.f32 %v2496, %v2532
      %v2565 = vadd.f32 %v2497, %v2533
      %v2566 = vadd.f32 %v2498, %v2534
      %v2567 = vadd.f32 %v2499, %v2535
      %v2568 = vadd.f32 %v2500, %v2536
      %v2569 = vadd.f32 %v2501, %v2537
      %v2570 = vadd.f32 %v2502, %v2538
      %v2571 = vadd.f32 %v2503, %v2539
      %v2572 = vadd.f32 %v2504, %v2540
      %v2573 = vadd.f32 %v2505, %v2541
      %v2574 = vadd.f32 %v2506, %v2542
      %v2575 = vadd.f32 %v2507, %v2543
      %v2576 = vadd.f32 %v2508, %v2544
      %v2577 = vadd.f32 %v2509, %v2545
      %v2578 = vadd.f32 %v2510, %v2546
      %v2579 = vadd.f32 %v2511, %v2547
      %v2580 = vadd.f32 %v2512, %v2548
      %v2581 = vadd.f32 %v2513, %v2549
      %v2582 = vadd.f32 %v2514, %v2550
      %v2583 = vadd.f32 %v2515, %v2551
      %v2584 = vadd.f32 %v2516, %v2552
      %v2585 = vlaneseq
      %v2586 = vshrl.u32 %v2585, 7
      %v2587 = vsub.s32 1, %v2586
      %v2588 = vrot.slane %v282, %v2587
      %v2589 = vmul.f32 %v2375, %v2588
      %v2590 = vmul.f32 %v2376, %v2588
      %v2591 = vmul.f32 %v2377, %v2588
      %v2592 = vmul.f32 %v2378, %v2588
      %v2593 = vmul.f32 %v2379, %v2588
      %v2594 = vmul.f32 %v2380, %v2588
      %v2595 = vmul.f32 %v2381, %v2588
      %v2596 = vmul.f32 %v2382, %v2588
      %v2597 = vmul.f32 %v2383, %v2588
      %v2598 = vmul.f32 %v2384, %v2588
      %v2599 = vmul.f32 %v2385, %v2588
      %v2600 = vmul.f32 %v2386, %v2588
      %v2601 = vmul.f32 %v2387, %v2588
      %v2602 = vmul.f32 %v2388, %v2588
      %v2603 = vmul.f32 %v2389, %v2588
      %v2604 = vmul.f32 %v2390, %v2588
      %v2605 = vmul.f32 %v2391, %v2588
      %v2606 = vmul.f32 %v2392, %v2588
      %v2607 = vmul.f32 %v2393, %v2588
      %v2608 = vmul.f32 %v2394, %v2588
      %v2609 = vmul.f32 %v2395, %v2588
      %v2610 = vmul.f32 %v2396, %v2588
      %v2611 = vmul.f32 %v2397, %v2588
      %v2612 = vmul.f32 %v2398, %v2588
      %v2613 = vmul.f32 %v2399, %v2588
      %v2614 = vmul.f32 %v2400, %v2588
      %v2615 = vmul.f32 %v2401, %v2588
      %v2616 = vmul.f32 %v2402, %v2588
      %v2617 = vmul.f32 %v2403, %v2588
      %v2618 = vmul.f32 %v2404, %v2588
      %v2619 = vmul.f32 %v2405, %v2588
      %v2620 = vmul.f32 %v2406, %v2588
      %v2621 = vadd.f32 %v2553, %v2589
      %v2622 = vadd.f32 %v2554, %v2590
      %v2623 = vadd.f32 %v2555, %v2591
      %v2624 = vadd.f32 %v2556, %v2592
      %v2625 = vadd.f32 %v2557, %v2593
      %v2626 = vadd.f32 %v2558, %v2594
      %v2627 = vadd.f32 %v2559, %v2595
      %v2628 = vadd.f32 %v2560, %v2596
      %v2629 = vadd.f32 %v2561, %v2597
      %v2630 = vadd.f32 %v2562, %v2598
      %v2631 = vadd.f32 %v2563, %v2599
      %v2632 = vadd.f32 %v2564, %v2600
      %v2633 = vadd.f32 %v2565, %v2601
      %v2634 = vadd.f32 %v2566, %v2602
      %v2635 = vadd.f32 %v2567, %v2603
      %v2636 = vadd.f32 %v2568, %v2604
      %v2637 = vadd.f32 %v2569, %v2605
      %v2638 = vadd.f32 %v2570, %v2606
      %v2639 = vadd.f32 %v2571, %v2607
      %v2640 = vadd.f32 %v2572, %v2608
      %v2641 = vadd.f32 %v2573, %v2609
      %v2642 = vadd.f32 %v2574, %v2610
      %v2643 = vadd.f32 %v2575, %v2611
      %v2644 = vadd.f32 %v2576, %v2612
      %v2645 = vadd.f32 %v2577, %v2613
      %v2646 = vadd.f32 %v2578, %v2614
      %v2647 = vadd.f32 %v2579, %v2615
      %v2648 = vadd.f32 %v2580, %v2616
      %v2649 = vadd.f32 %v2581, %v2617
      %v2650 = vadd.f32 %v2582, %v2618
      %v2651 = vadd.f32 %v2583, %v2619
      %v2652 = vadd.f32 %v2584, %v2620
      %v2653 = vlaneseq
      %v2654 = vshrl.u32 %v2653, 7
      %v2655 = vsub.s32 0, %v2654
      %v2656 = vrot.slane %v283, %v2655
      %v2657 = vmul.f32 %v2377, %v2656
      %v2658 = vmul.f32 %v2378, %v2656
      %v2659 = vmul.f32 %v2379, %v2656
      %v2660 = vmul.f32 %v2380, %v2656
      %v2661 = vmul.f32 %v2381, %v2656
      %v2662 = vmul.f32 %v2382, %v2656
      %v2663 = vmul.f32 %v2383, %v2656
      %v2664 = vmul.f32 %v2384, %v2656
      %v2665 = vmul.f32 %v2385, %v2656
      %v2666 = vmul.f32 %v2386, %v2656
      %v2667 = vmul.f32 %v2387, %v2656
      %v2668 = vmul.f32 %v2388, %v2656
      %v2669 = vmul.f32 %v2389, %v2656
      %v2670 = vmul.f32 %v2390, %v2656
      %v2671 = vmul.f32 %v2391, %v2656
      %v2672 = vmul.f32 %v2392, %v2656
      %v2673 = vmul.f32 %v2393, %v2656
      %v2674 = vmul.f32 %v2394, %v2656
      %v2675 = vmul.f32 %v2395, %v2656
      %v2676 = vmul.f32 %v2396, %v2656
      %v2677 = vmul.f32 %v2397, %v2656
      %v2678 = vmul.f32 %v2398, %v2656
      %v2679 = vmul.f32 %v2399, %v2656
      %v2680 = vmul.f32 %v2400, %v2656
      %v2681 = vmul.f32 %v2401, %v2656
      %v2682 = vmul.f32 %v2402, %v2656
      %v2683 = vmul.f32 %v2403, %v2656
      %v2684 = vmul.f32 %v2404, %v2656
      %v2685 = vmul.f32 %v2405, %v2656
      %v2686 = vmul.f32 %v2406, %v2656
      %v2687 = vmul.f32 %v2407, %v2656
      %v2688 = vmul.f32 %v2408, %v2656
      %v2689 = vadd.f32 %v2621, %v2657
      %v2690 = vadd.f32 %v2622, %v2658
      %v2691 = vadd.f32 %v2623, %v2659
      %v2692 = vadd.f32 %v2624, %v2660
      %v2693 = vadd.f32 %v2625, %v2661
      %v2694 = vadd.f32 %v2626, %v2662
      %v2695 = vadd.f32 %v2627, %v2663
      %v2696 = vadd.f32 %v2628, %v2664
      %v2697 = vadd.f32 %v2629, %v2665
      %v2698 = vadd.f32 %v2630, %v2666
      %v2699 = vadd.f32 %v2631, %v2667
      %v2700 = vadd.f32 %v2632, %v2668
      %v2701 = vadd.f32 %v2633, %v2669
      %v2702 = vadd.f32 %v2634, %v2670
      %v2703 = vadd.f32 %v2635, %v2671
      %v2704 = vadd.f32 %v2636, %v2672
      %v2705 = vadd.f32 %v2637, %v2673
      %v2706 = vadd.f32 %v2638, %v2674
      %v2707 = vadd.f32 %v2639, %v2675
      %v2708 = vadd.f32 %v2640, %v2676
      %v2709 = vadd.f32 %v2641, %v2677
      %v2710 = vadd.f32 %v2642, %v2678
      %v2711 = vadd.f32 %v2643, %v2679
      %v2712 = vadd.f32 %v2644, %v2680
      %v2713 = vadd.f32 %v2645, %v2681
      %v2714 = vadd.f32 %v2646, %v2682
      %v2715 = vadd.f32 %v2647, %v2683
      %v2716 = vadd.f32 %v2648, %v2684
      %v2717 = vadd.f32 %v2649, %v2685
      %v2718 = vadd.f32 %v2650, %v2686
      %v2719 = vadd.f32 %v2651, %v2687
      %v2720 = vadd.f32 %v2652, %v2688
      %v2721 = vlaneseq
      %v2722 = vshrl.u32 %v2721, 7
      %v2723 = vsub.s32 7, %v2722
      %v2724 = vrot.slane %v283, %v2723
      %v2725 = vmul.f32 %v2379, %v2724
      %v2726 = vmul.f32 %v2380, %v2724
      %v2727 = vmul.f32 %v2381, %v2724
      %v2728 = vmul.f32 %v2382, %v2724
      %v2729 = vmul.f32 %v2383, %v2724
      %v2730 = vmul.f32 %v2384, %v2724
      %v2731 = vmul.f32 %v2385, %v2724
      %v2732 = vmul.f32 %v2386, %v2724
      %v2733 = vmul.f32 %v2387, %v2724
      %v2734 = vmul.f32 %v2388, %v2724
      %v2735 = vmul.f32 %v2389, %v2724
      %v2736 = vmul.f32 %v2390, %v2724
      %v2737 = vmul.f32 %v2391, %v2724
      %v2738 = vmul.f32 %v2392, %v2724
      %v2739 = vmul.f32 %v2393, %v2724
      %v2740 = vmul.f32 %v2394, %v2724
      %v2741 = vmul.f32 %v2395, %v2724
      %v2742 = vmul.f32 %v2396, %v2724
      %v2743 = vmul.f32 %v2397, %v2724
      %v2744 = vmul.f32 %v2398, %v2724
      %v2745 = vmul.f32 %v2399, %v2724
      %v2746 = vmul.f32 %v2400, %v2724
      %v2747 = vmul.f32 %v2401, %v2724
      %v2748 = vmul.f32 %v2402, %v2724
      %v2749 = vmul.f32 %v2403, %v2724
      %v2750 = vmul.f32 %v2404, %v2724
      %v2751 = vmul.f32 %v2405, %v2724
      %v2752 = vmul.f32 %v2406, %v2724
      %v2753 = vmul.f32 %v2407, %v2724
      %v2754 = vmul.f32 %v2408, %v2724
      %v2755 = vmul.f32 %v2409, %v2724
      %v2756 = vmul.f32 %v2410, %v2724
      %v2757 = vadd.f32 %v2689, %v2725
      %v2758 = vadd.f32 %v2690, %v2726
      %v2759 = vadd.f32 %v2691, %v2727
      %v2760 = vadd.f32 %v2692, %v2728
      %v2761 = vadd.f32 %v2693, %v2729
      %v2762 = vadd.f32 %v2694, %v2730
      %v2763 = vadd.f32 %v2695, %v2731
      %v2764 = vadd.f32 %v2696, %v2732
      %v2765 = vadd.f32 %v2697, %v2733
      %v2766 = vadd.f32 %v2698, %v2734
      %v2767 = vadd.f32 %v2699, %v2735
      %v2768 = vadd.f32 %v2700, %v2736
      %v2769 = vadd.f32 %v2701, %v2737
      %v2770 = vadd.f32 %v2702, %v2738
      %v2771 = vadd.f32 %v2703, %v2739
      %v2772 = vadd.f32 %v2704, %v2740
      %v2773 = vadd.f32 %v2705, %v2741
      %v2774 = vadd.f32 %v2706, %v2742
      %v2775 = vadd.f32 %v2707, %v2743
      %v2776 = vadd.f32 %v2708, %v2744
      %v2777 = vadd.f32 %v2709, %v2745
      %v2778 = vadd.f32 %v2710, %v2746
      %v2779 = vadd.f32 %v2711, %v2747
      %v2780 = vadd.f32 %v2712, %v2748
      %v2781 = vadd.f32 %v2713, %v2749
      %v2782 = vadd.f32 %v2714, %v2750
      %v2783 = vadd.f32 %v2715, %v2751
      %v2784 = vadd.f32 %v2716, %v2752
      %v2785 = vadd.f32 %v2717, %v2753
      %v2786 = vadd.f32 %v2718, %v2754
      %v2787 = vadd.f32 %v2719, %v2755
      %v2788 = vadd.f32 %v2720, %v2756
      %v2789 = vlaneseq
      %v2790 = vshrl.u32 %v2789, 7
      %v2791 = vsub.s32 6, %v2790
      %v2792 = vrot.slane %v284, %v2791
      %v2793 = vmul.f32 %v2381, %v2792
      %v2794 = vmul.f32 %v2382, %v2792
      %v2795 = vmul.f32 %v2383, %v2792
      %v2796 = vmul.f32 %v2384, %v2792
      %v2797 = vmul.f32 %v2385, %v2792
      %v2798 = vmul.f32 %v2386, %v2792
      %v2799 = vmul.f32 %v2387, %v2792
      %v2800 = vmul.f32 %v2388, %v2792
      %v2801 = vmul.f32 %v2389, %v2792
      %v2802 = vmul.f32 %v2390, %v2792
      %v2803 = vmul.f32 %v2391, %v2792
      %v2804 = vmul.f32 %v2392, %v2792
      %v2805 = vmul.f32 %v2393, %v2792
      %v2806 = vmul.f32 %v2394, %v2792
      %v2807 = vmul.f32 %v2395, %v2792
      %v2808 = vmul.f32 %v2396, %v2792
      %v2809 = vmul.f32 %v2397, %v2792
      %v2810 = vmul.f32 %v2398, %v2792
      %v2811 = vmul.f32 %v2399, %v2792
      %v2812 = vmul.f32 %v2400, %v2792
      %v2813 = vmul.f32 %v2401, %v2792
      %v2814 = vmul.f32 %v2402, %v2792
      %v2815 = vmul.f32 %v2403, %v2792
      %v2816 = vmul.f32 %v2404, %v2792
      %v2817 = vmul.f32 %v2405, %v2792
      %v2818 = vmul.f32 %v2406, %v2792
      %v2819 = vmul.f32 %v2407, %v2792
      %v2820 = vmul.f32 %v2408, %v2792
      %v2821 = vmul.f32 %v2409, %v2792
      %v2822 = vmul.f32 %v2410, %v2792
      %v2823 = vmul.f32 %v2411, %v2792
      %v2824 = vmul.f32 %v2412, %v2792
      %v2825 = vadd.f32 %v2757, %v2793
      %v2826 = vadd.f32 %v2758, %v2794
      %v2827 = vadd.f32 %v2759, %v2795
      %v2828 = vadd.f32 %v2760, %v2796
      %v2829 = vadd.f32 %v2761, %v2797
      %v2830 = vadd.f32 %v2762, %v2798
      %v2831 = vadd.f32 %v2763, %v2799
      %v2832 = vadd.f32 %v2764, %v2800
      %v2833 = vadd.f32 %v2765, %v2801
      %v2834 = vadd.f32 %v2766, %v2802
      %v2835 = vadd.f32 %v2767, %v2803
      %v2836 = vadd.f32 %v2768, %v2804
      %v2837 = vadd.f32 %v2769, %v2805
      %v2838 = vadd.f32 %v2770, %v2806
      %v2839 = vadd.f32 %v2771, %v2807
      %v2840 = vadd.f32 %v2772, %v2808
      %v2841 = vadd.f32 %v2773, %v2809
      %v2842 = vadd.f32 %v2774, %v2810
      %v2843 = vadd.f32 %v2775, %v2811
      %v2844 = vadd.f32 %v2776, %v2812
      %v2845 = vadd.f32 %v2777, %v2813
      %v2846 = vadd.f32 %v2778, %v2814
      %v2847 = vadd.f32 %v2779, %v2815
      %v2848 = vadd.f32 %v2780, %v2816
      %v2849 = vadd.f32 %v2781, %v2817
      %v2850 = vadd.f32 %v2782, %v2818
      %v2851 = vadd.f32 %v2783, %v2819
      %v2852 = vadd.f32 %v2784, %v2820
      %v2853 = vadd.f32 %v2785, %v2821
      %v2854 = vadd.f32 %v2786, %v2822
      %v2855 = vadd.f32 %v2787, %v2823
      %v2856 = vadd.f32 %v2788, %v2824
      %v2857 = vadd.f32 %v2337, %v2825
      %v2858 = vadd.f32 %v2338, %v2826
      %v2859 = vadd.f32 %v2339, %v2827
      %v2860 = vadd.f32 %v2340, %v2828
      %v2861 = vadd.f32 %v2341, %v2829
      %v2862 = vadd.f32 %v2342, %v2830
      %v2863 = vadd.f32 %v2343, %v2831
      %v2864 = vadd.f32 %v2344, %v2832
      %v2865 = vadd.f32 %v2345, %v2833
      %v2866 = vadd.f32 %v2346, %v2834
      %v2867 = vadd.f32 %v2347, %v2835
      %v2868 = vadd.f32 %v2348, %v2836
      %v2869 = vadd.f32 %v2349, %v2837
      %v2870 = vadd.f32 %v2350, %v2838
      %v2871 = vadd.f32 %v2351, %v2839
      %v2872 = vadd.f32 %v2352, %v2840
      %v2873 = vadd.f32 %v2353, %v2841
      %v2874 = vadd.f32 %v2354, %v2842
      %v2875 = vadd.f32 %v2355, %v2843
      %v2876 = vadd.f32 %v2356, %v2844
      %v2877 = vadd.f32 %v2357, %v2845
      %v2878 = vadd.f32 %v2358, %v2846
      %v2879 = vadd.f32 %v2359, %v2847
      %v2880 = vadd.f32 %v2360, %v2848
      %v2881 = vadd.f32 %v2361, %v2849
      %v2882 = vadd.f32 %v2362, %v2850
      %v2883 = vadd.f32 %v2363, %v2851
      %v2884 = vadd.f32 %v2364, %v2852
      %v2885 = vadd.f32 %v2365, %v2853
      %v2886 = vadd.f32 %v2366, %v2854
      %v2887 = vadd.f32 %v2367, %v2855
      %v2888 = vadd.f32 %v2368, %v2856
      %v2889 = vld [vmem:[%s288 + $0x5] sm:$0xff]
      %v2890 = vld [vmem:[%s288 + $0xd] sm:$0xff]
      %v2891 = vld [vmem:[%s288 + $0x1d] sm:$0xff]
      %v2892 = vld [vmem:[%s288 + $0x25] sm:$0xff]
      %v2893 = vld [vmem:[%s288 + $0x35] sm:$0xff]
      %v2894 = vld [vmem:[%s288 + $0x3d] sm:$0xff]
      %v2895 = vld [vmem:[%s288 + $0x4d] sm:$0xff]
      %v2896 = vld [vmem:[%s288 + $0x55] sm:$0xff]
      %v2897 = vld [vmem:[%s288 + $0x65] sm:$0xff]
      %v2898 = vld [vmem:[%s288 + $0x6d] sm:$0xff]
      %v2899 = vld [vmem:[%s288 + $0x7d] sm:$0xff]
      %v2900 = vld [vmem:[%s288 + $0x85] sm:$0xff]
      %v2901 = vld [vmem:[%s288 + $0x95] sm:$0xff]
      %v2902 = vld [vmem:[%s288 + $0x9d] sm:$0xff]
      %v2903 = vld [vmem:[%s288 + $0xad] sm:$0xff]
      %v2904 = vld [vmem:[%s288 + $0xb5] sm:$0xff]
      %v2905 = vld [vmem:[%s288 + $0xc5] sm:$0xff]
      %v2906 = vld [vmem:[%s288 + $0xcd] sm:$0xff]
      %v2907 = vld [vmem:[%s288 + $0xdd] sm:$0xff]
      %v2908 = vld [vmem:[%s288 + $0xe5] sm:$0xff]
      %v2909 = vld [vmem:[%s288 + $0xf5] sm:$0xff]
      %v2910 = vld [vmem:[%s288 + $0xfd] sm:$0xff]
      %v2911 = vld [vmem:[%s288 + $0x10d] sm:$0xff]
      %v2912 = vld [vmem:[%s288 + $0x115] sm:$0xff]
      %v2913 = vld [vmem:[%s288 + $0x125] sm:$0xff]
      %v2914 = vld [vmem:[%s288 + $0x12d] sm:$0xff]
      %v2915 = vld [vmem:[%s288 + $0x13d] sm:$0xff]
      %v2916 = vld [vmem:[%s288 + $0x145] sm:$0xff]
      %v2917 = vld [vmem:[%s288 + $0x155] sm:$0xff]
      %v2918 = vld [vmem:[%s288 + $0x15d] sm:$0xff]
      %v2919 = vld [vmem:[%s288 + $0x16d] sm:$0xff]
      %v2920 = vld [vmem:[%s288 + $0x175] sm:$0xff]
      %v2921 = vld [vmem:[%s288 + $0x185] sm:$0xff]
      %v2922 = vld [vmem:[%s288 + $0x18d] sm:$0xff]
      %v2923 = vld [vmem:[%s288 + $0x19d] sm:$0xff]
      %v2924 = vld [vmem:[%s288 + $0x1a5] sm:$0xff]
      %v2925 = vld [vmem:[%s288 + $0x1b5] sm:$0xff]
      %v2926 = vld [vmem:[%s288 + $0x1bd] sm:$0xff]
      %v2927 = vld [vmem:[%s288 + $0x1cd] sm:$0xff]
      %v2928 = vld [vmem:[%s288 + $0x1d5] sm:$0xff]
      %v2929 = vld [vmem:[%s288 + $0x1e5] sm:$0xff]
      %v2930 = vld [vmem:[%s288 + $0x1ed] sm:$0xff]
      %v2931 = vld [vmem:[%s288 + $0x1fd] sm:$0xff]
      %v2932 = vld [vmem:[%s288 + $0x205] sm:$0xff]
      %v2933 = vlaneseq
      %v2934 = vshrl.u32 %v2933, 7
      %v2935 = vsub.s32 5, %v2934
      %v2936 = vrot.slane %v279, %v2935
      %v2937 = vmul.f32 %v2889, %v2936
      %v2938 = vmul.f32 %v2890, %v2936
      %v2939 = vmul.f32 %v2891, %v2936
      %v2940 = vmul.f32 %v2892, %v2936
      %v2941 = vmul.f32 %v2893, %v2936
      %v2942 = vmul.f32 %v2894, %v2936
      %v2943 = vmul.f32 %v2895, %v2936
      %v2944 = vmul.f32 %v2896, %v2936
      %v2945 = vmul.f32 %v2897, %v2936
      %v2946 = vmul.f32 %v2898, %v2936
      %v2947 = vmul.f32 %v2899, %v2936
      %v2948 = vmul.f32 %v2900, %v2936
      %v2949 = vmul.f32 %v2901, %v2936
      %v2950 = vmul.f32 %v2902, %v2936
      %v2951 = vmul.f32 %v2903, %v2936
      %v2952 = vmul.f32 %v2904, %v2936
      %v2953 = vmul.f32 %v2905, %v2936
      %v2954 = vmul.f32 %v2906, %v2936
      %v2955 = vmul.f32 %v2907, %v2936
      %v2956 = vmul.f32 %v2908, %v2936
      %v2957 = vmul.f32 %v2909, %v2936
      %v2958 = vmul.f32 %v2910, %v2936
      %v2959 = vmul.f32 %v2911, %v2936
      %v2960 = vmul.f32 %v2912, %v2936
      %v2961 = vmul.f32 %v2913, %v2936
      %v2962 = vmul.f32 %v2914, %v2936
      %v2963 = vmul.f32 %v2915, %v2936
      %v2964 = vmul.f32 %v2916, %v2936
      %v2965 = vmul.f32 %v2917, %v2936
      %v2966 = vmul.f32 %v2918, %v2936
      %v2967 = vmul.f32 %v2919, %v2936
      %v2968 = vmul.f32 %v2920, %v2936
      %v2969 = vlaneseq
      %v2970 = vshrl.u32 %v2969, 7
      %v2971 = vsub.s32 4, %v2970
      %v2972 = vrot.slane %v280, %v2971
      %v2973 = vmul.f32 %v2891, %v2972
      %v2974 = vmul.f32 %v2892, %v2972
      %v2975 = vmul.f32 %v2893, %v2972
      %v2976 = vmul.f32 %v2894, %v2972
      %v2977 = vmul.f32 %v2895, %v2972
      %v2978 = vmul.f32 %v2896, %v2972
      %v2979 = vmul.f32 %v2897, %v2972
      %v2980 = vmul.f32 %v2898, %v2972
      %v2981 = vmul.f32 %v2899, %v2972
      %v2982 = vmul.f32 %v2900, %v2972
      %v2983 = vmul.f32 %v2901, %v2972
      %v2984 = vmul.f32 %v2902, %v2972
      %v2985 = vmul.f32 %v2903, %v2972
      %v2986 = vmul.f32 %v2904, %v2972
      %v2987 = vmul.f32 %v2905, %v2972
      %v2988 = vmul.f32 %v2906, %v2972
      %v2989 = vmul.f32 %v2907, %v2972
      %v2990 = vmul.f32 %v2908, %v2972
      %v2991 = vmul.f32 %v2909, %v2972
      %v2992 = vmul.f32 %v2910, %v2972
      %v2993 = vmul.f32 %v2911, %v2972
      %v2994 = vmul.f32 %v2912, %v2972
      %v2995 = vmul.f32 %v2913, %v2972
      %v2996 = vmul.f32 %v2914, %v2972
      %v2997 = vmul.f32 %v2915, %v2972
      %v2998 = vmul.f32 %v2916, %v2972
      %v2999 = vmul.f32 %v2917, %v2972
      %v3000 = vmul.f32 %v2918, %v2972
      %v3001 = vmul.f32 %v2919, %v2972
      %v3002 = vmul.f32 %v2920, %v2972
      %v3003 = vmul.f32 %v2921, %v2972
      %v3004 = vmul.f32 %v2922, %v2972
      %v3005 = vadd.f32 %v2937, %v2973
      %v3006 = vadd.f32 %v2938, %v2974
      %v3007 = vadd.f32 %v2939, %v2975
      %v3008 = vadd.f32 %v2940, %v2976
      %v3009 = vadd.f32 %v2941, %v2977
      %v3010 = vadd.f32 %v2942, %v2978
      %v3011 = vadd.f32 %v2943, %v2979
      %v3012 = vadd.f32 %v2944, %v2980
      %v3013 = vadd.f32 %v2945, %v2981
      %v3014 = vadd.f32 %v2946, %v2982
      %v3015 = vadd.f32 %v2947, %v2983
      %v3016 = vadd.f32 %v2948, %v2984
      %v3017 = vadd.f32 %v2949, %v2985
      %v3018 = vadd.f32 %v2950, %v2986
      %v3019 = vadd.f32 %v2951, %v2987
      %v3020 = vadd.f32 %v2952, %v2988
      %v3021 = vadd.f32 %v2953, %v2989
      %v3022 = vadd.f32 %v2954, %v2990
      %v3023 = vadd.f32 %v2955, %v2991
      %v3024 = vadd.f32 %v2956, %v2992
      %v3025 = vadd.f32 %v2957, %v2993
      %v3026 = vadd.f32 %v2958, %v2994
      %v3027 = vadd.f32 %v2959, %v2995
      %v3028 = vadd.f32 %v2960, %v2996
      %v3029 = vadd.f32 %v2961, %v2997
      %v3030 = vadd.f32 %v2962, %v2998
      %v3031 = vadd.f32 %v2963, %v2999
      %v3032 = vadd.f32 %v2964, %v3000
      %v3033 = vadd.f32 %v2965, %v3001
      %v3034 = vadd.f32 %v2966, %v3002
      %v3035 = vadd.f32 %v2967, %v3003
      %v3036 = vadd.f32 %v2968, %v3004
      %v3037 = vlaneseq
      %v3038 = vshrl.u32 %v3037, 7
      %v3039 = vsub.s32 3, %v3038
      %v3040 = vrot.slane %v281, %v3039
      %v3041 = vmul.f32 %v2893, %v3040
      %v3042 = vmul.f32 %v2894, %v3040
      %v3043 = vmul.f32 %v2895, %v3040
      %v3044 = vmul.f32 %v2896, %v3040
      %v3045 = vmul.f32 %v2897, %v3040
      %v3046 = vmul.f32 %v2898, %v3040
      %v3047 = vmul.f32 %v2899, %v3040
      %v3048 = vmul.f32 %v2900, %v3040
      %v3049 = vmul.f32 %v2901, %v3040
      %v3050 = vmul.f32 %v2902, %v3040
      %v3051 = vmul.f32 %v2903, %v3040
      %v3052 = vmul.f32 %v2904, %v3040
      %v3053 = vmul.f32 %v2905, %v3040
      %v3054 = vmul.f32 %v2906, %v3040
      %v3055 = vmul.f32 %v2907, %v3040
      %v3056 = vmul.f32 %v2908, %v3040
      %v3057 = vmul.f32 %v2909, %v3040
      %v3058 = vmul.f32 %v2910, %v3040
      %v3059 = vmul.f32 %v2911, %v3040
      %v3060 = vmul.f32 %v2912, %v3040
      %v3061 = vmul.f32 %v2913, %v3040
      %v3062 = vmul.f32 %v2914, %v3040
      %v3063 = vmul.f32 %v2915, %v3040
      %v3064 = vmul.f32 %v2916, %v3040
      %v3065 = vmul.f32 %v2917, %v3040
      %v3066 = vmul.f32 %v2918, %v3040
      %v3067 = vmul.f32 %v2919, %v3040
      %v3068 = vmul.f32 %v2920, %v3040
      %v3069 = vmul.f32 %v2921, %v3040
      %v3070 = vmul.f32 %v2922, %v3040
      %v3071 = vmul.f32 %v2923, %v3040
      %v3072 = vmul.f32 %v2924, %v3040
      %v3073 = vadd.f32 %v3005, %v3041
      %v3074 = vadd.f32 %v3006, %v3042
      %v3075 = vadd.f32 %v3007, %v3043
      %v3076 = vadd.f32 %v3008, %v3044
      %v3077 = vadd.f32 %v3009, %v3045
      %v3078 = vadd.f32 %v3010, %v3046
      %v3079 = vadd.f32 %v3011, %v3047
      %v3080 = vadd.f32 %v3012, %v3048
      %v3081 = vadd.f32 %v3013, %v3049
      %v3082 = vadd.f32 %v3014, %v3050
      %v3083 = vadd.f32 %v3015, %v3051
      %v3084 = vadd.f32 %v3016, %v3052
      %v3085 = vadd.f32 %v3017, %v3053
      %v3086 = vadd.f32 %v3018, %v3054
      %v3087 = vadd.f32 %v3019, %v3055
      %v3088 = vadd.f32 %v3020, %v3056
      %v3089 = vadd.f32 %v3021, %v3057
      %v3090 = vadd.f32 %v3022, %v3058
      %v3091 = vadd.f32 %v3023, %v3059
      %v3092 = vadd.f32 %v3024, %v3060
      %v3093 = vadd.f32 %v3025, %v3061
      %v3094 = vadd.f32 %v3026, %v3062
      %v3095 = vadd.f32 %v3027, %v3063
      %v3096 = vadd.f32 %v3028, %v3064
      %v3097 = vadd.f32 %v3029, %v3065
      %v3098 = vadd.f32 %v3030, %v3066
      %v3099 = vadd.f32 %v3031, %v3067
      %v3100 = vadd.f32 %v3032, %v3068
      %v3101 = vadd.f32 %v3033, %v3069
      %v3102 = vadd.f32 %v3034, %v3070
      %v3103 = vadd.f32 %v3035, %v3071
      %v3104 = vadd.f32 %v3036, %v3072
      %v3105 = vlaneseq
      %v3106 = vshrl.u32 %v3105, 7
      %v3107 = vsub.s32 2, %v3106
      %v3108 = vrot.slane %v282, %v3107
      %v3109 = vmul.f32 %v2895, %v3108
      %v3110 = vmul.f32 %v2896, %v3108
      %v3111 = vmul.f32 %v2897, %v3108
      %v3112 = vmul.f32 %v2898, %v3108
      %v3113 = vmul.f32 %v2899, %v3108
      %v3114 = vmul.f32 %v2900, %v3108
      %v3115 = vmul.f32 %v2901, %v3108
      %v3116 = vmul.f32 %v2902, %v3108
      %v3117 = vmul.f32 %v2903, %v3108
      %v3118 = vmul.f32 %v2904, %v3108
      %v3119 = vmul.f32 %v2905, %v3108
      %v3120 = vmul.f32 %v2906, %v3108
      %v3121 = vmul.f32 %v2907, %v3108
      %v3122 = vmul.f32 %v2908, %v3108
      %v3123 = vmul.f32 %v2909, %v3108
      %v3124 = vmul.f32 %v2910, %v3108
      %v3125 = vmul.f32 %v2911, %v3108
      %v3126 = vmul.f32 %v2912, %v3108
      %v3127 = vmul.f32 %v2913, %v3108
      %v3128 = vmul.f32 %v2914, %v3108
      %v3129 = vmul.f32 %v2915, %v3108
      %v3130 = vmul.f32 %v2916, %v3108
      %v3131 = vmul.f32 %v2917, %v3108
      %v3132 = vmul.f32 %v2918, %v3108
      %v3133 = vmul.f32 %v2919, %v3108
      %v3134 = vmul.f32 %v2920, %v3108
      %v3135 = vmul.f32 %v2921, %v3108
      %v3136 = vmul.f32 %v2922, %v3108
      %v3137 = vmul.f32 %v2923, %v3108
      %v3138 = vmul.f32 %v2924, %v3108
      %v3139 = vmul.f32 %v2925, %v3108
      %v3140 = vmul.f32 %v2926, %v3108
      %v3141 = vadd.f32 %v3073, %v3109
      %v3142 = vadd.f32 %v3074, %v3110
      %v3143 = vadd.f32 %v3075, %v3111
      %v3144 = vadd.f32 %v3076, %v3112
      %v3145 = vadd.f32 %v3077, %v3113
      %v3146 = vadd.f32 %v3078, %v3114
      %v3147 = vadd.f32 %v3079, %v3115
      %v3148 = vadd.f32 %v3080, %v3116
      %v3149 = vadd.f32 %v3081, %v3117
      %v3150 = vadd.f32 %v3082, %v3118
      %v3151 = vadd.f32 %v3083, %v3119
      %v3152 = vadd.f32 %v3084, %v3120
      %v3153 = vadd.f32 %v3085, %v3121
      %v3154 = vadd.f32 %v3086, %v3122
      %v3155 = vadd.f32 %v3087, %v3123
      %v3156 = vadd.f32 %v3088, %v3124
      %v3157 = vadd.f32 %v3089, %v3125
      %v3158 = vadd.f32 %v3090, %v3126
      %v3159 = vadd.f32 %v3091, %v3127
      %v3160 = vadd.f32 %v3092, %v3128
      %v3161 = vadd.f32 %v3093, %v3129
      %v3162 = vadd.f32 %v3094, %v3130
      %v3163 = vadd.f32 %v3095, %v3131
      %v3164 = vadd.f32 %v3096, %v3132
      %v3165 = vadd.f32 %v3097, %v3133
      %v3166 = vadd.f32 %v3098, %v3134
      %v3167 = vadd.f32 %v3099, %v3135
      %v3168 = vadd.f32 %v3100, %v3136
      %v3169 = vadd.f32 %v3101, %v3137
      %v3170 = vadd.f32 %v3102, %v3138
      %v3171 = vadd.f32 %v3103, %v3139
      %v3172 = vadd.f32 %v3104, %v3140
      %v3173 = vlaneseq
      %v3174 = vshrl.u32 %v3173, 7
      %v3175 = vsub.s32 1, %v3174
      %v3176 = vrot.slane %v283, %v3175
      %v3177 = vmul.f32 %v2897, %v3176
      %v3178 = vmul.f32 %v2898, %v3176
      %v3179 = vmul.f32 %v2899, %v3176
      %v3180 = vmul.f32 %v2900, %v3176
      %v3181 = vmul.f32 %v2901, %v3176
      %v3182 = vmul.f32 %v2902, %v3176
      %v3183 = vmul.f32 %v2903, %v3176
      %v3184 = vmul.f32 %v2904, %v3176
      %v3185 = vmul.f32 %v2905, %v3176
      %v3186 = vmul.f32 %v2906, %v3176
      %v3187 = vmul.f32 %v2907, %v3176
      %v3188 = vmul.f32 %v2908, %v3176
      %v3189 = vmul.f32 %v2909, %v3176
      %v3190 = vmul.f32 %v2910, %v3176
      %v3191 = vmul.f32 %v2911, %v3176
      %v3192 = vmul.f32 %v2912, %v3176
      %v3193 = vmul.f32 %v2913, %v3176
      %v3194 = vmul.f32 %v2914, %v3176
      %v3195 = vmul.f32 %v2915, %v3176
      %v3196 = vmul.f32 %v2916, %v3176
      %v3197 = vmul.f32 %v2917, %v3176
      %v3198 = vmul.f32 %v2918, %v3176
      %v3199 = vmul.f32 %v2919, %v3176
      %v3200 = vmul.f32 %v2920, %v3176
      %v3201 = vmul.f32 %v2921, %v3176
      %v3202 = vmul.f32 %v2922, %v3176
      %v3203 = vmul.f32 %v2923, %v3176
      %v3204 = vmul.f32 %v2924, %v3176
      %v3205 = vmul.f32 %v2925, %v3176
      %v3206 = vmul.f32 %v2926, %v3176
      %v3207 = vmul.f32 %v2927, %v3176
      %v3208 = vmul.f32 %v2928, %v3176
      %v3209 = vadd.f32 %v3141, %v3177
      %v3210 = vadd.f32 %v3142, %v3178
      %v3211 = vadd.f32 %v3143, %v3179
      %v3212 = vadd.f32 %v3144, %v3180
      %v3213 = vadd.f32 %v3145, %v3181
      %v3214 = vadd.f32 %v3146, %v3182
      %v3215 = vadd.f32 %v3147, %v3183
      %v3216 = vadd.f32 %v3148, %v3184
      %v3217 = vadd.f32 %v3149, %v3185
      %v3218 = vadd.f32 %v3150, %v3186
      %v3219 = vadd.f32 %v3151, %v3187
      %v3220 = vadd.f32 %v3152, %v3188
      %v3221 = vadd.f32 %v3153, %v3189
      %v3222 = vadd.f32 %v3154, %v3190
      %v3223 = vadd.f32 %v3155, %v3191
      %v3224 = vadd.f32 %v3156, %v3192
      %v3225 = vadd.f32 %v3157, %v3193
      %v3226 = vadd.f32 %v3158, %v3194
      %v3227 = vadd.f32 %v3159, %v3195
      %v3228 = vadd.f32 %v3160, %v3196
      %v3229 = vadd.f32 %v3161, %v3197
      %v3230 = vadd.f32 %v3162, %v3198
      %v3231 = vadd.f32 %v3163, %v3199
      %v3232 = vadd.f32 %v3164, %v3200
      %v3233 = vadd.f32 %v3165, %v3201
      %v3234 = vadd.f32 %v3166, %v3202
      %v3235 = vadd.f32 %v3167, %v3203
      %v3236 = vadd.f32 %v3168, %v3204
      %v3237 = vadd.f32 %v3169, %v3205
      %v3238 = vadd.f32 %v3170, %v3206
      %v3239 = vadd.f32 %v3171, %v3207
      %v3240 = vadd.f32 %v3172, %v3208
      %v3241 = vlaneseq
      %v3242 = vshrl.u32 %v3241, 7
      %v3243 = vsub.s32 0, %v3242
      %v3244 = vrot.slane %v284, %v3243
      %v3245 = vmul.f32 %v2899, %v3244
      %v3246 = vmul.f32 %v2900, %v3244
      %v3247 = vmul.f32 %v2901, %v3244
      %v3248 = vmul.f32 %v2902, %v3244
      %v3249 = vmul.f32 %v2903, %v3244
      %v3250 = vmul.f32 %v2904, %v3244
      %v3251 = vmul.f32 %v2905, %v3244
      %v3252 = vmul.f32 %v2906, %v3244
      %v3253 = vmul.f32 %v2907, %v3244
      %v3254 = vmul.f32 %v2908, %v3244
      %v3255 = vmul.f32 %v2909, %v3244
      %v3256 = vmul.f32 %v2910, %v3244
      %v3257 = vmul.f32 %v2911, %v3244
      %v3258 = vmul.f32 %v2912, %v3244
      %v3259 = vmul.f32 %v2913, %v3244
      %v3260 = vmul.f32 %v2914, %v3244
      %v3261 = vmul.f32 %v2915, %v3244
      %v3262 = vmul.f32 %v2916, %v3244
      %v3263 = vmul.f32 %v2917, %v3244
      %v3264 = vmul.f32 %v2918, %v3244
      %v3265 = vmul.f32 %v2919, %v3244
      %v3266 = vmul.f32 %v2920, %v3244
      %v3267 = vmul.f32 %v2921, %v3244
      %v3268 = vmul.f32 %v2922, %v3244
      %v3269 = vmul.f32 %v2923, %v3244
      %v3270 = vmul.f32 %v2924, %v3244
      %v3271 = vmul.f32 %v2925, %v3244
      %v3272 = vmul.f32 %v2926, %v3244
      %v3273 = vmul.f32 %v2927, %v3244
      %v3274 = vmul.f32 %v2928, %v3244
      %v3275 = vmul.f32 %v2929, %v3244
      %v3276 = vmul.f32 %v2930, %v3244
      %v3277 = vadd.f32 %v3209, %v3245
      %v3278 = vadd.f32 %v3210, %v3246
      %v3279 = vadd.f32 %v3211, %v3247
      %v3280 = vadd.f32 %v3212, %v3248
      %v3281 = vadd.f32 %v3213, %v3249
      %v3282 = vadd.f32 %v3214, %v3250
      %v3283 = vadd.f32 %v3215, %v3251
      %v3284 = vadd.f32 %v3216, %v3252
      %v3285 = vadd.f32 %v3217, %v3253
      %v3286 = vadd.f32 %v3218, %v3254
      %v3287 = vadd.f32 %v3219, %v3255
      %v3288 = vadd.f32 %v3220, %v3256
      %v3289 = vadd.f32 %v3221, %v3257
      %v3290 = vadd.f32 %v3222, %v3258
      %v3291 = vadd.f32 %v3223, %v3259
      %v3292 = vadd.f32 %v3224, %v3260
      %v3293 = vadd.f32 %v3225, %v3261
      %v3294 = vadd.f32 %v3226, %v3262
      %v3295 = vadd.f32 %v3227, %v3263
      %v3296 = vadd.f32 %v3228, %v3264
      %v3297 = vadd.f32 %v3229, %v3265
      %v3298 = vadd.f32 %v3230, %v3266
      %v3299 = vadd.f32 %v3231, %v3267
      %v3300 = vadd.f32 %v3232, %v3268
      %v3301 = vadd.f32 %v3233, %v3269
      %v3302 = vadd.f32 %v3234, %v3270
      %v3303 = vadd.f32 %v3235, %v3271
      %v3304 = vadd.f32 %v3236, %v3272
      %v3305 = vadd.f32 %v3237, %v3273
      %v3306 = vadd.f32 %v3238, %v3274
      %v3307 = vadd.f32 %v3239, %v3275
      %v3308 = vadd.f32 %v3240, %v3276
      %v3309 = vlaneseq
      %v3310 = vshrl.u32 %v3309, 7
      %v3311 = vsub.s32 7, %v3310
      %v3312 = vrot.slane %v284, %v3311
      %v3313 = vmul.f32 %v2901, %v3312
      %v3314 = vmul.f32 %v2902, %v3312
      %v3315 = vmul.f32 %v2903, %v3312
      %v3316 = vmul.f32 %v2904, %v3312
      %v3317 = vmul.f32 %v2905, %v3312
      %v3318 = vmul.f32 %v2906, %v3312
      %v3319 = vmul.f32 %v2907, %v3312
      %v3320 = vmul.f32 %v2908, %v3312
      %v3321 = vmul.f32 %v2909, %v3312
      %v3322 = vmul.f32 %v2910, %v3312
      %v3323 = vmul.f32 %v2911, %v3312
      %v3324 = vmul.f32 %v2912, %v3312
      %v3325 = vmul.f32 %v2913, %v3312
      %v3326 = vmul.f32 %v2914, %v3312
      %v3327 = vmul.f32 %v2915, %v3312
      %v3328 = vmul.f32 %v2916, %v3312
      %v3329 = vmul.f32 %v2917, %v3312
      %v3330 = vmul.f32 %v2918, %v3312
      %v3331 = vmul.f32 %v2919, %v3312
      %v3332 = vmul.f32 %v2920, %v3312
      %v3333 = vmul.f32 %v2921, %v3312
      %v3334 = vmul.f32 %v2922, %v3312
      %v3335 = vmul.f32 %v2923, %v3312
      %v3336 = vmul.f32 %v2924, %v3312
      %v3337 = vmul.f32 %v2925, %v3312
      %v3338 = vmul.f32 %v2926, %v3312
      %v3339 = vmul.f32 %v2927, %v3312
      %v3340 = vmul.f32 %v2928, %v3312
      %v3341 = vmul.f32 %v2929, %v3312
      %v3342 = vmul.f32 %v2930, %v3312
      %v3343 = vmul.f32 %v2931, %v3312
      %v3344 = vmul.f32 %v2932, %v3312
      %v3345 = vadd.f32 %v3277, %v3313
      %v3346 = vadd.f32 %v3278, %v3314
      %v3347 = vadd.f32 %v3279, %v3315
      %v3348 = vadd.f32 %v3280, %v3316
      %v3349 = vadd.f32 %v3281, %v3317
      %v3350 = vadd.f32 %v3282, %v3318
      %v3351 = vadd.f32 %v3283, %v3319
      %v3352 = vadd.f32 %v3284, %v3320
      %v3353 = vadd.f32 %v3285, %v3321
      %v3354 = vadd.f32 %v3286, %v3322
      %v3355 = vadd.f32 %v3287, %v3323
      %v3356 = vadd.f32 %v3288, %v3324
      %v3357 = vadd.f32 %v3289, %v3325
      %v3358 = vadd.f32 %v3290, %v3326
      %v3359 = vadd.f32 %v3291, %v3327
      %v3360 = vadd.f32 %v3292, %v3328
      %v3361 = vadd.f32 %v3293, %v3329
      %v3362 = vadd.f32 %v3294, %v3330
      %v3363 = vadd.f32 %v3295, %v3331
      %v3364 = vadd.f32 %v3296, %v3332
      %v3365 = vadd.f32 %v3297, %v3333
      %v3366 = vadd.f32 %v3298, %v3334
      %v3367 = vadd.f32 %v3299, %v3335
      %v3368 = vadd.f32 %v3300, %v3336
      %v3369 = vadd.f32 %v3301, %v3337
      %v3370 = vadd.f32 %v3302, %v3338
      %v3371 = vadd.f32 %v3303, %v3339
      %v3372 = vadd.f32 %v3304, %v3340
      %v3373 = vadd.f32 %v3305, %v3341
      %v3374 = vadd.f32 %v3306, %v3342
      %v3375 = vadd.f32 %v3307, %v3343
      %v3376 = vadd.f32 %v3308, %v3344
      %v3377 = vadd.f32 %v2857, %v3345
      %v3378 = vadd.f32 %v2858, %v3346
      %v3379 = vadd.f32 %v2859, %v3347
      %v3380 = vadd.f32 %v2860, %v3348
      %v3381 = vadd.f32 %v2861, %v3349
      %v3382 = vadd.f32 %v2862, %v3350
      %v3383 = vadd.f32 %v2863, %v3351
      %v3384 = vadd.f32 %v2864, %v3352
      %v3385 = vadd.f32 %v2865, %v3353
      %v3386 = vadd.f32 %v2866, %v3354
      %v3387 = vadd.f32 %v2867, %v3355
      %v3388 = vadd.f32 %v2868, %v3356
      %v3389 = vadd.f32 %v2869, %v3357
      %v3390 = vadd.f32 %v2870, %v3358
      %v3391 = vadd.f32 %v2871, %v3359
      %v3392 = vadd.f32 %v2872, %v3360
      %v3393 = vadd.f32 %v2873, %v3361
      %v3394 = vadd.f32 %v2874, %v3362
      %v3395 = vadd.f32 %v2875, %v3363
      %v3396 = vadd.f32 %v2876, %v3364
      %v3397 = vadd.f32 %v2877, %v3365
      %v3398 = vadd.f32 %v2878, %v3366
      %v3399 = vadd.f32 %v2879, %v3367
      %v3400 = vadd.f32 %v2880, %v3368
      %v3401 = vadd.f32 %v2881, %v3369
      %v3402 = vadd.f32 %v2882, %v3370
      %v3403 = vadd.f32 %v2883, %v3371
      %v3404 = vadd.f32 %v2884, %v3372
      %v3405 = vadd.f32 %v2885, %v3373
      %v3406 = vadd.f32 %v2886, %v3374
      %v3407 = vadd.f32 %v2887, %v3375
      %v3408 = vadd.f32 %v2888, %v3376
      %v3409 = vld [vmem:[%s288 + $0x6] sm:$0xff]
      %v3410 = vld [vmem:[%s288 + $0xe] sm:$0xff]
      %v3411 = vld [vmem:[%s288 + $0x1e] sm:$0xff]
      %v3412 = vld [vmem:[%s288 + $0x26] sm:$0xff]
      %v3413 = vld [vmem:[%s288 + $0x36] sm:$0xff]
      %v3414 = vld [vmem:[%s288 + $0x3e] sm:$0xff]
      %v3415 = vld [vmem:[%s288 + $0x4e] sm:$0xff]
      %v3416 = vld [vmem:[%s288 + $0x56] sm:$0xff]
      %v3417 = vld [vmem:[%s288 + $0x66] sm:$0xff]
      %v3418 = vld [vmem:[%s288 + $0x6e] sm:$0xff]
      %v3419 = vld [vmem:[%s288 + $0x7e] sm:$0xff]
      %v3420 = vld [vmem:[%s288 + $0x86] sm:$0xff]
      %v3421 = vld [vmem:[%s288 + $0x96] sm:$0xff]
      %v3422 = vld [vmem:[%s288 + $0x9e] sm:$0xff]
      %v3423 = vld [vmem:[%s288 + $0xae] sm:$0xff]
      %v3424 = vld [vmem:[%s288 + $0xb6] sm:$0xff]
      %v3425 = vld [vmem:[%s288 + $0xc6] sm:$0xff]
      %v3426 = vld [vmem:[%s288 + $0xce] sm:$0xff]
      %v3427 = vld [vmem:[%s288 + $0xde] sm:$0xff]
      %v3428 = vld [vmem:[%s288 + $0xe6] sm:$0xff]
      %v3429 = vld [vmem:[%s288 + $0xf6] sm:$0xff]
      %v3430 = vld [vmem:[%s288 + $0xfe] sm:$0xff]
      %v3431 = vld [vmem:[%s288 + $0x10e] sm:$0xff]
      %v3432 = vld [vmem:[%s288 + $0x116] sm:$0xff]
      %v3433 = vld [vmem:[%s288 + $0x126] sm:$0xff]
      %v3434 = vld [vmem:[%s288 + $0x12e] sm:$0xff]
      %v3435 = vld [vmem:[%s288 + $0x13e] sm:$0xff]
      %v3436 = vld [vmem:[%s288 + $0x146] sm:$0xff]
      %v3437 = vld [vmem:[%s288 + $0x156] sm:$0xff]
      %v3438 = vld [vmem:[%s288 + $0x15e] sm:$0xff]
      %v3439 = vld [vmem:[%s288 + $0x16e] sm:$0xff]
      %v3440 = vld [vmem:[%s288 + $0x176] sm:$0xff]
      %v3441 = vld [vmem:[%s288 + $0x186] sm:$0xff]
      %v3442 = vld [vmem:[%s288 + $0x18e] sm:$0xff]
      %v3443 = vld [vmem:[%s288 + $0x19e] sm:$0xff]
      %v3444 = vld [vmem:[%s288 + $0x1a6] sm:$0xff]
      %v3445 = vld [vmem:[%s288 + $0x1b6] sm:$0xff]
      %v3446 = vld [vmem:[%s288 + $0x1be] sm:$0xff]
      %v3447 = vld [vmem:[%s288 + $0x1ce] sm:$0xff]
      %v3448 = vld [vmem:[%s288 + $0x1d6] sm:$0xff]
      %v3449 = vld [vmem:[%s288 + $0x1e6] sm:$0xff]
      %v3450 = vld [vmem:[%s288 + $0x1ee] sm:$0xff]
      %v3451 = vld [vmem:[%s288 + $0x1fe] sm:$0xff]
      %v3452 = vld [vmem:[%s288 + $0x206] sm:$0xff]
      %v3453 = vlaneseq
      %v3454 = vshrl.u32 %v3453, 7
      %v3455 = vsub.s32 6, %v3454
      %v3456 = vrot.slane %v279, %v3455
      %v3457 = vmul.f32 %v3409, %v3456
      %v3458 = vmul.f32 %v3410, %v3456
      %v3459 = vmul.f32 %v3411, %v3456
      %v3460 = vmul.f32 %v3412, %v3456
      %v3461 = vmul.f32 %v3413, %v3456
      %v3462 = vmul.f32 %v3414, %v3456
      %v3463 = vmul.f32 %v3415, %v3456
      %v3464 = vmul.f32 %v3416, %v3456
      %v3465 = vmul.f32 %v3417, %v3456
      %v3466 = vmul.f32 %v3418, %v3456
      %v3467 = vmul.f32 %v3419, %v3456
      %v3468 = vmul.f32 %v3420, %v3456
      %v3469 = vmul.f32 %v3421, %v3456
      %v3470 = vmul.f32 %v3422, %v3456
      %v3471 = vmul.f32 %v3423, %v3456
      %v3472 = vmul.f32 %v3424, %v3456
      %v3473 = vmul.f32 %v3425, %v3456
      %v3474 = vmul.f32 %v3426, %v3456
      %v3475 = vmul.f32 %v3427, %v3456
      %v3476 = vmul.f32 %v3428, %v3456
      %v3477 = vmul.f32 %v3429, %v3456
      %v3478 = vmul.f32 %v3430, %v3456
      %v3479 = vmul.f32 %v3431, %v3456
      %v3480 = vmul.f32 %v3432, %v3456
      %v3481 = vmul.f32 %v3433, %v3456
      %v3482 = vmul.f32 %v3434, %v3456
      %v3483 = vmul.f32 %v3435, %v3456
      %v3484 = vmul.f32 %v3436, %v3456
      %v3485 = vmul.f32 %v3437, %v3456
      %v3486 = vmul.f32 %v3438, %v3456
      %v3487 = vmul.f32 %v3439, %v3456
      %v3488 = vmul.f32 %v3440, %v3456
      %v3489 = vlaneseq
      %v3490 = vshrl.u32 %v3489, 7
      %v3491 = vsub.s32 5, %v3490
      %v3492 = vrot.slane %v280, %v3491
      %v3493 = vmul.f32 %v3411, %v3492
      %v3494 = vmul.f32 %v3412, %v3492
      %v3495 = vmul.f32 %v3413, %v3492
      %v3496 = vmul.f32 %v3414, %v3492
      %v3497 = vmul.f32 %v3415, %v3492
      %v3498 = vmul.f32 %v3416, %v3492
      %v3499 = vmul.f32 %v3417, %v3492
      %v3500 = vmul.f32 %v3418, %v3492
      %v3501 = vmul.f32 %v3419, %v3492
      %v3502 = vmul.f32 %v3420, %v3492
      %v3503 = vmul.f32 %v3421, %v3492
      %v3504 = vmul.f32 %v3422, %v3492
      %v3505 = vmul.f32 %v3423, %v3492
      %v3506 = vmul.f32 %v3424, %v3492
      %v3507 = vmul.f32 %v3425, %v3492
      %v3508 = vmul.f32 %v3426, %v3492
      %v3509 = vmul.f32 %v3427, %v3492
      %v3510 = vmul.f32 %v3428, %v3492
      %v3511 = vmul.f32 %v3429, %v3492
      %v3512 = vmul.f32 %v3430, %v3492
      %v3513 = vmul.f32 %v3431, %v3492
      %v3514 = vmul.f32 %v3432, %v3492
      %v3515 = vmul.f32 %v3433, %v3492
      %v3516 = vmul.f32 %v3434, %v3492
      %v3517 = vmul.f32 %v3435, %v3492
      %v3518 = vmul.f32 %v3436, %v3492
      %v3519 = vmul.f32 %v3437, %v3492
      %v3520 = vmul.f32 %v3438, %v3492
      %v3521 = vmul.f32 %v3439, %v3492
      %v3522 = vmul.f32 %v3440, %v3492
      %v3523 = vmul.f32 %v3441, %v3492
      %v3524 = vmul.f32 %v3442, %v3492
      %v3525 = vadd.f32 %v3457, %v3493
      %v3526 = vadd.f32 %v3458, %v3494
      %v3527 = vadd.f32 %v3459, %v3495
      %v3528 = vadd.f32 %v3460, %v3496
      %v3529 = vadd.f32 %v3461, %v3497
      %v3530 = vadd.f32 %v3462, %v3498
      %v3531 = vadd.f32 %v3463, %v3499
      %v3532 = vadd.f32 %v3464, %v3500
      %v3533 = vadd.f32 %v3465, %v3501
      %v3534 = vadd.f32 %v3466, %v3502
      %v3535 = vadd.f32 %v3467, %v3503
      %v3536 = vadd.f32 %v3468, %v3504
      %v3537 = vadd.f32 %v3469, %v3505
      %v3538 = vadd.f32 %v3470, %v3506
      %v3539 = vadd.f32 %v3471, %v3507
      %v3540 = vadd.f32 %v3472, %v3508
      %v3541 = vadd.f32 %v3473, %v3509
      %v3542 = vadd.f32 %v3474, %v3510
      %v3543 = vadd.f32 %v3475, %v3511
      %v3544 = vadd.f32 %v3476, %v3512
      %v3545 = vadd.f32 %v3477, %v3513
      %v3546 = vadd.f32 %v3478, %v3514
      %v3547 = vadd.f32 %v3479, %v3515
      %v3548 = vadd.f32 %v3480, %v3516
      %v3549 = vadd.f32 %v3481, %v3517
      %v3550 = vadd.f32 %v3482, %v3518
      %v3551 = vadd.f32 %v3483, %v3519
      %v3552 = vadd.f32 %v3484, %v3520
      %v3553 = vadd.f32 %v3485, %v3521
      %v3554 = vadd.f32 %v3486, %v3522
      %v3555 = vadd.f32 %v3487, %v3523
      %v3556 = vadd.f32 %v3488, %v3524
      %v3557 = vlaneseq
      %v3558 = vshrl.u32 %v3557, 7
      %v3559 = vsub.s32 4, %v3558
      %v3560 = vrot.slane %v281, %v3559
      %v3561 = vmul.f32 %v3413, %v3560
      %v3562 = vmul.f32 %v3414, %v3560
      %v3563 = vmul.f32 %v3415, %v3560
      %v3564 = vmul.f32 %v3416, %v3560
      %v3565 = vmul.f32 %v3417, %v3560
      %v3566 = vmul.f32 %v3418, %v3560
      %v3567 = vmul.f32 %v3419, %v3560
      %v3568 = vmul.f32 %v3420, %v3560
      %v3569 = vmul.f32 %v3421, %v3560
      %v3570 = vmul.f32 %v3422, %v3560
      %v3571 = vmul.f32 %v3423, %v3560
      %v3572 = vmul.f32 %v3424, %v3560
      %v3573 = vmul.f32 %v3425, %v3560
      %v3574 = vmul.f32 %v3426, %v3560
      %v3575 = vmul.f32 %v3427, %v3560
      %v3576 = vmul.f32 %v3428, %v3560
      %v3577 = vmul.f32 %v3429, %v3560
      %v3578 = vmul.f32 %v3430, %v3560
      %v3579 = vmul.f32 %v3431, %v3560
      %v3580 = vmul.f32 %v3432, %v3560
      %v3581 = vmul.f32 %v3433, %v3560
      %v3582 = vmul.f32 %v3434, %v3560
      %v3583 = vmul.f32 %v3435, %v3560
      %v3584 = vmul.f32 %v3436, %v3560
      %v3585 = vmul.f32 %v3437, %v3560
      %v3586 = vmul.f32 %v3438, %v3560
      %v3587 = vmul.f32 %v3439, %v3560
      %v3588 = vmul.f32 %v3440, %v3560
      %v3589 = vmul.f32 %v3441, %v3560
      %v3590 = vmul.f32 %v3442, %v3560
      %v3591 = vmul.f32 %v3443, %v3560
      %v3592 = vmul.f32 %v3444, %v3560
      %v3593 = vadd.f32 %v3525, %v3561
      %v3594 = vadd.f32 %v3526, %v3562
      %v3595 = vadd.f32 %v3527, %v3563
      %v3596 = vadd.f32 %v3528, %v3564
      %v3597 = vadd.f32 %v3529, %v3565
      %v3598 = vadd.f32 %v3530, %v3566
      %v3599 = vadd.f32 %v3531, %v3567
      %v3600 = vadd.f32 %v3532, %v3568
      %v3601 = vadd.f32 %v3533, %v3569
      %v3602 = vadd.f32 %v3534, %v3570
      %v3603 = vadd.f32 %v3535, %v3571
      %v3604 = vadd.f32 %v3536, %v3572
      %v3605 = vadd.f32 %v3537, %v3573
      %v3606 = vadd.f32 %v3538, %v3574
      %v3607 = vadd.f32 %v3539, %v3575
      %v3608 = vadd.f32 %v3540, %v3576
      %v3609 = vadd.f32 %v3541, %v3577
      %v3610 = vadd.f32 %v3542, %v3578
      %v3611 = vadd.f32 %v3543, %v3579
      %v3612 = vadd.f32 %v3544, %v3580
      %v3613 = vadd.f32 %v3545, %v3581
      %v3614 = vadd.f32 %v3546, %v3582
      %v3615 = vadd.f32 %v3547, %v3583
      %v3616 = vadd.f32 %v3548, %v3584
      %v3617 = vadd.f32 %v3549, %v3585
      %v3618 = vadd.f32 %v3550, %v3586
      %v3619 = vadd.f32 %v3551, %v3587
      %v3620 = vadd.f32 %v3552, %v3588
      %v3621 = vadd.f32 %v3553, %v3589
      %v3622 = vadd.f32 %v3554, %v3590
      %v3623 = vadd.f32 %v3555, %v3591
      %v3624 = vadd.f32 %v3556, %v3592
      %v3625 = vlaneseq
      %v3626 = vshrl.u32 %v3625, 7
      %v3627 = vsub.s32 3, %v3626
      %v3628 = vrot.slane %v282, %v3627
      %v3629 = vmul.f32 %v3415, %v3628
      %v3630 = vmul.f32 %v3416, %v3628
      %v3631 = vmul.f32 %v3417, %v3628
      %v3632 = vmul.f32 %v3418, %v3628
      %v3633 = vmul.f32 %v3419, %v3628
      %v3634 = vmul.f32 %v3420, %v3628
      %v3635 = vmul.f32 %v3421, %v3628
      %v3636 = vmul.f32 %v3422, %v3628
      %v3637 = vmul.f32 %v3423, %v3628
      %v3638 = vmul.f32 %v3424, %v3628
      %v3639 = vmul.f32 %v3425, %v3628
      %v3640 = vmul.f32 %v3426, %v3628
      %v3641 = vmul.f32 %v3427, %v3628
      %v3642 = vmul.f32 %v3428, %v3628
      %v3643 = vmul.f32 %v3429, %v3628
      %v3644 = vmul.f32 %v3430, %v3628
      %v3645 = vmul.f32 %v3431, %v3628
      %v3646 = vmul.f32 %v3432, %v3628
      %v3647 = vmul.f32 %v3433, %v3628
      %v3648 = vmul.f32 %v3434, %v3628
      %v3649 = vmul.f32 %v3435, %v3628
      %v3650 = vmul.f32 %v3436, %v3628
      %v3651 = vmul.f32 %v3437, %v3628
      %v3652 = vmul.f32 %v3438, %v3628
      %v3653 = vmul.f32 %v3439, %v3628
      %v3654 = vmul.f32 %v3440, %v3628
      %v3655 = vmul.f32 %v3441, %v3628
      %v3656 = vmul.f32 %v3442, %v3628
      %v3657 = vmul.f32 %v3443, %v3628
      %v3658 = vmul.f32 %v3444, %v3628
      %v3659 = vmul.f32 %v3445, %v3628
      %v3660 = vmul.f32 %v3446, %v3628
      %v3661 = vadd.f32 %v3593, %v3629
      %v3662 = vadd.f32 %v3594, %v3630
      %v3663 = vadd.f32 %v3595, %v3631
      %v3664 = vadd.f32 %v3596, %v3632
      %v3665 = vadd.f32 %v3597, %v3633
      %v3666 = vadd.f32 %v3598, %v3634
      %v3667 = vadd.f32 %v3599, %v3635
      %v3668 = vadd.f32 %v3600, %v3636
      %v3669 = vadd.f32 %v3601, %v3637
      %v3670 = vadd.f32 %v3602, %v3638
      %v3671 = vadd.f32 %v3603, %v3639
      %v3672 = vadd.f32 %v3604, %v3640
      %v3673 = vadd.f32 %v3605, %v3641
      %v3674 = vadd.f32 %v3606, %v3642
      %v3675 = vadd.f32 %v3607, %v3643
      %v3676 = vadd.f32 %v3608, %v3644
      %v3677 = vadd.f32 %v3609, %v3645
      %v3678 = vadd.f32 %v3610, %v3646
      %v3679 = vadd.f32 %v3611, %v3647
      %v3680 = vadd.f32 %v3612, %v3648
      %v3681 = vadd.f32 %v3613, %v3649
      %v3682 = vadd.f32 %v3614, %v3650
      %v3683 = vadd.f32 %v3615, %v3651
      %v3684 = vadd.f32 %v3616, %v3652
      %v3685 = vadd.f32 %v3617, %v3653
      %v3686 = vadd.f32 %v3618, %v3654
      %v3687 = vadd.f32 %v3619, %v3655
      %v3688 = vadd.f32 %v3620, %v3656
      %v3689 = vadd.f32 %v3621, %v3657
      %v3690 = vadd.f32 %v3622, %v3658
      %v3691 = vadd.f32 %v3623, %v3659
      %v3692 = vadd.f32 %v3624, %v3660
      %v3693 = vlaneseq
      %v3694 = vshrl.u32 %v3693, 7
      %v3695 = vsub.s32 2, %v3694
      %v3696 = vrot.slane %v283, %v3695
      %v3697 = vmul.f32 %v3417, %v3696
      %v3698 = vmul.f32 %v3418, %v3696
      %v3699 = vmul.f32 %v3419, %v3696
      %v3700 = vmul.f32 %v3420, %v3696
      %v3701 = vmul.f32 %v3421, %v3696
      %v3702 = vmul.f32 %v3422, %v3696
      %v3703 = vmul.f32 %v3423, %v3696
      %v3704 = vmul.f32 %v3424, %v3696
      %v3705 = vmul.f32 %v3425, %v3696
      %v3706 = vmul.f32 %v3426, %v3696
      %v3707 = vmul.f32 %v3427, %v3696
      %v3708 = vmul.f32 %v3428, %v3696
      %v3709 = vmul.f32 %v3429, %v3696
      %v3710 = vmul.f32 %v3430, %v3696
      %v3711 = vmul.f32 %v3431, %v3696
      %v3712 = vmul.f32 %v3432, %v3696
      %v3713 = vmul.f32 %v3433, %v3696
      %v3714 = vmul.f32 %v3434, %v3696
      %v3715 = vmul.f32 %v3435, %v3696
      %v3716 = vmul.f32 %v3436, %v3696
      %v3717 = vmul.f32 %v3437, %v3696
      %v3718 = vmul.f32 %v3438, %v3696
      %v3719 = vmul.f32 %v3439, %v3696
      %v3720 = vmul.f32 %v3440, %v3696
      %v3721 = vmul.f32 %v3441, %v3696
      %v3722 = vmul.f32 %v3442, %v3696
      %v3723 = vmul.f32 %v3443, %v3696
      %v3724 = vmul.f32 %v3444, %v3696
      %v3725 = vmul.f32 %v3445, %v3696
      %v3726 = vmul.f32 %v3446, %v3696
      %v3727 = vmul.f32 %v3447, %v3696
      %v3728 = vmul.f32 %v3448, %v3696
      %v3729 = vadd.f32 %v3661, %v3697
      %v3730 = vadd.f32 %v3662, %v3698
      %v3731 = vadd.f32 %v3663, %v3699
      %v3732 = vadd.f32 %v3664, %v3700
      %v3733 = vadd.f32 %v3665, %v3701
      %v3734 = vadd.f32 %v3666, %v3702
      %v3735 = vadd.f32 %v3667, %v3703
      %v3736 = vadd.f32 %v3668, %v3704
      %v3737 = vadd.f32 %v3669, %v3705
      %v3738 = vadd.f32 %v3670, %v3706
      %v3739 = vadd.f32 %v3671, %v3707
      %v3740 = vadd.f32 %v3672, %v3708
      %v3741 = vadd.f32 %v3673, %v3709
      %v3742 = vadd.f32 %v3674, %v3710
      %v3743 = vadd.f32 %v3675, %v3711
      %v3744 = vadd.f32 %v3676, %v3712
      %v3745 = vadd.f32 %v3677, %v3713
      %v3746 = vadd.f32 %v3678, %v3714
      %v3747 = vadd.f32 %v3679, %v3715
      %v3748 = vadd.f32 %v3680, %v3716
      %v3749 = vadd.f32 %v3681, %v3717
      %v3750 = vadd.f32 %v3682, %v3718
      %v3751 = vadd.f32 %v3683, %v3719
      %v3752 = vadd.f32 %v3684, %v3720
      %v3753 = vadd.f32 %v3685, %v3721
      %v3754 = vadd.f32 %v3686, %v3722
      %v3755 = vadd.f32 %v3687, %v3723
      %v3756 = vadd.f32 %v3688, %v3724
      %v3757 = vadd.f32 %v3689, %v3725
      %v3758 = vadd.f32 %v3690, %v3726
      %v3759 = vadd.f32 %v3691, %v3727
      %v3760 = vadd.f32 %v3692, %v3728
      %v3761 = vlaneseq
      %v3762 = vshrl.u32 %v3761, 7
      %v3763 = vsub.s32 1, %v3762
      %v3764 = vrot.slane %v284, %v3763
      %v3765 = vmul.f32 %v3419, %v3764
      %v3766 = vmul.f32 %v3420, %v3764
      %v3767 = vmul.f32 %v3421, %v3764
      %v3768 = vmul.f32 %v3422, %v3764
      %v3769 = vmul.f32 %v3423, %v3764
      %v3770 = vmul.f32 %v3424, %v3764
      %v3771 = vmul.f32 %v3425, %v3764
      %v3772 = vmul.f32 %v3426, %v3764
      %v3773 = vmul.f32 %v3427, %v3764
      %v3774 = vmul.f32 %v3428, %v3764
      %v3775 = vmul.f32 %v3429, %v3764
      %v3776 = vmul.f32 %v3430, %v3764
      %v3777 = vmul.f32 %v3431, %v3764
      %v3778 = vmul.f32 %v3432, %v3764
      %v3779 = vmul.f32 %v3433, %v3764
      %v3780 = vmul.f32 %v3434, %v3764
      %v3781 = vmul.f32 %v3435, %v3764
      %v3782 = vmul.f32 %v3436, %v3764
      %v3783 = vmul.f32 %v3437, %v3764
      %v3784 = vmul.f32 %v3438, %v3764
      %v3785 = vmul.f32 %v3439, %v3764
      %v3786 = vmul.f32 %v3440, %v3764
      %v3787 = vmul.f32 %v3441, %v3764
      %v3788 = vmul.f32 %v3442, %v3764
      %v3789 = vmul.f32 %v3443, %v3764
      %v3790 = vmul.f32 %v3444, %v3764
      %v3791 = vmul.f32 %v3445, %v3764
      %v3792 = vmul.f32 %v3446, %v3764
      %v3793 = vmul.f32 %v3447, %v3764
      %v3794 = vmul.f32 %v3448, %v3764
      %v3795 = vmul.f32 %v3449, %v3764
      %v3796 = vmul.f32 %v3450, %v3764
      %v3797 = vadd.f32 %v3729, %v3765
      %v3798 = vadd.f32 %v3730, %v3766
      %v3799 = vadd.f32 %v3731, %v3767
      %v3800 = vadd.f32 %v3732, %v3768
      %v3801 = vadd.f32 %v3733, %v3769
      %v3802 = vadd.f32 %v3734, %v3770
      %v3803 = vadd.f32 %v3735, %v3771
      %v3804 = vadd.f32 %v3736, %v3772
      %v3805 = vadd.f32 %v3737, %v3773
      %v3806 = vadd.f32 %v3738, %v3774
      %v3807 = vadd.f32 %v3739, %v3775
      %v3808 = vadd.f32 %v3740, %v3776
      %v3809 = vadd.f32 %v3741, %v3777
      %v3810 = vadd.f32 %v3742, %v3778
      %v3811 = vadd.f32 %v3743, %v3779
      %v3812 = vadd.f32 %v3744, %v3780
      %v3813 = vadd.f32 %v3745, %v3781
      %v3814 = vadd.f32 %v3746, %v3782
      %v3815 = vadd.f32 %v3747, %v3783
      %v3816 = vadd.f32 %v3748, %v3784
      %v3817 = vadd.f32 %v3749, %v3785
      %v3818 = vadd.f32 %v3750, %v3786
      %v3819 = vadd.f32 %v3751, %v3787
      %v3820 = vadd.f32 %v3752, %v3788
      %v3821 = vadd.f32 %v3753, %v3789
      %v3822 = vadd.f32 %v3754, %v3790
      %v3823 = vadd.f32 %v3755, %v3791
      %v3824 = vadd.f32 %v3756, %v3792
      %v3825 = vadd.f32 %v3757, %v3793
      %v3826 = vadd.f32 %v3758, %v3794
      %v3827 = vadd.f32 %v3759, %v3795
      %v3828 = vadd.f32 %v3760, %v3796
      %v3829 = vlaneseq
      %v3830 = vshrl.u32 %v3829, 7
      %v3831 = vsub.s32 0, %v3830
      %v3832 = vrot.slane %v285, %v3831
      %v3833 = vmul.f32 %v3421, %v3832
      %v3834 = vmul.f32 %v3422, %v3832
      %v3835 = vmul.f32 %v3423, %v3832
      %v3836 = vmul.f32 %v3424, %v3832
      %v3837 = vmul.f32 %v3425, %v3832
      %v3838 = vmul.f32 %v3426, %v3832
      %v3839 = vmul.f32 %v3427, %v3832
      %v3840 = vmul.f32 %v3428, %v3832
      %v3841 = vmul.f32 %v3429, %v3832
      %v3842 = vmul.f32 %v3430, %v3832
      %v3843 = vmul.f32 %v3431, %v3832
      %v3844 = vmul.f32 %v3432, %v3832
      %v3845 = vmul.f32 %v3433, %v3832
      %v3846 = vmul.f32 %v3434, %v3832
      %v3847 = vmul.f32 %v3435, %v3832
      %v3848 = vmul.f32 %v3436, %v3832
      %v3849 = vmul.f32 %v3437, %v3832
      %v3850 = vmul.f32 %v3438, %v3832
      %v3851 = vmul.f32 %v3439, %v3832
      %v3852 = vmul.f32 %v3440, %v3832
      %v3853 = vmul.f32 %v3441, %v3832
      %v3854 = vmul.f32 %v3442, %v3832
      %v3855 = vmul.f32 %v3443, %v3832
      %v3856 = vmul.f32 %v3444, %v3832
      %v3857 = vmul.f32 %v3445, %v3832
      %v3858 = vmul.f32 %v3446, %v3832
      %v3859 = vmul.f32 %v3447, %v3832
      %v3860 = vmul.f32 %v3448, %v3832
      %v3861 = vmul.f32 %v3449, %v3832
      %v3862 = vmul.f32 %v3450, %v3832
      %v3863 = vmul.f32 %v3451, %v3832
      %v3864 = vmul.f32 %v3452, %v3832
      %v3865 = vadd.f32 %v3797, %v3833
      %v3866 = vadd.f32 %v3798, %v3834
      %v3867 = vadd.f32 %v3799, %v3835
      %v3868 = vadd.f32 %v3800, %v3836
      %v3869 = vadd.f32 %v3801, %v3837
      %v3870 = vadd.f32 %v3802, %v3838
      %v3871 = vadd.f32 %v3803, %v3839
      %v3872 = vadd.f32 %v3804, %v3840
      %v3873 = vadd.f32 %v3805, %v3841
      %v3874 = vadd.f32 %v3806, %v3842
      %v3875 = vadd.f32 %v3807, %v3843
      %v3876 = vadd.f32 %v3808, %v3844
      %v3877 = vadd.f32 %v3809, %v3845
      %v3878 = vadd.f32 %v3810, %v3846
      %v3879 = vadd.f32 %v3811, %v3847
      %v3880 = vadd.f32 %v3812, %v3848
      %v3881 = vadd.f32 %v3813, %v3849
      %v3882 = vadd.f32 %v3814, %v3850
      %v3883 = vadd.f32 %v3815, %v3851
      %v3884 = vadd.f32 %v3816, %v3852
      %v3885 = vadd.f32 %v3817, %v3853
      %v3886 = vadd.f32 %v3818, %v3854
      %v3887 = vadd.f32 %v3819, %v3855
      %v3888 = vadd.f32 %v3820, %v3856
      %v3889 = vadd.f32 %v3821, %v3857
      %v3890 = vadd.f32 %v3822, %v3858
      %v3891 = vadd.f32 %v3823, %v3859
      %v3892 = vadd.f32 %v3824, %v3860
      %v3893 = vadd.f32 %v3825, %v3861
      %v3894 = vadd.f32 %v3826, %v3862
      %v3895 = vadd.f32 %v3827, %v3863
      %v3896 = vadd.f32 %v3828, %v3864
      %v3897 = vadd.f32 %v3377, %v3865
      %v3898 = vadd.f32 %v3378, %v3866
      %v3899 = vadd.f32 %v3379, %v3867
      %v3900 = vadd.f32 %v3380, %v3868
      %v3901 = vadd.f32 %v3381, %v3869
      %v3902 = vadd.f32 %v3382, %v3870
      %v3903 = vadd.f32 %v3383, %v3871
      %v3904 = vadd.f32 %v3384, %v3872
      %v3905 = vadd.f32 %v3385, %v3873
      %v3906 = vadd.f32 %v3386, %v3874
      %v3907 = vadd.f32 %v3387, %v3875
      %v3908 = vadd.f32 %v3388, %v3876
      %v3909 = vadd.f32 %v3389, %v3877
      %v3910 = vadd.f32 %v3390, %v3878
      %v3911 = vadd.f32 %v3391, %v3879
      %v3912 = vadd.f32 %v3392, %v3880
      %v3913 = vadd.f32 %v3393, %v3881
      %v3914 = vadd.f32 %v3394, %v3882
      %v3915 = vadd.f32 %v3395, %v3883
      %v3916 = vadd.f32 %v3396, %v3884
      %v3917 = vadd.f32 %v3397, %v3885
      %v3918 = vadd.f32 %v3398, %v3886
      %v3919 = vadd.f32 %v3399, %v3887
      %v3920 = vadd.f32 %v3400, %v3888
      %v3921 = vadd.f32 %v3401, %v3889
      %v3922 = vadd.f32 %v3402, %v3890
      %v3923 = vadd.f32 %v3403, %v3891
      %v3924 = vadd.f32 %v3404, %v3892
      %v3925 = vadd.f32 %v3405, %v3893
      %v3926 = vadd.f32 %v3406, %v3894
      %v3927 = vadd.f32 %v3407, %v3895
      %v3928 = vadd.f32 %v3408, %v3896
      %v3929 = vlaneseq
      %v3930 = vshrl.u32 %v3929, 7
      %v3931 = vsub.s32 0, %v3930
      %v3932 = vrot.slane %v286, %v3931
      %v3933 = vadd.f32 %v3897, %v3932
      %v3934 = vadd.f32 %v3898, %v3932
      %v3935 = vadd.f32 %v3899, %v3932
      %v3936 = vadd.f32 %v3900, %v3932
      %v3937 = vadd.f32 %v3901, %v3932
      %v3938 = vadd.f32 %v3902, %v3932
      %v3939 = vadd.f32 %v3903, %v3932
      %v3940 = vadd.f32 %v3904, %v3932
      %v3941 = vadd.f32 %v3905, %v3932
      %v3942 = vadd.f32 %v3906, %v3932
      %v3943 = vadd.f32 %v3907, %v3932
      %v3944 = vadd.f32 %v3908, %v3932
      %v3945 = vadd.f32 %v3909, %v3932
      %v3946 = vadd.f32 %v3910, %v3932
      %v3947 = vadd.f32 %v3911, %v3932
      %v3948 = vadd.f32 %v3912, %v3932
      %v3949 = vadd.f32 %v3913, %v3932
      %v3950 = vadd.f32 %v3914, %v3932
      %v3951 = vadd.f32 %v3915, %v3932
      %v3952 = vadd.f32 %v3916, %v3932
      %v3953 = vadd.f32 %v3917, %v3932
      %v3954 = vadd.f32 %v3918, %v3932
      %v3955 = vadd.f32 %v3919, %v3932
      %v3956 = vadd.f32 %v3920, %v3932
      %v3957 = vadd.f32 %v3921, %v3932
      %v3958 = vadd.f32 %v3922, %v3932
      %v3959 = vadd.f32 %v3923, %v3932
      %v3960 = vadd.f32 %v3924, %v3932
      %v3961 = vadd.f32 %v3925, %v3932
      %v3962 = vadd.f32 %v3926, %v3932
      %v3963 = vadd.f32 %v3927, %v3932
      %v3964 = vadd.f32 %v3928, %v3932
      %3965 = vadd.xlane.f32.xlu0 %v3933
      %v3966 = vpop.xlane.xlu0 %3965
      %3967 = vadd.xlane.f32.xlu0 %v3934
      %v3968 = vpop.xlane.xlu0 %3967
      %3969 = vadd.xlane.f32.xlu0 %v3935
      %v3970 = vpop.xlane.xlu0 %3969
      %3971 = vadd.xlane.f32.xlu0 %v3936
      %v3972 = vpop.xlane.xlu0 %3971
      %3973 = vadd.xlane.f32.xlu0 %v3937
      %v3974 = vpop.xlane.xlu0 %3973
      %3975 = vadd.xlane.f32.xlu0 %v3938
      %v3976 = vpop.xlane.xlu0 %3975
      %3977 = vadd.xlane.f32.xlu0 %v3939
      %v3978 = vpop.xlane.xlu0 %3977
      %3979 = vadd.xlane.f32.xlu0 %v3940
      %v3980 = vpop.xlane.xlu0 %3979
      %3981 = vadd.xlane.f32.xlu0 %v3941
      %v3982 = vpop.xlane.xlu0 %3981
      %3983 = vadd.xlane.f32.xlu0 %v3942
      %v3984 = vpop.xlane.xlu0 %3983
      %3985 = vadd.xlane.f32.xlu0 %v3943
      %v3986 = vpop.xlane.xlu0 %3985
      %3987 = vadd.xlane.f32.xlu0 %v3944
      %v3988 = vpop.xlane.xlu0 %3987
      %3989 = vadd.xlane.f32.xlu0 %v3945
      %v3990 = vpop.xlane.xlu0 %3989
      %3991 = vadd.xlane.f32.xlu0 %v3946
      %v3992 = vpop.xlane.xlu0 %3991
      %3993 = vadd.xlane.f32.xlu0 %v3947
      %v3994 = vpop.xlane.xlu0 %3993
      %3995 = vadd.xlane.f32.xlu0 %v3948
      %v3996 = vpop.xlane.xlu0 %3995
      %3997 = vadd.xlane.f32.xlu0 %v3949
      %v3998 = vpop.xlane.xlu0 %3997
      %3999 = vadd.xlane.f32.xlu0 %v3950
      %v4000 = vpop.xlane.xlu0 %3999
      %4001 = vadd.xlane.f32.xlu0 %v3951
      %v4002 = vpop.xlane.xlu0 %4001
      %4003 = vadd.xlane.f32.xlu0 %v3952
      %v4004 = vpop.xlane.xlu0 %4003
      %4005 = vadd.xlane.f32.xlu0 %v3953
      %v4006 = vpop.xlane.xlu0 %4005
      %4007 = vadd.xlane.f32.xlu0 %v3954
      %v4008 = vpop.xlane.xlu0 %4007
      %4009 = vadd.xlane.f32.xlu0 %v3955
      %v4010 = vpop.xlane.xlu0 %4009
      %4011 = vadd.xlane.f32.xlu0 %v3956
      %v4012 = vpop.xlane.xlu0 %4011
      %4013 = vadd.xlane.f32.xlu0 %v3957
      %v4014 = vpop.xlane.xlu0 %4013
      %4015 = vadd.xlane.f32.xlu0 %v3958
      %v4016 = vpop.xlane.xlu0 %4015
      %4017 = vadd.xlane.f32.xlu0 %v3959
      %v4018 = vpop.xlane.xlu0 %4017
      %4019 = vadd.xlane.f32.xlu0 %v3960
      %v4020 = vpop.xlane.xlu0 %4019
      %4021 = vadd.xlane.f32.xlu0 %v3961
      %v4022 = vpop.xlane.xlu0 %4021
      %4023 = vadd.xlane.f32.xlu0 %v3962
      %v4024 = vpop.xlane.xlu0 %4023
      %4025 = vadd.xlane.f32.xlu0 %v3963
      %v4026 = vpop.xlane.xlu0 %4025
      %4027 = vadd.xlane.f32.xlu0 %v3964
      %v4028 = vpop.xlane.xlu0 %4027
      %v4029 = vmul.f32 %v3933, %v3933
      %v4030 = vmul.f32 %v3934, %v3934
      %v4031 = vmul.f32 %v3935, %v3935
      %v4032 = vmul.f32 %v3936, %v3936
      %v4033 = vmul.f32 %v3937, %v3937
      %v4034 = vmul.f32 %v3938, %v3938
      %v4035 = vmul.f32 %v3939, %v3939
      %v4036 = vmul.f32 %v3940, %v3940
      %v4037 = vmul.f32 %v3941, %v3941
      %v4038 = vmul.f32 %v3942, %v3942
      %v4039 = vmul.f32 %v3943, %v3943
      %v4040 = vmul.f32 %v3944, %v3944
      %v4041 = vmul.f32 %v3945, %v3945
      %v4042 = vmul.f32 %v3946, %v3946
      %v4043 = vmul.f32 %v3947, %v3947
      %v4044 = vmul.f32 %v3948, %v3948
      %v4045 = vmul.f32 %v3949, %v3949
      %v4046 = vmul.f32 %v3950, %v3950
      %v4047 = vmul.f32 %v3951, %v3951
      %v4048 = vmul.f32 %v3952, %v3952
      %v4049 = vmul.f32 %v3953, %v3953
      %v4050 = vmul.f32 %v3954, %v3954
      %v4051 = vmul.f32 %v3955, %v3955
      %v4052 = vmul.f32 %v3956, %v3956
      %v4053 = vmul.f32 %v3957, %v3957
      %v4054 = vmul.f32 %v3958, %v3958
      %v4055 = vmul.f32 %v3959, %v3959
      %v4056 = vmul.f32 %v3960, %v3960
      %v4057 = vmul.f32 %v3961, %v3961
      %v4058 = vmul.f32 %v3962, %v3962
      %v4059 = vmul.f32 %v3963, %v3963
      %v4060 = vmul.f32 %v3964, %v3964
      %4061 = vadd.xlane.f32.xlu0 %v4029
      %v4062 = vpop.xlane.xlu0 %4061
      %4063 = vadd.xlane.f32.xlu0 %v4030
      %v4064 = vpop.xlane.xlu0 %4063
      %4065 = vadd.xlane.f32.xlu0 %v4031
      %v4066 = vpop.xlane.xlu0 %4065
      %4067 = vadd.xlane.f32.xlu0 %v4032
      %v4068 = vpop.xlane.xlu0 %4067
      %4069 = vadd.xlane.f32.xlu0 %v4033
      %v4070 = vpop.xlane.xlu0 %4069
      %4071 = vadd.xlane.f32.xlu0 %v4034
      %v4072 = vpop.xlane.xlu0 %4071
      %4073 = vadd.xlane.f32.xlu0 %v4035
      %v4074 = vpop.xlane.xlu0 %4073
      %4075 = vadd.xlane.f32.xlu0 %v4036
      %v4076 = vpop.xlane.xlu0 %4075
      %4077 = vadd.xlane.f32.xlu0 %v4037
      %v4078 = vpop.xlane.xlu0 %4077
      %4079 = vadd.xlane.f32.xlu0 %v4038
      %v4080 = vpop.xlane.xlu0 %4079
      %4081 = vadd.xlane.f32.xlu0 %v4039
      %v4082 = vpop.xlane.xlu0 %4081
      %4083 = vadd.xlane.f32.xlu0 %v4040
      %v4084 = vpop.xlane.xlu0 %4083
      %4085 = vadd.xlane.f32.xlu0 %v4041
      %v4086 = vpop.xlane.xlu0 %4085
      %4087 = vadd.xlane.f32.xlu0 %v4042
      %v4088 = vpop.xlane.xlu0 %4087
      %4089 = vadd.xlane.f32.xlu0 %v4043
      %v4090 = vpop.xlane.xlu0 %4089
      %4091 = vadd.xlane.f32.xlu0 %v4044
      %v4092 = vpop.xlane.xlu0 %4091
      %4093 = vadd.xlane.f32.xlu0 %v4045
      %v4094 = vpop.xlane.xlu0 %4093
      %4095 = vadd.xlane.f32.xlu0 %v4046
      %v4096 = vpop.xlane.xlu0 %4095
      %4097 = vadd.xlane.f32.xlu0 %v4047
      %v4098 = vpop.xlane.xlu0 %4097
      %4099 = vadd.xlane.f32.xlu0 %v4048
      %v4100 = vpop.xlane.xlu0 %4099
      %4101 = vadd.xlane.f32.xlu0 %v4049
      %v4102 = vpop.xlane.xlu0 %4101
      %4103 = vadd.xlane.f32.xlu0 %v4050
      %v4104 = vpop.xlane.xlu0 %4103
      %4105 = vadd.xlane.f32.xlu0 %v4051
      %v4106 = vpop.xlane.xlu0 %4105
      %4107 = vadd.xlane.f32.xlu0 %v4052
      %v4108 = vpop.xlane.xlu0 %4107
      %4109 = vadd.xlane.f32.xlu0 %v4053
      %v4110 = vpop.xlane.xlu0 %4109
      %4111 = vadd.xlane.f32.xlu0 %v4054
      %v4112 = vpop.xlane.xlu0 %4111
      %4113 = vadd.xlane.f32.xlu0 %v4055
      %v4114 = vpop.xlane.xlu0 %4113
      %4115 = vadd.xlane.f32.xlu0 %v4056
      %v4116 = vpop.xlane.xlu0 %4115
      %4117 = vadd.xlane.f32.xlu0 %v4057
      %v4118 = vpop.xlane.xlu0 %4117
      %4119 = vadd.xlane.f32.xlu0 %v4058
      %v4120 = vpop.xlane.xlu0 %4119
      %4121 = vadd.xlane.f32.xlu0 %v4059
      %v4122 = vpop.xlane.xlu0 %4121
      %4123 = vadd.xlane.f32.xlu0 %v4060
      %v4124 = vpop.xlane.xlu0 %4123
      %v4125 = vmul.f32 %v3966, 0.125
      %v4126 = vmul.f32 %v3968, 0.125
      %v4127 = vmul.f32 %v3970, 0.125
      %v4128 = vmul.f32 %v3972, 0.125
      %v4129 = vmul.f32 %v3974, 0.125
      %v4130 = vmul.f32 %v3976, 0.125
      %v4131 = vmul.f32 %v3978, 0.125
      %v4132 = vmul.f32 %v3980, 0.125
      %v4133 = vmul.f32 %v3982, 0.125
      %v4134 = vmul.f32 %v3984, 0.125
      %v4135 = vmul.f32 %v3986, 0.125
      %v4136 = vmul.f32 %v3988, 0.125
      %v4137 = vmul.f32 %v3990, 0.125
      %v4138 = vmul.f32 %v3992, 0.125
      %v4139 = vmul.f32 %v3994, 0.125
      %v4140 = vmul.f32 %v3996, 0.125
      %v4141 = vmul.f32 %v3998, 0.125
      %v4142 = vmul.f32 %v4000, 0.125
      %v4143 = vmul.f32 %v4002, 0.125
      %v4144 = vmul.f32 %v4004, 0.125
      %v4145 = vmul.f32 %v4006, 0.125
      %v4146 = vmul.f32 %v4008, 0.125
      %v4147 = vmul.f32 %v4010, 0.125
      %v4148 = vmul.f32 %v4012, 0.125
      %v4149 = vmul.f32 %v4014, 0.125
      %v4150 = vmul.f32 %v4016, 0.125
      %v4151 = vmul.f32 %v4018, 0.125
      %v4152 = vmul.f32 %v4020, 0.125
      %v4153 = vmul.f32 %v4022, 0.125
      %v4154 = vmul.f32 %v4024, 0.125
      %v4155 = vmul.f32 %v4026, 0.125
      %v4156 = vmul.f32 %v4028, 0.125
      %v4157 = vmul.f32 %v3966, %v4125
      %v4158 = vmul.f32 %v3968, %v4126
      %v4159 = vmul.f32 %v3970, %v4127
      %v4160 = vmul.f32 %v3972, %v4128
      %v4161 = vmul.f32 %v3974, %v4129
      %v4162 = vmul.f32 %v3976, %v4130
      %v4163 = vmul.f32 %v3978, %v4131
      %v4164 = vmul.f32 %v3980, %v4132
      %v4165 = vmul.f32 %v3982, %v4133
      %v4166 = vmul.f32 %v3984, %v4134
      %v4167 = vmul.f32 %v3986, %v4135
      %v4168 = vmul.f32 %v3988, %v4136
      %v4169 = vmul.f32 %v3990, %v4137
      %v4170 = vmul.f32 %v3992, %v4138
      %v4171 = vmul.f32 %v3994, %v4139
      %v4172 = vmul.f32 %v3996, %v4140
      %v4173 = vmul.f32 %v3998, %v4141
      %v4174 = vmul.f32 %v4000, %v4142
      %v4175 = vmul.f32 %v4002, %v4143
      %v4176 = vmul.f32 %v4004, %v4144
      %v4177 = vmul.f32 %v4006, %v4145
      %v4178 = vmul.f32 %v4008, %v4146
      %v4179 = vmul.f32 %v4010, %v4147
      %v4180 = vmul.f32 %v4012, %v4148
      %v4181 = vmul.f32 %v4014, %v4149
      %v4182 = vmul.f32 %v4016, %v4150
      %v4183 = vmul.f32 %v4018, %v4151
      %v4184 = vmul.f32 %v4020, %v4152
      %v4185 = vmul.f32 %v4022, %v4153
      %v4186 = vmul.f32 %v4024, %v4154
      %v4187 = vmul.f32 %v4026, %v4155
      %v4188 = vmul.f32 %v4028, %v4156
      %v4189 = vsub.f32 %v4062, %v4157
      %v4190 = vsub.f32 %v4064, %v4158
      %v4191 = vsub.f32 %v4066, %v4159
      %v4192 = vsub.f32 %v4068, %v4160
      %v4193 = vsub.f32 %v4070, %v4161
      %v4194 = vsub.f32 %v4072, %v4162
      %v4195 = vsub.f32 %v4074, %v4163
      %v4196 = vsub.f32 %v4076, %v4164
      %v4197 = vsub.f32 %v4078, %v4165
      %v4198 = vsub.f32 %v4080, %v4166
      %v4199 = vsub.f32 %v4082, %v4167
      %v4200 = vsub.f32 %v4084, %v4168
      %v4201 = vsub.f32 %v4086, %v4169
      %v4202 = vsub.f32 %v4088, %v4170
      %v4203 = vsub.f32 %v4090, %v4171
      %v4204 = vsub.f32 %v4092, %v4172
      %v4205 = vsub.f32 %v4094, %v4173
      %v4206 = vsub.f32 %v4096, %v4174
      %v4207 = vsub.f32 %v4098, %v4175
      %v4208 = vsub.f32 %v4100, %v4176
      %v4209 = vsub.f32 %v4102, %v4177
      %v4210 = vsub.f32 %v4104, %v4178
      %v4211 = vsub.f32 %v4106, %v4179
      %v4212 = vsub.f32 %v4108, %v4180
      %v4213 = vsub.f32 %v4110, %v4181
      %v4214 = vsub.f32 %v4112, %v4182
      %v4215 = vsub.f32 %v4114, %v4183
      %v4216 = vsub.f32 %v4116, %v4184
      %v4217 = vsub.f32 %v4118, %v4185
      %v4218 = vsub.f32 %v4120, %v4186
      %v4219 = vsub.f32 %v4122, %v4187
      %v4220 = vsub.f32 %v4124, %v4188
      %v4221 = vmul.f32 %v4189, 0.14285715
      %v4222 = vmul.f32 %v4190, 0.14285715
      %v4223 = vmul.f32 %v4191, 0.14285715
      %v4224 = vmul.f32 %v4192, 0.14285715
      %v4225 = vmul.f32 %v4193, 0.14285715
      %v4226 = vmul.f32 %v4194, 0.14285715
      %v4227 = vmul.f32 %v4195, 0.14285715
      %v4228 = vmul.f32 %v4196, 0.14285715
      %v4229 = vmul.f32 %v4197, 0.14285715
      %v4230 = vmul.f32 %v4198, 0.14285715
      %v4231 = vmul.f32 %v4199, 0.14285715
      %v4232 = vmul.f32 %v4200, 0.14285715
      %v4233 = vmul.f32 %v4201, 0.14285715
      %v4234 = vmul.f32 %v4202, 0.14285715
      %v4235 = vmul.f32 %v4203, 0.14285715
      %v4236 = vmul.f32 %v4204, 0.14285715
      %v4237 = vmul.f32 %v4205, 0.14285715
      %v4238 = vmul.f32 %v4206, 0.14285715
      %v4239 = vmul.f32 %v4207, 0.14285715
      %v4240 = vmul.f32 %v4208, 0.14285715
      %v4241 = vmul.f32 %v4209, 0.14285715
      %v4242 = vmul.f32 %v4210, 0.14285715
      %v4243 = vmul.f32 %v4211, 0.14285715
      %v4244 = vmul.f32 %v4212, 0.14285715
      %v4245 = vmul.f32 %v4213, 0.14285715
      %v4246 = vmul.f32 %v4214, 0.14285715
      %v4247 = vmul.f32 %v4215, 0.14285715
      %v4248 = vmul.f32 %v4216, 0.14285715
      %v4249 = vmul.f32 %v4217, 0.14285715
      %v4250 = vmul.f32 %v4218, 0.14285715
      %v4251 = vmul.f32 %v4219, 0.14285715
      %v4252 = vmul.f32 %v4220, 0.14285715
      %v4253 = vmax.f32 %v4221, 0.0
      %v4254 = vmax.f32 %v4222, 0.0
      %v4255 = vmax.f32 %v4223, 0.0
      %v4256 = vmax.f32 %v4224, 0.0
      %v4257 = vmax.f32 %v4225, 0.0
      %v4258 = vmax.f32 %v4226, 0.0
      %v4259 = vmax.f32 %v4227, 0.0
      %v4260 = vmax.f32 %v4228, 0.0
      %v4261 = vmax.f32 %v4229, 0.0
      %v4262 = vmax.f32 %v4230, 0.0
      %v4263 = vmax.f32 %v4231, 0.0
      %v4264 = vmax.f32 %v4232, 0.0
      %v4265 = vmax.f32 %v4233, 0.0
      %v4266 = vmax.f32 %v4234, 0.0
      %v4267 = vmax.f32 %v4235, 0.0
      %v4268 = vmax.f32 %v4236, 0.0
      %v4269 = vmax.f32 %v4237, 0.0
      %v4270 = vmax.f32 %v4238, 0.0
      %v4271 = vmax.f32 %v4239, 0.0
      %v4272 = vmax.f32 %v4240, 0.0
      %v4273 = vmax.f32 %v4241, 0.0
      %v4274 = vmax.f32 %v4242, 0.0
      %v4275 = vmax.f32 %v4243, 0.0
      %v4276 = vmax.f32 %v4244, 0.0
      %v4277 = vmax.f32 %v4245, 0.0
      %v4278 = vmax.f32 %v4246, 0.0
      %v4279 = vmax.f32 %v4247, 0.0
      %v4280 = vmax.f32 %v4248, 0.0
      %v4281 = vmax.f32 %v4249, 0.0
      %v4282 = vmax.f32 %v4250, 0.0
      %v4283 = vmax.f32 %v4251, 0.0
      %v4284 = vmax.f32 %v4252, 0.0
      %v4285 = vrsqrt.pop %v4253
      %v4286 = vmul.f32 %v4253, %v4285
      %vm4287 = vcmp.eq.f32.partialorder %v4253, inf
      %v4288 = vsel %vm4287, %v4253, %v4286
      %vm4289 = vcmp.eq.f32.partialorder %v4253, 0.0
      %v4290 = vand.u32 %v4253, 2147483648
      %v4291 = vsel %vm4289, %v4290, %v4288
      %v4292 = vrsqrt.pop %v4254
      %v4293 = vmul.f32 %v4254, %v4292
      %vm4294 = vcmp.eq.f32.partialorder %v4254, inf
      %v4295 = vsel %vm4294, %v4254, %v4293
      %vm4296 = vcmp.eq.f32.partialorder %v4254, 0.0
      %v4297 = vand.u32 %v4254, 2147483648
      %v4298 = vsel %vm4296, %v4297, %v4295
      %v4299 = vrsqrt.pop %v4255
      %v4300 = vmul.f32 %v4255, %v4299
      %vm4301 = vcmp.eq.f32.partialorder %v4255, inf
      %v4302 = vsel %vm4301, %v4255, %v4300
      %vm4303 = vcmp.eq.f32.partialorder %v4255, 0.0
      %v4304 = vand.u32 %v4255, 2147483648
      %v4305 = vsel %vm4303, %v4304, %v4302
      %v4306 = vrsqrt.pop %v4256
      %v4307 = vmul.f32 %v4256, %v4306
      %vm4308 = vcmp.eq.f32.partialorder %v4256, inf
      %v4309 = vsel %vm4308, %v4256, %v4307
      %vm4310 = vcmp.eq.f32.partialorder %v4256, 0.0
      %v4311 = vand.u32 %v4256, 2147483648
      %v4312 = vsel %vm4310, %v4311, %v4309
      %v4313 = vrsqrt.pop %v4257
      %v4314 = vmul.f32 %v4257, %v4313
      %vm4315 = vcmp.eq.f32.partialorder %v4257, inf
      %v4316 = vsel %vm4315, %v4257, %v4314
      %vm4317 = vcmp.eq.f32.partialorder %v4257, 0.0
      %v4318 = vand.u32 %v4257, 2147483648
      %v4319 = vsel %vm4317, %v4318, %v4316
      %v4320 = vrsqrt.pop %v4258
      %v4321 = vmul.f32 %v4258, %v4320
      %vm4322 = vcmp.eq.f32.partialorder %v4258, inf
      %v4323 = vsel %vm4322, %v4258, %v4321
      %vm4324 = vcmp.eq.f32.partialorder %v4258, 0.0
      %v4325 = vand.u32 %v4258, 2147483648
      %v4326 = vsel %vm4324, %v4325, %v4323
      %v4327 = vrsqrt.pop %v4259
      %v4328 = vmul.f32 %v4259, %v4327
      %vm4329 = vcmp.eq.f32.partialorder %v4259, inf
      %v4330 = vsel %vm4329, %v4259, %v4328
      %vm4331 = vcmp.eq.f32.partialorder %v4259, 0.0
      %v4332 = vand.u32 %v4259, 2147483648
      %v4333 = vsel %vm4331, %v4332, %v4330
      %v4334 = vrsqrt.pop %v4260
      %v4335 = vmul.f32 %v4260, %v4334
      %vm4336 = vcmp.eq.f32.partialorder %v4260, inf
      %v4337 = vsel %vm4336, %v4260, %v4335
      %vm4338 = vcmp.eq.f32.partialorder %v4260, 0.0
      %v4339 = vand.u32 %v4260, 2147483648
      %v4340 = vsel %vm4338, %v4339, %v4337
      %v4341 = vrsqrt.pop %v4261
      %v4342 = vmul.f32 %v4261, %v4341
      %vm4343 = vcmp.eq.f32.partialorder %v4261, inf
      %v4344 = vsel %vm4343, %v4261, %v4342
      %vm4345 = vcmp.eq.f32.partialorder %v4261, 0.0
      %v4346 = vand.u32 %v4261, 2147483648
      %v4347 = vsel %vm4345, %v4346, %v4344
      %v4348 = vrsqrt.pop %v4262
      %v4349 = vmul.f32 %v4262, %v4348
      %vm4350 = vcmp.eq.f32.partialorder %v4262, inf
      %v4351 = vsel %vm4350, %v4262, %v4349
      %vm4352 = vcmp.eq.f32.partialorder %v4262, 0.0
      %v4353 = vand.u32 %v4262, 2147483648
      %v4354 = vsel %vm4352, %v4353, %v4351
      %v4355 = vrsqrt.pop %v4263
      %v4356 = vmul.f32 %v4263, %v4355
      %vm4357 = vcmp.eq.f32.partialorder %v4263, inf
      %v4358 = vsel %vm4357, %v4263, %v4356
      %vm4359 = vcmp.eq.f32.partialorder %v4263, 0.0
      %v4360 = vand.u32 %v4263, 2147483648
      %v4361 = vsel %vm4359, %v4360, %v4358
      %v4362 = vrsqrt.pop %v4264
      %v4363 = vmul.f32 %v4264, %v4362
      %vm4364 = vcmp.eq.f32.partialorder %v4264, inf
      %v4365 = vsel %vm4364, %v4264, %v4363
      %vm4366 = vcmp.eq.f32.partialorder %v4264, 0.0
      %v4367 = vand.u32 %v4264, 2147483648
      %v4368 = vsel %vm4366, %v4367, %v4365
      %v4369 = vrsqrt.pop %v4265
      %v4370 = vmul.f32 %v4265, %v4369
      %vm4371 = vcmp.eq.f32.partialorder %v4265, inf
      %v4372 = vsel %vm4371, %v4265, %v4370
      %vm4373 = vcmp.eq.f32.partialorder %v4265, 0.0
      %v4374 = vand.u32 %v4265, 2147483648
      %v4375 = vsel %vm4373, %v4374, %v4372
      %v4376 = vrsqrt.pop %v4266
      %v4377 = vmul.f32 %v4266, %v4376
      %vm4378 = vcmp.eq.f32.partialorder %v4266, inf
      %v4379 = vsel %vm4378, %v4266, %v4377
      %vm4380 = vcmp.eq.f32.partialorder %v4266, 0.0
      %v4381 = vand.u32 %v4266, 2147483648
      %v4382 = vsel %vm4380, %v4381, %v4379
      %v4383 = vrsqrt.pop %v4267
      %v4384 = vmul.f32 %v4267, %v4383
      %vm4385 = vcmp.eq.f32.partialorder %v4267, inf
      %v4386 = vsel %vm4385, %v4267, %v4384
      %vm4387 = vcmp.eq.f32.partialorder %v4267, 0.0
      %v4388 = vand.u32 %v4267, 2147483648
      %v4389 = vsel %vm4387, %v4388, %v4386
      %v4390 = vrsqrt.pop %v4268
      %v4391 = vmul.f32 %v4268, %v4390
      %vm4392 = vcmp.eq.f32.partialorder %v4268, inf
      %v4393 = vsel %vm4392, %v4268, %v4391
      %vm4394 = vcmp.eq.f32.partialorder %v4268, 0.0
      %v4395 = vand.u32 %v4268, 2147483648
      %v4396 = vsel %vm4394, %v4395, %v4393
      %v4397 = vrsqrt.pop %v4269
      %v4398 = vmul.f32 %v4269, %v4397
      %vm4399 = vcmp.eq.f32.partialorder %v4269, inf
      %v4400 = vsel %vm4399, %v4269, %v4398
      %vm4401 = vcmp.eq.f32.partialorder %v4269, 0.0
      %v4402 = vand.u32 %v4269, 2147483648
      %v4403 = vsel %vm4401, %v4402, %v4400
      %v4404 = vrsqrt.pop %v4270
      %v4405 = vmul.f32 %v4270, %v4404
      %vm4406 = vcmp.eq.f32.partialorder %v4270, inf
      %v4407 = vsel %vm4406, %v4270, %v4405
      %vm4408 = vcmp.eq.f32.partialorder %v4270, 0.0
      %v4409 = vand.u32 %v4270, 2147483648
      %v4410 = vsel %vm4408, %v4409, %v4407
      %v4411 = vrsqrt.pop %v4271
      %v4412 = vmul.f32 %v4271, %v4411
      %vm4413 = vcmp.eq.f32.partialorder %v4271, inf
      %v4414 = vsel %vm4413, %v4271, %v4412
      %vm4415 = vcmp.eq.f32.partialorder %v4271, 0.0
      %v4416 = vand.u32 %v4271, 2147483648
      %v4417 = vsel %vm4415, %v4416, %v4414
      %v4418 = vrsqrt.pop %v4272
      %v4419 = vmul.f32 %v4272, %v4418
      %vm4420 = vcmp.eq.f32.partialorder %v4272, inf
      %v4421 = vsel %vm4420, %v4272, %v4419
      %vm4422 = vcmp.eq.f32.partialorder %v4272, 0.0
      %v4423 = vand.u32 %v4272, 2147483648
      %v4424 = vsel %vm4422, %v4423, %v4421
      %v4425 = vrsqrt.pop %v4273
      %v4426 = vmul.f32 %v4273, %v4425
      %vm4427 = vcmp.eq.f32.partialorder %v4273, inf
      %v4428 = vsel %vm4427, %v4273, %v4426
      %vm4429 = vcmp.eq.f32.partialorder %v4273, 0.0
      %v4430 = vand.u32 %v4273, 2147483648
      %v4431 = vsel %vm4429, %v4430, %v4428
      %v4432 = vrsqrt.pop %v4274
      %v4433 = vmul.f32 %v4274, %v4432
      %vm4434 = vcmp.eq.f32.partialorder %v4274, inf
      %v4435 = vsel %vm4434, %v4274, %v4433
      %vm4436 = vcmp.eq.f32.partialorder %v4274, 0.0
      %v4437 = vand.u32 %v4274, 2147483648
      %v4438 = vsel %vm4436, %v4437, %v4435
      %v4439 = vrsqrt.pop %v4275
      %v4440 = vmul.f32 %v4275, %v4439
      %vm4441 = vcmp.eq.f32.partialorder %v4275, inf
      %v4442 = vsel %vm4441, %v4275, %v4440
      %vm4443 = vcmp.eq.f32.partialorder %v4275, 0.0
      %v4444 = vand.u32 %v4275, 2147483648
      %v4445 = vsel %vm4443, %v4444, %v4442
      %v4446 = vrsqrt.pop %v4276
      %v4447 = vmul.f32 %v4276, %v4446
      %vm4448 = vcmp.eq.f32.partialorder %v4276, inf
      %v4449 = vsel %vm4448, %v4276, %v4447
      %vm4450 = vcmp.eq.f32.partialorder %v4276, 0.0
      %v4451 = vand.u32 %v4276, 2147483648
      %v4452 = vsel %vm4450, %v4451, %v4449
      %v4453 = vrsqrt.pop %v4277
      %v4454 = vmul.f32 %v4277, %v4453
      %vm4455 = vcmp.eq.f32.partialorder %v4277, inf
      %v4456 = vsel %vm4455, %v4277, %v4454
      %vm4457 = vcmp.eq.f32.partialorder %v4277, 0.0
      %v4458 = vand.u32 %v4277, 2147483648
      %v4459 = vsel %vm4457, %v4458, %v4456
      %v4460 = vrsqrt.pop %v4278
      %v4461 = vmul.f32 %v4278, %v4460
      %vm4462 = vcmp.eq.f32.partialorder %v4278, inf
      %v4463 = vsel %vm4462, %v4278, %v4461
      %vm4464 = vcmp.eq.f32.partialorder %v4278, 0.0
      %v4465 = vand.u32 %v4278, 2147483648
      %v4466 = vsel %vm4464, %v4465, %v4463
      %v4467 = vrsqrt.pop %v4279
      %v4468 = vmul.f32 %v4279, %v4467
      %vm4469 = vcmp.eq.f32.partialorder %v4279, inf
      %v4470 = vsel %vm4469, %v4279, %v4468
      %vm4471 = vcmp.eq.f32.partialorder %v4279, 0.0
      %v4472 = vand.u32 %v4279, 2147483648
      %v4473 = vsel %vm4471, %v4472, %v4470
      %v4474 = vrsqrt.pop %v4280
      %v4475 = vmul.f32 %v4280, %v4474
      %vm4476 = vcmp.eq.f32.partialorder %v4280, inf
      %v4477 = vsel %vm4476, %v4280, %v4475
      %vm4478 = vcmp.eq.f32.partialorder %v4280, 0.0
      %v4479 = vand.u32 %v4280, 2147483648
      %v4480 = vsel %vm4478, %v4479, %v4477
      %v4481 = vrsqrt.pop %v4281
      %v4482 = vmul.f32 %v4281, %v4481
      %vm4483 = vcmp.eq.f32.partialorder %v4281, inf
      %v4484 = vsel %vm4483, %v4281, %v4482
      %vm4485 = vcmp.eq.f32.partialorder %v4281, 0.0
      %v4486 = vand.u32 %v4281, 2147483648
      %v4487 = vsel %vm4485, %v4486, %v4484
      %v4488 = vrsqrt.pop %v4282
      %v4489 = vmul.f32 %v4282, %v4488
      %vm4490 = vcmp.eq.f32.partialorder %v4282, inf
      %v4491 = vsel %vm4490, %v4282, %v4489
      %vm4492 = vcmp.eq.f32.partialorder %v4282, 0.0
      %v4493 = vand.u32 %v4282, 2147483648
      %v4494 = vsel %vm4492, %v4493, %v4491
      %v4495 = vrsqrt.pop %v4283
      %v4496 = vmul.f32 %v4283, %v4495
      %vm4497 = vcmp.eq.f32.partialorder %v4283, inf
      %v4498 = vsel %vm4497, %v4283, %v4496
      %vm4499 = vcmp.eq.f32.partialorder %v4283, 0.0
      %v4500 = vand.u32 %v4283, 2147483648
      %v4501 = vsel %vm4499, %v4500, %v4498
      %v4502 = vrsqrt.pop %v4284
      %v4503 = vmul.f32 %v4284, %v4502
      %vm4504 = vcmp.eq.f32.partialorder %v4284, inf
      %v4505 = vsel %vm4504, %v4284, %v4503
      %vm4506 = vcmp.eq.f32.partialorder %v4284, 0.0
      %v4507 = vand.u32 %v4284, 2147483648
      %v4508 = vsel %vm4506, %v4507, %v4505
      %v4509 = vadd.f32 %v4291, 1e-06
      %v4510 = vadd.f32 %v4298, 1e-06
      %v4511 = vadd.f32 %v4305, 1e-06
      %v4512 = vadd.f32 %v4312, 1e-06
      %v4513 = vadd.f32 %v4319, 1e-06
      %v4514 = vadd.f32 %v4326, 1e-06
      %v4515 = vadd.f32 %v4333, 1e-06
      %v4516 = vadd.f32 %v4340, 1e-06
      %v4517 = vadd.f32 %v4347, 1e-06
      %v4518 = vadd.f32 %v4354, 1e-06
      %v4519 = vadd.f32 %v4361, 1e-06
      %v4520 = vadd.f32 %v4368, 1e-06
      %v4521 = vadd.f32 %v4375, 1e-06
      %v4522 = vadd.f32 %v4382, 1e-06
      %v4523 = vadd.f32 %v4389, 1e-06
      %v4524 = vadd.f32 %v4396, 1e-06
      %v4525 = vadd.f32 %v4403, 1e-06
      %v4526 = vadd.f32 %v4410, 1e-06
      %v4527 = vadd.f32 %v4417, 1e-06
      %v4528 = vadd.f32 %v4424, 1e-06
      %v4529 = vadd.f32 %v4431, 1e-06
      %v4530 = vadd.f32 %v4438, 1e-06
      %v4531 = vadd.f32 %v4445, 1e-06
      %v4532 = vadd.f32 %v4452, 1e-06
      %v4533 = vadd.f32 %v4459, 1e-06
      %v4534 = vadd.f32 %v4466, 1e-06
      %v4535 = vadd.f32 %v4473, 1e-06
      %v4536 = vadd.f32 %v4480, 1e-06
      %v4537 = vadd.f32 %v4487, 1e-06
      %v4538 = vadd.f32 %v4494, 1e-06
      %v4539 = vadd.f32 %v4501, 1e-06
      %v4540 = vadd.f32 %v4508, 1e-06
      %v4541 = vrcp.pop %v4509
      %v4542 = vrcp.pop %v4510
      %v4543 = vrcp.pop %v4511
      %v4544 = vrcp.pop %v4512
      %v4545 = vrcp.pop %v4513
      %v4546 = vrcp.pop %v4514
      %v4547 = vrcp.pop %v4515
      %v4548 = vrcp.pop %v4516
      %v4549 = vrcp.pop %v4517
      %v4550 = vrcp.pop %v4518
      %v4551 = vrcp.pop %v4519
      %v4552 = vrcp.pop %v4520
      %v4553 = vrcp.pop %v4521
      %v4554 = vrcp.pop %v4522
      %v4555 = vrcp.pop %v4523
      %v4556 = vrcp.pop %v4524
      %v4557 = vrcp.pop %v4525
      %v4558 = vrcp.pop %v4526
      %v4559 = vrcp.pop %v4527
      %v4560 = vrcp.pop %v4528
      %v4561 = vrcp.pop %v4529
      %v4562 = vrcp.pop %v4530
      %v4563 = vrcp.pop %v4531
      %v4564 = vrcp.pop %v4532
      %v4565 = vrcp.pop %v4533
      %v4566 = vrcp.pop %v4534
      %v4567 = vrcp.pop %v4535
      %v4568 = vrcp.pop %v4536
      %v4569 = vrcp.pop %v4537
      %v4570 = vrcp.pop %v4538
      %v4571 = vrcp.pop %v4539
      %v4572 = vrcp.pop %v4540
      %v4573 = vsub.f32 %v3933, %v4125
      %v4574 = vsub.f32 %v3934, %v4126
      %v4575 = vsub.f32 %v3935, %v4127
      %v4576 = vsub.f32 %v3936, %v4128
      %v4577 = vsub.f32 %v3937, %v4129
      %v4578 = vsub.f32 %v3938, %v4130
      %v4579 = vsub.f32 %v3939, %v4131
      %v4580 = vsub.f32 %v3940, %v4132
      %v4581 = vsub.f32 %v3941, %v4133
      %v4582 = vsub.f32 %v3942, %v4134
      %v4583 = vsub.f32 %v3943, %v4135
      %v4584 = vsub.f32 %v3944, %v4136
      %v4585 = vsub.f32 %v3945, %v4137
      %v4586 = vsub.f32 %v3946, %v4138
      %v4587 = vsub.f32 %v3947, %v4139
      %v4588 = vsub.f32 %v3948, %v4140
      %v4589 = vsub.f32 %v3949, %v4141
      %v4590 = vsub.f32 %v3950, %v4142
      %v4591 = vsub.f32 %v3951, %v4143
      %v4592 = vsub.f32 %v3952, %v4144
      %v4593 = vsub.f32 %v3953, %v4145
      %v4594 = vsub.f32 %v3954, %v4146
      %v4595 = vsub.f32 %v3955, %v4147
      %v4596 = vsub.f32 %v3956, %v4148
      %v4597 = vsub.f32 %v3957, %v4149
      %v4598 = vsub.f32 %v3958, %v4150
      %v4599 = vsub.f32 %v3959, %v4151
      %v4600 = vsub.f32 %v3960, %v4152
      %v4601 = vsub.f32 %v3961, %v4153
      %v4602 = vsub.f32 %v3962, %v4154
      %v4603 = vsub.f32 %v3963, %v4155
      %v4604 = vsub.f32 %v3964, %v4156
      %v4605 = vmul.f32 %v4573, %v4541
      %v4606 = vmul.f32 %v4574, %v4542
      %v4607 = vmul.f32 %v4575, %v4543
      %v4608 = vmul.f32 %v4576, %v4544
      %v4609 = vmul.f32 %v4577, %v4545
      %v4610 = vmul.f32 %v4578, %v4546
      %v4611 = vmul.f32 %v4579, %v4547
      %v4612 = vmul.f32 %v4580, %v4548
      %v4613 = vmul.f32 %v4581, %v4549
      %v4614 = vmul.f32 %v4582, %v4550
      %v4615 = vmul.f32 %v4583, %v4551
      %v4616 = vmul.f32 %v4584, %v4552
      %v4617 = vmul.f32 %v4585, %v4553
      %v4618 = vmul.f32 %v4586, %v4554
      %v4619 = vmul.f32 %v4587, %v4555
      %v4620 = vmul.f32 %v4588, %v4556
      %v4621 = vmul.f32 %v4589, %v4557
      %v4622 = vmul.f32 %v4590, %v4558
      %v4623 = vmul.f32 %v4591, %v4559
      %v4624 = vmul.f32 %v4592, %v4560
      %v4625 = vmul.f32 %v4593, %v4561
      %v4626 = vmul.f32 %v4594, %v4562
      %v4627 = vmul.f32 %v4595, %v4563
      %v4628 = vmul.f32 %v4596, %v4564
      %v4629 = vmul.f32 %v4597, %v4565
      %v4630 = vmul.f32 %v4598, %v4566
      %v4631 = vmul.f32 %v4599, %v4567
      %v4632 = vmul.f32 %v4600, %v4568
      %v4633 = vmul.f32 %v4601, %v4569
      %v4634 = vmul.f32 %v4602, %v4570
      %v4635 = vmul.f32 %v4603, %v4571
      %v4636 = vmul.f32 %v4604, %v4572
      %v4637 = vlaneseq
      %v4638 = vshrl.u32 %v4637, 7
      %v4639 = vsub.s32 1, %v4638
      %v4640 = vrot.slane %v286, %v4639
      %v4641 = vmul.f32 %v4640, %v4605
      %v4642 = vmul.f32 %v4640, %v4606
      %v4643 = vmul.f32 %v4640, %v4607
      %v4644 = vmul.f32 %v4640, %v4608
      %v4645 = vmul.f32 %v4640, %v4609
      %v4646 = vmul.f32 %v4640, %v4610
      %v4647 = vmul.f32 %v4640, %v4611
      %v4648 = vmul.f32 %v4640, %v4612
      %v4649 = vmul.f32 %v4640, %v4613
      %v4650 = vmul.f32 %v4640, %v4614
      %v4651 = vmul.f32 %v4640, %v4615
      %v4652 = vmul.f32 %v4640, %v4616
      %v4653 = vmul.f32 %v4640, %v4617
      %v4654 = vmul.f32 %v4640, %v4618
      %v4655 = vmul.f32 %v4640, %v4619
      %v4656 = vmul.f32 %v4640, %v4620
      %v4657 = vmul.f32 %v4640, %v4621
      %v4658 = vmul.f32 %v4640, %v4622
      %v4659 = vmul.f32 %v4640, %v4623
      %v4660 = vmul.f32 %v4640, %v4624
      %v4661 = vmul.f32 %v4640, %v4625
      %v4662 = vmul.f32 %v4640, %v4626
      %v4663 = vmul.f32 %v4640, %v4627
      %v4664 = vmul.f32 %v4640, %v4628
      %v4665 = vmul.f32 %v4640, %v4629
      %v4666 = vmul.f32 %v4640, %v4630
      %v4667 = vmul.f32 %v4640, %v4631
      %v4668 = vmul.f32 %v4640, %v4632
      %v4669 = vmul.f32 %v4640, %v4633
      %v4670 = vmul.f32 %v4640, %v4634
      %v4671 = vmul.f32 %v4640, %v4635
      %v4672 = vmul.f32 %v4640, %v4636
      %v4673 = vlaneseq
      %v4674 = vshrl.u32 %v4673, 7
      %v4675 = vsub.s32 2, %v4674
      %v4676 = vrot.slane %v286, %v4675
      %v4677 = vadd.f32 %v4641, %v4676
      %v4678 = vadd.f32 %v4642, %v4676
      %v4679 = vadd.f32 %v4643, %v4676
      %v4680 = vadd.f32 %v4644, %v4676
      %v4681 = vadd.f32 %v4645, %v4676
      %v4682 = vadd.f32 %v4646, %v4676
      %v4683 = vadd.f32 %v4647, %v4676
      %v4684 = vadd.f32 %v4648, %v4676
      %v4685 = vadd.f32 %v4649, %v4676
      %v4686 = vadd.f32 %v4650, %v4676
      %v4687 = vadd.f32 %v4651, %v4676
      %v4688 = vadd.f32 %v4652, %v4676
      %v4689 = vadd.f32 %v4653, %v4676
      %v4690 = vadd.f32 %v4654, %v4676
      %v4691 = vadd.f32 %v4655, %v4676
      %v4692 = vadd.f32 %v4656, %v4676
      %v4693 = vadd.f32 %v4657, %v4676
      %v4694 = vadd.f32 %v4658, %v4676
      %v4695 = vadd.f32 %v4659, %v4676
      %v4696 = vadd.f32 %v4660, %v4676
      %v4697 = vadd.f32 %v4661, %v4676
      %v4698 = vadd.f32 %v4662, %v4676
      %v4699 = vadd.f32 %v4663, %v4676
      %v4700 = vadd.f32 %v4664, %v4676
      %v4701 = vadd.f32 %v4665, %v4676
      %v4702 = vadd.f32 %v4666, %v4676
      %v4703 = vadd.f32 %v4667, %v4676
      %v4704 = vadd.f32 %v4668, %v4676
      %v4705 = vadd.f32 %v4669, %v4676
      %v4706 = vadd.f32 %v4670, %v4676
      %v4707 = vadd.f32 %v4671, %v4676
      %v4708 = vadd.f32 %v4672, %v4676
      %v4709 = vpack.c.bf16 %v4678, %v4677
      %v4710 = vpack.c.bf16 %v4680, %v4679
      %v4711 = vpack.c.bf16 %v4682, %v4681
      %v4712 = vpack.c.bf16 %v4684, %v4683
      %v4713 = vpack.c.bf16 %v4686, %v4685
      %v4714 = vpack.c.bf16 %v4688, %v4687
      %v4715 = vpack.c.bf16 %v4690, %v4689
      %v4716 = vpack.c.bf16 %v4692, %v4691
      %v4717 = vpack.c.bf16 %v4694, %v4693
      %v4718 = vpack.c.bf16 %v4696, %v4695
      %v4719 = vpack.c.bf16 %v4698, %v4697
      %v4720 = vpack.c.bf16 %v4700, %v4699
      %v4721 = vpack.c.bf16 %v4702, %v4701
      %v4722 = vpack.c.bf16 %v4704, %v4703
      %v4723 = vpack.c.bf16 %v4706, %v4705
      %v4724 = vpack.c.bf16 %v4708, %v4707
      %v4725 = vld [vmem:[%s3] sm:$0xf]
      %v4726 = vld [vmem:[%s3 + $0x4] sm:$0xf]
      %v4727 = vld [vmem:[%s3 + $0x8] sm:$0xf]
      %v4728 = vld [vmem:[%s3 + $0xc] sm:$0xf]
      %v4729 = vld [vmem:[%s3 + $0x10] sm:$0xf]
      %v4730 = vld [vmem:[%s3 + $0x14] sm:$0xf]
      %v4731 = vld [vmem:[%s3 + $0x18] sm:$0xf]
      %v4732 = vld [vmem:[%s3 + $0x1c] sm:$0xf]
      %v4733 = vld [vmem:[%s3 + $0x20] sm:$0xf]
      %v4734 = vld [vmem:[%s3 + $0x24] sm:$0xf]
      %v4735 = vld [vmem:[%s3 + $0x28] sm:$0xf]
      %v4736 = vld [vmem:[%s3 + $0x2c] sm:$0xf]
      %v4737 = vld [vmem:[%s3 + $0x30] sm:$0xf]
      %v4738 = vld [vmem:[%s3 + $0x34] sm:$0xf]
      %v4739 = vld [vmem:[%s3 + $0x38] sm:$0xf]
      %v4740 = vld [vmem:[%s3 + $0x3c] sm:$0xf]
      %v4741 = vld [vmem:[%s4] sm:$0x1]
      %v4743 = vlaneseq
      %v4744 = vshrl.u32 %v4743, 7
      %v4745 = vsub.s32 0, %v4744
      %v4746 = vrot.slane %v4741, %v4745
      %v4764 = vunpack.c.l.b16 %v4725
      %v4765 = vunpack.c.l.b16 %v4726
      %v4766 = vunpack.c.l.b16 %v4727
      %v4767 = vunpack.c.l.b16 %v4728
      %v4768 = vunpack.c.l.b16 %v4729
      %v4769 = vunpack.c.l.b16 %v4730
      %v4770 = vunpack.c.l.b16 %v4731
      %v4771 = vunpack.c.l.b16 %v4732
      %v4772 = vunpack.c.l.b16 %v4733
      %v4773 = vunpack.c.l.b16 %v4734
      %v4774 = vunpack.c.l.b16 %v4735
      %v4775 = vunpack.c.l.b16 %v4736
      %v4776 = vunpack.c.l.b16 %v4737
      %v4777 = vunpack.c.l.b16 %v4738
      %v4778 = vunpack.c.l.b16 %v4739
      %v4779 = vunpack.c.l.b16 %v4740
      %v4780 = vpack.c.b16 %v4765, %v4764
      %v4781 = vpack.c.b16 %v4767, %v4766
      %v4782 = vpack.c.b16 %v4769, %v4768
      %v4783 = vpack.c.b16 %v4771, %v4770
      %v4784 = vpack.c.b16 %v4773, %v4772
      %v4785 = vpack.c.b16 %v4775, %v4774
      %v4786 = vpack.c.b16 %v4777, %v4776
      %v4787 = vpack.c.b16 %v4779, %v4778
      %4796 = vmatprep.subr.bf16.mxu0 0
      %4797 = vmatpush1.bf16.msra.mxu0 %v4780
      %4798 = vmatprep.subr.bf16.mxu0 0
      %4799 = vmatpush1.bf16.msra.mxu0 %v4781
      %4800 = vmatprep.subr.bf16.mxu0 0
      %4801 = vmatpush1.bf16.msra.mxu0 %v4782
      %4802 = vmatprep.subr.bf16.mxu0 0
      %4803 = vmatpush1.bf16.msra.mxu0 %v4783
      %4804 = vmatprep.subr.bf16.mxu0 0
      %4805 = vmatpush1.bf16.msra.mxu0 %v4784
      %4806 = vmatprep.subr.bf16.mxu0 0
      %4807 = vmatpush1.bf16.msra.mxu0 %v4785
      %4808 = vmatprep.subr.bf16.mxu0 0
      %4809 = vmatpush1.bf16.msra.mxu0 %v4786
      %4810 = vmatprep.subr.bf16.mxu0 0
      %4811 = vmatpush1.bf16.msra.mxu0 %v4787
      %4812 = vmatprep.subr.bf16.mxu0 0
      %4813 = vmatpush1.bf16.msra.mxu0 0
      %4814 = vmatprep.subr.bf16.mxu0 0
      %4815 = vmatpush1.bf16.msra.mxu0 0
      %4816 = vmatprep.subr.bf16.mxu0 0
      %4817 = vmatpush1.bf16.msra.mxu0 0
      %4818 = vmatprep.subr.bf16.mxu0 0
      %4819 = vmatpush1.bf16.msra.mxu0 0
      %4820 = vmatprep.subr.bf16.mxu0 0
      %4821 = vmatpush1.bf16.msra.mxu0 0
      %4822 = vmatprep.subr.bf16.mxu0 0
      %4823 = vmatpush1.bf16.msra.mxu0 0
      %4824 = vmatprep.subr.bf16.mxu0 0
      %4825 = vmatpush1.bf16.msra.mxu0 0
      %4826 = vmatprep.subr.bf16.mxu0 0
      %4827 = vmatpush1.bf16.msra.mxu0 0
      %4828 = vmatprep.mubr.bf16.mxu0 0
      %4829 = vmatmul.mubr.bf16.gmra.mrb[0].mxu0 %v4709
      %v4830 = vpop.f32.mrb[0].mxu0
      %v4831 = vadd.f32 %v4746, %v4830
      %v4832 = vpop.f32.mrb[0].mxu0
      %v4833 = vpop.f32.mrb[0].mxu0
      %v4834 = vadd.f32 %v4746, %v4833
      %v4835 = vpop.f32.mrb[0].mxu0
      %4836 = vmatprep.mubr.bf16.mxu0 0
      %4837 = vmatmul.mubr.bf16.gmra.mrb[0].mxu0 %v4710
      %v4838 = vpop.f32.mrb[0].mxu0
      %v4839 = vadd.f32 %v4746, %v4838
      %v4840 = vpop.f32.mrb[0].mxu0
      %v4841 = vpop.f32.mrb[0].mxu0
      %v4842 = vadd.f32 %v4746, %v4841
      %v4843 = vpop.f32.mrb[0].mxu0
      %4844 = vmatprep.mubr.bf16.mxu0 0
      %4845 = vmatmul.mubr.bf16.gmra.mrb[0].mxu0 %v4711
      %v4846 = vpop.f32.mrb[0].mxu0
      %v4847 = vadd.f32 %v4746, %v4846
      %v4848 = vpop.f32.mrb[0].mxu0
      %v4849 = vpop.f32.mrb[0].mxu0
      %v4850 = vadd.f32 %v4746, %v4849
      %v4851 = vpop.f32.mrb[0].mxu0
      %4852 = vmatprep.mubr.bf16.mxu0 0
      %4853 = vmatmul.mubr.bf16.gmra.mrb[0].mxu0 %v4712
      %v4854 = vpop.f32.mrb[0].mxu0
      %v4855 = vadd.f32 %v4746, %v4854
      %v4856 = vpop.f32.mrb[0].mxu0
      %v4857 = vpop.f32.mrb[0].mxu0
      %v4858 = vadd.f32 %v4746, %v4857
      %v4859 = vpop.f32.mrb[0].mxu0
      %4860 = vmatprep.mubr.bf16.mxu0 0
      %4861 = vmatmul.mubr.bf16.gmra.mrb[0].mxu0 %v4713
      %v4862 = vpop.f32.mrb[0].mxu0
      %v4863 = vadd.f32 %v4746, %v4862
      %v4864 = vpop.f32.mrb[0].mxu0
      %v4865 = vpop.f32.mrb[0].mxu0
      %v4866 = vadd.f32 %v4746, %v4865
      %v4867 = vpop.f32.mrb[0].mxu0
      %4868 = vmatprep.mubr.bf16.mxu0 0
      %4869 = vmatmul.mubr.bf16.gmra.mrb[0].mxu0 %v4714
      %v4870 = vpop.f32.mrb[0].mxu0
      %v4871 = vadd.f32 %v4746, %v4870
      %v4872 = vpop.f32.mrb[0].mxu0
      %v4873 = vpop.f32.mrb[0].mxu0
      %v4874 = vadd.f32 %v4746, %v4873
      %v4875 = vpop.f32.mrb[0].mxu0
      %4876 = vmatprep.mubr.bf16.mxu0 0
      %4877 = vmatmul.mubr.bf16.gmra.mrb[0].mxu0 %v4715
      %v4878 = vpop.f32.mrb[0].mxu0
      %v4879 = vadd.f32 %v4746, %v4878
      %v4880 = vpop.f32.mrb[0].mxu0
      %v4881 = vpop.f32.mrb[0].mxu0
      %v4882 = vadd.f32 %v4746, %v4881
      %v4883 = vpop.f32.mrb[0].mxu0
      %4884 = vmatprep.mubr.bf16.mxu0 0
      %4885 = vmatmul.mubr.bf16.gmra.mrb[0].mxu0 %v4716
      %v4886 = vpop.f32.mrb[0].mxu0
      %v4887 = vadd.f32 %v4746, %v4886
      %v4888 = vpop.f32.mrb[0].mxu0
      %v4889 = vpop.f32.mrb[0].mxu0
      %v4890 = vadd.f32 %v4746, %v4889
      %v4891 = vpop.f32.mrb[0].mxu0
      %4892 = vmatprep.mubr.bf16.mxu0 0
      %4893 = vmatmul.mubr.bf16.gmra.mrb[0].mxu0 %v4717
      %v4894 = vpop.f32.mrb[0].mxu0
      %v4895 = vadd.f32 %v4746, %v4894
      %v4896 = vpop.f32.mrb[0].mxu0
      %v4897 = vpop.f32.mrb[0].mxu0
      %v4898 = vadd.f32 %v4746, %v4897
      %v4899 = vpop.f32.mrb[0].mxu0
      %4900 = vmatprep.mubr.bf16.mxu0 0
      %4901 = vmatmul.mubr.bf16.gmra.mrb[0].mxu0 %v4718
      %v4902 = vpop.f32.mrb[0].mxu0
      %v4903 = vadd.f32 %v4746, %v4902
      %v4904 = vpop.f32.mrb[0].mxu0
      %v4905 = vpop.f32.mrb[0].mxu0
      %v4906 = vadd.f32 %v4746, %v4905
      %v4907 = vpop.f32.mrb[0].mxu0
      %4908 = vmatprep.mubr.bf16.mxu0 0
      %4909 = vmatmul.mubr.bf16.gmra.mrb[0].mxu0 %v4719
      %v4910 = vpop.f32.mrb[0].mxu0
      %v4911 = vadd.f32 %v4746, %v4910
      %v4912 = vpop.f32.mrb[0].mxu0
      %v4913 = vpop.f32.mrb[0].mxu0
      %v4914 = vadd.f32 %v4746, %v4913
      %v4915 = vpop.f32.mrb[0].mxu0
      %4916 = vmatprep.mubr.bf16.mxu0 0
      %4917 = vmatmul.mubr.bf16.gmra.mrb[0].mxu0 %v4720
      %v4918 = vpop.f32.mrb[0].mxu0
      %v4919 = vadd.f32 %v4746, %v4918
      %v4920 = vpop.f32.mrb[0].mxu0
      %v4921 = vpop.f32.mrb[0].mxu0
      %v4922 = vadd.f32 %v4746, %v4921
      %v4923 = vpop.f32.mrb[0].mxu0
      %4924 = vmatprep.mubr.bf16.mxu0 0
      %4925 = vmatmul.mubr.bf16.gmra.mrb[0].mxu0 %v4721
      %v4926 = vpop.f32.mrb[0].mxu0
      %v4927 = vadd.f32 %v4746, %v4926
      %v4928 = vpop.f32.mrb[0].mxu0
      %v4929 = vpop.f32.mrb[0].mxu0
      %v4930 = vadd.f32 %v4746, %v4929
      %v4931 = vpop.f32.mrb[0].mxu0
      %4932 = vmatprep.mubr.bf16.mxu0 0
      %4933 = vmatmul.mubr.bf16.gmra.mrb[0].mxu0 %v4722
      %v4934 = vpop.f32.mrb[0].mxu0
      %v4935 = vadd.f32 %v4746, %v4934
      %v4936 = vpop.f32.mrb[0].mxu0
      %v4937 = vpop.f32.mrb[0].mxu0
      %v4938 = vadd.f32 %v4746, %v4937
      %v4939 = vpop.f32.mrb[0].mxu0
      %4940 = vmatprep.mubr.bf16.mxu0 0
      %4941 = vmatmul.mubr.bf16.gmra.mrb[0].mxu0 %v4723
      %v4942 = vpop.f32.mrb[0].mxu0
      %v4943 = vadd.f32 %v4746, %v4942
      %v4944 = vpop.f32.mrb[0].mxu0
      %v4945 = vpop.f32.mrb[0].mxu0
      %v4946 = vadd.f32 %v4746, %v4945
      %v4947 = vpop.f32.mrb[0].mxu0
      %4948 = vmatprep.mubr.bf16.mxu0 0
      %4949 = vmatmul.mubr.bf16.gmra.mrb[0].mxu0 %v4724
      %v4950 = vpop.f32.mrb[0].mxu0
      %v4951 = vadd.f32 %v4746, %v4950
      %v4952 = vpop.f32.mrb[0].mxu0
      %v4953 = vpop.f32.mrb[0].mxu0
      %v4954 = vadd.f32 %v4746, %v4953
      %v4955 = vpop.f32.mrb[0].mxu0
      %4956 = vdwg.mxu0
      %v4957 = vmul.f32 %v4831, 0.5
      %v4958 = vmul.f32 %v4834, 0.5
      %v4959 = vmul.f32 %v4839, 0.5
      %v4960 = vmul.f32 %v4842, 0.5
      %v4961 = vmul.f32 %v4847, 0.5
      %v4962 = vmul.f32 %v4850, 0.5
      %v4963 = vmul.f32 %v4855, 0.5
      %v4964 = vmul.f32 %v4858, 0.5
      %v4965 = vmul.f32 %v4863, 0.5
      %v4966 = vmul.f32 %v4866, 0.5
      %v4967 = vmul.f32 %v4871, 0.5
      %v4968 = vmul.f32 %v4874, 0.5
      %v4969 = vmul.f32 %v4879, 0.5
      %v4970 = vmul.f32 %v4882, 0.5
      %v4971 = vmul.f32 %v4887, 0.5
      %v4972 = vmul.f32 %v4890, 0.5
      %v4973 = vmul.f32 %v4895, 0.5
      %v4974 = vmul.f32 %v4898, 0.5
      %v4975 = vmul.f32 %v4903, 0.5
      %v4976 = vmul.f32 %v4906, 0.5
      %v4977 = vmul.f32 %v4911, 0.5
      %v4978 = vmul.f32 %v4914, 0.5
      %v4979 = vmul.f32 %v4919, 0.5
      %v4980 = vmul.f32 %v4922, 0.5
      %v4981 = vmul.f32 %v4927, 0.5
      %v4982 = vmul.f32 %v4930, 0.5
      %v4983 = vmul.f32 %v4935, 0.5
      %v4984 = vmul.f32 %v4938, 0.5
      %v4985 = vmul.f32 %v4943, 0.5
      %v4986 = vmul.f32 %v4946, 0.5
      %v4987 = vmul.f32 %v4951, 0.5
      %v4988 = vmul.f32 %v4954, 0.5
      %v4989 = vmul.f32 %v4831, %v4831
      %v4990 = vmul.f32 %v4834, %v4834
      %v4991 = vmul.f32 %v4839, %v4839
      %v4992 = vmul.f32 %v4842, %v4842
      %v4993 = vmul.f32 %v4847, %v4847
      %v4994 = vmul.f32 %v4850, %v4850
      %v4995 = vmul.f32 %v4855, %v4855
      %v4996 = vmul.f32 %v4858, %v4858
      %v4997 = vmul.f32 %v4863, %v4863
      %v4998 = vmul.f32 %v4866, %v4866
      %v4999 = vmul.f32 %v4871, %v4871
      %v5000 = vmul.f32 %v4874, %v4874
      %v5001 = vmul.f32 %v4879, %v4879
      %v5002 = vmul.f32 %v4882, %v4882
      %v5003 = vmul.f32 %v4887, %v4887
      %v5004 = vmul.f32 %v4890, %v4890
      %v5005 = vmul.f32 %v4895, %v4895
      %v5006 = vmul.f32 %v4898, %v4898
      %v5007 = vmul.f32 %v4903, %v4903
      %v5008 = vmul.f32 %v4906, %v4906
      %v5009 = vmul.f32 %v4911, %v4911
      %v5010 = vmul.f32 %v4914, %v4914
      %v5011 = vmul.f32 %v4919, %v4919
      %v5012 = vmul.f32 %v4922, %v4922
      %v5013 = vmul.f32 %v4927, %v4927
      %v5014 = vmul.f32 %v4930, %v4930
      %v5015 = vmul.f32 %v4935, %v4935
      %v5016 = vmul.f32 %v4938, %v4938
      %v5017 = vmul.f32 %v4943, %v4943
      %v5018 = vmul.f32 %v4946, %v4946
      %v5019 = vmul.f32 %v4951, %v4951
      %v5020 = vmul.f32 %v4954, %v4954
      %v5021 = vmul.f32 %v4989, %v4831
      %v5022 = vmul.f32 %v4990, %v4834
      %v5023 = vmul.f32 %v4991, %v4839
      %v5024 = vmul.f32 %v4992, %v4842
      %v5025 = vmul.f32 %v4993, %v4847
      %v5026 = vmul.f32 %v4994, %v4850
      %v5027 = vmul.f32 %v4995, %v4855
      %v5028 = vmul.f32 %v4996, %v4858
      %v5029 = vmul.f32 %v4997, %v4863
      %v5030 = vmul.f32 %v4998, %v4866
      %v5031 = vmul.f32 %v4999, %v4871
      %v5032 = vmul.f32 %v5000, %v4874
      %v5033 = vmul.f32 %v5001, %v4879
      %v5034 = vmul.f32 %v5002, %v4882
      %v5035 = vmul.f32 %v5003, %v4887
      %v5036 = vmul.f32 %v5004, %v4890
      %v5037 = vmul.f32 %v5005, %v4895
      %v5038 = vmul.f32 %v5006, %v4898
      %v5039 = vmul.f32 %v5007, %v4903
      %v5040 = vmul.f32 %v5008, %v4906
      %v5041 = vmul.f32 %v5009, %v4911
      %v5042 = vmul.f32 %v5010, %v4914
      %v5043 = vmul.f32 %v5011, %v4919
      %v5044 = vmul.f32 %v5012, %v4922
      %v5045 = vmul.f32 %v5013, %v4927
      %v5046 = vmul.f32 %v5014, %v4930
      %v5047 = vmul.f32 %v5015, %v4935
      %v5048 = vmul.f32 %v5016, %v4938
      %v5049 = vmul.f32 %v5017, %v4943
      %v5050 = vmul.f32 %v5018, %v4946
      %v5051 = vmul.f32 %v5019, %v4951
      %v5052 = vmul.f32 %v5020, %v4954
      %v5053 = vmul.f32 %v5021, 0.044715
      %v5054 = vmul.f32 %v5022, 0.044715
      %v5055 = vmul.f32 %v5023, 0.044715
      %v5056 = vmul.f32 %v5024, 0.044715
      %v5057 = vmul.f32 %v5025, 0.044715
      %v5058 = vmul.f32 %v5026, 0.044715
      %v5059 = vmul.f32 %v5027, 0.044715
      %v5060 = vmul.f32 %v5028, 0.044715
      %v5061 = vmul.f32 %v5029, 0.044715
      %v5062 = vmul.f32 %v5030, 0.044715
      %v5063 = vmul.f32 %v5031, 0.044715
      %v5064 = vmul.f32 %v5032, 0.044715
      %v5065 = vmul.f32 %v5033, 0.044715
      %v5066 = vmul.f32 %v5034, 0.044715
      %v5067 = vmul.f32 %v5035, 0.044715
      %v5068 = vmul.f32 %v5036, 0.044715
      %v5069 = vmul.f32 %v5037, 0.044715
      %v5070 = vmul.f32 %v5038, 0.044715
      %v5071 = vmul.f32 %v5039, 0.044715
      %v5072 = vmul.f32 %v5040, 0.044715
      %v5073 = vmul.f32 %v5041, 0.044715
      %v5074 = vmul.f32 %v5042, 0.044715
      %v5075 = vmul.f32 %v5043, 0.044715
      %v5076 = vmul.f32 %v5044, 0.044715
      %v5077 = vmul.f32 %v5045, 0.044715
      %v5078 = vmul.f32 %v5046, 0.044715
      %v5079 = vmul.f32 %v5047, 0.044715
      %v5080 = vmul.f32 %v5048, 0.044715
      %v5081 = vmul.f32 %v5049, 0.044715
      %v5082 = vmul.f32 %v5050, 0.044715
      %v5083 = vmul.f32 %v5051, 0.044715
      %v5084 = vmul.f32 %v5052, 0.044715
      %v5085 = vadd.f32 %v4831, %v5053
      %v5086 = vadd.f32 %v4834, %v5054
      %v5087 = vadd.f32 %v4839, %v5055
      %v5088 = vadd.f32 %v4842, %v5056
      %v5089 = vadd.f32 %v4847, %v5057
      %v5090 = vadd.f32 %v4850, %v5058
      %v5091 = vadd.f32 %v4855, %v5059
      %v5092 = vadd.f32 %v4858, %v5060
      %v5093 = vadd.f32 %v4863, %v5061
      %v5094 = vadd.f32 %v4866, %v5062
      %v5095 = vadd.f32 %v4871, %v5063
      %v5096 = vadd.f32 %v4874, %v5064
      %v5097 = vadd.f32 %v4879, %v5065
      %v5098 = vadd.f32 %v4882, %v5066
      %v5099 = vadd.f32 %v4887, %v5067
      %v5100 = vadd.f32 %v4890, %v5068
      %v5101 = vadd.f32 %v4895, %v5069
      %v5102 = vadd.f32 %v4898, %v5070
      %v5103 = vadd.f32 %v4903, %v5071
      %v5104 = vadd.f32 %v4906, %v5072
      %v5105 = vadd.f32 %v4911, %v5073
      %v5106 = vadd.f32 %v4914, %v5074
      %v5107 = vadd.f32 %v4919, %v5075
      %v5108 = vadd.f32 %v4922, %v5076
      %v5109 = vadd.f32 %v4927, %v5077
      %v5110 = vadd.f32 %v4930, %v5078
      %v5111 = vadd.f32 %v4935, %v5079
      %v5112 = vadd.f32 %v4938, %v5080
      %v5113 = vadd.f32 %v4943, %v5081
      %v5114 = vadd.f32 %v4946, %v5082
      %v5115 = vadd.f32 %v4951, %v5083
      %v5116 = vadd.f32 %v4954, %v5084
      %v5117 = vmul.f32 %v5085, 0.7978846
      %v5118 = vmul.f32 %v5086, 0.7978846
      %v5119 = vmul.f32 %v5087, 0.7978846
      %v5120 = vmul.f32 %v5088, 0.7978846
      %v5121 = vmul.f32 %v5089, 0.7978846
      %v5122 = vmul.f32 %v5090, 0.7978846
      %v5123 = vmul.f32 %v5091, 0.7978846
      %v5124 = vmul.f32 %v5092, 0.7978846
      %v5125 = vmul.f32 %v5093, 0.7978846
      %v5126 = vmul.f32 %v5094, 0.7978846
      %v5127 = vmul.f32 %v5095, 0.7978846
      %v5128 = vmul.f32 %v5096, 0.7978846
      %v5129 = vmul.f32 %v5097, 0.7978846
      %v5130 = vmul.f32 %v5098, 0.7978846
      %v5131 = vmul.f32 %v5099, 0.7978846
      %v5132 = vmul.f32 %v5100, 0.7978846
      %v5133 = vmul.f32 %v5101, 0.7978846
      %v5134 = vmul.f32 %v5102, 0.7978846
      %v5135 = vmul.f32 %v5103, 0.7978846
      %v5136 = vmul.f32 %v5104, 0.7978846
      %v5137 = vmul.f32 %v5105, 0.7978846
      %v5138 = vmul.f32 %v5106, 0.7978846
      %v5139 = vmul.f32 %v5107, 0.7978846
      %v5140 = vmul.f32 %v5108, 0.7978846
      %v5141 = vmul.f32 %v5109, 0.7978846
      %v5142 = vmul.f32 %v5110, 0.7978846
      %v5143 = vmul.f32 %v5111, 0.7978846
      %v5144 = vmul.f32 %v5112, 0.7978846
      %v5145 = vmul.f32 %v5113, 0.7978846
      %v5146 = vmul.f32 %v5114, 0.7978846
      %v5147 = vmul.f32 %v5115, 0.7978846
      %v5148 = vmul.f32 %v5116, 0.7978846
      %v5149 = vtanh.pop %v5117
      %v5150 = vtanh.pop %v5118
      %v5151 = vtanh.pop %v5119
      %v5152 = vtanh.pop %v5120
      %v5153 = vtanh.pop %v5121
      %v5154 = vtanh.pop %v5122
      %v5155 = vtanh.pop %v5123
      %v5156 = vtanh.pop %v5124
      %v5157 = vtanh.pop %v5125
      %v5158 = vtanh.pop %v5126
      %v5159 = vtanh.pop %v5127
      %v5160 = vtanh.pop %v5128
      %v5161 = vtanh.pop %v5129
      %v5162 = vtanh.pop %v5130
      %v5163 = vtanh.pop %v5131
      %v5164 = vtanh.pop %v5132
      %v5165 = vtanh.pop %v5133
      %v5166 = vtanh.pop %v5134
      %v5167 = vtanh.pop %v5135
      %v5168 = vtanh.pop %v5136
      %v5169 = vtanh.pop %v5137
      %v5170 = vtanh.pop %v5138
      %v5171 = vtanh.pop %v5139
      %v5172 = vtanh.pop %v5140
      %v5173 = vtanh.pop %v5141
      %v5174 = vtanh.pop %v5142
      %v5175 = vtanh.pop %v5143
      %v5176 = vtanh.pop %v5144
      %v5177 = vtanh.pop %v5145
      %v5178 = vtanh.pop %v5146
      %v5179 = vtanh.pop %v5147
      %v5180 = vtanh.pop %v5148
      %v5181 = vadd.f32 %v5149, 1.0
      %v5182 = vadd.f32 %v5150, 1.0
      %v5183 = vadd.f32 %v5151, 1.0
      %v5184 = vadd.f32 %v5152, 1.0
      %v5185 = vadd.f32 %v5153, 1.0
      %v5186 = vadd.f32 %v5154, 1.0
      %v5187 = vadd.f32 %v5155, 1.0
      %v5188 = vadd.f32 %v5156, 1.0
      %v5189 = vadd.f32 %v5157, 1.0
      %v5190 = vadd.f32 %v5158, 1.0
      %v5191 = vadd.f32 %v5159, 1.0
      %v5192 = vadd.f32 %v5160, 1.0
      %v5193 = vadd.f32 %v5161, 1.0
      %v5194 = vadd.f32 %v5162, 1.0
      %v5195 = vadd.f32 %v5163, 1.0
      %v5196 = vadd.f32 %v5164, 1.0
      %v5197 = vadd.f32 %v5165, 1.0
      %v5198 = vadd.f32 %v5166, 1.0
      %v5199 = vadd.f32 %v5167, 1.0
      %v5200 = vadd.f32 %v5168, 1.0
      %v5201 = vadd.f32 %v5169, 1.0
      %v5202 = vadd.f32 %v5170, 1.0
      %v5203 = vadd.f32 %v5171, 1.0
      %v5204 = vadd.f32 %v5172, 1.0
      %v5205 = vadd.f32 %v5173, 1.0
      %v5206 = vadd.f32 %v5174, 1.0
      %v5207 = vadd.f32 %v5175, 1.0
      %v5208 = vadd.f32 %v5176, 1.0
      %v5209 = vadd.f32 %v5177, 1.0
      %v5210 = vadd.f32 %v5178, 1.0
      %v5211 = vadd.f32 %v5179, 1.0
      %v5212 = vadd.f32 %v5180, 1.0
      %v5213 = vmul.f32 %v4957, %v5181
      %v5214 = vmul.f32 %v4958, %v5182
      %v5215 = vmul.f32 %v4959, %v5183
      %v5216 = vmul.f32 %v4960, %v5184
      %v5217 = vmul.f32 %v4961, %v5185
      %v5218 = vmul.f32 %v4962, %v5186
      %v5219 = vmul.f32 %v4963, %v5187
      %v5220 = vmul.f32 %v4964, %v5188
      %v5221 = vmul.f32 %v4965, %v5189
      %v5222 = vmul.f32 %v4966, %v5190
      %v5223 = vmul.f32 %v4967, %v5191
      %v5224 = vmul.f32 %v4968, %v5192
      %v5225 = vmul.f32 %v4969, %v5193
      %v5226 = vmul.f32 %v4970, %v5194
      %v5227 = vmul.f32 %v4971, %v5195
      %v5228 = vmul.f32 %v4972, %v5196
      %v5229 = vmul.f32 %v4973, %v5197
      %v5230 = vmul.f32 %v4974, %v5198
      %v5231 = vmul.f32 %v4975, %v5199
      %v5232 = vmul.f32 %v4976, %v5200
      %v5233 = vmul.f32 %v4977, %v5201
      %v5234 = vmul.f32 %v4978, %v5202
      %v5235 = vmul.f32 %v4979, %v5203
      %v5236 = vmul.f32 %v4980, %v5204
      %v5237 = vmul.f32 %v4981, %v5205
      %v5238 = vmul.f32 %v4982, %v5206
      %v5239 = vmul.f32 %v4983, %v5207
      %v5240 = vmul.f32 %v4984, %v5208
      %v5241 = vmul.f32 %v4985, %v5209
      %v5242 = vmul.f32 %v4986, %v5210
      %v5243 = vmul.f32 %v4987, %v5211
      %v5244 = vmul.f32 %v4988, %v5212
      %v5245 = vpack.c.bf16 %v5214, %v5213
      %v5246 = vpack.c.bf16 %v5216, %v5215
      %v5247 = vpack.c.bf16 %v5218, %v5217
      %v5248 = vpack.c.bf16 %v5220, %v5219
      %v5249 = vpack.c.bf16 %v5222, %v5221
      %v5250 = vpack.c.bf16 %v5224, %v5223
      %v5251 = vpack.c.bf16 %v5226, %v5225
      %v5252 = vpack.c.bf16 %v5228, %v5227
      %v5253 = vpack.c.bf16 %v5230, %v5229
      %v5254 = vpack.c.bf16 %v5232, %v5231
      %v5255 = vpack.c.bf16 %v5234, %v5233
      %v5256 = vpack.c.bf16 %v5236, %v5235
      %v5257 = vpack.c.bf16 %v5238, %v5237
      %v5258 = vpack.c.bf16 %v5240, %v5239
      %v5259 = vpack.c.bf16 %v5242, %v5241
      %v5260 = vpack.c.bf16 %v5244, %v5243
      %v5261 = vld [vmem:[%s5] sm:$0xf]
      %v5262 = vld [vmem:[%s5 + $0x4] sm:$0xf]
      %v5263 = vld [vmem:[%s5 + $0x8] sm:$0xf]
      %v5264 = vld [vmem:[%s5 + $0xc] sm:$0xf]
      %v5265 = vld [vmem:[%s5 + $0x10] sm:$0xf]
      %v5266 = vld [vmem:[%s5 + $0x14] sm:$0xf]
      %v5267 = vld [vmem:[%s5 + $0x18] sm:$0xf]
      %v5268 = vld [vmem:[%s5 + $0x1c] sm:$0xf]
      %v5269 = vld [vmem:[%s5 + $0x20] sm:$0xf]
      %v5270 = vld [vmem:[%s5 + $0x24] sm:$0xf]
      %v5271 = vld [vmem:[%s5 + $0x28] sm:$0xf]
      %v5272 = vld [vmem:[%s5 + $0x2c] sm:$0xf]
      %v5273 = vld [vmem:[%s5 + $0x30] sm:$0xf]
      %v5274 = vld [vmem:[%s5 + $0x34] sm:$0xf]
      %v5275 = vld [vmem:[%s5 + $0x38] sm:$0xf]
      %v5276 = vld [vmem:[%s5 + $0x3c] sm:$0xf]
      %v5277 = vlaneseq
      %v5278 = vshrl.u32 %v5277, 7
      %v5279 = vsub.s32 4, %v5278
      %v5280 = vrot.slane %v286, %v5279
      %v5297 = vunpack.c.l.b16 %v5261
      %v5298 = vunpack.c.l.b16 %v5262
      %v5299 = vunpack.c.l.b16 %v5263
      %v5300 = vunpack.c.l.b16 %v5264
      %v5301 = vunpack.c.l.b16 %v5265
      %v5302 = vunpack.c.l.b16 %v5266
      %v5303 = vunpack.c.l.b16 %v5267
      %v5304 = vunpack.c.l.b16 %v5268
      %v5305 = vunpack.c.l.b16 %v5269
      %v5306 = vunpack.c.l.b16 %v5270
      %v5307 = vunpack.c.l.b16 %v5271
      %v5308 = vunpack.c.l.b16 %v5272
      %v5309 = vunpack.c.l.b16 %v5273
      %v5310 = vunpack.c.l.b16 %v5274
      %v5311 = vunpack.c.l.b16 %v5275
      %v5312 = vunpack.c.l.b16 %v5276
      %v5313 = vpack.c.b16 %v5298, %v5297
      %v5314 = vpack.c.b16 %v5300, %v5299
      %v5315 = vpack.c.b16 %v5302, %v5301
      %v5316 = vpack.c.b16 %v5304, %v5303
      %v5317 = vpack.c.b16 %v5306, %v5305
      %v5318 = vpack.c.b16 %v5308, %v5307
      %v5319 = vpack.c.b16 %v5310, %v5309
      %v5320 = vpack.c.b16 %v5312, %v5311
      %5329 = vmatprep.subr.bf16.mxu0 0
      %5330 = vmatpush1.bf16.msra.mxu0 %v5313
      %5331 = vmatprep.subr.bf16.mxu0 0
      %5332 = vmatpush1.bf16.msra.mxu0 %v5314
      %5333 = vmatprep.subr.bf16.mxu0 0
      %5334 = vmatpush1.bf16.msra.mxu0 %v5315
      %5335 = vmatprep.subr.bf16.mxu0 0
      %5336 = vmatpush1.bf16.msra.mxu0 %v5316
      %5337 = vmatprep.subr.bf16.mxu0 0
      %5338 = vmatpush1.bf16.msra.mxu0 %v5317
      %5339 = vmatprep.subr.bf16.mxu0 0
      %5340 = vmatpush1.bf16.msra.mxu0 %v5318
      %5341 = vmatprep.subr.bf16.mxu0 0
      %5342 = vmatpush1.bf16.msra.mxu0 %v5319
      %5343 = vmatprep.subr.bf16.mxu0 0
      %5344 = vmatpush1.bf16.msra.mxu0 %v5320
      %5345 = vmatprep.subr.bf16.mxu0 0
      %5346 = vmatpush1.bf16.msra.mxu0 0
      %5347 = vmatprep.subr.bf16.mxu0 0
      %5348 = vmatpush1.bf16.msra.mxu0 0
      %5349 = vmatprep.subr.bf16.mxu0 0
      %5350 = vmatpush1.bf16.msra.mxu0 0
      %5351 = vmatprep.subr.bf16.mxu0 0
      %5352 = vmatpush1.bf16.msra.mxu0 0
      %5353 = vmatprep.subr.bf16.mxu0 0
      %5354 = vmatpush1.bf16.msra.mxu0 0
      %5355 = vmatprep.subr.bf16.mxu0 0
      %5356 = vmatpush1.bf16.msra.mxu0 0
      %5357 = vmatprep.subr.bf16.mxu0 0
      %5358 = vmatpush1.bf16.msra.mxu0 0
      %5359 = vmatprep.subr.bf16.mxu0 0
      %5360 = vmatpush1.bf16.msra.mxu0 0
      %5361 = vmatprep.mubr.bf16.mxu0 0
      %5362 = vmatmul.mubr.bf16.gmra.mrb[0].mxu0 %v5245
      %v5363 = vpop.f32.mrb[0].mxu0
      %v5364 = vadd.f32 %v5280, %v5363
      %v5365 = vpop.f32.mrb[0].mxu0
      %v5366 = vpop.f32.mrb[0].mxu0
      %v5367 = vadd.f32 %v5280, %v5366
      %v5368 = vpop.f32.mrb[0].mxu0
      %5369 = vmatprep.mubr.bf16.mxu0 0
      %5370 = vmatmul.mubr.bf16.gmra.mrb[0].mxu0 %v5246
      %v5371 = vpop.f32.mrb[0].mxu0
      %v5372 = vadd.f32 %v5280, %v5371
      %v5373 = vpop.f32.mrb[0].mxu0
      %v5374 = vpop.f32.mrb[0].mxu0
      %v5375 = vadd.f32 %v5280, %v5374
      %v5376 = vpop.f32.mrb[0].mxu0
      %5377 = vmatprep.mubr.bf16.mxu0 0
      %5378 = vmatmul.mubr.bf16.gmra.mrb[0].mxu0 %v5247
      %v5379 = vpop.f32.mrb[0].mxu0
      %v5380 = vadd.f32 %v5280, %v5379
      %v5381 = vpop.f32.mrb[0].mxu0
      %v5382 = vpop.f32.mrb[0].mxu0
      %v5383 = vadd.f32 %v5280, %v5382
      %v5384 = vpop.f32.mrb[0].mxu0
      %5385 = vmatprep.mubr.bf16.mxu0 0
      %5386 = vmatmul.mubr.bf16.gmra.mrb[0].mxu0 %v5248
      %v5387 = vpop.f32.mrb[0].mxu0
      %v5388 = vadd.f32 %v5280, %v5387
      %v5389 = vpop.f32.mrb[0].mxu0
      %v5390 = vpop.f32.mrb[0].mxu0
      %v5391 = vadd.f32 %v5280, %v5390
      %v5392 = vpop.f32.mrb[0].mxu0
      %5393 = vmatprep.mubr.bf16.mxu0 0
      %5394 = vmatmul.mubr.bf16.gmra.mrb[0].mxu0 %v5249
      %v5395 = vpop.f32.mrb[0].mxu0
      %v5396 = vadd.f32 %v5280, %v5395
      %v5397 = vpop.f32.mrb[0].mxu0
      %v5398 = vpop.f32.mrb[0].mxu0
      %v5399 = vadd.f32 %v5280, %v5398
      %v5400 = vpop.f32.mrb[0].mxu0
      %5401 = vmatprep.mubr.bf16.mxu0 0
      %5402 = vmatmul.mubr.bf16.gmra.mrb[0].mxu0 %v5250
      %v5403 = vpop.f32.mrb[0].mxu0
      %v5404 = vadd.f32 %v5280, %v5403
      %v5405 = vpop.f32.mrb[0].mxu0
      %v5406 = vpop.f32.mrb[0].mxu0
      %v5407 = vadd.f32 %v5280, %v5406
      %v5408 = vpop.f32.mrb[0].mxu0
      %5409 = vmatprep.mubr.bf16.mxu0 0
      %5410 = vmatmul.mubr.bf16.gmra.mrb[0].mxu0 %v5251
      %v5411 = vpop.f32.mrb[0].mxu0
      %v5412 = vadd.f32 %v5280, %v5411
      %v5413 = vpop.f32.mrb[0].mxu0
      %v5414 = vpop.f32.mrb[0].mxu0
      %v5415 = vadd.f32 %v5280, %v5414
      %v5416 = vpop.f32.mrb[0].mxu0
      %5417 = vmatprep.mubr.bf16.mxu0 0
      %5418 = vmatmul.mubr.bf16.gmra.mrb[0].mxu0 %v5252
      %v5419 = vpop.f32.mrb[0].mxu0
      %v5420 = vadd.f32 %v5280, %v5419
      %v5421 = vpop.f32.mrb[0].mxu0
      %v5422 = vpop.f32.mrb[0].mxu0
      %v5423 = vadd.f32 %v5280, %v5422
      %v5424 = vpop.f32.mrb[0].mxu0
      %5425 = vmatprep.mubr.bf16.mxu0 0
      %5426 = vmatmul.mubr.bf16.gmra.mrb[0].mxu0 %v5253
      %v5427 = vpop.f32.mrb[0].mxu0
      %v5428 = vadd.f32 %v5280, %v5427
      %v5429 = vpop.f32.mrb[0].mxu0
      %v5430 = vpop.f32.mrb[0].mxu0
      %v5431 = vadd.f32 %v5280, %v5430
      %v5432 = vpop.f32.mrb[0].mxu0
      %5433 = vmatprep.mubr.bf16.mxu0 0
      %5434 = vmatmul.mubr.bf16.gmra.mrb[0].mxu0 %v5254
      %v5435 = vpop.f32.mrb[0].mxu0
      %v5436 = vadd.f32 %v5280, %v5435
      %v5437 = vpop.f32.mrb[0].mxu0
      %v5438 = vpop.f32.mrb[0].mxu0
      %v5439 = vadd.f32 %v5280, %v5438
      %v5440 = vpop.f32.mrb[0].mxu0
      %5441 = vmatprep.mubr.bf16.mxu0 0
      %5442 = vmatmul.mubr.bf16.gmra.mrb[0].mxu0 %v5255
      %v5443 = vpop.f32.mrb[0].mxu0
      %v5444 = vadd.f32 %v5280, %v5443
      %v5445 = vpop.f32.mrb[0].mxu0
      %v5446 = vpop.f32.mrb[0].mxu0
      %v5447 = vadd.f32 %v5280, %v5446
      %v5448 = vpop.f32.mrb[0].mxu0
      %5449 = vmatprep.mubr.bf16.mxu0 0
      %5450 = vmatmul.mubr.bf16.gmra.mrb[0].mxu0 %v5256
      %v5451 = vpop.f32.mrb[0].mxu0
      %v5452 = vadd.f32 %v5280, %v5451
      %v5453 = vpop.f32.mrb[0].mxu0
      %v5454 = vpop.f32.mrb[0].mxu0
      %v5455 = vadd.f32 %v5280, %v5454
      %v5456 = vpop.f32.mrb[0].mxu0
      %5457 = vmatprep.mubr.bf16.mxu0 0
      %5458 = vmatmul.mubr.bf16.gmra.mrb[0].mxu0 %v5257
      %v5459 = vpop.f32.mrb[0].mxu0
      %v5460 = vadd.f32 %v5280, %v5459
      %v5461 = vpop.f32.mrb[0].mxu0
      %v5462 = vpop.f32.mrb[0].mxu0
      %v5463 = vadd.f32 %v5280, %v5462
      %v5464 = vpop.f32.mrb[0].mxu0
      %5465 = vmatprep.mubr.bf16.mxu0 0
      %5466 = vmatmul.mubr.bf16.gmra.mrb[0].mxu0 %v5258
      %v5467 = vpop.f32.mrb[0].mxu0
      %v5468 = vadd.f32 %v5280, %v5467
      %v5469 = vpop.f32.mrb[0].mxu0
      %v5470 = vpop.f32.mrb[0].mxu0
      %v5471 = vadd.f32 %v5280, %v5470
      %v5472 = vpop.f32.mrb[0].mxu0
      %5473 = vmatprep.mubr.bf16.mxu0 0
      %5474 = vmatmul.mubr.bf16.gmra.mrb[0].mxu0 %v5259
      %v5475 = vpop.f32.mrb[0].mxu0
      %v5476 = vadd.f32 %v5280, %v5475
      %v5477 = vpop.f32.mrb[0].mxu0
      %v5478 = vpop.f32.mrb[0].mxu0
      %v5479 = vadd.f32 %v5280, %v5478
      %v5480 = vpop.f32.mrb[0].mxu0
      %5481 = vmatprep.mubr.bf16.mxu0 0
      %5482 = vmatmul.mubr.bf16.gmra.mrb[0].mxu0 %v5260
      %v5483 = vpop.f32.mrb[0].mxu0
      %v5484 = vadd.f32 %v5280, %v5483
      %v5485 = vpop.f32.mrb[0].mxu0
      %v5486 = vpop.f32.mrb[0].mxu0
      %v5487 = vadd.f32 %v5280, %v5486
      %v5488 = vpop.f32.mrb[0].mxu0
      %5489 = vdwg.mxu0
      %s5490 = sadd.s32 %s278, 3
      %s5491 = smul.u32 %s5490, 24
      %s5492 = scalar_lea.vmem %s265, %s5491
      %v5493 = vld [vmem:[%s5492 + $0x3] sm:$0xff]
      %v5494 = vld [vmem:[%s5492 + $0xb] sm:$0xff]
      %v5495 = vld [vmem:[%s5492 + $0x1b] sm:$0xff]
      %v5496 = vld [vmem:[%s5492 + $0x23] sm:$0xff]
      %v5497 = vld [vmem:[%s5492 + $0x33] sm:$0xff]
      %v5498 = vld [vmem:[%s5492 + $0x3b] sm:$0xff]
      %v5499 = vld [vmem:[%s5492 + $0x4b] sm:$0xff]
      %v5500 = vld [vmem:[%s5492 + $0x53] sm:$0xff]
      %v5501 = vld [vmem:[%s5492 + $0x63] sm:$0xff]
      %v5502 = vld [vmem:[%s5492 + $0x6b] sm:$0xff]
      %v5503 = vld [vmem:[%s5492 + $0x7b] sm:$0xff]
      %v5504 = vld [vmem:[%s5492 + $0x83] sm:$0xff]
      %v5505 = vld [vmem:[%s5492 + $0x93] sm:$0xff]
      %v5506 = vld [vmem:[%s5492 + $0x9b] sm:$0xff]
      %v5507 = vld [vmem:[%s5492 + $0xab] sm:$0xff]
      %v5508 = vld [vmem:[%s5492 + $0xb3] sm:$0xff]
      %v5509 = vld [vmem:[%s5492 + $0xc3] sm:$0xff]
      %v5510 = vld [vmem:[%s5492 + $0xcb] sm:$0xff]
      %v5511 = vld [vmem:[%s5492 + $0xdb] sm:$0xff]
      %v5512 = vld [vmem:[%s5492 + $0xe3] sm:$0xff]
      %v5513 = vld [vmem:[%s5492 + $0xf3] sm:$0xff]
      %v5514 = vld [vmem:[%s5492 + $0xfb] sm:$0xff]
      %v5515 = vld [vmem:[%s5492 + $0x10b] sm:$0xff]
      %v5516 = vld [vmem:[%s5492 + $0x113] sm:$0xff]
      %v5517 = vld [vmem:[%s5492 + $0x123] sm:$0xff]
      %v5518 = vld [vmem:[%s5492 + $0x12b] sm:$0xff]
      %v5519 = vld [vmem:[%s5492 + $0x13b] sm:$0xff]
      %v5520 = vld [vmem:[%s5492 + $0x143] sm:$0xff]
      %v5521 = vld [vmem:[%s5492 + $0x153] sm:$0xff]
      %v5522 = vld [vmem:[%s5492 + $0x15b] sm:$0xff]
      %v5523 = vld [vmem:[%s5492 + $0x16b] sm:$0xff]
      %v5524 = vld [vmem:[%s5492 + $0x173] sm:$0xff]
      %v5525 = vlaneseq
      %v5526 = vshrl.u32 %v5525, 7
      %v5527 = vsub.s32 3, %v5526
      %v5528 = vrot.slane %v286, %v5527
      %v5529 = vmul.f32 %v5364, %v5528
      %v5530 = vmul.f32 %v5367, %v5528
      %v5531 = vmul.f32 %v5372, %v5528
      %v5532 = vmul.f32 %v5375, %v5528
      %v5533 = vmul.f32 %v5380, %v5528
      %v5534 = vmul.f32 %v5383, %v5528
      %v5535 = vmul.f32 %v5388, %v5528
      %v5536 = vmul.f32 %v5391, %v5528
      %v5537 = vmul.f32 %v5396, %v5528
      %v5538 = vmul.f32 %v5399, %v5528
      %v5539 = vmul.f32 %v5404, %v5528
      %v5540 = vmul.f32 %v5407, %v5528
      %v5541 = vmul.f32 %v5412, %v5528
      %v5542 = vmul.f32 %v5415, %v5528
      %v5543 = vmul.f32 %v5420, %v5528
      %v5544 = vmul.f32 %v5423, %v5528
      %v5545 = vmul.f32 %v5428, %v5528
      %v5546 = vmul.f32 %v5431, %v5528
      %v5547 = vmul.f32 %v5436, %v5528
      %v5548 = vmul.f32 %v5439, %v5528
      %v5549 = vmul.f32 %v5444, %v5528
      %v5550 = vmul.f32 %v5447, %v5528
      %v5551 = vmul.f32 %v5452, %v5528
      %v5552 = vmul.f32 %v5455, %v5528
      %v5553 = vmul.f32 %v5460, %v5528
      %v5554 = vmul.f32 %v5463, %v5528
      %v5555 = vmul.f32 %v5468, %v5528
      %v5556 = vmul.f32 %v5471, %v5528
      %v5557 = vmul.f32 %v5476, %v5528
      %v5558 = vmul.f32 %v5479, %v5528
      %v5559 = vmul.f32 %v5484, %v5528
      %v5560 = vmul.f32 %v5487, %v5528
      %v5561 = vadd.f32 %v5529, %v5493
      %v5562 = vadd.f32 %v5530, %v5494
      %v5563 = vadd.f32 %v5531, %v5495
      %v5564 = vadd.f32 %v5532, %v5496
      %v5565 = vadd.f32 %v5533, %v5497
      %v5566 = vadd.f32 %v5534, %v5498
      %v5567 = vadd.f32 %v5535, %v5499
      %v5568 = vadd.f32 %v5536, %v5500
      %v5569 = vadd.f32 %v5537, %v5501
      %v5570 = vadd.f32 %v5538, %v5502
      %v5571 = vadd.f32 %v5539, %v5503
      %v5572 = vadd.f32 %v5540, %v5504
      %v5573 = vadd.f32 %v5541, %v5505
      %v5574 = vadd.f32 %v5542, %v5506
      %v5575 = vadd.f32 %v5543, %v5507
      %v5576 = vadd.f32 %v5544, %v5508
      %v5577 = vadd.f32 %v5545, %v5509
      %v5578 = vadd.f32 %v5546, %v5510
      %v5579 = vadd.f32 %v5547, %v5511
      %v5580 = vadd.f32 %v5548, %v5512
      %v5581 = vadd.f32 %v5549, %v5513
      %v5582 = vadd.f32 %v5550, %v5514
      %v5583 = vadd.f32 %v5551, %v5515
      %v5584 = vadd.f32 %v5552, %v5516
      %v5585 = vadd.f32 %v5553, %v5517
      %v5586 = vadd.f32 %v5554, %v5518
      %v5587 = vadd.f32 %v5555, %v5519
      %v5588 = vadd.f32 %v5556, %v5520
      %v5589 = vadd.f32 %v5557, %v5521
      %v5590 = vadd.f32 %v5558, %v5522
      %v5591 = vadd.f32 %v5559, %v5523
      %v5592 = vadd.f32 %v5560, %v5524
      %5593 = vst [vmem:[%s275] sm:$0xff] %v5561
      %5594 = vst [vmem:[%s275 + $0x8] sm:$0xff] %v5562
      %5595 = vst [vmem:[%s275 + $0x10] sm:$0xff] %v5563
      %5596 = vst [vmem:[%s275 + $0x18] sm:$0xff] %v5564
      %5597 = vst [vmem:[%s275 + $0x20] sm:$0xff] %v5565
      %5598 = vst [vmem:[%s275 + $0x28] sm:$0xff] %v5566
      %5599 = vst [vmem:[%s275 + $0x30] sm:$0xff] %v5567
      %5600 = vst [vmem:[%s275 + $0x38] sm:$0xff] %v5568
      %5601 = vst [vmem:[%s275 + $0x40] sm:$0xff] %v5569
      %5602 = vst [vmem:[%s275 + $0x48] sm:$0xff] %v5570
      %5603 = vst [vmem:[%s275 + $0x50] sm:$0xff] %v5571
      %5604 = vst [vmem:[%s275 + $0x58] sm:$0xff] %v5572
      %5605 = vst [vmem:[%s275 + $0x60] sm:$0xff] %v5573
      %5606 = vst [vmem:[%s275 + $0x68] sm:$0xff] %v5574
      %5607 = vst [vmem:[%s275 + $0x70] sm:$0xff] %v5575
      %5608 = vst [vmem:[%s275 + $0x78] sm:$0xff] %v5576
      %5609 = vst [vmem:[%s275 + $0x80] sm:$0xff] %v5577
      %5610 = vst [vmem:[%s275 + $0x88] sm:$0xff] %v5578
      %5611 = vst [vmem:[%s275 + $0x90] sm:$0xff] %v5579
      %5612 = vst [vmem:[%s275 + $0x98] sm:$0xff] %v5580
      %5613 = vst [vmem:[%s275 + $0xa0] sm:$0xff] %v5581
      %5614 = vst [vmem:[%s275 + $0xa8] sm:$0xff] %v5582
      %5615 = vst [vmem:[%s275 + $0xb0] sm:$0xff] %v5583
      %5616 = vst [vmem:[%s275 + $0xb8] sm:$0xff] %v5584
      %5617 = vst [vmem:[%s275 + $0xc0] sm:$0xff] %v5585
      %5618 = vst [vmem:[%s275 + $0xc8] sm:$0xff] %v5586
      %5619 = vst [vmem:[%s275 + $0xd0] sm:$0xff] %v5587
      %5620 = vst [vmem:[%s275 + $0xd8] sm:$0xff] %v5588
      %5621 = vst [vmem:[%s275 + $0xe0] sm:$0xff] %v5589
      %5622 = vst [vmem:[%s275 + $0xe8] sm:$0xff] %v5590
      %5623 = vst [vmem:[%s275 + $0xf0] sm:$0xff] %v5591
      %5624 = vst [vmem:[%s275 + $0xf8] sm:$0xff] %v5592
      %s5625 = smul.u32 16, %s22
      %p5626 = scmp.lt.s32.totalorder %s21, 1
      %s5627 = scalar_select %p5626, %s21, 1
      %p5628 = scmp.lt.s32.totalorder %s5625, 15
      %s5629 = scalar_select %p5628, %s5625, 15
      %s5630 = smul.addr %s5629, 2
      %s5631 = smul.addr %s5627, 32
      %s5632 = sadd.s32 %s5630, %s5631
      %s5633 = smul.addr %s5632, 8
      %s5634 = scalar_lea.vmem %s6, %s5633
      // Predicated region
      $region45: #{convnext_block.1} parent=43 // pred_check
        %p5635 = pneg %p180
      $region46: #{convnext_block.1} parent=43 // pred_check_branch
        %5637 = sbr.rel (%p5635) target = $region48
      $region47: #{convnext_block.1} parent=43 // pred_region
        %s5638 = smul.u32 16, %s22
      $region48: #{convnext_block.1} parent=43 // pred_fallthru
        _
    $region44: #{convnext_block.1} parent=5 // pred_fallthru
      _
    %p5639 = scmp.le.s32.totalorder 2, %s12
    // Predicated region
    $region49: #{convnext_block.1} parent=5 // pred_check
      %p5640 = pneg %p5639
    $region50: #{convnext_block.1} parent=5 // pred_check_branch
      %5642 = sbr.rel (%p5640) target = $region52
    $region51: #{convnext_block.1} parent=5 // pred_region
      %s5643 = ssub.s32 %s12, 2
      // Predicated region
      $region53: #{convnext_block.1} parent=51 // pred_check
        %p5644 = pneg %p186
      $region54: #{convnext_block.1} parent=51 // pred_check_branch
        %5646 = sbr.rel (%p5644) target = $region56
      $region55: #{convnext_block.1} parent=51 // pred_region
        %s5647 = smul.u32 16, %s24
        %p5648 = scmp.lt.s32.totalorder %s23, 1
        %s5649 = scalar_select %p5648, %s23, 1
        %p5650 = scmp.lt.s32.totalorder %s5647, 15
        %s5651 = scalar_select %p5650, %s5647, 15
        %s5652 = smul.addr %s5651, 2
        %s5653 = smul.addr %s5649, 32
        %s5654 = sadd.s32 %s5652, %s5653
        %s5655 = smul.addr %s5654, 8
        %s5656 = scalar_lea.vmem %s6, %s5655
      $region56: #{convnext_block.1} parent=51 // pred_fallthru
        _
    $region52: #{convnext_block.1} parent=5 // pred_fallthru
      _
  $region6: #{convnext_block.1} parent=0 // loop_footer
    %s16 = sadd.s32 1, %s12
  $region7: #{convnext_block.1} parent=0 // loop_footer_branch
    %11 = sbr.rel target = $region3
  $region8: #{convnext_block.1} parent=0 // loop_exit
    _

</llo_original>
